<compile_context>
chip_gen: v7x
topology: tpu7x:2x2x1
jax: 0.10.0
libtpu: 0.0.40
codegen_flags: <defaults>
</compile_context>

<pallas_src>
import math

import jax
import jax.numpy as jnp
from jax import lax
from jax.experimental import pallas as pl
from jax.experimental.pallas import tpu as pltpu

# ----------------------------- config ---------------------------------------
N_HEAD = 4
N_LAYER = 4
D_MODEL = 128
D_HEAD = D_MODEL // N_HEAD          # 32
D_HIDDEN = 256
SEQ = 128
BATCH = 2
SCALE = 1.0 / math.sqrt(2.0 * N_LAYER)
EPS = 1e-5


# ----------------------------- kernel ---------------------------------------
def _rms_norm(v):
    ms = jnp.mean(v * v, axis=-1, keepdims=True)
    return v * lax.rsqrt(ms + EPS)


def layer_kernel(x_ref, wqkv_ref, wo_ref, wmlp_ref, wp_ref, rot_ref,
                 cos_ref, sin_ref, bias_ref, o_ref):
    rows, d_model = x_ref.shape           # (B*S, D)
    seq = bias_ref.shape[0]
    batch = rows // seq

    x = x_ref[...]                        # (B*S, D) f32

    # ---- attention branch: n1 -> qkv -> rope -> causal softmax attn -> o ----
    xn = _rms_norm(x).astype(jnp.bfloat16)
    qkv = jnp.dot(xn, wqkv_ref[...], preferred_element_type=jnp.float32)  # (B*S, 3D)

    q = qkv[:, 0 * d_model:1 * d_model]
    k = qkv[:, 1 * d_model:2 * d_model]
    v = qkv[:, 2 * d_model:3 * d_model].astype(jnp.bfloat16)

    cosf = cos_ref[...]                   # (B*S, D) f32 (tiled per head & batch)
    sinf = sin_ref[...]
    rot = rot_ref[...]                    # (D, D) bf16 +/-1 permutation

    # rotate_half via MXU matmul on the full slab (no narrow slices/concat).
    q_rot = jnp.dot(q.astype(jnp.bfloat16), rot, preferred_element_type=jnp.float32)
    k_rot = jnp.dot(k.astype(jnp.bfloat16), rot, preferred_element_type=jnp.float32)
    q = (q * cosf + q_rot * sinf).astype(jnp.bfloat16)
    k = (k * cosf + k_rot * sinf).astype(jnp.bfloat16)

    bias = bias_ref[...]                  # (S, S) additive causal bias
    wo = wo_ref[...]                      # (D, D) bf16
    inv_sqrt_dh = 1.0 / math.sqrt(D_HEAD)

    attn_parts = []
    for b in range(batch):
        r0 = b * seq
        qb = q[r0:r0 + seq, :]
        kb = k[r0:r0 + seq, :]
        vb = v[r0:r0 + seq, :]
        acc = jnp.zeros((seq, d_model), jnp.float32)
        for h in range(N_HEAD):
            c0 = h * D_HEAD
            qh = qb[:, c0:c0 + D_HEAD]
            kh = kb[:, c0:c0 + D_HEAD]
            vh = vb[:, c0:c0 + D_HEAD]
            # scores = q @ k^T (contract last dims), f32 accumulate on MXU
            s = lax.dot_general(qh, kh, (((1,), (1,)), ((), ())),
                                preferred_element_type=jnp.float32)
            s = s * inv_sqrt_dh + bias
            m = jnp.max(s, axis=-1, keepdims=True)
            p = jnp.exp(s - m)
            denom = jnp.sum(p, axis=-1, keepdims=True)
            z = jnp.dot(p.astype(jnp.bfloat16), vh,
                        preferred_element_type=jnp.float32)          # (S, Dh)
            z = z * pl.reciprocal(denom, approx=True)                # deferred softmax norm
            # fuse output projection per head -> no z_scratch / masked stores
            acc = acc + jnp.dot(z.astype(jnp.bfloat16), wo[c0:c0 + D_HEAD, :],
                                preferred_element_type=jnp.float32)
        attn_parts.append(acc)
    attn_out = attn_parts[0] if batch == 1 else jnp.concatenate(attn_parts, axis=0)

    x1 = x + SCALE * attn_out

    # ---- MLP branch: n2 -> bilinear (left * right) -> projection ----
    x2n = _rms_norm(x1).astype(jnp.bfloat16)
    hid = jnp.dot(x2n, wmlp_ref[...], preferred_element_type=jnp.float32)  # (B*S, 2H)
    gated = (hid[:, :D_HIDDEN] * hid[:, D_HIDDEN:]).astype(jnp.bfloat16)
    mlp_out = jnp.dot(gated, wp_ref[...], preferred_element_type=jnp.float32)

    o_ref[...] = x1 + mlp_out


# ----------------------------- wrapper ---------------------------------------
@jax.jit
def layer_forward(x, w_qkv_t, w_o_t, w_mlp_t, w_p_t, cos, sin):
    B, S, D = x.shape
    xf = x.reshape(B * S, D)

    # bf16 weights (MXU-native); accumulation stays f32 inside the kernel.
    wqkv_bf = w_qkv_t.astype(jnp.bfloat16)
    wo_bf = w_o_t.astype(jnp.bfloat16)
    wmlp_bf = w_mlp_t.astype(jnp.bfloat16)
    wp_bf = w_p_t.astype(jnp.bfloat16)

    # rotary tables tiled per head (to 128 lanes) and over the fused batch rows.
    cosf = jnp.tile(jnp.tile(cos, (1, N_HEAD)), (B, 1)).astype(jnp.float32)
    sinf = jnp.tile(jnp.tile(sin, (1, N_HEAD)), (B, 1)).astype(jnp.float32)

    # rotate_half expressed as a matmul: rotate_half(q) == q @ rot
    c = jnp.arange(D)
    jj = c % D_HEAD
    src = jnp.where(jj < D_HEAD // 2, c + D_HEAD // 2, c - D_HEAD // 2)
    sign = jnp.where(jj < D_HEAD // 2, -1.0, 1.0)
    rot = jnp.zeros((D, D), jnp.float32).at[src, c].set(sign).astype(jnp.bfloat16)

    # additive causal bias (0 on/below diagonal, -1e30 above).
    r = jnp.arange(S)
    bias = jnp.where(r[:, None] >= r[None, :], 0.0, -1e30).astype(jnp.float32)

    out = pl.pallas_call(
        layer_kernel,
        out_shape=jax.ShapeDtypeStruct((B * S, D), jnp.float32),
        in_specs=[pl.BlockSpec(memory_space=pltpu.MemorySpace.VMEM)] * 9,
        out_specs=pl.BlockSpec(memory_space=pltpu.MemorySpace.VMEM),
    )(xf, wqkv_bf, wo_bf, wmlp_bf, wp_bf, rot, cosf, sinf, bias)
    return out.reshape(B, S, D)


# ----------------------------- pure-JAX reference -----------------------------
def reference_forward(x, w_qkv_t, w_o_t, w_mlp_t, w_p_t, cos, sin):
    def rms(v):
        return v * lax.rsqrt(jnp.mean(v * v, axis=-1, keepdims=True) + EPS)

    B, S, D = x.shape
    xn = rms(x)
    qkv = xn @ w_qkv_t                                    # (B, S, 3D)
    qkv = qkv.reshape(B, S, 3, N_HEAD, D_HEAD)
    q = jnp.transpose(qkv[:, :, 0], (0, 2, 1, 3))         # (B, H, S, Dh)
    k = jnp.transpose(qkv[:, :, 1], (0, 2, 1, 3))
    v = jnp.transpose(qkv[:, :, 2], (0, 2, 1, 3))

    def rh(t):
        t1, t2 = t[..., :D_HEAD // 2], t[..., D_HEAD // 2:]
        return jnp.concatenate([-t2, t1], axis=-1)

    cc = cos[None, None]
    ss = sin[None, None]
    q = q * cc + rh(q) * ss
    k = k * cc + rh(k) * ss

    scores = jnp.einsum("bhqd,bhkd->bhqk", q, k) / math.sqrt(D_HEAD)
    causal = jnp.tril(jnp.ones((S, S), dtype=bool))
    scores = jnp.where(causal[None, None], scores, -jnp.inf)
    pattern = jax.nn.softmax(scores, axis=-1)
    z = jnp.einsum("bhqk,bhkd->bhqd", pattern, v)
    z = jnp.transpose(z, (0, 2, 1, 3)).reshape(B, S, D)
    x1 = x + SCALE * (z @ w_o_t)

    x2n = rms(x1)
    hid = x2n @ w_mlp_t
    mlp = (hid[..., :D_HIDDEN] * hid[..., D_HIDDEN:]) @ w_p_t
    return x1 + mlp


# ----------------------------- main -------------------------------------------
if __name__ == "__main__":
    key = jax.random.PRNGKey(0)
    kx, k1, k2, k3, k4 = jax.random.split(key, 5)

    x = jax.random.normal(kx, (BATCH, SEQ, D_MODEL), dtype=jnp.float32)

    # Deterministic parameter init (nn.Linear weights, passed pre-transposed).
    w_qkv_t = 0.02 * jax.random.normal(k1, (D_MODEL, 3 * D_MODEL), dtype=jnp.float32)
    w_o_t = 0.02 * jax.random.normal(k2, (D_MODEL, D_MODEL), dtype=jnp.float32)
    w_mlp_t = 0.02 * jax.random.normal(k3, (D_MODEL, 2 * D_HIDDEN), dtype=jnp.float32)
    w_p_t = 0.02 * jax.random.normal(k4, (D_HIDDEN, D_MODEL), dtype=jnp.float32)

    # Rotary cos/sin (same as Rotary.forward: emb = cat(freqs, freqs)).
    inv_freq = 1.0 / (10000.0 ** (jnp.arange(0, D_HEAD, 2, dtype=jnp.float32) / D_HEAD))
    t = jnp.arange(SEQ, dtype=jnp.float32)
    freqs = jnp.einsum("i,j->ij", t, inv_freq)            # (S, D_HEAD/2)
    emb = jnp.concatenate([freqs, freqs], axis=-1)        # (S, D_HEAD)
    cos = jnp.cos(emb)
    sin = jnp.sin(emb)

    out = layer_forward(x, w_qkv_t, w_o_t, w_mlp_t, w_p_t, cos, sin)
    out = jax.block_until_ready(out)

    ref = reference_forward(x, w_qkv_t, w_o_t, w_mlp_t, w_p_t, cos, sin)
    assert out.shape == (BATCH, SEQ, D_MODEL)
    # bf16 matmul operands (f32 accumulate) vs f32 reference -> relaxed tolerance.
    assert jnp.allclose(out, ref, atol=2e-2, rtol=2e-2), "mismatch vs reference"

    print("KERNEL_OK")
</pallas_src>

<mosaic_0001>
module attributes {stable_mosaic.version = 11 : i64} {
  func.func @layer_kernel(%arg0: memref<256x128xf32, #tpu.memory_space<vmem>>, %arg1: memref<128x384xbf16, #tpu.memory_space<vmem>>, %arg2: memref<128x128xbf16, #tpu.memory_space<vmem>>, %arg3: memref<128x512xbf16, #tpu.memory_space<vmem>>, %arg4: memref<256x128xbf16, #tpu.memory_space<vmem>>, %arg5: memref<128x128xbf16, #tpu.memory_space<vmem>>, %arg6: memref<256x128xf32, #tpu.memory_space<vmem>>, %arg7: memref<256x128xf32, #tpu.memory_space<vmem>>, %arg8: memref<128x128xf32, #tpu.memory_space<vmem>>, %arg9: memref<256x128xf32, #tpu.memory_space<vmem>>) attributes {dimension_semantics = [], scalar_prefetch = 0 : i64, scratch_operands = 0 : i64, tpu.core_type = #tpu.core_type<tc>} {
    %c0 = arith.constant 0 : index
    %c0_0 = arith.constant 0 : index
    %0 = vector.load %arg0[%c0, %c0_0] : memref<256x128xf32, #tpu.memory_space<vmem>>, vector<256x128xf32>
    %1 = arith.mulf %0, %0 : vector<256x128xf32>
    %cst = arith.constant dense<0.000000e+00> : vector<256xf32>
    %2 = vector.multi_reduction <add>, %1, %cst [1] : vector<256x128xf32> to vector<256xf32>
    %3 = vector.shape_cast %2 : vector<256xf32> to vector<256x1xf32>
    %cst_1 = arith.constant 1.280000e+02 : f32
    %4 = vector.broadcast %cst_1 : f32 to vector<256x1xf32>
    %5 = arith.divf %3, %4 : vector<256x1xf32>
    %cst_2 = arith.constant 9.99999974E-6 : f32
    %6 = vector.broadcast %cst_2 : f32 to vector<256x1xf32>
    %7 = arith.addf %5, %6 : vector<256x1xf32>
    %8 = math.rsqrt %7 : vector<256x1xf32>
    %9 = vector.broadcast %8 : vector<256x1xf32> to vector<256x128xf32>
    %10 = arith.mulf %0, %9 : vector<256x128xf32>
    %11 = arith.truncf %10 : vector<256x128xf32> to vector<256x128xbf16>
    %c0_3 = arith.constant 0 : index
    %c0_4 = arith.constant 0 : index
    %12 = vector.load %arg1[%c0_3, %c0_4] : memref<128x384xbf16, #tpu.memory_space<vmem>>, vector<128x384xbf16>
    %cst_5 = arith.constant dense<0.000000e+00> : vector<256x384xf32>
    %13 = tpu.matmul %11, %12, %cst_5 {dimension_numbers = #tpu.dot_dimension_numbers<[1], [0], [0], [1], [0, 0, 1, 1], [], []>} : vector<256x128xbf16>, vector<128x384xbf16>, vector<256x384xf32> -> vector<256x384xf32>
    %14 = vector.extract_strided_slice %13 {offsets = [0, 0], sizes = [256, 128], strides = [1, 1]} : vector<256x384xf32> to vector<256x128xf32>
    %15 = vector.extract_strided_slice %13 {offsets = [0, 128], sizes = [256, 128], strides = [1, 1]} : vector<256x384xf32> to vector<256x128xf32>
    %16 = vector.extract_strided_slice %13 {offsets = [0, 256], sizes = [256, 128], strides = [1, 1]} : vector<256x384xf32> to vector<256x128xf32>
    %17 = arith.truncf %16 : vector<256x128xf32> to vector<256x128xbf16>
    %c0_6 = arith.constant 0 : index
    %c0_7 = arith.constant 0 : index
    %18 = vector.load %arg6[%c0_6, %c0_7] : memref<256x128xf32, #tpu.memory_space<vmem>>, vector<256x128xf32>
    %c0_8 = arith.constant 0 : index
    %c0_9 = arith.constant 0 : index
    %19 = vector.load %arg7[%c0_8, %c0_9] : memref<256x128xf32, #tpu.memory_space<vmem>>, vector<256x128xf32>
    %c0_10 = arith.constant 0 : index
    %c0_11 = arith.constant 0 : index
    %20 = vector.load %arg5[%c0_10, %c0_11] : memref<128x128xbf16, #tpu.memory_space<vmem>>, vector<128x128xbf16>
    %21 = arith.truncf %14 : vector<256x128xf32> to vector<256x128xbf16>
    %cst_12 = arith.constant dense<0.000000e+00> : vector<256x128xf32>
    %22 = tpu.matmul %21, %20, %cst_12 {dimension_numbers = #tpu.dot_dimension_numbers<[1], [0], [0], [1], [0, 0, 1, 1], [], []>} : vector<256x128xbf16>, vector<128x128xbf16>, vector<256x128xf32> -> vector<256x128xf32>
    %23 = arith.truncf %15 : vector<256x128xf32> to vector<256x128xbf16>
    %cst_13 = arith.constant dense<0.000000e+00> : vector<256x128xf32>
    %24 = tpu.matmul %23, %20, %cst_13 {dimension_numbers = #tpu.dot_dimension_numbers<[1], [0], [0], [1], [0, 0, 1, 1], [], []>} : vector<256x128xbf16>, vector<128x128xbf16>, vector<256x128xf32> -> vector<256x128xf32>
    %25 = arith.mulf %14, %18 : vector<256x128xf32>
    %26 = arith.mulf %22, %19 : vector<256x128xf32>
    %27 = arith.addf %25, %26 : vector<256x128xf32>
    %28 = arith.truncf %27 : vector<256x128xf32> to vector<256x128xbf16>
    %29 = arith.mulf %15, %18 : vector<256x128xf32>
    %30 = arith.mulf %24, %19 : vector<256x128xf32>
    %31 = arith.addf %29, %30 : vector<256x128xf32>
    %32 = arith.truncf %31 : vector<256x128xf32> to vector<256x128xbf16>
    %c0_14 = arith.constant 0 : index
    %c0_15 = arith.constant 0 : index
    %33 = vector.load %arg8[%c0_14, %c0_15] : memref<128x128xf32, #tpu.memory_space<vmem>>, vector<128x128xf32>
    %c0_16 = arith.constant 0 : index
    %c0_17 = arith.constant 0 : index
    %34 = vector.load %arg2[%c0_16, %c0_17] : memref<128x128xbf16, #tpu.memory_space<vmem>>, vector<128x128xbf16>
    %35 = vector.extract_strided_slice %28 {offsets = [0, 0], sizes = [128, 128], strides = [1, 1]} : vector<256x128xbf16> to vector<128x128xbf16>
    %36 = vector.extract_strided_slice %32 {offsets = [0, 0], sizes = [128, 128], strides = [1, 1]} : vector<256x128xbf16> to vector<128x128xbf16>
    %37 = vector.extract_strided_slice %17 {offsets = [0, 0], sizes = [128, 128], strides = [1, 1]} : vector<256x128xbf16> to vector<128x128xbf16>
    %cst_18 = arith.constant 0.000000e+00 : f32
    %38 = vector.broadcast %cst_18 : f32 to vector<128x128xf32>
    %39 = vector.extract_strided_slice %35 {offsets = [0, 0], sizes = [128, 32], strides = [1, 1]} : vector<128x128xbf16> to vector<128x32xbf16>
    %40 = vector.extract_strided_slice %36 {offsets = [0, 0], sizes = [128, 32], strides = [1, 1]} : vector<128x128xbf16> to vector<128x32xbf16>
    %41 = vector.extract_strided_slice %37 {offsets = [0, 0], sizes = [128, 32], strides = [1, 1]} : vector<128x128xbf16> to vector<128x32xbf16>
    %cst_19 = arith.constant dense<0.000000e+00> : vector<128x128xf32>
    %42 = tpu.matmul %39, %40, %cst_19 {dimension_numbers = #tpu.dot_dimension_numbers<[1], [1], [0], [0], [0, 0, 1, 0], [], []>} : vector<128x32xbf16>, vector<128x32xbf16>, vector<128x128xf32> -> vector<128x128xf32>
    %cst_20 = arith.constant 0.176776692 : f32
    %43 = vector.broadcast %cst_20 : f32 to vector<128x128xf32>
    %44 = arith.mulf %42, %43 : vector<128x128xf32>
    %45 = arith.addf %44, %33 : vector<128x128xf32>
    %cst_21 = arith.constant dense<0xFF800000> : vector<128xf32>
    %46 = vector.multi_reduction <maximumf>, %45, %cst_21 [1] : vector<128x128xf32> to vector<128xf32>
    %47 = vector.shape_cast %46 : vector<128xf32> to vector<128x1xf32>
    %48 = vector.broadcast %47 : vector<128x1xf32> to vector<128x128xf32>
    %49 = arith.subf %45, %48 : vector<128x128xf32>
    %50 = math.exp %49 : vector<128x128xf32>
    %cst_22 = arith.constant dense<0.000000e+00> : vector<128xf32>
    %51 = vector.multi_reduction <add>, %50, %cst_22 [1] : vector<128x128xf32> to vector<128xf32>
    %52 = vector.shape_cast %51 : vector<128xf32> to vector<128x1xf32>
    %53 = arith.truncf %50 : vector<128x128xf32> to vector<128x128xbf16>
    %cst_23 = arith.constant dense<0.000000e+00> : vector<128x32xf32>
    %54 = tpu.matmul %53, %41, %cst_23 {dimension_numbers = #tpu.dot_dimension_numbers<[1], [0], [0], [1], [0, 0, 1, 1], [], []>} : vector<128x128xbf16>, vector<128x32xbf16>, vector<128x32xf32> -> vector<128x32xf32>
    %55 = tpu.reciprocal %52 {approx = true} : vector<128x1xf32> -> vector<128x1xf32>
    %56 = vector.broadcast %55 : vector<128x1xf32> to vector<128x32xf32>
    %57 = arith.mulf %54, %56 : vector<128x32xf32>
    %58 = arith.truncf %57 : vector<128x32xf32> to vector<128x32xbf16>
    %59 = vector.extract_strided_slice %34 {offsets = [0, 0], sizes = [32, 128], strides = [1, 1]} : vector<128x128xbf16> to vector<32x128xbf16>
    %cst_24 = arith.constant dense<0.000000e+00> : vector<128x128xf32>
    %60 = tpu.matmul %58, %59, %cst_24 {dimension_numbers = #tpu.dot_dimension_numbers<[1], [0], [0], [1], [0, 0, 1, 1], [], []>} : vector<128x32xbf16>, vector<32x128xbf16>, vector<128x128xf32> -> vector<128x128xf32>
    %61 = arith.addf %38, %60 : vector<128x128xf32>
    %62 = vector.extract_strided_slice %35 {offsets = [0, 32], sizes = [128, 32], strides = [1, 1]} : vector<128x128xbf16> to vector<128x32xbf16>
    %63 = vector.extract_strided_slice %36 {offsets = [0, 32], sizes = [128, 32], strides = [1, 1]} : vector<128x128xbf16> to vector<128x32xbf16>
    %64 = vector.extract_strided_slice %37 {offsets = [0, 32], sizes = [128, 32], strides = [1, 1]} : vector<128x128xbf16> to vector<128x32xbf16>
    %cst_25 = arith.constant dense<0.000000e+00> : vector<128x128xf32>
    %65 = tpu.matmul %62, %63, %cst_25 {dimension_numbers = #tpu.dot_dimension_numbers<[1], [1], [0], [0], [0, 0, 1, 0], [], []>} : vector<128x32xbf16>, vector<128x32xbf16>, vector<128x128xf32> -> vector<128x128xf32>
    %cst_26 = arith.constant 0.176776692 : f32
    %66 = vector.broadcast %cst_26 : f32 to vector<128x128xf32>
    %67 = arith.mulf %65, %66 : vector<128x128xf32>
    %68 = arith.addf %67, %33 : vector<128x128xf32>
    %cst_27 = arith.constant dense<0xFF800000> : vector<128xf32>
    %69 = vector.multi_reduction <maximumf>, %68, %cst_27 [1] : vector<128x128xf32> to vector<128xf32>
    %70 = vector.shape_cast %69 : vector<128xf32> to vector<128x1xf32>
    %71 = vector.broadcast %70 : vector<128x1xf32> to vector<128x128xf32>
    %72 = arith.subf %68, %71 : vector<128x128xf32>
    %73 = math.exp %72 : vector<128x128xf32>
    %cst_28 = arith.constant dense<0.000000e+00> : vector<128xf32>
    %74 = vector.multi_reduction <add>, %73, %cst_28 [1] : vector<128x128xf32> to vector<128xf32>
    %75 = vector.shape_cast %74 : vector<128xf32> to vector<128x1xf32>
    %76 = arith.truncf %73 : vector<128x128xf32> to vector<128x128xbf16>
    %cst_29 = arith.constant dense<0.000000e+00> : vector<128x32xf32>
    %77 = tpu.matmul %76, %64, %cst_29 {dimension_numbers = #tpu.dot_dimension_numbers<[1], [0], [0], [1], [0, 0, 1, 1], [], []>} : vector<128x128xbf16>, vector<128x32xbf16>, vector<128x32xf32> -> vector<128x32xf32>
    %78 = tpu.reciprocal %75 {approx = true} : vector<128x1xf32> -> vector<128x1xf32>
    %79 = vector.broadcast %78 : vector<128x1xf32> to vector<128x32xf32>
    %80 = arith.mulf %77, %79 : vector<128x32xf32>
    %81 = arith.truncf %80 : vector<128x32xf32> to vector<128x32xbf16>
    %82 = vector.extract_strided_slice %34 {offsets = [32, 0], sizes = [32, 128], strides = [1, 1]} : vector<128x128xbf16> to vector<32x128xbf16>
    %cst_30 = arith.constant dense<0.000000e+00> : vector<128x128xf32>
    %83 = tpu.matmul %81, %82, %cst_30 {dimension_numbers = #tpu.dot_dimension_numbers<[1], [0], [0], [1], [0, 0, 1, 1], [], []>} : vector<128x32xbf16>, vector<32x128xbf16>, vector<128x128xf32> -> vector<128x128xf32>
    %84 = arith.addf %61, %83 : vector<128x128xf32>
    %85 = vector.extract_strided_slice %35 {offsets = [0, 64], sizes = [128, 32], strides = [1, 1]} : vector<128x128xbf16> to vector<128x32xbf16>
    %86 = vector.extract_strided_slice %36 {offsets = [0, 64], sizes = [128, 32], strides = [1, 1]} : vector<128x128xbf16> to vector<128x32xbf16>
    %87 = vector.extract_strided_slice %37 {offsets = [0, 64], sizes = [128, 32], strides = [1, 1]} : vector<128x128xbf16> to vector<128x32xbf16>
    %cst_31 = arith.constant dense<0.000000e+00> : vector<128x128xf32>
    %88 = tpu.matmul %85, %86, %cst_31 {dimension_numbers = #tpu.dot_dimension_numbers<[1], [1], [0], [0], [0, 0, 1, 0], [], []>} : vector<128x32xbf16>, vector<128x32xbf16>, vector<128x128xf32> -> vector<128x128xf32>
    %cst_32 = arith.constant 0.176776692 : f32
    %89 = vector.broadcast %cst_32 : f32 to vector<128x128xf32>
    %90 = arith.mulf %88, %89 : vector<128x128xf32>
    %91 = arith.addf %90, %33 : vector<128x128xf32>
    %cst_33 = arith.constant dense<0xFF800000> : vector<128xf32>
    %92 = vector.multi_reduction <maximumf>, %91, %cst_33 [1] : vector<128x128xf32> to vector<128xf32>
    %93 = vector.shape_cast %92 : vector<128xf32> to vector<128x1xf32>
    %94 = vector.broadcast %93 : vector<128x1xf32> to vector<128x128xf32>
    %95 = arith.subf %91, %94 : vector<128x128xf32>
    %96 = math.exp %95 : vector<128x128xf32>
    %cst_34 = arith.constant dense<0.000000e+00> : vector<128xf32>
    %97 = vector.multi_reduction <add>, %96, %cst_34 [1] : vector<128x128xf32> to vector<128xf32>
    %98 = vector.shape_cast %97 : vector<128xf32> to vector<128x1xf32>
    %99 = arith.truncf %96 : vector<128x128xf32> to vector<128x128xbf16>
    %cst_35 = arith.constant dense<0.000000e+00> : vector<128x32xf32>
    %100 = tpu.matmul %99, %87, %cst_35 {dimension_numbers = #tpu.dot_dimension_numbers<[1], [0], [0], [1], [0, 0, 1, 1], [], []>} : vector<128x128xbf16>, vector<128x32xbf16>, vector<128x32xf32> -> vector<128x32xf32>
    %101 = tpu.reciprocal %98 {approx = true} : vector<128x1xf32> -> vector<128x1xf32>
    %102 = vector.broadcast %101 : vector<128x1xf32> to vector<128x32xf32>
    %103 = arith.mulf %100, %102 : vector<128x32xf32>
    %104 = arith.truncf %103 : vector<128x32xf32> to vector<128x32xbf16>
    %105 = vector.extract_strided_slice %34 {offsets = [64, 0], sizes = [32, 128], strides = [1, 1]} : vector<128x128xbf16> to vector<32x128xbf16>
    %cst_36 = arith.constant dense<0.000000e+00> : vector<128x128xf32>
    %106 = tpu.matmul %104, %105, %cst_36 {dimension_numbers = #tpu.dot_dimension_numbers<[1], [0], [0], [1], [0, 0, 1, 1], [], []>} : vector<128x32xbf16>, vector<32x128xbf16>, vector<128x128xf32> -> vector<128x128xf32>
    %107 = arith.addf %84, %106 : vector<128x128xf32>
    %108 = vector.extract_strided_slice %35 {offsets = [0, 96], sizes = [128, 32], strides = [1, 1]} : vector<128x128xbf16> to vector<128x32xbf16>
    %109 = vector.extract_strided_slice %36 {offsets = [0, 96], sizes = [128, 32], strides = [1, 1]} : vector<128x128xbf16> to vector<128x32xbf16>
    %110 = vector.extract_strided_slice %37 {offsets = [0, 96], sizes = [128, 32], strides = [1, 1]} : vector<128x128xbf16> to vector<128x32xbf16>
    %cst_37 = arith.constant dense<0.000000e+00> : vector<128x128xf32>
    %111 = tpu.matmul %108, %109, %cst_37 {dimension_numbers = #tpu.dot_dimension_numbers<[1], [1], [0], [0], [0, 0, 1, 0], [], []>} : vector<128x32xbf16>, vector<128x32xbf16>, vector<128x128xf32> -> vector<128x128xf32>
    %cst_38 = arith.constant 0.176776692 : f32
    %112 = vector.broadcast %cst_38 : f32 to vector<128x128xf32>
    %113 = arith.mulf %111, %112 : vector<128x128xf32>
    %114 = arith.addf %113, %33 : vector<128x128xf32>
    %cst_39 = arith.constant dense<0xFF800000> : vector<128xf32>
    %115 = vector.multi_reduction <maximumf>, %114, %cst_39 [1] : vector<128x128xf32> to vector<128xf32>
    %116 = vector.shape_cast %115 : vector<128xf32> to vector<128x1xf32>
    %117 = vector.broadcast %116 : vector<128x1xf32> to vector<128x128xf32>
    %118 = arith.subf %114, %117 : vector<128x128xf32>
    %119 = math.exp %118 : vector<128x128xf32>
    %cst_40 = arith.constant dense<0.000000e+00> : vector<128xf32>
    %120 = vector.multi_reduction <add>, %119, %cst_40 [1] : vector<128x128xf32> to vector<128xf32>
    %121 = vector.shape_cast %120 : vector<128xf32> to vector<128x1xf32>
    %122 = arith.truncf %119 : vector<128x128xf32> to vector<128x128xbf16>
    %cst_41 = arith.constant dense<0.000000e+00> : vector<128x32xf32>
    %123 = tpu.matmul %122, %110, %cst_41 {dimension_numbers = #tpu.dot_dimension_numbers<[1], [0], [0], [1], [0, 0, 1, 1], [], []>} : vector<128x128xbf16>, vector<128x32xbf16>, vector<128x32xf32> -> vector<128x32xf32>
    %124 = tpu.reciprocal %121 {approx = true} : vector<128x1xf32> -> vector<128x1xf32>
    %125 = vector.broadcast %124 : vector<128x1xf32> to vector<128x32xf32>
    %126 = arith.mulf %123, %125 : vector<128x32xf32>
    %127 = arith.truncf %126 : vector<128x32xf32> to vector<128x32xbf16>
    %128 = vector.extract_strided_slice %34 {offsets = [96, 0], sizes = [32, 128], strides = [1, 1]} : vector<128x128xbf16> to vector<32x128xbf16>
    %cst_42 = arith.constant dense<0.000000e+00> : vector<128x128xf32>
    %129 = tpu.matmul %127, %128, %cst_42 {dimension_numbers = #tpu.dot_dimension_numbers<[1], [0], [0], [1], [0, 0, 1, 1], [], []>} : vector<128x32xbf16>, vector<32x128xbf16>, vector<128x128xf32> -> vector<128x128xf32>
    %130 = arith.addf %107, %129 : vector<128x128xf32>
    %131 = vector.extract_strided_slice %28 {offsets = [128, 0], sizes = [128, 128], strides = [1, 1]} : vector<256x128xbf16> to vector<128x128xbf16>
    %132 = vector.extract_strided_slice %32 {offsets = [128, 0], sizes = [128, 128], strides = [1, 1]} : vector<256x128xbf16> to vector<128x128xbf16>
    %133 = vector.extract_strided_slice %17 {offsets = [128, 0], sizes = [128, 128], strides = [1, 1]} : vector<256x128xbf16> to vector<128x128xbf16>
    %cst_43 = arith.constant 0.000000e+00 : f32
    %134 = vector.broadcast %cst_43 : f32 to vector<128x128xf32>
    %135 = vector.extract_strided_slice %131 {offsets = [0, 0], sizes = [128, 32], strides = [1, 1]} : vector<128x128xbf16> to vector<128x32xbf16>
    %136 = vector.extract_strided_slice %132 {offsets = [0, 0], sizes = [128, 32], strides = [1, 1]} : vector<128x128xbf16> to vector<128x32xbf16>
    %137 = vector.extract_strided_slice %133 {offsets = [0, 0], sizes = [128, 32], strides = [1, 1]} : vector<128x128xbf16> to vector<128x32xbf16>
    %cst_44 = arith.constant dense<0.000000e+00> : vector<128x128xf32>
    %138 = tpu.matmul %135, %136, %cst_44 {dimension_numbers = #tpu.dot_dimension_numbers<[1], [1], [0], [0], [0, 0, 1, 0], [], []>} : vector<128x32xbf16>, vector<128x32xbf16>, vector<128x128xf32> -> vector<128x128xf32>
    %cst_45 = arith.constant 0.176776692 : f32
    %139 = vector.broadcast %cst_45 : f32 to vector<128x128xf32>
    %140 = arith.mulf %138, %139 : vector<128x128xf32>
    %141 = arith.addf %140, %33 : vector<128x128xf32>
    %cst_46 = arith.constant dense<0xFF800000> : vector<128xf32>
    %142 = vector.multi_reduction <maximumf>, %141, %cst_46 [1] : vector<128x128xf32> to vector<128xf32>
    %143 = vector.shape_cast %142 : vector<128xf32> to vector<128x1xf32>
    %144 = vector.broadcast %143 : vector<128x1xf32> to vector<128x128xf32>
    %145 = arith.subf %141, %144 : vector<128x128xf32>
    %146 = math.exp %145 : vector<128x128xf32>
    %cst_47 = arith.constant dense<0.000000e+00> : vector<128xf32>
    %147 = vector.multi_reduction <add>, %146, %cst_47 [1] : vector<128x128xf32> to vector<128xf32>
    %148 = vector.shape_cast %147 : vector<128xf32> to vector<128x1xf32>
    %149 = arith.truncf %146 : vector<128x128xf32> to vector<128x128xbf16>
    %cst_48 = arith.constant dense<0.000000e+00> : vector<128x32xf32>
    %150 = tpu.matmul %149, %137, %cst_48 {dimension_numbers = #tpu.dot_dimension_numbers<[1], [0], [0], [1], [0, 0, 1, 1], [], []>} : vector<128x128xbf16>, vector<128x32xbf16>, vector<128x32xf32> -> vector<128x32xf32>
    %151 = tpu.reciprocal %148 {approx = true} : vector<128x1xf32> -> vector<128x1xf32>
    %152 = vector.broadcast %151 : vector<128x1xf32> to vector<128x32xf32>
    %153 = arith.mulf %150, %152 : vector<128x32xf32>
    %154 = arith.truncf %153 : vector<128x32xf32> to vector<128x32xbf16>
    %155 = vector.extract_strided_slice %34 {offsets = [0, 0], sizes = [32, 128], strides = [1, 1]} : vector<128x128xbf16> to vector<32x128xbf16>
    %cst_49 = arith.constant dense<0.000000e+00> : vector<128x128xf32>
    %156 = tpu.matmul %154, %155, %cst_49 {dimension_numbers = #tpu.dot_dimension_numbers<[1], [0], [0], [1], [0, 0, 1, 1], [], []>} : vector<128x32xbf16>, vector<32x128xbf16>, vector<128x128xf32> -> vector<128x128xf32>
    %157 = arith.addf %134, %156 : vector<128x128xf32>
    %158 = vector.extract_strided_slice %131 {offsets = [0, 32], sizes = [128, 32], strides = [1, 1]} : vector<128x128xbf16> to vector<128x32xbf16>
    %159 = vector.extract_strided_slice %132 {offsets = [0, 32], sizes = [128, 32], strides = [1, 1]} : vector<128x128xbf16> to vector<128x32xbf16>
    %160 = vector.extract_strided_slice %133 {offsets = [0, 32], sizes = [128, 32], strides = [1, 1]} : vector<128x128xbf16> to vector<128x32xbf16>
    %cst_50 = arith.constant dense<0.000000e+00> : vector<128x128xf32>
    %161 = tpu.matmul %158, %159, %cst_50 {dimension_numbers = #tpu.dot_dimension_numbers<[1], [1], [0], [0], [0, 0, 1, 0], [], []>} : vector<128x32xbf16>, vector<128x32xbf16>, vector<128x128xf32> -> vector<128x128xf32>
    %cst_51 = arith.constant 0.176776692 : f32
    %162 = vector.broadcast %cst_51 : f32 to vector<128x128xf32>
    %163 = arith.mulf %161, %162 : vector<128x128xf32>
    %164 = arith.addf %163, %33 : vector<128x128xf32>
    %cst_52 = arith.constant dense<0xFF800000> : vector<128xf32>
    %165 = vector.multi_reduction <maximumf>, %164, %cst_52 [1] : vector<128x128xf32> to vector<128xf32>
    %166 = vector.shape_cast %165 : vector<128xf32> to vector<128x1xf32>
    %167 = vector.broadcast %166 : vector<128x1xf32> to vector<128x128xf32>
    %168 = arith.subf %164, %167 : vector<128x128xf32>
    %169 = math.exp %168 : vector<128x128xf32>
    %cst_53 = arith.constant dense<0.000000e+00> : vector<128xf32>
    %170 = vector.multi_reduction <add>, %169, %cst_53 [1] : vector<128x128xf32> to vector<128xf32>
    %171 = vector.shape_cast %170 : vector<128xf32> to vector<128x1xf32>
    %172 = arith.truncf %169 : vector<128x128xf32> to vector<128x128xbf16>
    %cst_54 = arith.constant dense<0.000000e+00> : vector<128x32xf32>
    %173 = tpu.matmul %172, %160, %cst_54 {dimension_numbers = #tpu.dot_dimension_numbers<[1], [0], [0], [1], [0, 0, 1, 1], [], []>} : vector<128x128xbf16>, vector<128x32xbf16>, vector<128x32xf32> -> vector<128x32xf32>
    %174 = tpu.reciprocal %171 {approx = true} : vector<128x1xf32> -> vector<128x1xf32>
    %175 = vector.broadcast %174 : vector<128x1xf32> to vector<128x32xf32>
    %176 = arith.mulf %173, %175 : vector<128x32xf32>
    %177 = arith.truncf %176 : vector<128x32xf32> to vector<128x32xbf16>
    %178 = vector.extract_strided_slice %34 {offsets = [32, 0], sizes = [32, 128], strides = [1, 1]} : vector<128x128xbf16> to vector<32x128xbf16>
    %cst_55 = arith.constant dense<0.000000e+00> : vector<128x128xf32>
    %179 = tpu.matmul %177, %178, %cst_55 {dimension_numbers = #tpu.dot_dimension_numbers<[1], [0], [0], [1], [0, 0, 1, 1], [], []>} : vector<128x32xbf16>, vector<32x128xbf16>, vector<128x128xf32> -> vector<128x128xf32>
    %180 = arith.addf %157, %179 : vector<128x128xf32>
    %181 = vector.extract_strided_slice %131 {offsets = [0, 64], sizes = [128, 32], strides = [1, 1]} : vector<128x128xbf16> to vector<128x32xbf16>
    %182 = vector.extract_strided_slice %132 {offsets = [0, 64], sizes = [128, 32], strides = [1, 1]} : vector<128x128xbf16> to vector<128x32xbf16>
    %183 = vector.extract_strided_slice %133 {offsets = [0, 64], sizes = [128, 32], strides = [1, 1]} : vector<128x128xbf16> to vector<128x32xbf16>
    %cst_56 = arith.constant dense<0.000000e+00> : vector<128x128xf32>
    %184 = tpu.matmul %181, %182, %cst_56 {dimension_numbers = #tpu.dot_dimension_numbers<[1], [1], [0], [0], [0, 0, 1, 0], [], []>} : vector<128x32xbf16>, vector<128x32xbf16>, vector<128x128xf32> -> vector<128x128xf32>
    %cst_57 = arith.constant 0.176776692 : f32
    %185 = vector.broadcast %cst_57 : f32 to vector<128x128xf32>
    %186 = arith.mulf %184, %185 : vector<128x128xf32>
    %187 = arith.addf %186, %33 : vector<128x128xf32>
    %cst_58 = arith.constant dense<0xFF800000> : vector<128xf32>
    %188 = vector.multi_reduction <maximumf>, %187, %cst_58 [1] : vector<128x128xf32> to vector<128xf32>
    %189 = vector.shape_cast %188 : vector<128xf32> to vector<128x1xf32>
    %190 = vector.broadcast %189 : vector<128x1xf32> to vector<128x128xf32>
    %191 = arith.subf %187, %190 : vector<128x128xf32>
    %192 = math.exp %191 : vector<128x128xf32>
    %cst_59 = arith.constant dense<0.000000e+00> : vector<128xf32>
    %193 = vector.multi_reduction <add>, %192, %cst_59 [1] : vector<128x128xf32> to vector<128xf32>
    %194 = vector.shape_cast %193 : vector<128xf32> to vector<128x1xf32>
    %195 = arith.truncf %192 : vector<128x128xf32> to vector<128x128xbf16>
    %cst_60 = arith.constant dense<0.000000e+00> : vector<128x32xf32>
    %196 = tpu.matmul %195, %183, %cst_60 {dimension_numbers = #tpu.dot_dimension_numbers<[1], [0], [0], [1], [0, 0, 1, 1], [], []>} : vector<128x128xbf16>, vector<128x32xbf16>, vector<128x32xf32> -> vector<128x32xf32>
    %197 = tpu.reciprocal %194 {approx = true} : vector<128x1xf32> -> vector<128x1xf32>
    %198 = vector.broadcast %197 : vector<128x1xf32> to vector<128x32xf32>
    %199 = arith.mulf %196, %198 : vector<128x32xf32>
    %200 = arith.truncf %199 : vector<128x32xf32> to vector<128x32xbf16>
    %201 = vector.extract_strided_slice %34 {offsets = [64, 0], sizes = [32, 128], strides = [1, 1]} : vector<128x128xbf16> to vector<32x128xbf16>
    %cst_61 = arith.constant dense<0.000000e+00> : vector<128x128xf32>
    %202 = tpu.matmul %200, %201, %cst_61 {dimension_numbers = #tpu.dot_dimension_numbers<[1], [0], [0], [1], [0, 0, 1, 1], [], []>} : vector<128x32xbf16>, vector<32x128xbf16>, vector<128x128xf32> -> vector<128x128xf32>
    %203 = arith.addf %180, %202 : vector<128x128xf32>
    %204 = vector.extract_strided_slice %131 {offsets = [0, 96], sizes = [128, 32], strides = [1, 1]} : vector<128x128xbf16> to vector<128x32xbf16>
    %205 = vector.extract_strided_slice %132 {offsets = [0, 96], sizes = [128, 32], strides = [1, 1]} : vector<128x128xbf16> to vector<128x32xbf16>
    %206 = vector.extract_strided_slice %133 {offsets = [0, 96], sizes = [128, 32], strides = [1, 1]} : vector<128x128xbf16> to vector<128x32xbf16>
    %cst_62 = arith.constant dense<0.000000e+00> : vector<128x128xf32>
    %207 = tpu.matmul %204, %205, %cst_62 {dimension_numbers = #tpu.dot_dimension_numbers<[1], [1], [0], [0], [0, 0, 1, 0], [], []>} : vector<128x32xbf16>, vector<128x32xbf16>, vector<128x128xf32> -> vector<128x128xf32>
    %cst_63 = arith.constant 0.176776692 : f32
    %208 = vector.broadcast %cst_63 : f32 to vector<128x128xf32>
    %209 = arith.mulf %207, %208 : vector<128x128xf32>
    %210 = arith.addf %209, %33 : vector<128x128xf32>
    %cst_64 = arith.constant dense<0xFF800000> : vector<128xf32>
    %211 = vector.multi_reduction <maximumf>, %210, %cst_64 [1] : vector<128x128xf32> to vector<128xf32>
    %212 = vector.shape_cast %211 : vector<128xf32> to vector<128x1xf32>
    %213 = vector.broadcast %212 : vector<128x1xf32> to vector<128x128xf32>
    %214 = arith.subf %210, %213 : vector<128x128xf32>
    %215 = math.exp %214 : vector<128x128xf32>
    %cst_65 = arith.constant dense<0.000000e+00> : vector<128xf32>
    %216 = vector.multi_reduction <add>, %215, %cst_65 [1] : vector<128x128xf32> to vector<128xf32>
    %217 = vector.shape_cast %216 : vector<128xf32> to vector<128x1xf32>
    %218 = arith.truncf %215 : vector<128x128xf32> to vector<128x128xbf16>
    %cst_66 = arith.constant dense<0.000000e+00> : vector<128x32xf32>
    %219 = tpu.matmul %218, %206, %cst_66 {dimension_numbers = #tpu.dot_dimension_numbers<[1], [0], [0], [1], [0, 0, 1, 1], [], []>} : vector<128x128xbf16>, vector<128x32xbf16>, vector<128x32xf32> -> vector<128x32xf32>
    %220 = tpu.reciprocal %217 {approx = true} : vector<128x1xf32> -> vector<128x1xf32>
    %221 = vector.broadcast %220 : vector<128x1xf32> to vector<128x32xf32>
    %222 = arith.mulf %219, %221 : vector<128x32xf32>
    %223 = arith.truncf %222 : vector<128x32xf32> to vector<128x32xbf16>
    %224 = vector.extract_strided_slice %34 {offsets = [96, 0], sizes = [32, 128], strides = [1, 1]} : vector<128x128xbf16> to vector<32x128xbf16>
    %cst_67 = arith.constant dense<0.000000e+00> : vector<128x128xf32>
    %225 = tpu.matmul %223, %224, %cst_67 {dimension_numbers = #tpu.dot_dimension_numbers<[1], [0], [0], [1], [0, 0, 1, 1], [], []>} : vector<128x32xbf16>, vector<32x128xbf16>, vector<128x128xf32> -> vector<128x128xf32>
    %226 = arith.addf %203, %225 : vector<128x128xf32>
    %227 = tpu.concatenate %130, %226 in 0 : vector<128x128xf32>, vector<128x128xf32> -> vector<256x128xf32>
    %cst_68 = arith.constant 0.353553385 : f32
    %228 = vector.broadcast %cst_68 : f32 to vector<256x128xf32>
    %229 = arith.mulf %228, %227 : vector<256x128xf32>
    %230 = arith.addf %0, %229 : vector<256x128xf32>
    %231 = arith.mulf %230, %230 : vector<256x128xf32>
    %cst_69 = arith.constant dense<0.000000e+00> : vector<256xf32>
    %232 = vector.multi_reduction <add>, %231, %cst_69 [1] : vector<256x128xf32> to vector<256xf32>
    %233 = vector.shape_cast %232 : vector<256xf32> to vector<256x1xf32>
    %cst_70 = arith.constant 1.280000e+02 : f32
    %234 = vector.broadcast %cst_70 : f32 to vector<256x1xf32>
    %235 = arith.divf %233, %234 : vector<256x1xf32>
    %cst_71 = arith.constant 9.99999974E-6 : f32
    %236 = vector.broadcast %cst_71 : f32 to vector<256x1xf32>
    %237 = arith.addf %235, %236 : vector<256x1xf32>
    %238 = math.rsqrt %237 : vector<256x1xf32>
    %239 = vector.broadcast %238 : vector<256x1xf32> to vector<256x128xf32>
    %240 = arith.mulf %230, %239 : vector<256x128xf32>
    %241 = arith.truncf %240 : vector<256x128xf32> to vector<256x128xbf16>
    %c0_72 = arith.constant 0 : index
    %c0_73 = arith.constant 0 : index
    %242 = vector.load %arg3[%c0_72, %c0_73] : memref<128x512xbf16, #tpu.memory_space<vmem>>, vector<128x512xbf16>
    %cst_74 = arith.constant dense<0.000000e+00> : vector<256x512xf32>
    %243 = tpu.matmul %241, %242, %cst_74 {dimension_numbers = #tpu.dot_dimension_numbers<[1], [0], [0], [1], [0, 0, 1, 1], [], []>} : vector<256x128xbf16>, vector<128x512xbf16>, vector<256x512xf32> -> vector<256x512xf32>
    %244 = vector.extract_strided_slice %243 {offsets = [0, 0], sizes = [256, 256], strides = [1, 1]} : vector<256x512xf32> to vector<256x256xf32>
    %245 = vector.extract_strided_slice %243 {offsets = [0, 256], sizes = [256, 256], strides = [1, 1]} : vector<256x512xf32> to vector<256x256xf32>
    %246 = arith.mulf %244, %245 : vector<256x256xf32>
    %247 = arith.truncf %246 : vector<256x256xf32> to vector<256x256xbf16>
    %c0_75 = arith.constant 0 : index
    %c0_76 = arith.constant 0 : index
    %248 = vector.load %arg4[%c0_75, %c0_76] : memref<256x128xbf16, #tpu.memory_space<vmem>>, vector<256x128xbf16>
    %cst_77 = arith.constant dense<0.000000e+00> : vector<256x128xf32>
    %249 = tpu.matmul %247, %248, %cst_77 {dimension_numbers = #tpu.dot_dimension_numbers<[1], [0], [0], [1], [0, 0, 1, 1], [], []>} : vector<256x256xbf16>, vector<256x128xbf16>, vector<256x128xf32> -> vector<256x128xf32>
    %250 = arith.addf %230, %249 : vector<256x128xf32>
    %c0_78 = arith.constant 0 : index
    %c0_79 = arith.constant 0 : index
    %251 = vector.load %arg9[%c0_78, %c0_79] : memref<256x128xf32, #tpu.memory_space<vmem>>, vector<256x128xf32>
    tpu.vector_store %arg9[%c0_78, %c0_79], %250 {strides = array<i32>} : memref<256x128xf32, #tpu.memory_space<vmem>>, vector<256x128xf32>,
    return
  }
}

</mosaic_0001>

<llo_original>
// kernel: layer_forward.1
$region0: #{layer_forward.1}
  #allocation0 [shape = 'u32[]', space=smem, size = 0x4, offset = 0x4, fixed_abs, tag = 'smem constant byte address 0x4 - core index']
  #allocation1 [shape = 'u32[144,128]{1,0:T(1,128)}', space=vmem, size = 0x12000, scoped, tag = 'internal scratch']
  %s0 = inlined_call_operand.vmem [shape: f32[256,128], index: 0, kind: input, shape index: {}]
  %s1 = inlined_call_operand.vmem [shape: bf16[128,384], index: 1, kind: input, shape index: {}]
  %s2 = inlined_call_operand.vmem [shape: bf16[128,128], index: 2, kind: input, shape index: {}]
  %s3 = inlined_call_operand.vmem [shape: bf16[128,512], index: 3, kind: input, shape index: {}]
  %s4 = inlined_call_operand.vmem [shape: bf16[256,128], index: 4, kind: input, shape index: {}]
  %s5 = inlined_call_operand.vmem [shape: bf16[128,128], index: 5, kind: input, shape index: {}]
  %s6 = inlined_call_operand.vmem [shape: f32[256,128], index: 6, kind: input, shape index: {}]
  %s7 = inlined_call_operand.vmem [shape: f32[256,128], index: 7, kind: input, shape index: {}]
  %s8 = inlined_call_operand.vmem [shape: f32[128,128], index: 8, kind: input, shape index: {}]
  %s9 = inlined_call_operand.hbm [shape: f32[256,128], index: 9, kind: output, shape index: {}]
  %s10 = sld [smem:[#allocation0]]
  $region46: #{layer_forward.1} parent=0
    _
  %s12 = ssub.s32 1, %s10
  %s13 = scalar_select 0, %s12, %s10
  $region1: #{layer_forward.1} parent=0
    #allocation2 [shape = 'u8[131072]{0}', space=vmem, size = 0x20000, scoped, tag = 'output window, operand 0, single buffered']
    #allocation3 [shape = 's32[1]{0}', space=sflag, size = 0x4, scoped, tag = 'scoped memory for layer_forward.1']
    %14 = vsyncpa [#allocation3], 0
    // Predicated region
    $region2: #{layer_forward.1} parent=1 // pred_check
      _
    $region3: #{layer_forward.1} parent=1 // pred_check_branch
      %16 = sbr.rel (0) target = $region5
    $region4: #{layer_forward.1} parent=1 // pred_region
      _
    $region5: #{layer_forward.1} parent=1 // pred_fallthru
      _
    // Predicated region
    $region6: #{layer_forward.1} parent=1 // pred_check
      _
    $region7: #{layer_forward.1} parent=1 // pred_check_branch
      %18 = sbr.rel (0) target = $region9
    $region8: #{layer_forward.1} parent=1 // pred_region
      _
    $region9: #{layer_forward.1} parent=1 // pred_fallthru
      _
    // Predicated region
    $region10: #{layer_forward.1} parent=1 // pred_check
      _
    $region11: #{layer_forward.1} parent=1 // pred_check_branch
      %20 = sbr.rel (0) target = $region13
    $region12: #{layer_forward.1} parent=1 // pred_region
      _
    $region13: #{layer_forward.1} parent=1 // pred_fallthru
      _
    // Predicated region
    $region14: #{layer_forward.1} parent=1 // pred_check
      _
    $region15: #{layer_forward.1} parent=1 // pred_check_branch
      %22 = sbr.rel (0) target = $region17
    $region16: #{layer_forward.1} parent=1 // pred_region
      _
    $region17: #{layer_forward.1} parent=1 // pred_fallthru
      _
    // Predicated region
    $region18: #{layer_forward.1} parent=1 // pred_check
      _
    $region19: #{layer_forward.1} parent=1 // pred_check_branch
      %24 = sbr.rel (0) target = $region21
    $region20: #{layer_forward.1} parent=1 // pred_region
      _
    $region21: #{layer_forward.1} parent=1 // pred_fallthru
      _
    // Predicated region
    $region22: #{layer_forward.1} parent=1 // pred_check
      _
    $region23: #{layer_forward.1} parent=1 // pred_check_branch
      %26 = sbr.rel (0) target = $region25
    $region24: #{layer_forward.1} parent=1 // pred_region
      _
    $region25: #{layer_forward.1} parent=1 // pred_fallthru
      _
    // Predicated region
    $region26: #{layer_forward.1} parent=1 // pred_check
      _
    $region27: #{layer_forward.1} parent=1 // pred_check_branch
      %28 = sbr.rel (0) target = $region29
    $region28: #{layer_forward.1} parent=1 // pred_region
      _
    $region29: #{layer_forward.1} parent=1 // pred_fallthru
      _
    // Predicated region
    $region30: #{layer_forward.1} parent=1 // pred_check
      _
    $region31: #{layer_forward.1} parent=1 // pred_check_branch
      %30 = sbr.rel (0) target = $region33
    $region32: #{layer_forward.1} parent=1 // pred_region
      _
    $region33: #{layer_forward.1} parent=1 // pred_fallthru
      _
    // Predicated region
    $region34: #{layer_forward.1} parent=1 // pred_check
      _
    $region35: #{layer_forward.1} parent=1 // pred_check_branch
      %32 = sbr.rel (0) target = $region37
    $region36: #{layer_forward.1} parent=1 // pred_region
      _
    $region37: #{layer_forward.1} parent=1 // pred_fallthru
      _
    %v34 = vld [vmem:[%s0] sm:$0xff]
    %v35 = vld [vmem:[%s0 + $0x8] sm:$0xff]
    %v36 = vld [vmem:[%s0 + $0x10] sm:$0xff]
    %v37 = vld [vmem:[%s0 + $0x18] sm:$0xff]
    %v38 = vld [vmem:[%s0 + $0x20] sm:$0xff]
    %v39 = vld [vmem:[%s0 + $0x28] sm:$0xff]
    %v40 = vld [vmem:[%s0 + $0x30] sm:$0xff]
    %v41 = vld [vmem:[%s0 + $0x38] sm:$0xff]
    %v42 = vld [vmem:[%s0 + $0x40] sm:$0xff]
    %v43 = vld [vmem:[%s0 + $0x48] sm:$0xff]
    %v44 = vld [vmem:[%s0 + $0x50] sm:$0xff]
    %v45 = vld [vmem:[%s0 + $0x58] sm:$0xff]
    %v46 = vld [vmem:[%s0 + $0x60] sm:$0xff]
    %v47 = vld [vmem:[%s0 + $0x68] sm:$0xff]
    %v48 = vld [vmem:[%s0 + $0x70] sm:$0xff]
    %v49 = vld [vmem:[%s0 + $0x78] sm:$0xff]
    %v50 = vld [vmem:[%s0 + $0x80] sm:$0xff]
    %v51 = vld [vmem:[%s0 + $0x88] sm:$0xff]
    %v52 = vld [vmem:[%s0 + $0x90] sm:$0xff]
    %v53 = vld [vmem:[%s0 + $0x98] sm:$0xff]
    %v54 = vld [vmem:[%s0 + $0xa0] sm:$0xff]
    %v55 = vld [vmem:[%s0 + $0xa8] sm:$0xff]
    %v56 = vld [vmem:[%s0 + $0xb0] sm:$0xff]
    %v57 = vld [vmem:[%s0 + $0xb8] sm:$0xff]
    %v58 = vld [vmem:[%s0 + $0xc0] sm:$0xff]
    %v59 = vld [vmem:[%s0 + $0xc8] sm:$0xff]
    %v60 = vld [vmem:[%s0 + $0xd0] sm:$0xff]
    %v61 = vld [vmem:[%s0 + $0xd8] sm:$0xff]
    %v62 = vld [vmem:[%s0 + $0xe0] sm:$0xff]
    %v63 = vld [vmem:[%s0 + $0xe8] sm:$0xff]
    %v64 = vld [vmem:[%s0 + $0xf0] sm:$0xff]
    %v65 = vld [vmem:[%s0 + $0xf8] sm:$0xff]
    %v66 = vmul.f32 %v34, %v34
    %v67 = vmul.f32 %v35, %v35
    %v68 = vmul.f32 %v36, %v36
    %v69 = vmul.f32 %v37, %v37
    %v70 = vmul.f32 %v38, %v38
    %v71 = vmul.f32 %v39, %v39
    %v72 = vmul.f32 %v40, %v40
    %v73 = vmul.f32 %v41, %v41
    %v74 = vmul.f32 %v42, %v42
    %v75 = vmul.f32 %v43, %v43
    %v76 = vmul.f32 %v44, %v44
    %v77 = vmul.f32 %v45, %v45
    %v78 = vmul.f32 %v46, %v46
    %v79 = vmul.f32 %v47, %v47
    %v80 = vmul.f32 %v48, %v48
    %v81 = vmul.f32 %v49, %v49
    %v82 = vmul.f32 %v50, %v50
    %v83 = vmul.f32 %v51, %v51
    %v84 = vmul.f32 %v52, %v52
    %v85 = vmul.f32 %v53, %v53
    %v86 = vmul.f32 %v54, %v54
    %v87 = vmul.f32 %v55, %v55
    %v88 = vmul.f32 %v56, %v56
    %v89 = vmul.f32 %v57, %v57
    %v90 = vmul.f32 %v58, %v58
    %v91 = vmul.f32 %v59, %v59
    %v92 = vmul.f32 %v60, %v60
    %v93 = vmul.f32 %v61, %v61
    %v94 = vmul.f32 %v62, %v62
    %v95 = vmul.f32 %v63, %v63
    %v96 = vmul.f32 %v64, %v64
    %v97 = vmul.f32 %v65, %v65
    %98 = vadd.xlane.f32.xlu0 %v66
    %v99 = vpop.xlane.xlu0 %98
    %100 = vadd.xlane.f32.xlu0 %v67
    %v101 = vpop.xlane.xlu0 %100
    %102 = vadd.xlane.f32.xlu0 %v68
    %v103 = vpop.xlane.xlu0 %102
    %104 = vadd.xlane.f32.xlu0 %v69
    %v105 = vpop.xlane.xlu0 %104
    %106 = vadd.xlane.f32.xlu0 %v70
    %v107 = vpop.xlane.xlu0 %106
    %108 = vadd.xlane.f32.xlu0 %v71
    %v109 = vpop.xlane.xlu0 %108
    %110 = vadd.xlane.f32.xlu0 %v72
    %v111 = vpop.xlane.xlu0 %110
    %112 = vadd.xlane.f32.xlu0 %v73
    %v113 = vpop.xlane.xlu0 %112
    %114 = vadd.xlane.f32.xlu0 %v74
    %v115 = vpop.xlane.xlu0 %114
    %116 = vadd.xlane.f32.xlu0 %v75
    %v117 = vpop.xlane.xlu0 %116
    %118 = vadd.xlane.f32.xlu0 %v76
    %v119 = vpop.xlane.xlu0 %118
    %120 = vadd.xlane.f32.xlu0 %v77
    %v121 = vpop.xlane.xlu0 %120
    %122 = vadd.xlane.f32.xlu0 %v78
    %v123 = vpop.xlane.xlu0 %122
    %124 = vadd.xlane.f32.xlu0 %v79
    %v125 = vpop.xlane.xlu0 %124
    %126 = vadd.xlane.f32.xlu0 %v80
    %v127 = vpop.xlane.xlu0 %126
    %128 = vadd.xlane.f32.xlu0 %v81
    %v129 = vpop.xlane.xlu0 %128
    %130 = vadd.xlane.f32.xlu0 %v82
    %v131 = vpop.xlane.xlu0 %130
    %132 = vadd.xlane.f32.xlu0 %v83
    %v133 = vpop.xlane.xlu0 %132
    %134 = vadd.xlane.f32.xlu0 %v84
    %v135 = vpop.xlane.xlu0 %134
    %136 = vadd.xlane.f32.xlu0 %v85
    %v137 = vpop.xlane.xlu0 %136
    %138 = vadd.xlane.f32.xlu0 %v86
    %v139 = vpop.xlane.xlu0 %138
    %140 = vadd.xlane.f32.xlu0 %v87
    %v141 = vpop.xlane.xlu0 %140
    %142 = vadd.xlane.f32.xlu0 %v88
    %v143 = vpop.xlane.xlu0 %142
    %144 = vadd.xlane.f32.xlu0 %v89
    %v145 = vpop.xlane.xlu0 %144
    %146 = vadd.xlane.f32.xlu0 %v90
    %v147 = vpop.xlane.xlu0 %146
    %148 = vadd.xlane.f32.xlu0 %v91
    %v149 = vpop.xlane.xlu0 %148
    %150 = vadd.xlane.f32.xlu0 %v92
    %v151 = vpop.xlane.xlu0 %150
    %152 = vadd.xlane.f32.xlu0 %v93
    %v153 = vpop.xlane.xlu0 %152
    %154 = vadd.xlane.f32.xlu0 %v94
    %v155 = vpop.xlane.xlu0 %154
    %156 = vadd.xlane.f32.xlu0 %v95
    %v157 = vpop.xlane.xlu0 %156
    %158 = vadd.xlane.f32.xlu0 %v96
    %v159 = vpop.xlane.xlu0 %158
    %160 = vadd.xlane.f32.xlu0 %v97
    %v161 = vpop.xlane.xlu0 %160
    %v162 = vrcp.pop 128.0
    %v163 = vmul.f32 %v99, %v162
    %v164 = vmul.f32 %v101, %v162
    %v165 = vmul.f32 %v103, %v162
    %v166 = vmul.f32 %v105, %v162
    %v167 = vmul.f32 %v107, %v162
    %v168 = vmul.f32 %v109, %v162
    %v169 = vmul.f32 %v111, %v162
    %v170 = vmul.f32 %v113, %v162
    %v171 = vmul.f32 %v115, %v162
    %v172 = vmul.f32 %v117, %v162
    %v173 = vmul.f32 %v119, %v162
    %v174 = vmul.f32 %v121, %v162
    %v175 = vmul.f32 %v123, %v162
    %v176 = vmul.f32 %v125, %v162
    %v177 = vmul.f32 %v127, %v162
    %v178 = vmul.f32 %v129, %v162
    %v179 = vmul.f32 %v131, %v162
    %v180 = vmul.f32 %v133, %v162
    %v181 = vmul.f32 %v135, %v162
    %v182 = vmul.f32 %v137, %v162
    %v183 = vmul.f32 %v139, %v162
    %v184 = vmul.f32 %v141, %v162
    %v185 = vmul.f32 %v143, %v162
    %v186 = vmul.f32 %v145, %v162
    %v187 = vmul.f32 %v147, %v162
    %v188 = vmul.f32 %v149, %v162
    %v189 = vmul.f32 %v151, %v162
    %v190 = vmul.f32 %v153, %v162
    %v191 = vmul.f32 %v155, %v162
    %v192 = vmul.f32 %v157, %v162
    %v193 = vmul.f32 %v159, %v162
    %v194 = vmul.f32 %v161, %v162
    %v195 = vadd.f32 %v163, 1e-05
    %v196 = vadd.f32 %v164, 1e-05
    %v197 = vadd.f32 %v165, 1e-05
    %v198 = vadd.f32 %v166, 1e-05
    %v199 = vadd.f32 %v167, 1e-05
    %v200 = vadd.f32 %v168, 1e-05
    %v201 = vadd.f32 %v169, 1e-05
    %v202 = vadd.f32 %v170, 1e-05
    %v203 = vadd.f32 %v171, 1e-05
    %v204 = vadd.f32 %v172, 1e-05
    %v205 = vadd.f32 %v173, 1e-05
    %v206 = vadd.f32 %v174, 1e-05
    %v207 = vadd.f32 %v175, 1e-05
    %v208 = vadd.f32 %v176, 1e-05
    %v209 = vadd.f32 %v177, 1e-05
    %v210 = vadd.f32 %v178, 1e-05
    %v211 = vadd.f32 %v179, 1e-05
    %v212 = vadd.f32 %v180, 1e-05
    %v213 = vadd.f32 %v181, 1e-05
    %v214 = vadd.f32 %v182, 1e-05
    %v215 = vadd.f32 %v183, 1e-05
    %v216 = vadd.f32 %v184, 1e-05
    %v217 = vadd.f32 %v185, 1e-05
    %v218 = vadd.f32 %v186, 1e-05
    %v219 = vadd.f32 %v187, 1e-05
    %v220 = vadd.f32 %v188, 1e-05
    %v221 = vadd.f32 %v189, 1e-05
    %v222 = vadd.f32 %v190, 1e-05
    %v223 = vadd.f32 %v191, 1e-05
    %v224 = vadd.f32 %v192, 1e-05
    %v225 = vadd.f32 %v193, 1e-05
    %v226 = vadd.f32 %v194, 1e-05
    %v227 = vrsqrt.pop %v195
    %v228 = vrsqrt.pop %v196
    %v229 = vrsqrt.pop %v197
    %v230 = vrsqrt.pop %v198
    %v231 = vrsqrt.pop %v199
    %v232 = vrsqrt.pop %v200
    %v233 = vrsqrt.pop %v201
    %v234 = vrsqrt.pop %v202
    %v235 = vrsqrt.pop %v203
    %v236 = vrsqrt.pop %v204
    %v237 = vrsqrt.pop %v205
    %v238 = vrsqrt.pop %v206
    %v239 = vrsqrt.pop %v207
    %v240 = vrsqrt.pop %v208
    %v241 = vrsqrt.pop %v209
    %v242 = vrsqrt.pop %v210
    %v243 = vrsqrt.pop %v211
    %v244 = vrsqrt.pop %v212
    %v245 = vrsqrt.pop %v213
    %v246 = vrsqrt.pop %v214
    %v247 = vrsqrt.pop %v215
    %v248 = vrsqrt.pop %v216
    %v249 = vrsqrt.pop %v217
    %v250 = vrsqrt.pop %v218
    %v251 = vrsqrt.pop %v219
    %v252 = vrsqrt.pop %v220
    %v253 = vrsqrt.pop %v221
    %v254 = vrsqrt.pop %v222
    %v255 = vrsqrt.pop %v223
    %v256 = vrsqrt.pop %v224
    %v257 = vrsqrt.pop %v225
    %v258 = vrsqrt.pop %v226
    %v259 = vmul.f32 %v34, %v227
    %v260 = vmul.f32 %v35, %v228
    %v261 = vmul.f32 %v36, %v229
    %v262 = vmul.f32 %v37, %v230
    %v263 = vmul.f32 %v38, %v231
    %v264 = vmul.f32 %v39, %v232
    %v265 = vmul.f32 %v40, %v233
    %v266 = vmul.f32 %v41, %v234
    %v267 = vmul.f32 %v42, %v235
    %v268 = vmul.f32 %v43, %v236
    %v269 = vmul.f32 %v44, %v237
    %v270 = vmul.f32 %v45, %v238
    %v271 = vmul.f32 %v46, %v239
    %v272 = vmul.f32 %v47, %v240
    %v273 = vmul.f32 %v48, %v241
    %v274 = vmul.f32 %v49, %v242
    %v275 = vmul.f32 %v50, %v243
    %v276 = vmul.f32 %v51, %v244
    %v277 = vmul.f32 %v52, %v245
    %v278 = vmul.f32 %v53, %v246
    %v279 = vmul.f32 %v54, %v247
    %v280 = vmul.f32 %v55, %v248
    %v281 = vmul.f32 %v56, %v249
    %v282 = vmul.f32 %v57, %v250
    %v283 = vmul.f32 %v58, %v251
    %v284 = vmul.f32 %v59, %v252
    %v285 = vmul.f32 %v60, %v253
    %v286 = vmul.f32 %v61, %v254
    %v287 = vmul.f32 %v62, %v255
    %v288 = vmul.f32 %v63, %v256
    %v289 = vmul.f32 %v64, %v257
    %v290 = vmul.f32 %v65, %v258
    %v291 = vpack.c.bf16 %v260, %v259
    %v292 = vpack.c.bf16 %v262, %v261
    %v293 = vpack.c.bf16 %v264, %v263
    %v294 = vpack.c.bf16 %v266, %v265
    %v295 = vpack.c.bf16 %v268, %v267
    %v296 = vpack.c.bf16 %v270, %v269
    %v297 = vpack.c.bf16 %v272, %v271
    %v298 = vpack.c.bf16 %v274, %v273
    %v299 = vpack.c.bf16 %v276, %v275
    %v300 = vpack.c.bf16 %v278, %v277
    %v301 = vpack.c.bf16 %v280, %v279
    %v302 = vpack.c.bf16 %v282, %v281
    %v303 = vpack.c.bf16 %v284, %v283
    %v304 = vpack.c.bf16 %v286, %v285
    %v305 = vpack.c.bf16 %v288, %v287
    %v306 = vpack.c.bf16 %v290, %v289
    %v307 = vld [vmem:[%s1] sm:$0xff]
    %v308 = vld [vmem:[%s1 + $0x8] sm:$0xf]
    %v309 = vld [vmem:[%s1 + $0xc] sm:$0xff]
    %v310 = vld [vmem:[%s1 + $0x14] sm:$0xf]
    %v311 = vld [vmem:[%s1 + $0x18] sm:$0xff]
    %v312 = vld [vmem:[%s1 + $0x20] sm:$0xf]
    %v313 = vld [vmem:[%s1 + $0x24] sm:$0xff]
    %v314 = vld [vmem:[%s1 + $0x2c] sm:$0xf]
    %v315 = vld [vmem:[%s1 + $0x30] sm:$0xff]
    %v316 = vld [vmem:[%s1 + $0x38] sm:$0xf]
    %v317 = vld [vmem:[%s1 + $0x3c] sm:$0xff]
    %v318 = vld [vmem:[%s1 + $0x44] sm:$0xf]
    %v319 = vld [vmem:[%s1 + $0x48] sm:$0xff]
    %v320 = vld [vmem:[%s1 + $0x50] sm:$0xf]
    %v321 = vld [vmem:[%s1 + $0x54] sm:$0xff]
    %v322 = vld [vmem:[%s1 + $0x5c] sm:$0xf]
    %v323 = vld [vmem:[%s1 + $0x60] sm:$0xff]
    %v324 = vld [vmem:[%s1 + $0x68] sm:$0xf]
    %v325 = vld [vmem:[%s1 + $0x6c] sm:$0xff]
    %v326 = vld [vmem:[%s1 + $0x74] sm:$0xf]
    %v327 = vld [vmem:[%s1 + $0x78] sm:$0xff]
    %v328 = vld [vmem:[%s1 + $0x80] sm:$0xf]
    %v329 = vld [vmem:[%s1 + $0x84] sm:$0xff]
    %v330 = vld [vmem:[%s1 + $0x8c] sm:$0xf]
    %v331 = vld [vmem:[%s1 + $0x90] sm:$0xff]
    %v332 = vld [vmem:[%s1 + $0x98] sm:$0xf]
    %v333 = vld [vmem:[%s1 + $0x9c] sm:$0xff]
    %v334 = vld [vmem:[%s1 + $0xa4] sm:$0xf]
    %v335 = vld [vmem:[%s1 + $0xa8] sm:$0xff]
    %v336 = vld [vmem:[%s1 + $0xb0] sm:$0xf]
    %v337 = vld [vmem:[%s1 + $0xb4] sm:$0xff]
    %v338 = vld [vmem:[%s1 + $0xbc] sm:$0xf]
    %v371 = vunpack.c.l.b16 %v307
    %v372 = vunpack.c.h.b16 %v307
    %v373 = vunpack.c.l.b16 %v308
    %v374 = vunpack.c.l.b16 %v309
    %v375 = vunpack.c.h.b16 %v309
    %v376 = vunpack.c.l.b16 %v310
    %v377 = vunpack.c.l.b16 %v311
    %v378 = vunpack.c.h.b16 %v311
    %v379 = vunpack.c.l.b16 %v312
    %v380 = vunpack.c.l.b16 %v313
    %v381 = vunpack.c.h.b16 %v313
    %v382 = vunpack.c.l.b16 %v314
    %v383 = vunpack.c.l.b16 %v315
    %v384 = vunpack.c.h.b16 %v315
    %v385 = vunpack.c.l.b16 %v316
    %v386 = vunpack.c.l.b16 %v317
    %v387 = vunpack.c.h.b16 %v317
    %v388 = vunpack.c.l.b16 %v318
    %v389 = vunpack.c.l.b16 %v319
    %v390 = vunpack.c.h.b16 %v319
    %v391 = vunpack.c.l.b16 %v320
    %v392 = vunpack.c.l.b16 %v321
    %v393 = vunpack.c.h.b16 %v321
    %v394 = vunpack.c.l.b16 %v322
    %v395 = vunpack.c.l.b16 %v323
    %v396 = vunpack.c.h.b16 %v323
    %v397 = vunpack.c.l.b16 %v324
    %v398 = vunpack.c.l.b16 %v325
    %v399 = vunpack.c.h.b16 %v325
    %v400 = vunpack.c.l.b16 %v326
    %v401 = vunpack.c.l.b16 %v327
    %v402 = vunpack.c.h.b16 %v327
    %v403 = vunpack.c.l.b16 %v328
    %v404 = vunpack.c.l.b16 %v329
    %v405 = vunpack.c.h.b16 %v329
    %v406 = vunpack.c.l.b16 %v330
    %v407 = vunpack.c.l.b16 %v331
    %v408 = vunpack.c.h.b16 %v331
    %v409 = vunpack.c.l.b16 %v332
    %v410 = vunpack.c.l.b16 %v333
    %v411 = vunpack.c.h.b16 %v333
    %v412 = vunpack.c.l.b16 %v334
    %v413 = vunpack.c.l.b16 %v335
    %v414 = vunpack.c.h.b16 %v335
    %v415 = vunpack.c.l.b16 %v336
    %v416 = vunpack.c.l.b16 %v337
    %v417 = vunpack.c.h.b16 %v337
    %v418 = vunpack.c.l.b16 %v338
    %v419 = vpack.c.b16 %v374, %v371
    %v420 = vpack.c.b16 %v375, %v372
    %v421 = vpack.c.b16 %v376, %v373
    %v422 = vpack.c.b16 %v380, %v377
    %v423 = vpack.c.b16 %v381, %v378
    %v424 = vpack.c.b16 %v382, %v379
    %v425 = vpack.c.b16 %v386, %v383
    %v426 = vpack.c.b16 %v387, %v384
    %v427 = vpack.c.b16 %v388, %v385
    %v428 = vpack.c.b16 %v392, %v389
    %v429 = vpack.c.b16 %v393, %v390
    %v430 = vpack.c.b16 %v394, %v391
    %v431 = vpack.c.b16 %v398, %v395
    %v432 = vpack.c.b16 %v399, %v396
    %v433 = vpack.c.b16 %v400, %v397
    %v434 = vpack.c.b16 %v404, %v401
    %v435 = vpack.c.b16 %v405, %v402
    %v436 = vpack.c.b16 %v406, %v403
    %v437 = vpack.c.b16 %v410, %v407
    %v438 = vpack.c.b16 %v411, %v408
    %v439 = vpack.c.b16 %v412, %v409
    %v440 = vpack.c.b16 %v416, %v413
    %v441 = vpack.c.b16 %v417, %v414
    %v442 = vpack.c.b16 %v418, %v415
    %467 = vmatprep.subr.bf16.mxu0 %v420
    %468 = vmatpush1.bf16.msra.mxu0 %v419
    %469 = vmatprep.subr.bf16.mxu0 %v423
    %470 = vmatpush1.bf16.msra.mxu0 %v422
    %471 = vmatprep.subr.bf16.mxu0 %v426
    %472 = vmatpush1.bf16.msra.mxu0 %v425
    %473 = vmatprep.subr.bf16.mxu0 %v429
    %474 = vmatpush1.bf16.msra.mxu0 %v428
    %475 = vmatprep.subr.bf16.mxu0 %v432
    %476 = vmatpush1.bf16.msra.mxu0 %v431
    %477 = vmatprep.subr.bf16.mxu0 %v435
    %478 = vmatpush1.bf16.msra.mxu0 %v434
    %479 = vmatprep.subr.bf16.mxu0 %v438
    %480 = vmatpush1.bf16.msra.mxu0 %v437
    %481 = vmatprep.subr.bf16.mxu0 %v441
    %482 = vmatpush1.bf16.msra.mxu0 %v440
    %483 = vmatprep.subr.bf16.mxu0 0
    %484 = vmatpush1.bf16.msra.mxu0 0
    %485 = vmatprep.subr.bf16.mxu0 0
    %486 = vmatpush1.bf16.msra.mxu0 0
    %487 = vmatprep.subr.bf16.mxu0 0
    %488 = vmatpush1.bf16.msra.mxu0 0
    %489 = vmatprep.subr.bf16.mxu0 0
    %490 = vmatpush1.bf16.msra.mxu0 0
    %491 = vmatprep.subr.bf16.mxu0 0
    %492 = vmatpush1.bf16.msra.mxu0 0
    %493 = vmatprep.subr.bf16.mxu0 0
    %494 = vmatpush1.bf16.msra.mxu0 0
    %495 = vmatprep.subr.bf16.mxu0 0
    %496 = vmatpush1.bf16.msra.mxu0 0
    %497 = vmatprep.subr.bf16.mxu0 0
    %498 = vmatpush1.bf16.msra.mxu0 0
    %499 = vmatprep.mubr.bf16.mxu0 0
    %500 = vmatmul.mubr.bf16.gmra.mrb[0].mxu0 %v291
    %v501 = vpop.f32.mrb[0].mxu0
    %v502 = vadd.f32 0.0, %v501
    %v503 = vpop.f32.mrb[0].mxu0
    %v504 = vadd.f32 0.0, %v503
    %v505 = vpop.f32.mrb[0].mxu0
    %v506 = vadd.f32 0.0, %v505
    %v507 = vpop.f32.mrb[0].mxu0
    %v508 = vadd.f32 0.0, %v507
    %509 = vmatprep.mubr.bf16.mxu0 0
    %510 = vmatmul.mubr.bf16.gmra.mrb[0].mxu0 %v292
    %v511 = vpop.f32.mrb[0].mxu0
    %v512 = vadd.f32 0.0, %v511
    %v513 = vpop.f32.mrb[0].mxu0
    %v514 = vadd.f32 0.0, %v513
    %v515 = vpop.f32.mrb[0].mxu0
    %v516 = vadd.f32 0.0, %v515
    %v517 = vpop.f32.mrb[0].mxu0
    %v518 = vadd.f32 0.0, %v517
    %519 = vmatprep.mubr.bf16.mxu0 0
    %520 = vmatmul.mubr.bf16.gmra.mrb[0].mxu0 %v293
    %v521 = vpop.f32.mrb[0].mxu0
    %v522 = vadd.f32 0.0, %v521
    %v523 = vpop.f32.mrb[0].mxu0
    %v524 = vadd.f32 0.0, %v523
    %v525 = vpop.f32.mrb[0].mxu0
    %v526 = vadd.f32 0.0, %v525
    %v527 = vpop.f32.mrb[0].mxu0
    %v528 = vadd.f32 0.0, %v527
    %529 = vmatprep.mubr.bf16.mxu0 0
    %530 = vmatmul.mubr.bf16.gmra.mrb[0].mxu0 %v294
    %v531 = vpop.f32.mrb[0].mxu0
    %v532 = vadd.f32 0.0, %v531
    %v533 = vpop.f32.mrb[0].mxu0
    %v534 = vadd.f32 0.0, %v533
    %v535 = vpop.f32.mrb[0].mxu0
    %v536 = vadd.f32 0.0, %v535
    %v537 = vpop.f32.mrb[0].mxu0
    %v538 = vadd.f32 0.0, %v537
    %539 = vmatprep.mubr.bf16.mxu0 0
    %540 = vmatmul.mubr.bf16.gmra.mrb[0].mxu0 %v295
    %v541 = vpop.f32.mrb[0].mxu0
    %v542 = vadd.f32 0.0, %v541
    %v543 = vpop.f32.mrb[0].mxu0
    %v544 = vadd.f32 0.0, %v543
    %v545 = vpop.f32.mrb[0].mxu0
    %v546 = vadd.f32 0.0, %v545
    %v547 = vpop.f32.mrb[0].mxu0
    %v548 = vadd.f32 0.0, %v547
    %549 = vmatprep.mubr.bf16.mxu0 0
    %550 = vmatmul.mubr.bf16.gmra.mrb[0].mxu0 %v296
    %v551 = vpop.f32.mrb[0].mxu0
    %v552 = vadd.f32 0.0, %v551
    %v553 = vpop.f32.mrb[0].mxu0
    %v554 = vadd.f32 0.0, %v553
    %v555 = vpop.f32.mrb[0].mxu0
    %v556 = vadd.f32 0.0, %v555
    %v557 = vpop.f32.mrb[0].mxu0
    %v558 = vadd.f32 0.0, %v557
    %559 = vmatprep.mubr.bf16.mxu0 0
    %560 = vmatmul.mubr.bf16.gmra.mrb[0].mxu0 %v297
    %v561 = vpop.f32.mrb[0].mxu0
    %v562 = vadd.f32 0.0, %v561
    %v563 = vpop.f32.mrb[0].mxu0
    %v564 = vadd.f32 0.0, %v563
    %v565 = vpop.f32.mrb[0].mxu0
    %v566 = vadd.f32 0.0, %v565
    %v567 = vpop.f32.mrb[0].mxu0
    %v568 = vadd.f32 0.0, %v567
    %569 = vmatprep.mubr.bf16.mxu0 0
    %570 = vmatmul.mubr.bf16.gmra.mrb[0].mxu0 %v298
    %v571 = vpop.f32.mrb[0].mxu0
    %v572 = vadd.f32 0.0, %v571
    %v573 = vpop.f32.mrb[0].mxu0
    %v574 = vadd.f32 0.0, %v573
    %v575 = vpop.f32.mrb[0].mxu0
    %v576 = vadd.f32 0.0, %v575
    %v577 = vpop.f32.mrb[0].mxu0
    %v578 = vadd.f32 0.0, %v577
    %579 = vmatprep.mubr.bf16.mxu0 0
    %580 = vmatmul.mubr.bf16.gmra.mrb[0].mxu0 %v299
    %v581 = vpop.f32.mrb[0].mxu0
    %v582 = vadd.f32 0.0, %v581
    %v583 = vpop.f32.mrb[0].mxu0
    %v584 = vadd.f32 0.0, %v583
    %v585 = vpop.f32.mrb[0].mxu0
    %v586 = vadd.f32 0.0, %v585
    %v587 = vpop.f32.mrb[0].mxu0
    %v588 = vadd.f32 0.0, %v587
    %589 = vmatprep.mubr.bf16.mxu0 0
    %590 = vmatmul.mubr.bf16.gmra.mrb[0].mxu0 %v300
    %v591 = vpop.f32.mrb[0].mxu0
    %v592 = vadd.f32 0.0, %v591
    %v593 = vpop.f32.mrb[0].mxu0
    %v594 = vadd.f32 0.0, %v593
    %v595 = vpop.f32.mrb[0].mxu0
    %v596 = vadd.f32 0.0, %v595
    %v597 = vpop.f32.mrb[0].mxu0
    %v598 = vadd.f32 0.0, %v597
    %599 = vmatprep.mubr.bf16.mxu0 0
    %600 = vmatmul.mubr.bf16.gmra.mrb[0].mxu0 %v301
    %v601 = vpop.f32.mrb[0].mxu0
    %v602 = vadd.f32 0.0, %v601
    %v603 = vpop.f32.mrb[0].mxu0
    %v604 = vadd.f32 0.0, %v603
    %v605 = vpop.f32.mrb[0].mxu0
    %v606 = vadd.f32 0.0, %v605
    %v607 = vpop.f32.mrb[0].mxu0
    %v608 = vadd.f32 0.0, %v607
    %609 = vmatprep.mubr.bf16.mxu0 0
    %610 = vmatmul.mubr.bf16.gmra.mrb[0].mxu0 %v302
    %v611 = vpop.f32.mrb[0].mxu0
    %v612 = vadd.f32 0.0, %v611
    %v613 = vpop.f32.mrb[0].mxu0
    %v614 = vadd.f32 0.0, %v613
    %v615 = vpop.f32.mrb[0].mxu0
    %v616 = vadd.f32 0.0, %v615
    %v617 = vpop.f32.mrb[0].mxu0
    %v618 = vadd.f32 0.0, %v617
    %619 = vmatprep.mubr.bf16.mxu0 0
    %620 = vmatmul.mubr.bf16.gmra.mrb[0].mxu0 %v303
    %v621 = vpop.f32.mrb[0].mxu0
    %v622 = vadd.f32 0.0, %v621
    %v623 = vpop.f32.mrb[0].mxu0
    %v624 = vadd.f32 0.0, %v623
    %v625 = vpop.f32.mrb[0].mxu0
    %v626 = vadd.f32 0.0, %v625
    %v627 = vpop.f32.mrb[0].mxu0
    %v628 = vadd.f32 0.0, %v627
    %629 = vmatprep.mubr.bf16.mxu0 0
    %630 = vmatmul.mubr.bf16.gmra.mrb[0].mxu0 %v304
    %v631 = vpop.f32.mrb[0].mxu0
    %v632 = vadd.f32 0.0, %v631
    %v633 = vpop.f32.mrb[0].mxu0
    %v634 = vadd.f32 0.0, %v633
    %v635 = vpop.f32.mrb[0].mxu0
    %v636 = vadd.f32 0.0, %v635
    %v637 = vpop.f32.mrb[0].mxu0
    %v638 = vadd.f32 0.0, %v637
    %639 = vmatprep.mubr.bf16.mxu0 0
    %640 = vmatmul.mubr.bf16.gmra.mrb[0].mxu0 %v305
    %v641 = vpop.f32.mrb[0].mxu0
    %v642 = vadd.f32 0.0, %v641
    %v643 = vpop.f32.mrb[0].mxu0
    %v644 = vadd.f32 0.0, %v643
    %v645 = vpop.f32.mrb[0].mxu0
    %v646 = vadd.f32 0.0, %v645
    %v647 = vpop.f32.mrb[0].mxu0
    %v648 = vadd.f32 0.0, %v647
    %649 = vmatprep.mubr.bf16.mxu0 0
    %650 = vmatmul.mubr.bf16.gmra.mrb[0].mxu0 %v306
    %v651 = vpop.f32.mrb[0].mxu0
    %v652 = vadd.f32 0.0, %v651
    %v653 = vpop.f32.mrb[0].mxu0
    %v654 = vadd.f32 0.0, %v653
    %v655 = vpop.f32.mrb[0].mxu0
    %v656 = vadd.f32 0.0, %v655
    %v657 = vpop.f32.mrb[0].mxu0
    %v658 = vadd.f32 0.0, %v657
    %659 = vdwg.mxu0
    %660 = vmatprep.subr.bf16.mxu0 0
    %661 = vmatpush1.bf16.msra.mxu0 %v421
    %662 = vmatprep.subr.bf16.mxu0 0
    %663 = vmatpush1.bf16.msra.mxu0 %v424
    %664 = vmatprep.subr.bf16.mxu0 0
    %665 = vmatpush1.bf16.msra.mxu0 %v427
    %666 = vmatprep.subr.bf16.mxu0 0
    %667 = vmatpush1.bf16.msra.mxu0 %v430
    %668 = vmatprep.subr.bf16.mxu0 0
    %669 = vmatpush1.bf16.msra.mxu0 %v433
    %670 = vmatprep.subr.bf16.mxu0 0
    %671 = vmatpush1.bf16.msra.mxu0 %v436
    %672 = vmatprep.subr.bf16.mxu0 0
    %673 = vmatpush1.bf16.msra.mxu0 %v439
    %674 = vmatprep.subr.bf16.mxu0 0
    %675 = vmatpush1.bf16.msra.mxu0 %v442
    %676 = vmatprep.subr.bf16.mxu0 0
    %677 = vmatpush1.bf16.msra.mxu0 0
    %678 = vmatprep.subr.bf16.mxu0 0
    %679 = vmatpush1.bf16.msra.mxu0 0
    %680 = vmatprep.subr.bf16.mxu0 0
    %681 = vmatpush1.bf16.msra.mxu0 0
    %682 = vmatprep.subr.bf16.mxu0 0
    %683 = vmatpush1.bf16.msra.mxu0 0
    %684 = vmatprep.subr.bf16.mxu0 0
    %685 = vmatpush1.bf16.msra.mxu0 0
    %686 = vmatprep.subr.bf16.mxu0 0
    %687 = vmatpush1.bf16.msra.mxu0 0
    %688 = vmatprep.subr.bf16.mxu0 0
    %689 = vmatpush1.bf16.msra.mxu0 0
    %690 = vmatprep.subr.bf16.mxu0 0
    %691 = vmatpush1.bf16.msra.mxu0 0
    %692 = vmatprep.mubr.bf16.mxu0 0
    %693 = vmatmul.mubr.bf16.gmra.mrb[0].mxu0 %v291
    %v694 = vpop.f32.mrb[0].mxu0
    %v695 = vadd.f32 0.0, %v694
    %v696 = vpop.f32.mrb[0].mxu0
    %v697 = vpop.f32.mrb[0].mxu0
    %v698 = vadd.f32 0.0, %v697
    %v699 = vpop.f32.mrb[0].mxu0
    %700 = vmatprep.mubr.bf16.mxu0 0
    %701 = vmatmul.mubr.bf16.gmra.mrb[0].mxu0 %v292
    %v702 = vpop.f32.mrb[0].mxu0
    %v703 = vadd.f32 0.0, %v702
    %v704 = vpop.f32.mrb[0].mxu0
    %v705 = vpop.f32.mrb[0].mxu0
    %v706 = vadd.f32 0.0, %v705
    %v707 = vpop.f32.mrb[0].mxu0
    %708 = vmatprep.mubr.bf16.mxu0 0
    %709 = vmatmul.mubr.bf16.gmra.mrb[0].mxu0 %v293
    %v710 = vpop.f32.mrb[0].mxu0
    %v711 = vadd.f32 0.0, %v710
    %v712 = vpop.f32.mrb[0].mxu0
    %v713 = vpop.f32.mrb[0].mxu0
    %v714 = vadd.f32 0.0, %v713
    %v715 = vpop.f32.mrb[0].mxu0
    %716 = vmatprep.mubr.bf16.mxu0 0
    %717 = vmatmul.mubr.bf16.gmra.mrb[0].mxu0 %v294
    %v718 = vpop.f32.mrb[0].mxu0
    %v719 = vadd.f32 0.0, %v718
    %v720 = vpop.f32.mrb[0].mxu0
    %v721 = vpop.f32.mrb[0].mxu0
    %v722 = vadd.f32 0.0, %v721
    %v723 = vpop.f32.mrb[0].mxu0
    %724 = vmatprep.mubr.bf16.mxu0 0
    %725 = vmatmul.mubr.bf16.gmra.mrb[0].mxu0 %v295
    %v726 = vpop.f32.mrb[0].mxu0
    %v727 = vadd.f32 0.0, %v726
    %v728 = vpop.f32.mrb[0].mxu0
    %v729 = vpop.f32.mrb[0].mxu0
    %v730 = vadd.f32 0.0, %v729
    %v731 = vpop.f32.mrb[0].mxu0
    %732 = vmatprep.mubr.bf16.mxu0 0
    %733 = vmatmul.mubr.bf16.gmra.mrb[0].mxu0 %v296
    %v734 = vpop.f32.mrb[0].mxu0
    %v735 = vadd.f32 0.0, %v734
    %v736 = vpop.f32.mrb[0].mxu0
    %v737 = vpop.f32.mrb[0].mxu0
    %v738 = vadd.f32 0.0, %v737
    %v739 = vpop.f32.mrb[0].mxu0
    %740 = vmatprep.mubr.bf16.mxu0 0
    %741 = vmatmul.mubr.bf16.gmra.mrb[0].mxu0 %v297
    %v742 = vpop.f32.mrb[0].mxu0
    %v743 = vadd.f32 0.0, %v742
    %v744 = vpop.f32.mrb[0].mxu0
    %v745 = vpop.f32.mrb[0].mxu0
    %v746 = vadd.f32 0.0, %v745
    %v747 = vpop.f32.mrb[0].mxu0
    %748 = vmatprep.mubr.bf16.mxu0 0
    %749 = vmatmul.mubr.bf16.gmra.mrb[0].mxu0 %v298
    %v750 = vpop.f32.mrb[0].mxu0
    %v751 = vadd.f32 0.0, %v750
    %v752 = vpop.f32.mrb[0].mxu0
    %v753 = vpop.f32.mrb[0].mxu0
    %v754 = vadd.f32 0.0, %v753
    %v755 = vpop.f32.mrb[0].mxu0
    %756 = vmatprep.mubr.bf16.mxu0 0
    %757 = vmatmul.mubr.bf16.gmra.mrb[0].mxu0 %v299
    %v758 = vpop.f32.mrb[0].mxu0
    %v759 = vadd.f32 0.0, %v758
    %v760 = vpop.f32.mrb[0].mxu0
    %v761 = vpop.f32.mrb[0].mxu0
    %v762 = vadd.f32 0.0, %v761
    %v763 = vpop.f32.mrb[0].mxu0
    %764 = vmatprep.mubr.bf16.mxu0 0
    %765 = vmatmul.mubr.bf16.gmra.mrb[0].mxu0 %v300
    %v766 = vpop.f32.mrb[0].mxu0
    %v767 = vadd.f32 0.0, %v766
    %v768 = vpop.f32.mrb[0].mxu0
    %v769 = vpop.f32.mrb[0].mxu0
    %v770 = vadd.f32 0.0, %v769
    %v771 = vpop.f32.mrb[0].mxu0
    %772 = vmatprep.mubr.bf16.mxu0 0
    %773 = vmatmul.mubr.bf16.gmra.mrb[0].mxu0 %v301
    %v774 = vpop.f32.mrb[0].mxu0
    %v775 = vadd.f32 0.0, %v774
    %v776 = vpop.f32.mrb[0].mxu0
    %v777 = vpop.f32.mrb[0].mxu0
    %v778 = vadd.f32 0.0, %v777
    %v779 = vpop.f32.mrb[0].mxu0
    %780 = vmatprep.mubr.bf16.mxu0 0
    %781 = vmatmul.mubr.bf16.gmra.mrb[0].mxu0 %v302
    %v782 = vpop.f32.mrb[0].mxu0
    %v783 = vadd.f32 0.0, %v782
    %v784 = vpop.f32.mrb[0].mxu0
    %v785 = vpop.f32.mrb[0].mxu0
    %v786 = vadd.f32 0.0, %v785
    %v787 = vpop.f32.mrb[0].mxu0
    %788 = vmatprep.mubr.bf16.mxu0 0
    %789 = vmatmul.mubr.bf16.gmra.mrb[0].mxu0 %v303
    %v790 = vpop.f32.mrb[0].mxu0
    %v791 = vadd.f32 0.0, %v790
    %v792 = vpop.f32.mrb[0].mxu0
    %v793 = vpop.f32.mrb[0].mxu0
    %v794 = vadd.f32 0.0, %v793
    %v795 = vpop.f32.mrb[0].mxu0
    %796 = vmatprep.mubr.bf16.mxu0 0
    %797 = vmatmul.mubr.bf16.gmra.mrb[0].mxu0 %v304
    %v798 = vpop.f32.mrb[0].mxu0
    %v799 = vadd.f32 0.0, %v798
    %v800 = vpop.f32.mrb[0].mxu0
    %v801 = vpop.f32.mrb[0].mxu0
    %v802 = vadd.f32 0.0, %v801
    %v803 = vpop.f32.mrb[0].mxu0
    %804 = vmatprep.mubr.bf16.mxu0 0
    %805 = vmatmul.mubr.bf16.gmra.mrb[0].mxu0 %v305
    %v806 = vpop.f32.mrb[0].mxu0
    %v807 = vadd.f32 0.0, %v806
    %v808 = vpop.f32.mrb[0].mxu0
    %v809 = vpop.f32.mrb[0].mxu0
    %v810 = vadd.f32 0.0, %v809
    %v811 = vpop.f32.mrb[0].mxu0
    %812 = vmatprep.mubr.bf16.mxu0 0
    %813 = vmatmul.mubr.bf16.gmra.mrb[0].mxu0 %v306
    %v814 = vpop.f32.mrb[0].mxu0
    %v815 = vadd.f32 0.0, %v814
    %v816 = vpop.f32.mrb[0].mxu0
    %v817 = vpop.f32.mrb[0].mxu0
    %v818 = vadd.f32 0.0, %v817
    %v819 = vpop.f32.mrb[0].mxu0
    %820 = vdwg.mxu0
    %v821 = vpack.c.bf16 %v698, %v695
    %v822 = vpack.c.bf16 %v706, %v703
    %v823 = vpack.c.bf16 %v714, %v711
    %v824 = vpack.c.bf16 %v722, %v719
    %v825 = vpack.c.bf16 %v730, %v727
    %v826 = vpack.c.bf16 %v738, %v735
    %v827 = vpack.c.bf16 %v746, %v743
    %v828 = vpack.c.bf16 %v754, %v751
    %v829 = vpack.c.bf16 %v762, %v759
    %v830 = vpack.c.bf16 %v770, %v767
    %v831 = vpack.c.bf16 %v778, %v775
    %v832 = vpack.c.bf16 %v786, %v783
    %v833 = vpack.c.bf16 %v794, %v791
    %v834 = vpack.c.bf16 %v802, %v799
    %v835 = vpack.c.bf16 %v810, %v807
    %v836 = vpack.c.bf16 %v818, %v815
    %v837 = vld [vmem:[%s6] sm:$0xff]
    %v838 = vld [vmem:[%s6 + $0x8] sm:$0xff]
    %v839 = vld [vmem:[%s6 + $0x10] sm:$0xff]
    %v840 = vld [vmem:[%s6 + $0x18] sm:$0xff]
    %v841 = vld [vmem:[%s6 + $0x20] sm:$0xff]
    %v842 = vld [vmem:[%s6 + $0x28] sm:$0xff]
    %v843 = vld [vmem:[%s6 + $0x30] sm:$0xff]
    %v844 = vld [vmem:[%s6 + $0x38] sm:$0xff]
    %v845 = vld [vmem:[%s6 + $0x40] sm:$0xff]
    %v846 = vld [vmem:[%s6 + $0x48] sm:$0xff]
    %v847 = vld [vmem:[%s6 + $0x50] sm:$0xff]
    %v848 = vld [vmem:[%s6 + $0x58] sm:$0xff]
    %v849 = vld [vmem:[%s6 + $0x60] sm:$0xff]
    %v850 = vld [vmem:[%s6 + $0x68] sm:$0xff]
    %v851 = vld [vmem:[%s6 + $0x70] sm:$0xff]
    %v852 = vld [vmem:[%s6 + $0x78] sm:$0xff]
    %v853 = vld [vmem:[%s6 + $0x80] sm:$0xff]
    %v854 = vld [vmem:[%s6 + $0x88] sm:$0xff]
    %v855 = vld [vmem:[%s6 + $0x90] sm:$0xff]
    %v856 = vld [vmem:[%s6 + $0x98] sm:$0xff]
    %v857 = vld [vmem:[%s6 + $0xa0] sm:$0xff]
    %v858 = vld [vmem:[%s6 + $0xa8] sm:$0xff]
    %v859 = vld [vmem:[%s6 + $0xb0] sm:$0xff]
    %v860 = vld [vmem:[%s6 + $0xb8] sm:$0xff]
    %v861 = vld [vmem:[%s6 + $0xc0] sm:$0xff]
    %v862 = vld [vmem:[%s6 + $0xc8] sm:$0xff]
    %v863 = vld [vmem:[%s6 + $0xd0] sm:$0xff]
    %v864 = vld [vmem:[%s6 + $0xd8] sm:$0xff]
    %v865 = vld [vmem:[%s6 + $0xe0] sm:$0xff]
    %v866 = vld [vmem:[%s6 + $0xe8] sm:$0xff]
    %v867 = vld [vmem:[%s6 + $0xf0] sm:$0xff]
    %v868 = vld [vmem:[%s6 + $0xf8] sm:$0xff]
    %v869 = vld [vmem:[%s7] sm:$0xff]
    %v870 = vld [vmem:[%s7 + $0x8] sm:$0xff]
    %v871 = vld [vmem:[%s7 + $0x10] sm:$0xff]
    %v872 = vld [vmem:[%s7 + $0x18] sm:$0xff]
    %v873 = vld [vmem:[%s7 + $0x20] sm:$0xff]
    %v874 = vld [vmem:[%s7 + $0x28] sm:$0xff]
    %v875 = vld [vmem:[%s7 + $0x30] sm:$0xff]
    %v876 = vld [vmem:[%s7 + $0x38] sm:$0xff]
    %v877 = vld [vmem:[%s7 + $0x40] sm:$0xff]
    %v878 = vld [vmem:[%s7 + $0x48] sm:$0xff]
    %v879 = vld [vmem:[%s7 + $0x50] sm:$0xff]
    %v880 = vld [vmem:[%s7 + $0x58] sm:$0xff]
    %v881 = vld [vmem:[%s7 + $0x60] sm:$0xff]
    %v882 = vld [vmem:[%s7 + $0x68] sm:$0xff]
    %v883 = vld [vmem:[%s7 + $0x70] sm:$0xff]
    %v884 = vld [vmem:[%s7 + $0x78] sm:$0xff]
    %v885 = vld [vmem:[%s7 + $0x80] sm:$0xff]
    %v886 = vld [vmem:[%s7 + $0x88] sm:$0xff]
    %v887 = vld [vmem:[%s7 + $0x90] sm:$0xff]
    %v888 = vld [vmem:[%s7 + $0x98] sm:$0xff]
    %v889 = vld [vmem:[%s7 + $0xa0] sm:$0xff]
    %v890 = vld [vmem:[%s7 + $0xa8] sm:$0xff]
    %v891 = vld [vmem:[%s7 + $0xb0] sm:$0xff]
    %v892 = vld [vmem:[%s7 + $0xb8] sm:$0xff]
    %v893 = vld [vmem:[%s7 + $0xc0] sm:$0xff]
    %v894 = vld [vmem:[%s7 + $0xc8] sm:$0xff]
    %v895 = vld [vmem:[%s7 + $0xd0] sm:$0xff]
    %v896 = vld [vmem:[%s7 + $0xd8] sm:$0xff]
    %v897 = vld [vmem:[%s7 + $0xe0] sm:$0xff]
    %v898 = vld [vmem:[%s7 + $0xe8] sm:$0xff]
    %v899 = vld [vmem:[%s7 + $0xf0] sm:$0xff]
    %v900 = vld [vmem:[%s7 + $0xf8] sm:$0xff]
    %v901 = vld [vmem:[%s5] sm:$0xf]
    %v902 = vld [vmem:[%s5 + $0x4] sm:$0xf]
    %v903 = vld [vmem:[%s5 + $0x8] sm:$0xf]
    %v904 = vld [vmem:[%s5 + $0xc] sm:$0xf]
    %v905 = vld [vmem:[%s5 + $0x10] sm:$0xf]
    %v906 = vld [vmem:[%s5 + $0x14] sm:$0xf]
    %v907 = vld [vmem:[%s5 + $0x18] sm:$0xf]
    %v908 = vld [vmem:[%s5 + $0x1c] sm:$0xf]
    %v909 = vld [vmem:[%s5 + $0x20] sm:$0xf]
    %v910 = vld [vmem:[%s5 + $0x24] sm:$0xf]
    %v911 = vld [vmem:[%s5 + $0x28] sm:$0xf]
    %v912 = vld [vmem:[%s5 + $0x2c] sm:$0xf]
    %v913 = vld [vmem:[%s5 + $0x30] sm:$0xf]
    %v914 = vld [vmem:[%s5 + $0x34] sm:$0xf]
    %v915 = vld [vmem:[%s5 + $0x38] sm:$0xf]
    %v916 = vld [vmem:[%s5 + $0x3c] sm:$0xf]
    %v917 = vpack.c.bf16 %v506, %v502
    %v918 = vpack.c.bf16 %v516, %v512
    %v919 = vpack.c.bf16 %v526, %v522
    %v920 = vpack.c.bf16 %v536, %v532
    %v921 = vpack.c.bf16 %v546, %v542
    %v922 = vpack.c.bf16 %v556, %v552
    %v923 = vpack.c.bf16 %v566, %v562
    %v924 = vpack.c.bf16 %v576, %v572
    %v925 = vpack.c.bf16 %v586, %v582
    %v926 = vpack.c.bf16 %v596, %v592
    %v927 = vpack.c.bf16 %v606, %v602
    %v928 = vpack.c.bf16 %v616, %v612
    %v929 = vpack.c.bf16 %v626, %v622
    %v930 = vpack.c.bf16 %v636, %v632
    %v931 = vpack.c.bf16 %v646, %v642
    %v932 = vpack.c.bf16 %v656, %v652
    %v949 = vunpack.c.l.b16 %v901
    %v950 = vunpack.c.l.b16 %v902
    %v951 = vunpack.c.l.b16 %v903
    %v952 = vunpack.c.l.b16 %v904
    %v953 = vunpack.c.l.b16 %v905
    %v954 = vunpack.c.l.b16 %v906
    %v955 = vunpack.c.l.b16 %v907
    %v956 = vunpack.c.l.b16 %v908
    %v957 = vunpack.c.l.b16 %v909
    %v958 = vunpack.c.l.b16 %v910
    %v959 = vunpack.c.l.b16 %v911
    %v960 = vunpack.c.l.b16 %v912
    %v961 = vunpack.c.l.b16 %v913
    %v962 = vunpack.c.l.b16 %v914
    %v963 = vunpack.c.l.b16 %v915
    %v964 = vunpack.c.l.b16 %v916
    %v965 = vpack.c.b16 %v950, %v949
    %v966 = vpack.c.b16 %v952, %v951
    %v967 = vpack.c.b16 %v954, %v953
    %v968 = vpack.c.b16 %v956, %v955
    %v969 = vpack.c.b16 %v958, %v957
    %v970 = vpack.c.b16 %v960, %v959
    %v971 = vpack.c.b16 %v962, %v961
    %v972 = vpack.c.b16 %v964, %v963
    %981 = vmatprep.subr.bf16.mxu0 0
    %982 = vmatpush1.bf16.msra.mxu0 %v965
    %983 = vmatprep.subr.bf16.mxu0 0
    %984 = vmatpush1.bf16.msra.mxu0 %v966
    %985 = vmatprep.subr.bf16.mxu0 0
    %986 = vmatpush1.bf16.msra.mxu0 %v967
    %987 = vmatprep.subr.bf16.mxu0 0
    %988 = vmatpush1.bf16.msra.mxu0 %v968
    %989 = vmatprep.subr.bf16.mxu0 0
    %990 = vmatpush1.bf16.msra.mxu0 %v969
    %991 = vmatprep.subr.bf16.mxu0 0
    %992 = vmatpush1.bf16.msra.mxu0 %v970
    %993 = vmatprep.subr.bf16.mxu0 0
    %994 = vmatpush1.bf16.msra.mxu0 %v971
    %995 = vmatprep.subr.bf16.mxu0 0
    %996 = vmatpush1.bf16.msra.mxu0 %v972
    %997 = vmatprep.subr.bf16.mxu0 0
    %998 = vmatpush1.bf16.msra.mxu0 0
    %999 = vmatprep.subr.bf16.mxu0 0
    %1000 = vmatpush1.bf16.msra.mxu0 0
    %1001 = vmatprep.subr.bf16.mxu0 0
    %1002 = vmatpush1.bf16.msra.mxu0 0
    %1003 = vmatprep.subr.bf16.mxu0 0
    %1004 = vmatpush1.bf16.msra.mxu0 0
    %1005 = vmatprep.subr.bf16.mxu0 0
    %1006 = vmatpush1.bf16.msra.mxu0 0
    %1007 = vmatprep.subr.bf16.mxu0 0
    %1008 = vmatpush1.bf16.msra.mxu0 0
    %1009 = vmatprep.subr.bf16.mxu0 0
    %1010 = vmatpush1.bf16.msra.mxu0 0
    %1011 = vmatprep.subr.bf16.mxu0 0
    %1012 = vmatpush1.bf16.msra.mxu0 0
    %1013 = vmatprep.mubr.bf16.mxu0 0
    %1014 = vmatmul.mubr.bf16.gmra.mrb[0].mxu0 %v917
    %v1015 = vpop.f32.mrb[0].mxu0
    %v1016 = vadd.f32 0.0, %v1015
    %v1017 = vpop.f32.mrb[0].mxu0
    %v1018 = vpop.f32.mrb[0].mxu0
    %v1019 = vadd.f32 0.0, %v1018
    %v1020 = vpop.f32.mrb[0].mxu0
    %1021 = vmatprep.mubr.bf16.mxu0 0
    %1022 = vmatmul.mubr.bf16.gmra.mrb[0].mxu0 %v918
    %v1023 = vpop.f32.mrb[0].mxu0
    %v1024 = vadd.f32 0.0, %v1023
    %v1025 = vpop.f32.mrb[0].mxu0
    %v1026 = vpop.f32.mrb[0].mxu0
    %v1027 = vadd.f32 0.0, %v1026
    %v1028 = vpop.f32.mrb[0].mxu0
    %1029 = vmatprep.mubr.bf16.mxu0 0
    %1030 = vmatmul.mubr.bf16.gmra.mrb[0].mxu0 %v919
    %v1031 = vpop.f32.mrb[0].mxu0
    %v1032 = vadd.f32 0.0, %v1031
    %v1033 = vpop.f32.mrb[0].mxu0
    %v1034 = vpop.f32.mrb[0].mxu0
    %v1035 = vadd.f32 0.0, %v1034
    %v1036 = vpop.f32.mrb[0].mxu0
    %1037 = vmatprep.mubr.bf16.mxu0 0
    %1038 = vmatmul.mubr.bf16.gmra.mrb[0].mxu0 %v920
    %v1039 = vpop.f32.mrb[0].mxu0
    %v1040 = vadd.f32 0.0, %v1039
    %v1041 = vpop.f32.mrb[0].mxu0
    %v1042 = vpop.f32.mrb[0].mxu0
    %v1043 = vadd.f32 0.0, %v1042
    %v1044 = vpop.f32.mrb[0].mxu0
    %1045 = vmatprep.mubr.bf16.mxu0 0
    %1046 = vmatmul.mubr.bf16.gmra.mrb[0].mxu0 %v921
    %v1047 = vpop.f32.mrb[0].mxu0
    %v1048 = vadd.f32 0.0, %v1047
    %v1049 = vpop.f32.mrb[0].mxu0
    %v1050 = vpop.f32.mrb[0].mxu0
    %v1051 = vadd.f32 0.0, %v1050
    %v1052 = vpop.f32.mrb[0].mxu0
    %1053 = vmatprep.mubr.bf16.mxu0 0
    %1054 = vmatmul.mubr.bf16.gmra.mrb[0].mxu0 %v922
    %v1055 = vpop.f32.mrb[0].mxu0
    %v1056 = vadd.f32 0.0, %v1055
    %v1057 = vpop.f32.mrb[0].mxu0
    %v1058 = vpop.f32.mrb[0].mxu0
    %v1059 = vadd.f32 0.0, %v1058
    %v1060 = vpop.f32.mrb[0].mxu0
    %1061 = vmatprep.mubr.bf16.mxu0 0
    %1062 = vmatmul.mubr.bf16.gmra.mrb[0].mxu0 %v923
    %v1063 = vpop.f32.mrb[0].mxu0
    %v1064 = vadd.f32 0.0, %v1063
    %v1065 = vpop.f32.mrb[0].mxu0
    %v1066 = vpop.f32.mrb[0].mxu0
    %v1067 = vadd.f32 0.0, %v1066
    %v1068 = vpop.f32.mrb[0].mxu0
    %1069 = vmatprep.mubr.bf16.mxu0 0
    %1070 = vmatmul.mubr.bf16.gmra.mrb[0].mxu0 %v924
    %v1071 = vpop.f32.mrb[0].mxu0
    %v1072 = vadd.f32 0.0, %v1071
    %v1073 = vpop.f32.mrb[0].mxu0
    %v1074 = vpop.f32.mrb[0].mxu0
    %v1075 = vadd.f32 0.0, %v1074
    %v1076 = vpop.f32.mrb[0].mxu0
    %1077 = vmatprep.mubr.bf16.mxu0 0
    %1078 = vmatmul.mubr.bf16.gmra.mrb[0].mxu0 %v925
    %v1079 = vpop.f32.mrb[0].mxu0
    %v1080 = vadd.f32 0.0, %v1079
    %v1081 = vpop.f32.mrb[0].mxu0
    %v1082 = vpop.f32.mrb[0].mxu0
    %v1083 = vadd.f32 0.0, %v1082
    %v1084 = vpop.f32.mrb[0].mxu0
    %1085 = vmatprep.mubr.bf16.mxu0 0
    %1086 = vmatmul.mubr.bf16.gmra.mrb[0].mxu0 %v926
    %v1087 = vpop.f32.mrb[0].mxu0
    %v1088 = vadd.f32 0.0, %v1087
    %v1089 = vpop.f32.mrb[0].mxu0
    %v1090 = vpop.f32.mrb[0].mxu0
    %v1091 = vadd.f32 0.0, %v1090
    %v1092 = vpop.f32.mrb[0].mxu0
    %1093 = vmatprep.mubr.bf16.mxu0 0
    %1094 = vmatmul.mubr.bf16.gmra.mrb[0].mxu0 %v927
    %v1095 = vpop.f32.mrb[0].mxu0
    %v1096 = vadd.f32 0.0, %v1095
    %v1097 = vpop.f32.mrb[0].mxu0
    %v1098 = vpop.f32.mrb[0].mxu0
    %v1099 = vadd.f32 0.0, %v1098
    %v1100 = vpop.f32.mrb[0].mxu0
    %1101 = vmatprep.mubr.bf16.mxu0 0
    %1102 = vmatmul.mubr.bf16.gmra.mrb[0].mxu0 %v928
    %v1103 = vpop.f32.mrb[0].mxu0
    %v1104 = vadd.f32 0.0, %v1103
    %v1105 = vpop.f32.mrb[0].mxu0
    %v1106 = vpop.f32.mrb[0].mxu0
    %v1107 = vadd.f32 0.0, %v1106
    %v1108 = vpop.f32.mrb[0].mxu0
    %1109 = vmatprep.mubr.bf16.mxu0 0
    %1110 = vmatmul.mubr.bf16.gmra.mrb[0].mxu0 %v929
    %v1111 = vpop.f32.mrb[0].mxu0
    %v1112 = vadd.f32 0.0, %v1111
    %v1113 = vpop.f32.mrb[0].mxu0
    %v1114 = vpop.f32.mrb[0].mxu0
    %v1115 = vadd.f32 0.0, %v1114
    %v1116 = vpop.f32.mrb[0].mxu0
    %1117 = vmatprep.mubr.bf16.mxu0 0
    %1118 = vmatmul.mubr.bf16.gmra.mrb[0].mxu0 %v930
    %v1119 = vpop.f32.mrb[0].mxu0
    %v1120 = vadd.f32 0.0, %v1119
    %v1121 = vpop.f32.mrb[0].mxu0
    %v1122 = vpop.f32.mrb[0].mxu0
    %v1123 = vadd.f32 0.0, %v1122
    %v1124 = vpop.f32.mrb[0].mxu0
    %1125 = vmatprep.mubr.bf16.mxu0 0
    %1126 = vmatmul.mubr.bf16.gmra.mrb[0].mxu0 %v931
    %v1127 = vpop.f32.mrb[0].mxu0
    %v1128 = vadd.f32 0.0, %v1127
    %v1129 = vpop.f32.mrb[0].mxu0
    %v1130 = vpop.f32.mrb[0].mxu0
    %v1131 = vadd.f32 0.0, %v1130
    %v1132 = vpop.f32.mrb[0].mxu0
    %1133 = vmatprep.mubr.bf16.mxu0 0
    %1134 = vmatmul.mubr.bf16.gmra.mrb[0].mxu0 %v932
    %v1135 = vpop.f32.mrb[0].mxu0
    %v1136 = vadd.f32 0.0, %v1135
    %v1137 = vpop.f32.mrb[0].mxu0
    %v1138 = vpop.f32.mrb[0].mxu0
    %v1139 = vadd.f32 0.0, %v1138
    %v1140 = vpop.f32.mrb[0].mxu0
    %1141 = vdwg.mxu0
    %v1142 = vpack.c.bf16 %v508, %v504
    %v1143 = vpack.c.bf16 %v518, %v514
    %v1144 = vpack.c.bf16 %v528, %v524
    %v1145 = vpack.c.bf16 %v538, %v534
    %v1146 = vpack.c.bf16 %v548, %v544
    %v1147 = vpack.c.bf16 %v558, %v554
    %v1148 = vpack.c.bf16 %v568, %v564
    %v1149 = vpack.c.bf16 %v578, %v574
    %v1150 = vpack.c.bf16 %v588, %v584
    %v1151 = vpack.c.bf16 %v598, %v594
    %v1152 = vpack.c.bf16 %v608, %v604
    %v1153 = vpack.c.bf16 %v618, %v614
    %v1154 = vpack.c.bf16 %v628, %v624
    %v1155 = vpack.c.bf16 %v638, %v634
    %v1156 = vpack.c.bf16 %v648, %v644
    %v1157 = vpack.c.bf16 %v658, %v654
    %1158 = vmatprep.subr.bf16.mxu0 0
    %1159 = vmatpush1.bf16.msra.mxu0 %v965
    %1160 = vmatprep.subr.bf16.mxu0 0
    %1161 = vmatpush1.bf16.msra.mxu0 %v966
    %1162 = vmatprep.subr.bf16.mxu0 0
    %1163 = vmatpush1.bf16.msra.mxu0 %v967
    %1164 = vmatprep.subr.bf16.mxu0 0
    %1165 = vmatpush1.bf16.msra.mxu0 %v968
    %1166 = vmatprep.subr.bf16.mxu0 0
    %1167 = vmatpush1.bf16.msra.mxu0 %v969
    %1168 = vmatprep.subr.bf16.mxu0 0
    %1169 = vmatpush1.bf16.msra.mxu0 %v970
    %1170 = vmatprep.subr.bf16.mxu0 0
    %1171 = vmatpush1.bf16.msra.mxu0 %v971
    %1172 = vmatprep.subr.bf16.mxu0 0
    %1173 = vmatpush1.bf16.msra.mxu0 %v972
    %1174 = vmatprep.subr.bf16.mxu0 0
    %1175 = vmatpush1.bf16.msra.mxu0 0
    %1176 = vmatprep.subr.bf16.mxu0 0
    %1177 = vmatpush1.bf16.msra.mxu0 0
    %1178 = vmatprep.subr.bf16.mxu0 0
    %1179 = vmatpush1.bf16.msra.mxu0 0
    %1180 = vmatprep.subr.bf16.mxu0 0
    %1181 = vmatpush1.bf16.msra.mxu0 0
    %1182 = vmatprep.subr.bf16.mxu0 0
    %1183 = vmatpush1.bf16.msra.mxu0 0
    %1184 = vmatprep.subr.bf16.mxu0 0
    %1185 = vmatpush1.bf16.msra.mxu0 0
    %1186 = vmatprep.subr.bf16.mxu0 0
    %1187 = vmatpush1.bf16.msra.mxu0 0
    %1188 = vmatprep.subr.bf16.mxu0 0
    %1189 = vmatpush1.bf16.msra.mxu0 0
    %1190 = vmatprep.mubr.bf16.mxu0 0
    %1191 = vmatmul.mubr.bf16.gmra.mrb[0].mxu0 %v1142
    %v1192 = vpop.f32.mrb[0].mxu0
    %v1193 = vadd.f32 0.0, %v1192
    %v1194 = vpop.f32.mrb[0].mxu0
    %v1195 = vpop.f32.mrb[0].mxu0
    %v1196 = vadd.f32 0.0, %v1195
    %v1197 = vpop.f32.mrb[0].mxu0
    %1198 = vmatprep.mubr.bf16.mxu0 0
    %1199 = vmatmul.mubr.bf16.gmra.mrb[0].mxu0 %v1143
    %v1200 = vpop.f32.mrb[0].mxu0
    %v1201 = vadd.f32 0.0, %v1200
    %v1202 = vpop.f32.mrb[0].mxu0
    %v1203 = vpop.f32.mrb[0].mxu0
    %v1204 = vadd.f32 0.0, %v1203
    %v1205 = vpop.f32.mrb[0].mxu0
    %1206 = vmatprep.mubr.bf16.mxu0 0
    %1207 = vmatmul.mubr.bf16.gmra.mrb[0].mxu0 %v1144
    %v1208 = vpop.f32.mrb[0].mxu0
    %v1209 = vadd.f32 0.0, %v1208
    %v1210 = vpop.f32.mrb[0].mxu0
    %v1211 = vpop.f32.mrb[0].mxu0
    %v1212 = vadd.f32 0.0, %v1211
    %v1213 = vpop.f32.mrb[0].mxu0
    %1214 = vmatprep.mubr.bf16.mxu0 0
    %1215 = vmatmul.mubr.bf16.gmra.mrb[0].mxu0 %v1145
    %v1216 = vpop.f32.mrb[0].mxu0
    %v1217 = vadd.f32 0.0, %v1216
    %v1218 = vpop.f32.mrb[0].mxu0
    %v1219 = vpop.f32.mrb[0].mxu0
    %v1220 = vadd.f32 0.0, %v1219
    %v1221 = vpop.f32.mrb[0].mxu0
    %1222 = vmatprep.mubr.bf16.mxu0 0
    %1223 = vmatmul.mubr.bf16.gmra.mrb[0].mxu0 %v1146
    %v1224 = vpop.f32.mrb[0].mxu0
    %v1225 = vadd.f32 0.0, %v1224
    %v1226 = vpop.f32.mrb[0].mxu0
    %v1227 = vpop.f32.mrb[0].mxu0
    %v1228 = vadd.f32 0.0, %v1227
    %v1229 = vpop.f32.mrb[0].mxu0
    %1230 = vmatprep.mubr.bf16.mxu0 0
    %1231 = vmatmul.mubr.bf16.gmra.mrb[0].mxu0 %v1147
    %v1232 = vpop.f32.mrb[0].mxu0
    %v1233 = vadd.f32 0.0, %v1232
    %v1234 = vpop.f32.mrb[0].mxu0
    %v1235 = vpop.f32.mrb[0].mxu0
    %v1236 = vadd.f32 0.0, %v1235
    %v1237 = vpop.f32.mrb[0].mxu0
    %1238 = vmatprep.mubr.bf16.mxu0 0
    %1239 = vmatmul.mubr.bf16.gmra.mrb[0].mxu0 %v1148
    %v1240 = vpop.f32.mrb[0].mxu0
    %v1241 = vadd.f32 0.0, %v1240
    %v1242 = vpop.f32.mrb[0].mxu0
    %v1243 = vpop.f32.mrb[0].mxu0
    %v1244 = vadd.f32 0.0, %v1243
    %v1245 = vpop.f32.mrb[0].mxu0
    %1246 = vmatprep.mubr.bf16.mxu0 0
    %1247 = vmatmul.mubr.bf16.gmra.mrb[0].mxu0 %v1149
    %v1248 = vpop.f32.mrb[0].mxu0
    %v1249 = vadd.f32 0.0, %v1248
    %v1250 = vpop.f32.mrb[0].mxu0
    %v1251 = vpop.f32.mrb[0].mxu0
    %v1252 = vadd.f32 0.0, %v1251
    %v1253 = vpop.f32.mrb[0].mxu0
    %1254 = vmatprep.mubr.bf16.mxu0 0
    %1255 = vmatmul.mubr.bf16.gmra.mrb[0].mxu0 %v1150
    %v1256 = vpop.f32.mrb[0].mxu0
    %v1257 = vadd.f32 0.0, %v1256
    %v1258 = vpop.f32.mrb[0].mxu0
    %v1259 = vpop.f32.mrb[0].mxu0
    %v1260 = vadd.f32 0.0, %v1259
    %v1261 = vpop.f32.mrb[0].mxu0
    %1262 = vmatprep.mubr.bf16.mxu0 0
    %1263 = vmatmul.mubr.bf16.gmra.mrb[0].mxu0 %v1151
    %v1264 = vpop.f32.mrb[0].mxu0
    %v1265 = vadd.f32 0.0, %v1264
    %v1266 = vpop.f32.mrb[0].mxu0
    %v1267 = vpop.f32.mrb[0].mxu0
    %v1268 = vadd.f32 0.0, %v1267
    %v1269 = vpop.f32.mrb[0].mxu0
    %1270 = vmatprep.mubr.bf16.mxu0 0
    %1271 = vmatmul.mubr.bf16.gmra.mrb[0].mxu0 %v1152
    %v1272 = vpop.f32.mrb[0].mxu0
    %v1273 = vadd.f32 0.0, %v1272
    %v1274 = vpop.f32.mrb[0].mxu0
    %v1275 = vpop.f32.mrb[0].mxu0
    %v1276 = vadd.f32 0.0, %v1275
    %v1277 = vpop.f32.mrb[0].mxu0
    %1278 = vmatprep.mubr.bf16.mxu0 0
    %1279 = vmatmul.mubr.bf16.gmra.mrb[0].mxu0 %v1153
    %v1280 = vpop.f32.mrb[0].mxu0
    %v1281 = vadd.f32 0.0, %v1280
    %v1282 = vpop.f32.mrb[0].mxu0
    %v1283 = vpop.f32.mrb[0].mxu0
    %v1284 = vadd.f32 0.0, %v1283
    %v1285 = vpop.f32.mrb[0].mxu0
    %1286 = vmatprep.mubr.bf16.mxu0 0
    %1287 = vmatmul.mubr.bf16.gmra.mrb[0].mxu0 %v1154
    %v1288 = vpop.f32.mrb[0].mxu0
    %v1289 = vadd.f32 0.0, %v1288
    %v1290 = vpop.f32.mrb[0].mxu0
    %v1291 = vpop.f32.mrb[0].mxu0
    %v1292 = vadd.f32 0.0, %v1291
    %v1293 = vpop.f32.mrb[0].mxu0
    %1294 = vmatprep.mubr.bf16.mxu0 0
    %1295 = vmatmul.mubr.bf16.gmra.mrb[0].mxu0 %v1155
    %v1296 = vpop.f32.mrb[0].mxu0
    %v1297 = vadd.f32 0.0, %v1296
    %v1298 = vpop.f32.mrb[0].mxu0
    %v1299 = vpop.f32.mrb[0].mxu0
    %v1300 = vadd.f32 0.0, %v1299
    %v1301 = vpop.f32.mrb[0].mxu0
    %1302 = vmatprep.mubr.bf16.mxu0 0
    %1303 = vmatmul.mubr.bf16.gmra.mrb[0].mxu0 %v1156
    %v1304 = vpop.f32.mrb[0].mxu0
    %v1305 = vadd.f32 0.0, %v1304
    %v1306 = vpop.f32.mrb[0].mxu0
    %v1307 = vpop.f32.mrb[0].mxu0
    %v1308 = vadd.f32 0.0, %v1307
    %v1309 = vpop.f32.mrb[0].mxu0
    %1310 = vmatprep.mubr.bf16.mxu0 0
    %1311 = vmatmul.mubr.bf16.gmra.mrb[0].mxu0 %v1157
    %v1312 = vpop.f32.mrb[0].mxu0
    %v1313 = vadd.f32 0.0, %v1312
    %v1314 = vpop.f32.mrb[0].mxu0
    %v1315 = vpop.f32.mrb[0].mxu0
    %v1316 = vadd.f32 0.0, %v1315
    %v1317 = vpop.f32.mrb[0].mxu0
    %1318 = vdwg.mxu0
    %v1319 = vmul.f32 %v502, %v837
    %v1320 = vmul.f32 %v506, %v838
    %v1321 = vmul.f32 %v512, %v839
    %v1322 = vmul.f32 %v516, %v840
    %v1323 = vmul.f32 %v522, %v841
    %v1324 = vmul.f32 %v526, %v842
    %v1325 = vmul.f32 %v532, %v843
    %v1326 = vmul.f32 %v536, %v844
    %v1327 = vmul.f32 %v542, %v845
    %v1328 = vmul.f32 %v546, %v846
    %v1329 = vmul.f32 %v552, %v847
    %v1330 = vmul.f32 %v556, %v848
    %v1331 = vmul.f32 %v562, %v849
    %v1332 = vmul.f32 %v566, %v850
    %v1333 = vmul.f32 %v572, %v851
    %v1334 = vmul.f32 %v576, %v852
    %v1335 = vmul.f32 %v582, %v853
    %v1336 = vmul.f32 %v586, %v854
    %v1337 = vmul.f32 %v592, %v855
    %v1338 = vmul.f32 %v596, %v856
    %v1339 = vmul.f32 %v602, %v857
    %v1340 = vmul.f32 %v606, %v858
    %v1341 = vmul.f32 %v612, %v859
    %v1342 = vmul.f32 %v616, %v860
    %v1343 = vmul.f32 %v622, %v861
    %v1344 = vmul.f32 %v626, %v862
    %v1345 = vmul.f32 %v632, %v863
    %v1346 = vmul.f32 %v636, %v864
    %v1347 = vmul.f32 %v642, %v865
    %v1348 = vmul.f32 %v646, %v866
    %v1349 = vmul.f32 %v652, %v867
    %v1350 = vmul.f32 %v656, %v868
    %v1351 = vmul.f32 %v1016, %v869
    %v1352 = vmul.f32 %v1019, %v870
    %v1353 = vmul.f32 %v1024, %v871
    %v1354 = vmul.f32 %v1027, %v872
    %v1355 = vmul.f32 %v1032, %v873
    %v1356 = vmul.f32 %v1035, %v874
    %v1357 = vmul.f32 %v1040, %v875
    %v1358 = vmul.f32 %v1043, %v876
    %v1359 = vmul.f32 %v1048, %v877
    %v1360 = vmul.f32 %v1051, %v878
    %v1361 = vmul.f32 %v1056, %v879
    %v1362 = vmul.f32 %v1059, %v880
    %v1363 = vmul.f32 %v1064, %v881
    %v1364 = vmul.f32 %v1067, %v882
    %v1365 = vmul.f32 %v1072, %v883
    %v1366 = vmul.f32 %v1075, %v884
    %v1367 = vmul.f32 %v1080, %v885
    %v1368 = vmul.f32 %v1083, %v886
    %v1369 = vmul.f32 %v1088, %v887
    %v1370 = vmul.f32 %v1091, %v888
    %v1371 = vmul.f32 %v1096, %v889
    %v1372 = vmul.f32 %v1099, %v890
    %v1373 = vmul.f32 %v1104, %v891
    %v1374 = vmul.f32 %v1107, %v892
    %v1375 = vmul.f32 %v1112, %v893
    %v1376 = vmul.f32 %v1115, %v894
    %v1377 = vmul.f32 %v1120, %v895
    %v1378 = vmul.f32 %v1123, %v896
    %v1379 = vmul.f32 %v1128, %v897
    %v1380 = vmul.f32 %v1131, %v898
    %v1381 = vmul.f32 %v1136, %v899
    %v1382 = vmul.f32 %v1139, %v900
    %v1383 = vadd.f32 %v1319, %v1351
    %v1384 = vadd.f32 %v1320, %v1352
    %v1385 = vadd.f32 %v1321, %v1353
    %v1386 = vadd.f32 %v1322, %v1354
    %v1387 = vadd.f32 %v1323, %v1355
    %v1388 = vadd.f32 %v1324, %v1356
    %v1389 = vadd.f32 %v1325, %v1357
    %v1390 = vadd.f32 %v1326, %v1358
    %v1391 = vadd.f32 %v1327, %v1359
    %v1392 = vadd.f32 %v1328, %v1360
    %v1393 = vadd.f32 %v1329, %v1361
    %v1394 = vadd.f32 %v1330, %v1362
    %v1395 = vadd.f32 %v1331, %v1363
    %v1396 = vadd.f32 %v1332, %v1364
    %v1397 = vadd.f32 %v1333, %v1365
    %v1398 = vadd.f32 %v1334, %v1366
    %v1399 = vadd.f32 %v1335, %v1367
    %v1400 = vadd.f32 %v1336, %v1368
    %v1401 = vadd.f32 %v1337, %v1369
    %v1402 = vadd.f32 %v1338, %v1370
    %v1403 = vadd.f32 %v1339, %v1371
    %v1404 = vadd.f32 %v1340, %v1372
    %v1405 = vadd.f32 %v1341, %v1373
    %v1406 = vadd.f32 %v1342, %v1374
    %v1407 = vadd.f32 %v1343, %v1375
    %v1408 = vadd.f32 %v1344, %v1376
    %v1409 = vadd.f32 %v1345, %v1377
    %v1410 = vadd.f32 %v1346, %v1378
    %v1411 = vadd.f32 %v1347, %v1379
    %v1412 = vadd.f32 %v1348, %v1380
    %v1413 = vadd.f32 %v1349, %v1381
    %v1414 = vadd.f32 %v1350, %v1382
    %v1415 = vpack.c.bf16 %v1384, %v1383
    %v1416 = vpack.c.bf16 %v1386, %v1385
    %v1417 = vpack.c.bf16 %v1388, %v1387
    %v1418 = vpack.c.bf16 %v1390, %v1389
    %v1419 = vpack.c.bf16 %v1392, %v1391
    %v1420 = vpack.c.bf16 %v1394, %v1393
    %v1421 = vpack.c.bf16 %v1396, %v1395
    %v1422 = vpack.c.bf16 %v1398, %v1397
    %v1423 = vpack.c.bf16 %v1400, %v1399
    %v1424 = vpack.c.bf16 %v1402, %v1401
    %v1425 = vpack.c.bf16 %v1404, %v1403
    %v1426 = vpack.c.bf16 %v1406, %v1405
    %v1427 = vpack.c.bf16 %v1408, %v1407
    %v1428 = vpack.c.bf16 %v1410, %v1409
    %v1429 = vpack.c.bf16 %v1412, %v1411
    %v1430 = vpack.c.bf16 %v1414, %v1413
    %v1431 = vmul.f32 %v504, %v837
    %v1432 = vmul.f32 %v508, %v838
    %v1433 = vmul.f32 %v514, %v839
    %v1434 = vmul.f32 %v518, %v840
    %v1435 = vmul.f32 %v524, %v841
    %v1436 = vmul.f32 %v528, %v842
    %v1437 = vmul.f32 %v534, %v843
    %v1438 = vmul.f32 %v538, %v844
    %v1439 = vmul.f32 %v544, %v845
    %v1440 = vmul.f32 %v548, %v846
    %v1441 = vmul.f32 %v554, %v847
    %v1442 = vmul.f32 %v558, %v848
    %v1443 = vmul.f32 %v564, %v849
    %v1444 = vmul.f32 %v568, %v850
    %v1445 = vmul.f32 %v574, %v851
    %v1446 = vmul.f32 %v578, %v852
    %v1447 = vmul.f32 %v584, %v853
    %v1448 = vmul.f32 %v588, %v854
    %v1449 = vmul.f32 %v594, %v855
    %v1450 = vmul.f32 %v598, %v856
    %v1451 = vmul.f32 %v604, %v857
    %v1452 = vmul.f32 %v608, %v858
    %v1453 = vmul.f32 %v614, %v859
    %v1454 = vmul.f32 %v618, %v860
    %v1455 = vmul.f32 %v624, %v861
    %v1456 = vmul.f32 %v628, %v862
    %v1457 = vmul.f32 %v634, %v863
    %v1458 = vmul.f32 %v638, %v864
    %v1459 = vmul.f32 %v644, %v865
    %v1460 = vmul.f32 %v648, %v866
    %v1461 = vmul.f32 %v654, %v867
    %v1462 = vmul.f32 %v658, %v868
    %v1463 = vmul.f32 %v1193, %v869
    %v1464 = vmul.f32 %v1196, %v870
    %v1465 = vmul.f32 %v1201, %v871
    %v1466 = vmul.f32 %v1204, %v872
    %v1467 = vmul.f32 %v1209, %v873
    %v1468 = vmul.f32 %v1212, %v874
    %v1469 = vmul.f32 %v1217, %v875
    %v1470 = vmul.f32 %v1220, %v876
    %v1471 = vmul.f32 %v1225, %v877
    %v1472 = vmul.f32 %v1228, %v878
    %v1473 = vmul.f32 %v1233, %v879
    %v1474 = vmul.f32 %v1236, %v880
    %v1475 = vmul.f32 %v1241, %v881
    %v1476 = vmul.f32 %v1244, %v882
    %v1477 = vmul.f32 %v1249, %v883
    %v1478 = vmul.f32 %v1252, %v884
    %v1479 = vmul.f32 %v1257, %v885
    %v1480 = vmul.f32 %v1260, %v886
    %v1481 = vmul.f32 %v1265, %v887
    %v1482 = vmul.f32 %v1268, %v888
    %v1483 = vmul.f32 %v1273, %v889
    %v1484 = vmul.f32 %v1276, %v890
    %v1485 = vmul.f32 %v1281, %v891
    %v1486 = vmul.f32 %v1284, %v892
    %v1487 = vmul.f32 %v1289, %v893
    %v1488 = vmul.f32 %v1292, %v894
    %v1489 = vmul.f32 %v1297, %v895
    %v1490 = vmul.f32 %v1300, %v896
    %v1491 = vmul.f32 %v1305, %v897
    %v1492 = vmul.f32 %v1308, %v898
    %v1493 = vmul.f32 %v1313, %v899
    %v1494 = vmul.f32 %v1316, %v900
    %v1495 = vadd.f32 %v1431, %v1463
    %v1496 = vadd.f32 %v1432, %v1464
    %v1497 = vadd.f32 %v1433, %v1465
    %v1498 = vadd.f32 %v1434, %v1466
    %v1499 = vadd.f32 %v1435, %v1467
    %v1500 = vadd.f32 %v1436, %v1468
    %v1501 = vadd.f32 %v1437, %v1469
    %v1502 = vadd.f32 %v1438, %v1470
    %v1503 = vadd.f32 %v1439, %v1471
    %v1504 = vadd.f32 %v1440, %v1472
    %v1505 = vadd.f32 %v1441, %v1473
    %v1506 = vadd.f32 %v1442, %v1474
    %v1507 = vadd.f32 %v1443, %v1475
    %v1508 = vadd.f32 %v1444, %v1476
    %v1509 = vadd.f32 %v1445, %v1477
    %v1510 = vadd.f32 %v1446, %v1478
    %v1511 = vadd.f32 %v1447, %v1479
    %v1512 = vadd.f32 %v1448, %v1480
    %v1513 = vadd.f32 %v1449, %v1481
    %v1514 = vadd.f32 %v1450, %v1482
    %v1515 = vadd.f32 %v1451, %v1483
    %v1516 = vadd.f32 %v1452, %v1484
    %v1517 = vadd.f32 %v1453, %v1485
    %v1518 = vadd.f32 %v1454, %v1486
    %v1519 = vadd.f32 %v1455, %v1487
    %v1520 = vadd.f32 %v1456, %v1488
    %v1521 = vadd.f32 %v1457, %v1489
    %v1522 = vadd.f32 %v1458, %v1490
    %v1523 = vadd.f32 %v1459, %v1491
    %v1524 = vadd.f32 %v1460, %v1492
    %v1525 = vadd.f32 %v1461, %v1493
    %v1526 = vadd.f32 %v1462, %v1494
    %v1527 = vpack.c.bf16 %v1496, %v1495
    %v1528 = vpack.c.bf16 %v1498, %v1497
    %v1529 = vpack.c.bf16 %v1500, %v1499
    %v1530 = vpack.c.bf16 %v1502, %v1501
    %v1531 = vpack.c.bf16 %v1504, %v1503
    %v1532 = vpack.c.bf16 %v1506, %v1505
    %v1533 = vpack.c.bf16 %v1508, %v1507
    %v1534 = vpack.c.bf16 %v1510, %v1509
    %v1535 = vpack.c.bf16 %v1512, %v1511
    %v1536 = vpack.c.bf16 %v1514, %v1513
    %v1537 = vpack.c.bf16 %v1516, %v1515
    %v1538 = vpack.c.bf16 %v1518, %v1517
    %v1539 = vpack.c.bf16 %v1520, %v1519
    %v1540 = vpack.c.bf16 %v1522, %v1521
    %v1541 = vpack.c.bf16 %v1524, %v1523
    %v1542 = vpack.c.bf16 %v1526, %v1525
    %v1543 = vld [vmem:[%s8] sm:$0xff]
    %v1544 = vld [vmem:[%s8 + $0x8] sm:$0xff]
    %v1545 = vld [vmem:[%s8 + $0x10] sm:$0xff]
    %v1546 = vld [vmem:[%s8 + $0x18] sm:$0xff]
    %v1547 = vld [vmem:[%s8 + $0x20] sm:$0xff]
    %v1548 = vld [vmem:[%s8 + $0x28] sm:$0xff]
    %v1549 = vld [vmem:[%s8 + $0x30] sm:$0xff]
    %v1550 = vld [vmem:[%s8 + $0x38] sm:$0xff]
    %v1551 = vld [vmem:[%s8 + $0x40] sm:$0xff]
    %v1552 = vld [vmem:[%s8 + $0x48] sm:$0xff]
    %v1553 = vld [vmem:[%s8 + $0x50] sm:$0xff]
    %v1554 = vld [vmem:[%s8 + $0x58] sm:$0xff]
    %v1555 = vld [vmem:[%s8 + $0x60] sm:$0xff]
    %v1556 = vld [vmem:[%s8 + $0x68] sm:$0xff]
    %v1557 = vld [vmem:[%s8 + $0x70] sm:$0xff]
    %v1558 = vld [vmem:[%s8 + $0x78] sm:$0xff]
    %v1559 = vld [vmem:[%s2] sm:$0xf]
    %v1560 = vld [vmem:[%s2 + $0x4] sm:$0xf]
    %v1561 = vld [vmem:[%s2 + $0x8] sm:$0xf]
    %v1562 = vld [vmem:[%s2 + $0xc] sm:$0xf]
    %v1563 = vld [vmem:[%s2 + $0x10] sm:$0xf]
    %v1564 = vld [vmem:[%s2 + $0x14] sm:$0xf]
    %v1565 = vld [vmem:[%s2 + $0x18] sm:$0xf]
    %v1566 = vld [vmem:[%s2 + $0x1c] sm:$0xf]
    %v1567 = vld [vmem:[%s2 + $0x20] sm:$0xf]
    %v1568 = vld [vmem:[%s2 + $0x24] sm:$0xf]
    %v1569 = vld [vmem:[%s2 + $0x28] sm:$0xf]
    %v1570 = vld [vmem:[%s2 + $0x2c] sm:$0xf]
    %v1571 = vld [vmem:[%s2 + $0x30] sm:$0xf]
    %v1572 = vld [vmem:[%s2 + $0x34] sm:$0xf]
    %v1573 = vld [vmem:[%s2 + $0x38] sm:$0xf]
    %v1574 = vld [vmem:[%s2 + $0x3c] sm:$0xf]
    %vm1575 = vcmask 261120
    %v1577 = vsel %vm1575, %v1415, 0
    %v1580 = vsel %vm1575, %v1416, 0
    %v1583 = vsel %vm1575, %v1417, 0
    %v1586 = vsel %vm1575, %v1418, 0
    %v1589 = vsel %vm1575, %v1419, 0
    %v1592 = vsel %vm1575, %v1420, 0
    %v1595 = vsel %vm1575, %v1421, 0
    %v1598 = vsel %vm1575, %v1422, 0
    %v1601 = vsel %vm1575, %v1527, 0
    %v1604 = vsel %vm1575, %v1528, 0
    %v1607 = vsel %vm1575, %v1529, 0
    %v1610 = vsel %vm1575, %v1530, 0
    %v1613 = vsel %vm1575, %v1531, 0
    %v1616 = vsel %vm1575, %v1532, 0
    %v1619 = vsel %vm1575, %v1533, 0
    %v1622 = vsel %vm1575, %v1534, 0
    %1624 = vmatprep.subr.bf16.mxu0 0
    %1625 = vmatpush1.bf16.xpose.msra.mxu0 %v1601
    %1626 = vmatprep.subr.bf16.mxu0 0
    %1627 = vmatpush1.bf16.xpose.msra.mxu0 %v1604
    %1628 = vmatprep.subr.bf16.mxu0 0
    %1629 = vmatpush1.bf16.xpose.msra.mxu0 %v1607
    %1630 = vmatprep.subr.bf16.mxu0 0
    %1631 = vmatpush1.bf16.xpose.msra.mxu0 %v1610
    %1632 = vmatprep.subr.bf16.mxu0 0
    %1633 = vmatpush1.bf16.xpose.msra.mxu0 %v1613
    %1634 = vmatprep.subr.bf16.mxu0 0
    %1635 = vmatpush1.bf16.xpose.msra.mxu0 %v1616
    %1636 = vmatprep.subr.bf16.mxu0 0
    %1637 = vmatpush1.bf16.xpose.msra.mxu0 %v1619
    %1638 = vmatprep.subr.bf16.mxu0 0
    %1639 = vmatpush1.bf16.xpose.msra.mxu0 %v1622
    %1640 = vmatprep.subr.bf16.mxu0 0
    %1641 = vmatpush1.bf16.xpose.msra.mxu0 0
    %1642 = vmatprep.subr.bf16.mxu0 0
    %1643 = vmatpush1.bf16.xpose.msra.mxu0 0
    %1644 = vmatprep.subr.bf16.mxu0 0
    %1645 = vmatpush1.bf16.xpose.msra.mxu0 0
    %1646 = vmatprep.subr.bf16.mxu0 0
    %1647 = vmatpush1.bf16.xpose.msra.mxu0 0
    %1648 = vmatprep.subr.bf16.mxu0 0
    %1649 = vmatpush1.bf16.xpose.msra.mxu0 0
    %1650 = vmatprep.subr.bf16.mxu0 0
    %1651 = vmatpush1.bf16.xpose.msra.mxu0 0
    %1652 = vmatprep.subr.bf16.mxu0 0
    %1653 = vmatpush1.bf16.xpose.msra.mxu0 0
    %1654 = vmatprep.subr.bf16.mxu0 0
    %1655 = vmatpush1.bf16.xpose.msra.mxu0 0
    %1656 = vmatprep.mubr.bf16.mxu0 0
    %1657 = vmatmul.mubr.bf16.gmra.mrb[0].mxu0 %v1577
    %v1658 = vpop.f32.mrb[0].mxu0
    %v1659 = vadd.f32 0.0, %v1658
    %v1660 = vpop.f32.mrb[0].mxu0
    %v1661 = vpop.f32.mrb[0].mxu0
    %v1662 = vadd.f32 0.0, %v1661
    %v1663 = vpop.f32.mrb[0].mxu0
    %1664 = vmatprep.mubr.bf16.mxu0 0
    %1665 = vmatmul.mubr.bf16.gmra.mrb[0].mxu0 %v1580
    %v1666 = vpop.f32.mrb[0].mxu0
    %v1667 = vadd.f32 0.0, %v1666
    %v1668 = vpop.f32.mrb[0].mxu0
    %v1669 = vpop.f32.mrb[0].mxu0
    %v1670 = vadd.f32 0.0, %v1669
    %v1671 = vpop.f32.mrb[0].mxu0
    %1672 = vmatprep.mubr.bf16.mxu0 0
    %1673 = vmatmul.mubr.bf16.gmra.mrb[0].mxu0 %v1583
    %v1674 = vpop.f32.mrb[0].mxu0
    %v1675 = vadd.f32 0.0, %v1674
    %v1676 = vpop.f32.mrb[0].mxu0
    %v1677 = vpop.f32.mrb[0].mxu0
    %v1678 = vadd.f32 0.0, %v1677
    %v1679 = vpop.f32.mrb[0].mxu0
    %1680 = vmatprep.mubr.bf16.mxu0 0
    %1681 = vmatmul.mubr.bf16.gmra.mrb[0].mxu0 %v1586
    %v1682 = vpop.f32.mrb[0].mxu0
    %v1683 = vadd.f32 0.0, %v1682
    %v1684 = vpop.f32.mrb[0].mxu0
    %v1685 = vpop.f32.mrb[0].mxu0
    %v1686 = vadd.f32 0.0, %v1685
    %v1687 = vpop.f32.mrb[0].mxu0
    %1688 = vmatprep.mubr.bf16.mxu0 0
    %1689 = vmatmul.mubr.bf16.gmra.mrb[0].mxu0 %v1589
    %v1690 = vpop.f32.mrb[0].mxu0
    %v1691 = vadd.f32 0.0, %v1690
    %v1692 = vpop.f32.mrb[0].mxu0
    %v1693 = vpop.f32.mrb[0].mxu0
    %v1694 = vadd.f32 0.0, %v1693
    %v1695 = vpop.f32.mrb[0].mxu0
    %1696 = vmatprep.mubr.bf16.mxu0 0
    %1697 = vmatmul.mubr.bf16.gmra.mrb[0].mxu0 %v1592
    %v1698 = vpop.f32.mrb[0].mxu0
    %v1699 = vadd.f32 0.0, %v1698
    %v1700 = vpop.f32.mrb[0].mxu0
    %v1701 = vpop.f32.mrb[0].mxu0
    %v1702 = vadd.f32 0.0, %v1701
    %v1703 = vpop.f32.mrb[0].mxu0
    %1704 = vmatprep.mubr.bf16.mxu0 0
    %1705 = vmatmul.mubr.bf16.gmra.mrb[0].mxu0 %v1595
    %v1706 = vpop.f32.mrb[0].mxu0
    %v1707 = vadd.f32 0.0, %v1706
    %v1708 = vpop.f32.mrb[0].mxu0
    %v1709 = vpop.f32.mrb[0].mxu0
    %v1710 = vadd.f32 0.0, %v1709
    %v1711 = vpop.f32.mrb[0].mxu0
    %1712 = vmatprep.mubr.bf16.mxu0 0
    %1713 = vmatmul.mubr.bf16.gmra.mrb[0].mxu0 %v1598
    %v1714 = vpop.f32.mrb[0].mxu0
    %v1715 = vadd.f32 0.0, %v1714
    %v1716 = vpop.f32.mrb[0].mxu0
    %v1717 = vpop.f32.mrb[0].mxu0
    %v1718 = vadd.f32 0.0, %v1717
    %v1719 = vpop.f32.mrb[0].mxu0
    %1720 = vdwg.mxu0
    %v1721 = vmul.f32 %v1659, 0.17677669
    %v1722 = vmul.f32 %v1662, 0.17677669
    %v1723 = vmul.f32 %v1667, 0.17677669
    %v1724 = vmul.f32 %v1670, 0.17677669
    %v1725 = vmul.f32 %v1675, 0.17677669
    %v1726 = vmul.f32 %v1678, 0.17677669
    %v1727 = vmul.f32 %v1683, 0.17677669
    %v1728 = vmul.f32 %v1686, 0.17677669
    %v1729 = vmul.f32 %v1691, 0.17677669
    %v1730 = vmul.f32 %v1694, 0.17677669
    %v1731 = vmul.f32 %v1699, 0.17677669
    %v1732 = vmul.f32 %v1702, 0.17677669
    %v1733 = vmul.f32 %v1707, 0.17677669
    %v1734 = vmul.f32 %v1710, 0.17677669
    %v1735 = vmul.f32 %v1715, 0.17677669
    %v1736 = vmul.f32 %v1718, 0.17677669
    %v1737 = vadd.f32 %v1721, %v1543
    %v1738 = vadd.f32 %v1722, %v1544
    %v1739 = vadd.f32 %v1723, %v1545
    %v1740 = vadd.f32 %v1724, %v1546
    %v1741 = vadd.f32 %v1725, %v1547
    %v1742 = vadd.f32 %v1726, %v1548
    %v1743 = vadd.f32 %v1727, %v1549
    %v1744 = vadd.f32 %v1728, %v1550
    %v1745 = vadd.f32 %v1729, %v1551
    %v1746 = vadd.f32 %v1730, %v1552
    %v1747 = vadd.f32 %v1731, %v1553
    %v1748 = vadd.f32 %v1732, %v1554
    %v1749 = vadd.f32 %v1733, %v1555
    %v1750 = vadd.f32 %v1734, %v1556
    %v1751 = vadd.f32 %v1735, %v1557
    %v1752 = vadd.f32 %v1736, %v1558
    %1753 = vmax.xlane.f32.xlu0 %v1737
    %v1754 = vpop.xlane.xlu0 %1753
    %1755 = vmax.xlane.f32.xlu0 %v1738
    %v1756 = vpop.xlane.xlu0 %1755
    %1757 = vmax.xlane.f32.xlu0 %v1739
    %v1758 = vpop.xlane.xlu0 %1757
    %1759 = vmax.xlane.f32.xlu0 %v1740
    %v1760 = vpop.xlane.xlu0 %1759
    %1761 = vmax.xlane.f32.xlu0 %v1741
    %v1762 = vpop.xlane.xlu0 %1761
    %1763 = vmax.xlane.f32.xlu0 %v1742
    %v1764 = vpop.xlane.xlu0 %1763
    %1765 = vmax.xlane.f32.xlu0 %v1743
    %v1766 = vpop.xlane.xlu0 %1765
    %1767 = vmax.xlane.f32.xlu0 %v1744
    %v1768 = vpop.xlane.xlu0 %1767
    %1769 = vmax.xlane.f32.xlu0 %v1745
    %v1770 = vpop.xlane.xlu0 %1769
    %1771 = vmax.xlane.f32.xlu0 %v1746
    %v1772 = vpop.xlane.xlu0 %1771
    %1773 = vmax.xlane.f32.xlu0 %v1747
    %v1774 = vpop.xlane.xlu0 %1773
    %1775 = vmax.xlane.f32.xlu0 %v1748
    %v1776 = vpop.xlane.xlu0 %1775
    %1777 = vmax.xlane.f32.xlu0 %v1749
    %v1778 = vpop.xlane.xlu0 %1777
    %1779 = vmax.xlane.f32.xlu0 %v1750
    %v1780 = vpop.xlane.xlu0 %1779
    %1781 = vmax.xlane.f32.xlu0 %v1751
    %v1782 = vpop.xlane.xlu0 %1781
    %1783 = vmax.xlane.f32.xlu0 %v1752
    %v1784 = vpop.xlane.xlu0 %1783
    %v1785 = vsub.f32 %v1737, %v1754
    %v1786 = vsub.f32 %v1738, %v1756
    %v1787 = vsub.f32 %v1739, %v1758
    %v1788 = vsub.f32 %v1740, %v1760
    %v1789 = vsub.f32 %v1741, %v1762
    %v1790 = vsub.f32 %v1742, %v1764
    %v1791 = vsub.f32 %v1743, %v1766
    %v1792 = vsub.f32 %v1744, %v1768
    %v1793 = vsub.f32 %v1745, %v1770
    %v1794 = vsub.f32 %v1746, %v1772
    %v1795 = vsub.f32 %v1747, %v1774
    %v1796 = vsub.f32 %v1748, %v1776
    %v1797 = vsub.f32 %v1749, %v1778
    %v1798 = vsub.f32 %v1750, %v1780
    %v1799 = vsub.f32 %v1751, %v1782
    %v1800 = vsub.f32 %v1752, %v1784
    %v1801 = vmul.f32 %v1785, 1.442695
    %v1802 = vpow.pop %v1801
    %v1803 = vmul.f32 %v1786, 1.442695
    %v1804 = vpow.pop %v1803
    %v1805 = vmul.f32 %v1787, 1.442695
    %v1806 = vpow.pop %v1805
    %v1807 = vmul.f32 %v1788, 1.442695
    %v1808 = vpow.pop %v1807
    %v1809 = vmul.f32 %v1789, 1.442695
    %v1810 = vpow.pop %v1809
    %v1811 = vmul.f32 %v1790, 1.442695
    %v1812 = vpow.pop %v1811
    %v1813 = vmul.f32 %v1791, 1.442695
    %v1814 = vpow.pop %v1813
    %v1815 = vmul.f32 %v1792, 1.442695
    %v1816 = vpow.pop %v1815
    %v1817 = vmul.f32 %v1793, 1.442695
    %v1818 = vpow.pop %v1817
    %v1819 = vmul.f32 %v1794, 1.442695
    %v1820 = vpow.pop %v1819
    %v1821 = vmul.f32 %v1795, 1.442695
    %v1822 = vpow.pop %v1821
    %v1823 = vmul.f32 %v1796, 1.442695
    %v1824 = vpow.pop %v1823
    %v1825 = vmul.f32 %v1797, 1.442695
    %v1826 = vpow.pop %v1825
    %v1827 = vmul.f32 %v1798, 1.442695
    %v1828 = vpow.pop %v1827
    %v1829 = vmul.f32 %v1799, 1.442695
    %v1830 = vpow.pop %v1829
    %v1831 = vmul.f32 %v1800, 1.442695
    %v1832 = vpow.pop %v1831
    %1833 = vadd.xlane.f32.xlu0 %v1802
    %v1834 = vpop.xlane.xlu0 %1833
    %1835 = vadd.xlane.f32.xlu0 %v1804
    %v1836 = vpop.xlane.xlu0 %1835
    %1837 = vadd.xlane.f32.xlu0 %v1806
    %v1838 = vpop.xlane.xlu0 %1837
    %1839 = vadd.xlane.f32.xlu0 %v1808
    %v1840 = vpop.xlane.xlu0 %1839
    %1841 = vadd.xlane.f32.xlu0 %v1810
    %v1842 = vpop.xlane.xlu0 %1841
    %1843 = vadd.xlane.f32.xlu0 %v1812
    %v1844 = vpop.xlane.xlu0 %1843
    %1845 = vadd.xlane.f32.xlu0 %v1814
    %v1846 = vpop.xlane.xlu0 %1845
    %1847 = vadd.xlane.f32.xlu0 %v1816
    %v1848 = vpop.xlane.xlu0 %1847
    %1849 = vadd.xlane.f32.xlu0 %v1818
    %v1850 = vpop.xlane.xlu0 %1849
    %1851 = vadd.xlane.f32.xlu0 %v1820
    %v1852 = vpop.xlane.xlu0 %1851
    %1853 = vadd.xlane.f32.xlu0 %v1822
    %v1854 = vpop.xlane.xlu0 %1853
    %1855 = vadd.xlane.f32.xlu0 %v1824
    %v1856 = vpop.xlane.xlu0 %1855
    %1857 = vadd.xlane.f32.xlu0 %v1826
    %v1858 = vpop.xlane.xlu0 %1857
    %1859 = vadd.xlane.f32.xlu0 %v1828
    %v1860 = vpop.xlane.xlu0 %1859
    %1861 = vadd.xlane.f32.xlu0 %v1830
    %v1862 = vpop.xlane.xlu0 %1861
    %1863 = vadd.xlane.f32.xlu0 %v1832
    %v1864 = vpop.xlane.xlu0 %1863
    %v1865 = vpack.c.bf16 %v1804, %v1802
    %v1866 = vpack.c.bf16 %v1808, %v1806
    %v1867 = vpack.c.bf16 %v1812, %v1810
    %v1868 = vpack.c.bf16 %v1816, %v1814
    %v1869 = vpack.c.bf16 %v1820, %v1818
    %v1870 = vpack.c.bf16 %v1824, %v1822
    %v1871 = vpack.c.bf16 %v1828, %v1826
    %v1872 = vpack.c.bf16 %v1832, %v1830
    %1873 = vmatprep.subr.bf16.mxu0 0
    %1874 = vmatpush1.bf16.msra.mxu0 %v821
    %1875 = vmatprep.subr.bf16.mxu0 0
    %1876 = vmatpush1.bf16.msra.mxu0 %v822
    %1877 = vmatprep.subr.bf16.mxu0 0
    %1878 = vmatpush1.bf16.msra.mxu0 %v823
    %1879 = vmatprep.subr.bf16.mxu0 0
    %1880 = vmatpush1.bf16.msra.mxu0 %v824
    %1881 = vmatprep.subr.bf16.mxu0 0
    %1882 = vmatpush1.bf16.msra.mxu0 %v825
    %1883 = vmatprep.subr.bf16.mxu0 0
    %1884 = vmatpush1.bf16.msra.mxu0 %v826
    %1885 = vmatprep.subr.bf16.mxu0 0
    %1886 = vmatpush1.bf16.msra.mxu0 %v827
    %1887 = vmatprep.subr.bf16.mxu0 0
    %1888 = vmatpush1.bf16.msra.mxu0 %v828
    %1889 = vmatprep.subr.bf16.mxu0 0
    %1890 = vmatpush1.bf16.msra.mxu0 0
    %1891 = vmatprep.subr.bf16.mxu0 0
    %1892 = vmatpush1.bf16.msra.mxu0 0
    %1893 = vmatprep.subr.bf16.mxu0 0
    %1894 = vmatpush1.bf16.msra.mxu0 0
    %1895 = vmatprep.subr.bf16.mxu0 0
    %1896 = vmatpush1.bf16.msra.mxu0 0
    %1897 = vmatprep.subr.bf16.mxu0 0
    %1898 = vmatpush1.bf16.msra.mxu0 0
    %1899 = vmatprep.subr.bf16.mxu0 0
    %1900 = vmatpush1.bf16.msra.mxu0 0
    %1901 = vmatprep.subr.bf16.mxu0 0
    %1902 = vmatpush1.bf16.msra.mxu0 0
    %1903 = vmatprep.subr.bf16.mxu0 0
    %1904 = vmatpush1.bf16.msra.mxu0 0
    %1905 = vmatprep.mubr.bf16.mxu0 0
    %1906 = vmatmul.mubr.bf16.gmra.mrb[0].mxu0 %v1865
    %v1907 = vpop.f32.mrb[0].mxu0
    %v1908 = vadd.f32 0.0, %v1907
    %v1909 = vpop.f32.mrb[0].mxu0
    %v1910 = vpop.f32.mrb[0].mxu0
    %v1911 = vadd.f32 0.0, %v1910
    %v1912 = vpop.f32.mrb[0].mxu0
    %1913 = vmatprep.mubr.bf16.mxu0 0
    %1914 = vmatmul.mubr.bf16.gmra.mrb[0].mxu0 %v1866
    %v1915 = vpop.f32.mrb[0].mxu0
    %v1916 = vadd.f32 0.0, %v1915
    %v1917 = vpop.f32.mrb[0].mxu0
    %v1918 = vpop.f32.mrb[0].mxu0
    %v1919 = vadd.f32 0.0, %v1918
    %v1920 = vpop.f32.mrb[0].mxu0
    %1921 = vmatprep.mubr.bf16.mxu0 0
    %1922 = vmatmul.mubr.bf16.gmra.mrb[0].mxu0 %v1867
    %v1923 = vpop.f32.mrb[0].mxu0
    %v1924 = vadd.f32 0.0, %v1923
    %v1925 = vpop.f32.mrb[0].mxu0
    %v1926 = vpop.f32.mrb[0].mxu0
    %v1927 = vadd.f32 0.0, %v1926
    %v1928 = vpop.f32.mrb[0].mxu0
    %1929 = vmatprep.mubr.bf16.mxu0 0
    %1930 = vmatmul.mubr.bf16.gmra.mrb[0].mxu0 %v1868
    %v1931 = vpop.f32.mrb[0].mxu0
    %v1932 = vadd.f32 0.0, %v1931
    %v1933 = vpop.f32.mrb[0].mxu0
    %v1934 = vpop.f32.mrb[0].mxu0
    %v1935 = vadd.f32 0.0, %v1934
    %v1936 = vpop.f32.mrb[0].mxu0
    %1937 = vmatprep.mubr.bf16.mxu0 0
    %1938 = vmatmul.mubr.bf16.gmra.mrb[0].mxu0 %v1869
    %v1939 = vpop.f32.mrb[0].mxu0
    %v1940 = vadd.f32 0.0, %v1939
    %v1941 = vpop.f32.mrb[0].mxu0
    %v1942 = vpop.f32.mrb[0].mxu0
    %v1943 = vadd.f32 0.0, %v1942
    %v1944 = vpop.f32.mrb[0].mxu0
    %1945 = vmatprep.mubr.bf16.mxu0 0
    %1946 = vmatmul.mubr.bf16.gmra.mrb[0].mxu0 %v1870
    %v1947 = vpop.f32.mrb[0].mxu0
    %v1948 = vadd.f32 0.0, %v1947
    %v1949 = vpop.f32.mrb[0].mxu0
    %v1950 = vpop.f32.mrb[0].mxu0
    %v1951 = vadd.f32 0.0, %v1950
    %v1952 = vpop.f32.mrb[0].mxu0
    %1953 = vmatprep.mubr.bf16.mxu0 0
    %1954 = vmatmul.mubr.bf16.gmra.mrb[0].mxu0 %v1871
    %v1955 = vpop.f32.mrb[0].mxu0
    %v1956 = vadd.f32 0.0, %v1955
    %v1957 = vpop.f32.mrb[0].mxu0
    %v1958 = vpop.f32.mrb[0].mxu0
    %v1959 = vadd.f32 0.0, %v1958
    %v1960 = vpop.f32.mrb[0].mxu0
    %1961 = vmatprep.mubr.bf16.mxu0 0
    %1962 = vmatmul.mubr.bf16.gmra.mrb[0].mxu0 %v1872
    %v1963 = vpop.f32.mrb[0].mxu0
    %v1964 = vadd.f32 0.0, %v1963
    %v1965 = vpop.f32.mrb[0].mxu0
    %v1966 = vpop.f32.mrb[0].mxu0
    %v1967 = vadd.f32 0.0, %v1966
    %v1968 = vpop.f32.mrb[0].mxu0
    %1969 = vdwg.mxu0
    %v1970 = vrcp.pop %v1834
    %v1971 = vrcp.pop %v1836
    %v1972 = vrcp.pop %v1838
    %v1973 = vrcp.pop %v1840
    %v1974 = vrcp.pop %v1842
    %v1975 = vrcp.pop %v1844
    %v1976 = vrcp.pop %v1846
    %v1977 = vrcp.pop %v1848
    %v1978 = vrcp.pop %v1850
    %v1979 = vrcp.pop %v1852
    %v1980 = vrcp.pop %v1854
    %v1981 = vrcp.pop %v1856
    %v1982 = vrcp.pop %v1858
    %v1983 = vrcp.pop %v1860
    %v1984 = vrcp.pop %v1862
    %v1985 = vrcp.pop %v1864
    %v1986 = vmul.f32 %v1908, %v1970
    %v1987 = vmul.f32 %v1911, %v1971
    %v1988 = vmul.f32 %v1916, %v1972
    %v1989 = vmul.f32 %v1919, %v1973
    %v1990 = vmul.f32 %v1924, %v1974
    %v1991 = vmul.f32 %v1927, %v1975
    %v1992 = vmul.f32 %v1932, %v1976
    %v1993 = vmul.f32 %v1935, %v1977
    %v1994 = vmul.f32 %v1940, %v1978
    %v1995 = vmul.f32 %v1943, %v1979
    %v1996 = vmul.f32 %v1948, %v1980
    %v1997 = vmul.f32 %v1951, %v1981
    %v1998 = vmul.f32 %v1956, %v1982
    %v1999 = vmul.f32 %v1959, %v1983
    %v2000 = vmul.f32 %v1964, %v1984
    %v2001 = vmul.f32 %v1967, %v1985
    %v2002 = vpack.c.bf16 %v1987, %v1986
    %v2003 = vpack.c.bf16 %v1989, %v1988
    %v2004 = vpack.c.bf16 %v1991, %v1990
    %v2005 = vpack.c.bf16 %v1993, %v1992
    %v2006 = vpack.c.bf16 %v1995, %v1994
    %v2007 = vpack.c.bf16 %v1997, %v1996
    %v2008 = vpack.c.bf16 %v1999, %v1998
    %v2009 = vpack.c.bf16 %v2001, %v2000
    %2018 = vrot.lane.b32.xlu0 %v1415, 96
    %v2019 = vpop.permute.xlu0 %2018
    %2020 = vrot.lane.b32.xlu0 %v1416, 96
    %v2021 = vpop.permute.xlu0 %2020
    %2022 = vrot.lane.b32.xlu0 %v1417, 96
    %v2023 = vpop.permute.xlu0 %2022
    %2024 = vrot.lane.b32.xlu0 %v1418, 96
    %v2025 = vpop.permute.xlu0 %2024
    %2026 = vrot.lane.b32.xlu0 %v1419, 96
    %v2027 = vpop.permute.xlu0 %2026
    %2028 = vrot.lane.b32.xlu0 %v1420, 96
    %v2029 = vpop.permute.xlu0 %2028
    %2030 = vrot.lane.b32.xlu0 %v1421, 96
    %v2031 = vpop.permute.xlu0 %2030
    %2032 = vrot.lane.b32.xlu0 %v1422, 96
    %v2033 = vpop.permute.xlu0 %2032
    %2042 = vrot.lane.b32.xlu0 %v1527, 96
    %v2043 = vpop.permute.xlu0 %2042
    %2044 = vrot.lane.b32.xlu0 %v1528, 96
    %v2045 = vpop.permute.xlu0 %2044
    %2046 = vrot.lane.b32.xlu0 %v1529, 96
    %v2047 = vpop.permute.xlu0 %2046
    %2048 = vrot.lane.b32.xlu0 %v1530, 96
    %v2049 = vpop.permute.xlu0 %2048
    %2050 = vrot.lane.b32.xlu0 %v1531, 96
    %v2051 = vpop.permute.xlu0 %2050
    %2052 = vrot.lane.b32.xlu0 %v1532, 96
    %v2053 = vpop.permute.xlu0 %2052
    %2054 = vrot.lane.b32.xlu0 %v1533, 96
    %v2055 = vpop.permute.xlu0 %2054
    %2056 = vrot.lane.b32.xlu0 %v1534, 96
    %v2057 = vpop.permute.xlu0 %2056
    %v2059 = vsel %vm1575, %v2019, 0
    %v2062 = vsel %vm1575, %v2021, 0
    %v2065 = vsel %vm1575, %v2023, 0
    %v2068 = vsel %vm1575, %v2025, 0
    %v2071 = vsel %vm1575, %v2027, 0
    %v2074 = vsel %vm1575, %v2029, 0
    %v2077 = vsel %vm1575, %v2031, 0
    %v2080 = vsel %vm1575, %v2033, 0
    %v2083 = vsel %vm1575, %v2043, 0
    %v2086 = vsel %vm1575, %v2045, 0
    %v2089 = vsel %vm1575, %v2047, 0
    %v2092 = vsel %vm1575, %v2049, 0
    %v2095 = vsel %vm1575, %v2051, 0
    %v2098 = vsel %vm1575, %v2053, 0
    %v2101 = vsel %vm1575, %v2055, 0
    %v2104 = vsel %vm1575, %v2057, 0
    %2106 = vmatprep.subr.bf16.mxu0 0
    %2107 = vmatpush1.bf16.xpose.msra.mxu0 %v2083
    %2108 = vmatprep.subr.bf16.mxu0 0
    %2109 = vmatpush1.bf16.xpose.msra.mxu0 %v2086
    %2110 = vmatprep.subr.bf16.mxu0 0
    %2111 = vmatpush1.bf16.xpose.msra.mxu0 %v2089
    %2112 = vmatprep.subr.bf16.mxu0 0
    %2113 = vmatpush1.bf16.xpose.msra.mxu0 %v2092
    %2114 = vmatprep.subr.bf16.mxu0 0
    %2115 = vmatpush1.bf16.xpose.msra.mxu0 %v2095
    %2116 = vmatprep.subr.bf16.mxu0 0
    %2117 = vmatpush1.bf16.xpose.msra.mxu0 %v2098
    %2118 = vmatprep.subr.bf16.mxu0 0
    %2119 = vmatpush1.bf16.xpose.msra.mxu0 %v2101
    %2120 = vmatprep.subr.bf16.mxu0 0
    %2121 = vmatpush1.bf16.xpose.msra.mxu0 %v2104
    %2122 = vmatprep.subr.bf16.mxu0 0
    %2123 = vmatpush1.bf16.xpose.msra.mxu0 0
    %2124 = vmatprep.subr.bf16.mxu0 0
    %2125 = vmatpush1.bf16.xpose.msra.mxu0 0
    %2126 = vmatprep.subr.bf16.mxu0 0
    %2127 = vmatpush1.bf16.xpose.msra.mxu0 0
    %2128 = vmatprep.subr.bf16.mxu0 0
    %2129 = vmatpush1.bf16.xpose.msra.mxu0 0
    %2130 = vmatprep.subr.bf16.mxu0 0
    %2131 = vmatpush1.bf16.xpose.msra.mxu0 0
    %2132 = vmatprep.subr.bf16.mxu0 0
    %2133 = vmatpush1.bf16.xpose.msra.mxu0 0
    %2134 = vmatprep.subr.bf16.mxu0 0
    %2135 = vmatpush1.bf16.xpose.msra.mxu0 0
    %2136 = vmatprep.subr.bf16.mxu0 0
    %2137 = vmatpush1.bf16.xpose.msra.mxu0 0
    %2138 = vmatprep.mubr.bf16.mxu0 0
    %2139 = vmatmul.mubr.bf16.gmra.mrb[0].mxu0 %v2059
    %v2140 = vpop.f32.mrb[0].mxu0
    %v2141 = vadd.f32 0.0, %v2140
    %v2142 = vpop.f32.mrb[0].mxu0
    %v2143 = vpop.f32.mrb[0].mxu0
    %v2144 = vadd.f32 0.0, %v2143
    %v2145 = vpop.f32.mrb[0].mxu0
    %2146 = vmatprep.mubr.bf16.mxu0 0
    %2147 = vmatmul.mubr.bf16.gmra.mrb[0].mxu0 %v2062
    %v2148 = vpop.f32.mrb[0].mxu0
    %v2149 = vadd.f32 0.0, %v2148
    %v2150 = vpop.f32.mrb[0].mxu0
    %v2151 = vpop.f32.mrb[0].mxu0
    %v2152 = vadd.f32 0.0, %v2151
    %v2153 = vpop.f32.mrb[0].mxu0
    %2154 = vmatprep.mubr.bf16.mxu0 0
    %2155 = vmatmul.mubr.bf16.gmra.mrb[0].mxu0 %v2065
    %v2156 = vpop.f32.mrb[0].mxu0
    %v2157 = vadd.f32 0.0, %v2156
    %v2158 = vpop.f32.mrb[0].mxu0
    %v2159 = vpop.f32.mrb[0].mxu0
    %v2160 = vadd.f32 0.0, %v2159
    %v2161 = vpop.f32.mrb[0].mxu0
    %2162 = vmatprep.mubr.bf16.mxu0 0
    %2163 = vmatmul.mubr.bf16.gmra.mrb[0].mxu0 %v2068
    %v2164 = vpop.f32.mrb[0].mxu0
    %v2165 = vadd.f32 0.0, %v2164
    %v2166 = vpop.f32.mrb[0].mxu0
    %v2167 = vpop.f32.mrb[0].mxu0
    %v2168 = vadd.f32 0.0, %v2167
    %v2169 = vpop.f32.mrb[0].mxu0
    %2170 = vmatprep.mubr.bf16.mxu0 0
    %2171 = vmatmul.mubr.bf16.gmra.mrb[0].mxu0 %v2071
    %v2172 = vpop.f32.mrb[0].mxu0
    %v2173 = vadd.f32 0.0, %v2172
    %v2174 = vpop.f32.mrb[0].mxu0
    %v2175 = vpop.f32.mrb[0].mxu0
    %v2176 = vadd.f32 0.0, %v2175
    %v2177 = vpop.f32.mrb[0].mxu0
    %2178 = vmatprep.mubr.bf16.mxu0 0
    %2179 = vmatmul.mubr.bf16.gmra.mrb[0].mxu0 %v2074
    %v2180 = vpop.f32.mrb[0].mxu0
    %v2181 = vadd.f32 0.0, %v2180
    %v2182 = vpop.f32.mrb[0].mxu0
    %v2183 = vpop.f32.mrb[0].mxu0
    %v2184 = vadd.f32 0.0, %v2183
    %v2185 = vpop.f32.mrb[0].mxu0
    %2186 = vmatprep.mubr.bf16.mxu0 0
    %2187 = vmatmul.mubr.bf16.gmra.mrb[0].mxu0 %v2077
    %v2188 = vpop.f32.mrb[0].mxu0
    %v2189 = vadd.f32 0.0, %v2188
    %v2190 = vpop.f32.mrb[0].mxu0
    %v2191 = vpop.f32.mrb[0].mxu0
    %v2192 = vadd.f32 0.0, %v2191
    %v2193 = vpop.f32.mrb[0].mxu0
    %2194 = vmatprep.mubr.bf16.mxu0 0
    %2195 = vmatmul.mubr.bf16.gmra.mrb[0].mxu0 %v2080
    %v2196 = vpop.f32.mrb[0].mxu0
    %v2197 = vadd.f32 0.0, %v2196
    %v2198 = vpop.f32.mrb[0].mxu0
    %v2199 = vpop.f32.mrb[0].mxu0
    %v2200 = vadd.f32 0.0, %v2199
    %v2201 = vpop.f32.mrb[0].mxu0
    %2202 = vdwg.mxu0
    %v2203 = vmul.f32 %v2141, 0.17677669
    %v2204 = vmul.f32 %v2144, 0.17677669
    %v2205 = vmul.f32 %v2149, 0.17677669
    %v2206 = vmul.f32 %v2152, 0.17677669
    %v2207 = vmul.f32 %v2157, 0.17677669
    %v2208 = vmul.f32 %v2160, 0.17677669
    %v2209 = vmul.f32 %v2165, 0.17677669
    %v2210 = vmul.f32 %v2168, 0.17677669
    %v2211 = vmul.f32 %v2173, 0.17677669
    %v2212 = vmul.f32 %v2176, 0.17677669
    %v2213 = vmul.f32 %v2181, 0.17677669
    %v2214 = vmul.f32 %v2184, 0.17677669
    %v2215 = vmul.f32 %v2189, 0.17677669
    %v2216 = vmul.f32 %v2192, 0.17677669
    %v2217 = vmul.f32 %v2197, 0.17677669
    %v2218 = vmul.f32 %v2200, 0.17677669
    %v2219 = vadd.f32 %v2203, %v1543
    %v2220 = vadd.f32 %v2204, %v1544
    %v2221 = vadd.f32 %v2205, %v1545
    %v2222 = vadd.f32 %v2206, %v1546
    %v2223 = vadd.f32 %v2207, %v1547
    %v2224 = vadd.f32 %v2208, %v1548
    %v2225 = vadd.f32 %v2209, %v1549
    %v2226 = vadd.f32 %v2210, %v1550
    %v2227 = vadd.f32 %v2211, %v1551
    %v2228 = vadd.f32 %v2212, %v1552
    %v2229 = vadd.f32 %v2213, %v1553
    %v2230 = vadd.f32 %v2214, %v1554
    %v2231 = vadd.f32 %v2215, %v1555
    %v2232 = vadd.f32 %v2216, %v1556
    %v2233 = vadd.f32 %v2217, %v1557
    %v2234 = vadd.f32 %v2218, %v1558
    %2235 = vmax.xlane.f32.xlu0 %v2219
    %v2236 = vpop.xlane.xlu0 %2235
    %2237 = vmax.xlane.f32.xlu0 %v2220
    %v2238 = vpop.xlane.xlu0 %2237
    %2239 = vmax.xlane.f32.xlu0 %v2221
    %v2240 = vpop.xlane.xlu0 %2239
    %2241 = vmax.xlane.f32.xlu0 %v2222
    %v2242 = vpop.xlane.xlu0 %2241
    %2243 = vmax.xlane.f32.xlu0 %v2223
    %v2244 = vpop.xlane.xlu0 %2243
    %2245 = vmax.xlane.f32.xlu0 %v2224
    %v2246 = vpop.xlane.xlu0 %2245
    %2247 = vmax.xlane.f32.xlu0 %v2225
    %v2248 = vpop.xlane.xlu0 %2247
    %2249 = vmax.xlane.f32.xlu0 %v2226
    %v2250 = vpop.xlane.xlu0 %2249
    %2251 = vmax.xlane.f32.xlu0 %v2227
    %v2252 = vpop.xlane.xlu0 %2251
    %2253 = vmax.xlane.f32.xlu0 %v2228
    %v2254 = vpop.xlane.xlu0 %2253
    %2255 = vmax.xlane.f32.xlu0 %v2229
    %v2256 = vpop.xlane.xlu0 %2255
    %2257 = vmax.xlane.f32.xlu0 %v2230
    %v2258 = vpop.xlane.xlu0 %2257
    %2259 = vmax.xlane.f32.xlu0 %v2231
    %v2260 = vpop.xlane.xlu0 %2259
    %2261 = vmax.xlane.f32.xlu0 %v2232
    %v2262 = vpop.xlane.xlu0 %2261
    %2263 = vmax.xlane.f32.xlu0 %v2233
    %v2264 = vpop.xlane.xlu0 %2263
    %2265 = vmax.xlane.f32.xlu0 %v2234
    %v2266 = vpop.xlane.xlu0 %2265
    %v2267 = vsub.f32 %v2219, %v2236
    %v2268 = vsub.f32 %v2220, %v2238
    %v2269 = vsub.f32 %v2221, %v2240
    %v2270 = vsub.f32 %v2222, %v2242
    %v2271 = vsub.f32 %v2223, %v2244
    %v2272 = vsub.f32 %v2224, %v2246
    %v2273 = vsub.f32 %v2225, %v2248
    %v2274 = vsub.f32 %v2226, %v2250
    %v2275 = vsub.f32 %v2227, %v2252
    %v2276 = vsub.f32 %v2228, %v2254
    %v2277 = vsub.f32 %v2229, %v2256
    %v2278 = vsub.f32 %v2230, %v2258
    %v2279 = vsub.f32 %v2231, %v2260
    %v2280 = vsub.f32 %v2232, %v2262
    %v2281 = vsub.f32 %v2233, %v2264
    %v2282 = vsub.f32 %v2234, %v2266
    %v2283 = vmul.f32 %v2267, 1.442695
    %v2284 = vpow.pop %v2283
    %v2285 = vmul.f32 %v2268, 1.442695
    %v2286 = vpow.pop %v2285
    %v2287 = vmul.f32 %v2269, 1.442695
    %v2288 = vpow.pop %v2287
    %v2289 = vmul.f32 %v2270, 1.442695
    %v2290 = vpow.pop %v2289
    %v2291 = vmul.f32 %v2271, 1.442695
    %v2292 = vpow.pop %v2291
    %v2293 = vmul.f32 %v2272, 1.442695
    %v2294 = vpow.pop %v2293
    %v2295 = vmul.f32 %v2273, 1.442695
    %v2296 = vpow.pop %v2295
    %v2297 = vmul.f32 %v2274, 1.442695
    %v2298 = vpow.pop %v2297
    %v2299 = vmul.f32 %v2275, 1.442695
    %v2300 = vpow.pop %v2299
    %v2301 = vmul.f32 %v2276, 1.442695
    %v2302 = vpow.pop %v2301
    %v2303 = vmul.f32 %v2277, 1.442695
    %v2304 = vpow.pop %v2303
    %v2305 = vmul.f32 %v2278, 1.442695
    %v2306 = vpow.pop %v2305
    %v2307 = vmul.f32 %v2279, 1.442695
    %v2308 = vpow.pop %v2307
    %v2309 = vmul.f32 %v2280, 1.442695
    %v2310 = vpow.pop %v2309
    %v2311 = vmul.f32 %v2281, 1.442695
    %v2312 = vpow.pop %v2311
    %v2313 = vmul.f32 %v2282, 1.442695
    %v2314 = vpow.pop %v2313
    %2315 = vadd.xlane.f32.xlu0 %v2284
    %v2316 = vpop.xlane.xlu0 %2315
    %2317 = vadd.xlane.f32.xlu0 %v2286
    %v2318 = vpop.xlane.xlu0 %2317
    %2319 = vadd.xlane.f32.xlu0 %v2288
    %v2320 = vpop.xlane.xlu0 %2319
    %2321 = vadd.xlane.f32.xlu0 %v2290
    %v2322 = vpop.xlane.xlu0 %2321
    %2323 = vadd.xlane.f32.xlu0 %v2292
    %v2324 = vpop.xlane.xlu0 %2323
    %2325 = vadd.xlane.f32.xlu0 %v2294
    %v2326 = vpop.xlane.xlu0 %2325
    %2327 = vadd.xlane.f32.xlu0 %v2296
    %v2328 = vpop.xlane.xlu0 %2327
    %2329 = vadd.xlane.f32.xlu0 %v2298
    %v2330 = vpop.xlane.xlu0 %2329
    %2331 = vadd.xlane.f32.xlu0 %v2300
    %v2332 = vpop.xlane.xlu0 %2331
    %2333 = vadd.xlane.f32.xlu0 %v2302
    %v2334 = vpop.xlane.xlu0 %2333
    %2335 = vadd.xlane.f32.xlu0 %v2304
    %v2336 = vpop.xlane.xlu0 %2335
    %2337 = vadd.xlane.f32.xlu0 %v2306
    %v2338 = vpop.xlane.xlu0 %2337
    %2339 = vadd.xlane.f32.xlu0 %v2308
    %v2340 = vpop.xlane.xlu0 %2339
    %2341 = vadd.xlane.f32.xlu0 %v2310
    %v2342 = vpop.xlane.xlu0 %2341
    %2343 = vadd.xlane.f32.xlu0 %v2312
    %v2344 = vpop.xlane.xlu0 %2343
    %2345 = vadd.xlane.f32.xlu0 %v2314
    %v2346 = vpop.xlane.xlu0 %2345
    %v2347 = vpack.c.bf16 %v2286, %v2284
    %v2348 = vpack.c.bf16 %v2290, %v2288
    %v2349 = vpack.c.bf16 %v2294, %v2292
    %v2350 = vpack.c.bf16 %v2298, %v2296
    %v2351 = vpack.c.bf16 %v2302, %v2300
    %v2352 = vpack.c.bf16 %v2306, %v2304
    %v2353 = vpack.c.bf16 %v2310, %v2308
    %v2354 = vpack.c.bf16 %v2314, %v2312
    %2363 = vrot.lane.b32.xlu0 %v821, 96
    %v2364 = vpop.permute.xlu0 %2363
    %2365 = vrot.lane.b32.xlu0 %v822, 96
    %v2366 = vpop.permute.xlu0 %2365
    %2367 = vrot.lane.b32.xlu0 %v823, 96
    %v2368 = vpop.permute.xlu0 %2367
    %2369 = vrot.lane.b32.xlu0 %v824, 96
    %v2370 = vpop.permute.xlu0 %2369
    %2371 = vrot.lane.b32.xlu0 %v825, 96
    %v2372 = vpop.permute.xlu0 %2371
    %2373 = vrot.lane.b32.xlu0 %v826, 96
    %v2374 = vpop.permute.xlu0 %2373
    %2375 = vrot.lane.b32.xlu0 %v827, 96
    %v2376 = vpop.permute.xlu0 %2375
    %2377 = vrot.lane.b32.xlu0 %v828, 96
    %v2378 = vpop.permute.xlu0 %2377
    %2387 = vmatprep.subr.bf16.mxu0 0
    %2388 = vmatpush1.bf16.msra.mxu0 %v2364
    %2389 = vmatprep.subr.bf16.mxu0 0
    %2390 = vmatpush1.bf16.msra.mxu0 %v2366
    %2391 = vmatprep.subr.bf16.mxu0 0
    %2392 = vmatpush1.bf16.msra.mxu0 %v2368
    %2393 = vmatprep.subr.bf16.mxu0 0
    %2394 = vmatpush1.bf16.msra.mxu0 %v2370
    %2395 = vmatprep.subr.bf16.mxu0 0
    %2396 = vmatpush1.bf16.msra.mxu0 %v2372
    %2397 = vmatprep.subr.bf16.mxu0 0
    %2398 = vmatpush1.bf16.msra.mxu0 %v2374
    %2399 = vmatprep.subr.bf16.mxu0 0
    %2400 = vmatpush1.bf16.msra.mxu0 %v2376
    %2401 = vmatprep.subr.bf16.mxu0 0
    %2402 = vmatpush1.bf16.msra.mxu0 %v2378
    %2403 = vmatprep.subr.bf16.mxu0 0
    %2404 = vmatpush1.bf16.msra.mxu0 0
    %2405 = vmatprep.subr.bf16.mxu0 0
    %2406 = vmatpush1.bf16.msra.mxu0 0
    %2407 = vmatprep.subr.bf16.mxu0 0
    %2408 = vmatpush1.bf16.msra.mxu0 0
    %2409 = vmatprep.subr.bf16.mxu0 0
    %2410 = vmatpush1.bf16.msra.mxu0 0
    %2411 = vmatprep.subr.bf16.mxu0 0
    %2412 = vmatpush1.bf16.msra.mxu0 0
    %2413 = vmatprep.subr.bf16.mxu0 0
    %2414 = vmatpush1.bf16.msra.mxu0 0
    %2415 = vmatprep.subr.bf16.mxu0 0
    %2416 = vmatpush1.bf16.msra.mxu0 0
    %2417 = vmatprep.subr.bf16.mxu0 0
    %2418 = vmatpush1.bf16.msra.mxu0 0
    %2419 = vmatprep.mubr.bf16.mxu0 0
    %2420 = vmatmul.mubr.bf16.gmra.mrb[0].mxu0 %v2347
    %v2421 = vpop.f32.mrb[0].mxu0
    %v2422 = vadd.f32 0.0, %v2421
    %v2423 = vpop.f32.mrb[0].mxu0
    %v2424 = vpop.f32.mrb[0].mxu0
    %v2425 = vadd.f32 0.0, %v2424
    %v2426 = vpop.f32.mrb[0].mxu0
    %2427 = vmatprep.mubr.bf16.mxu0 0
    %2428 = vmatmul.mubr.bf16.gmra.mrb[0].mxu0 %v2348
    %v2429 = vpop.f32.mrb[0].mxu0
    %v2430 = vadd.f32 0.0, %v2429
    %v2431 = vpop.f32.mrb[0].mxu0
    %v2432 = vpop.f32.mrb[0].mxu0
    %v2433 = vadd.f32 0.0, %v2432
    %v2434 = vpop.f32.mrb[0].mxu0
    %2435 = vmatprep.mubr.bf16.mxu0 0
    %2436 = vmatmul.mubr.bf16.gmra.mrb[0].mxu0 %v2349
    %v2437 = vpop.f32.mrb[0].mxu0
    %v2438 = vadd.f32 0.0, %v2437
    %v2439 = vpop.f32.mrb[0].mxu0
    %v2440 = vpop.f32.mrb[0].mxu0
    %v2441 = vadd.f32 0.0, %v2440
    %v2442 = vpop.f32.mrb[0].mxu0
    %2443 = vmatprep.mubr.bf16.mxu0 0
    %2444 = vmatmul.mubr.bf16.gmra.mrb[0].mxu0 %v2350
    %v2445 = vpop.f32.mrb[0].mxu0
    %v2446 = vadd.f32 0.0, %v2445
    %v2447 = vpop.f32.mrb[0].mxu0
    %v2448 = vpop.f32.mrb[0].mxu0
    %v2449 = vadd.f32 0.0, %v2448
    %v2450 = vpop.f32.mrb[0].mxu0
    %2451 = vmatprep.mubr.bf16.mxu0 0
    %2452 = vmatmul.mubr.bf16.gmra.mrb[0].mxu0 %v2351
    %v2453 = vpop.f32.mrb[0].mxu0
    %v2454 = vadd.f32 0.0, %v2453
    %v2455 = vpop.f32.mrb[0].mxu0
    %v2456 = vpop.f32.mrb[0].mxu0
    %v2457 = vadd.f32 0.0, %v2456
    %v2458 = vpop.f32.mrb[0].mxu0
    %2459 = vmatprep.mubr.bf16.mxu0 0
    %2460 = vmatmul.mubr.bf16.gmra.mrb[0].mxu0 %v2352
    %v2461 = vpop.f32.mrb[0].mxu0
    %v2462 = vadd.f32 0.0, %v2461
    %v2463 = vpop.f32.mrb[0].mxu0
    %v2464 = vpop.f32.mrb[0].mxu0
    %v2465 = vadd.f32 0.0, %v2464
    %v2466 = vpop.f32.mrb[0].mxu0
    %2467 = vmatprep.mubr.bf16.mxu0 0
    %2468 = vmatmul.mubr.bf16.gmra.mrb[0].mxu0 %v2353
    %v2469 = vpop.f32.mrb[0].mxu0
    %v2470 = vadd.f32 0.0, %v2469
    %v2471 = vpop.f32.mrb[0].mxu0
    %v2472 = vpop.f32.mrb[0].mxu0
    %v2473 = vadd.f32 0.0, %v2472
    %v2474 = vpop.f32.mrb[0].mxu0
    %2475 = vmatprep.mubr.bf16.mxu0 0
    %2476 = vmatmul.mubr.bf16.gmra.mrb[0].mxu0 %v2354
    %v2477 = vpop.f32.mrb[0].mxu0
    %v2478 = vadd.f32 0.0, %v2477
    %v2479 = vpop.f32.mrb[0].mxu0
    %v2480 = vpop.f32.mrb[0].mxu0
    %v2481 = vadd.f32 0.0, %v2480
    %v2482 = vpop.f32.mrb[0].mxu0
    %2483 = vdwg.mxu0
    %v2484 = vrcp.pop %v2316
    %v2485 = vrcp.pop %v2318
    %v2486 = vrcp.pop %v2320
    %v2487 = vrcp.pop %v2322
    %v2488 = vrcp.pop %v2324
    %v2489 = vrcp.pop %v2326
    %v2490 = vrcp.pop %v2328
    %v2491 = vrcp.pop %v2330
    %v2492 = vrcp.pop %v2332
    %v2493 = vrcp.pop %v2334
    %v2494 = vrcp.pop %v2336
    %v2495 = vrcp.pop %v2338
    %v2496 = vrcp.pop %v2340
    %v2497 = vrcp.pop %v2342
    %v2498 = vrcp.pop %v2344
    %v2499 = vrcp.pop %v2346
    %v2500 = vmul.f32 %v2422, %v2484
    %v2501 = vmul.f32 %v2425, %v2485
    %v2502 = vmul.f32 %v2430, %v2486
    %v2503 = vmul.f32 %v2433, %v2487
    %v2504 = vmul.f32 %v2438, %v2488
    %v2505 = vmul.f32 %v2441, %v2489
    %v2506 = vmul.f32 %v2446, %v2490
    %v2507 = vmul.f32 %v2449, %v2491
    %v2508 = vmul.f32 %v2454, %v2492
    %v2509 = vmul.f32 %v2457, %v2493
    %v2510 = vmul.f32 %v2462, %v2494
    %v2511 = vmul.f32 %v2465, %v2495
    %v2512 = vmul.f32 %v2470, %v2496
    %v2513 = vmul.f32 %v2473, %v2497
    %v2514 = vmul.f32 %v2478, %v2498
    %v2515 = vmul.f32 %v2481, %v2499
    %v2516 = vpack.c.bf16 %v2501, %v2500
    %v2517 = vpack.c.bf16 %v2503, %v2502
    %v2518 = vpack.c.bf16 %v2505, %v2504
    %v2519 = vpack.c.bf16 %v2507, %v2506
    %v2520 = vpack.c.bf16 %v2509, %v2508
    %v2521 = vpack.c.bf16 %v2511, %v2510
    %v2522 = vpack.c.bf16 %v2513, %v2512
    %v2523 = vpack.c.bf16 %v2515, %v2514
    %v2528 = vunpack.c.l.b16 %v1563
    %v2529 = vunpack.c.l.b16 %v1564
    %v2530 = vunpack.c.l.b16 %v1565
    %v2531 = vunpack.c.l.b16 %v1566
    %v2532 = vpack.c.b16 %v2529, %v2528
    %v2533 = vpack.c.b16 %v2531, %v2530
    %v2537 = vsel %vm1575, %v2516, 0
    %v2540 = vsel %vm1575, %v2517, 0
    %v2543 = vsel %vm1575, %v2518, 0
    %v2546 = vsel %vm1575, %v2519, 0
    %v2549 = vsel %vm1575, %v2520, 0
    %v2552 = vsel %vm1575, %v2521, 0
    %v2555 = vsel %vm1575, %v2522, 0
    %v2558 = vsel %vm1575, %v2523, 0
    %2560 = vmatprep.subr.bf16.mxu0 0
    %2561 = vmatpush1.bf16.msra.mxu0 %v2532
    %2562 = vmatprep.subr.bf16.mxu0 0
    %2563 = vmatpush1.bf16.msra.mxu0 %v2533
    %2564 = vmatprep.subr.bf16.mxu0 0
    %2565 = vmatpush1.bf16.msra.mxu0 0
    %2566 = vmatprep.subr.bf16.mxu0 0
    %2567 = vmatpush1.bf16.msra.mxu0 0
    %2568 = vmatprep.subr.bf16.mxu0 0
    %2569 = vmatpush1.bf16.msra.mxu0 0
    %2570 = vmatprep.subr.bf16.mxu0 0
    %2571 = vmatpush1.bf16.msra.mxu0 0
    %2572 = vmatprep.subr.bf16.mxu0 0
    %2573 = vmatpush1.bf16.msra.mxu0 0
    %2574 = vmatprep.subr.bf16.mxu0 0
    %2575 = vmatpush1.bf16.msra.mxu0 0
    %2576 = vmatprep.subr.bf16.mxu0 0
    %2577 = vmatpush1.bf16.msra.mxu0 0
    %2578 = vmatprep.subr.bf16.mxu0 0
    %2579 = vmatpush1.bf16.msra.mxu0 0
    %2580 = vmatprep.subr.bf16.mxu0 0
    %2581 = vmatpush1.bf16.msra.mxu0 0
    %2582 = vmatprep.subr.bf16.mxu0 0
    %2583 = vmatpush1.bf16.msra.mxu0 0
    %2584 = vmatprep.subr.bf16.mxu0 0
    %2585 = vmatpush1.bf16.msra.mxu0 0
    %2586 = vmatprep.subr.bf16.mxu0 0
    %2587 = vmatpush1.bf16.msra.mxu0 0
    %2588 = vmatprep.subr.bf16.mxu0 0
    %2589 = vmatpush1.bf16.msra.mxu0 0
    %2590 = vmatprep.subr.bf16.mxu0 0
    %2591 = vmatpush1.bf16.msra.mxu0 0
    %2592 = vmatprep.mubr.bf16.mxu0 0
    %2593 = vmatmul.mubr.bf16.gmra.mrb[0].mxu0 %v2537
    %v2594 = vpop.f32.mrb[0].mxu0
    %v2595 = vadd.f32 0.0, %v2594
    %v2596 = vpop.f32.mrb[0].mxu0
    %v2597 = vpop.f32.mrb[0].mxu0
    %v2598 = vadd.f32 0.0, %v2597
    %v2599 = vpop.f32.mrb[0].mxu0
    %2600 = vmatprep.mubr.bf16.mxu0 0
    %2601 = vmatmul.mubr.bf16.gmra.mrb[0].mxu0 %v2540
    %v2602 = vpop.f32.mrb[0].mxu0
    %v2603 = vadd.f32 0.0, %v2602
    %v2604 = vpop.f32.mrb[0].mxu0
    %v2605 = vpop.f32.mrb[0].mxu0
    %v2606 = vadd.f32 0.0, %v2605
    %v2607 = vpop.f32.mrb[0].mxu0
    %2608 = vmatprep.mubr.bf16.mxu0 0
    %2609 = vmatmul.mubr.bf16.gmra.mrb[0].mxu0 %v2543
    %v2610 = vpop.f32.mrb[0].mxu0
    %v2611 = vadd.f32 0.0, %v2610
    %v2612 = vpop.f32.mrb[0].mxu0
    %v2613 = vpop.f32.mrb[0].mxu0
    %v2614 = vadd.f32 0.0, %v2613
    %v2615 = vpop.f32.mrb[0].mxu0
    %2616 = vmatprep.mubr.bf16.mxu0 0
    %2617 = vmatmul.mubr.bf16.gmra.mrb[0].mxu0 %v2546
    %v2618 = vpop.f32.mrb[0].mxu0
    %v2619 = vadd.f32 0.0, %v2618
    %v2620 = vpop.f32.mrb[0].mxu0
    %v2621 = vpop.f32.mrb[0].mxu0
    %v2622 = vadd.f32 0.0, %v2621
    %v2623 = vpop.f32.mrb[0].mxu0
    %2624 = vmatprep.mubr.bf16.mxu0 0
    %2625 = vmatmul.mubr.bf16.gmra.mrb[0].mxu0 %v2549
    %v2626 = vpop.f32.mrb[0].mxu0
    %v2627 = vadd.f32 0.0, %v2626
    %v2628 = vpop.f32.mrb[0].mxu0
    %v2629 = vpop.f32.mrb[0].mxu0
    %v2630 = vadd.f32 0.0, %v2629
    %v2631 = vpop.f32.mrb[0].mxu0
    %2632 = vmatprep.mubr.bf16.mxu0 0
    %2633 = vmatmul.mubr.bf16.gmra.mrb[0].mxu0 %v2552
    %v2634 = vpop.f32.mrb[0].mxu0
    %v2635 = vadd.f32 0.0, %v2634
    %v2636 = vpop.f32.mrb[0].mxu0
    %v2637 = vpop.f32.mrb[0].mxu0
    %v2638 = vadd.f32 0.0, %v2637
    %v2639 = vpop.f32.mrb[0].mxu0
    %2640 = vmatprep.mubr.bf16.mxu0 0
    %2641 = vmatmul.mubr.bf16.gmra.mrb[0].mxu0 %v2555
    %v2642 = vpop.f32.mrb[0].mxu0
    %v2643 = vadd.f32 0.0, %v2642
    %v2644 = vpop.f32.mrb[0].mxu0
    %v2645 = vpop.f32.mrb[0].mxu0
    %v2646 = vadd.f32 0.0, %v2645
    %v2647 = vpop.f32.mrb[0].mxu0
    %2648 = vmatprep.mubr.bf16.mxu0 0
    %2649 = vmatmul.mubr.bf16.gmra.mrb[0].mxu0 %v2558
    %v2650 = vpop.f32.mrb[0].mxu0
    %v2651 = vadd.f32 0.0, %v2650
    %v2652 = vpop.f32.mrb[0].mxu0
    %v2653 = vpop.f32.mrb[0].mxu0
    %v2654 = vadd.f32 0.0, %v2653
    %v2655 = vpop.f32.mrb[0].mxu0
    %2656 = vdwg.mxu0
    %v2661 = vunpack.c.l.b16 %v1559
    %v2662 = vunpack.c.l.b16 %v1560
    %v2663 = vunpack.c.l.b16 %v1561
    %v2664 = vunpack.c.l.b16 %v1562
    %v2665 = vpack.c.b16 %v2662, %v2661
    %v2666 = vpack.c.b16 %v2664, %v2663
    %v2670 = vsel %vm1575, %v2002, 0
    %v2673 = vsel %vm1575, %v2003, 0
    %v2676 = vsel %vm1575, %v2004, 0
    %v2679 = vsel %vm1575, %v2005, 0
    %v2682 = vsel %vm1575, %v2006, 0
    %v2685 = vsel %vm1575, %v2007, 0
    %v2688 = vsel %vm1575, %v2008, 0
    %v2691 = vsel %vm1575, %v2009, 0
    %2693 = vmatprep.subr.bf16.mxu0 0
    %2694 = vmatpush1.bf16.msra.mxu0 %v2665
    %2695 = vmatprep.subr.bf16.mxu0 0
    %2696 = vmatpush1.bf16.msra.mxu0 %v2666
    %2697 = vmatprep.subr.bf16.mxu0 0
    %2698 = vmatpush1.bf16.msra.mxu0 0
    %2699 = vmatprep.subr.bf16.mxu0 0
    %2700 = vmatpush1.bf16.msra.mxu0 0
    %2701 = vmatprep.subr.bf16.mxu0 0
    %2702 = vmatpush1.bf16.msra.mxu0 0
    %2703 = vmatprep.subr.bf16.mxu0 0
    %2704 = vmatpush1.bf16.msra.mxu0 0
    %2705 = vmatprep.subr.bf16.mxu0 0
    %2706 = vmatpush1.bf16.msra.mxu0 0
    %2707 = vmatprep.subr.bf16.mxu0 0
    %2708 = vmatpush1.bf16.msra.mxu0 0
    %2709 = vmatprep.subr.bf16.mxu0 0
    %2710 = vmatpush1.bf16.msra.mxu0 0
    %2711 = vmatprep.subr.bf16.mxu0 0
    %2712 = vmatpush1.bf16.msra.mxu0 0
    %2713 = vmatprep.subr.bf16.mxu0 0
    %2714 = vmatpush1.bf16.msra.mxu0 0
    %2715 = vmatprep.subr.bf16.mxu0 0
    %2716 = vmatpush1.bf16.msra.mxu0 0
    %2717 = vmatprep.subr.bf16.mxu0 0
    %2718 = vmatpush1.bf16.msra.mxu0 0
    %2719 = vmatprep.subr.bf16.mxu0 0
    %2720 = vmatpush1.bf16.msra.mxu0 0
    %2721 = vmatprep.subr.bf16.mxu0 0
    %2722 = vmatpush1.bf16.msra.mxu0 0
    %2723 = vmatprep.subr.bf16.mxu0 0
    %2724 = vmatpush1.bf16.msra.mxu0 0
    %2725 = vmatprep.mubr.bf16.mxu0 0
    %2726 = vmatmul.mubr.bf16.gmra.mrb[0].mxu0 %v2670
    %v2727 = vpop.f32.mrb[0].mxu0
    %v2728 = vadd.f32 %v2595, %v2727
    %v2729 = vpop.f32.mrb[0].mxu0
    %v2730 = vpop.f32.mrb[0].mxu0
    %v2731 = vadd.f32 %v2598, %v2730
    %v2732 = vpop.f32.mrb[0].mxu0
    %2733 = vmatprep.mubr.bf16.mxu0 0
    %2734 = vmatmul.mubr.bf16.gmra.mrb[0].mxu0 %v2673
    %v2735 = vpop.f32.mrb[0].mxu0
    %v2736 = vadd.f32 %v2603, %v2735
    %v2737 = vpop.f32.mrb[0].mxu0
    %v2738 = vpop.f32.mrb[0].mxu0
    %v2739 = vadd.f32 %v2606, %v2738
    %v2740 = vpop.f32.mrb[0].mxu0
    %2741 = vmatprep.mubr.bf16.mxu0 0
    %2742 = vmatmul.mubr.bf16.gmra.mrb[0].mxu0 %v2676
    %v2743 = vpop.f32.mrb[0].mxu0
    %v2744 = vadd.f32 %v2611, %v2743
    %v2745 = vpop.f32.mrb[0].mxu0
    %v2746 = vpop.f32.mrb[0].mxu0
    %v2747 = vadd.f32 %v2614, %v2746
    %v2748 = vpop.f32.mrb[0].mxu0
    %2749 = vmatprep.mubr.bf16.mxu0 0
    %2750 = vmatmul.mubr.bf16.gmra.mrb[0].mxu0 %v2679
    %v2751 = vpop.f32.mrb[0].mxu0
    %v2752 = vadd.f32 %v2619, %v2751
    %v2753 = vpop.f32.mrb[0].mxu0
    %v2754 = vpop.f32.mrb[0].mxu0
    %v2755 = vadd.f32 %v2622, %v2754
    %v2756 = vpop.f32.mrb[0].mxu0
    %2757 = vmatprep.mubr.bf16.mxu0 0
    %2758 = vmatmul.mubr.bf16.gmra.mrb[0].mxu0 %v2682
    %v2759 = vpop.f32.mrb[0].mxu0
    %v2760 = vadd.f32 %v2627, %v2759
    %v2761 = vpop.f32.mrb[0].mxu0
    %v2762 = vpop.f32.mrb[0].mxu0
    %v2763 = vadd.f32 %v2630, %v2762
    %v2764 = vpop.f32.mrb[0].mxu0
    %2765 = vmatprep.mubr.bf16.mxu0 0
    %2766 = vmatmul.mubr.bf16.gmra.mrb[0].mxu0 %v2685
    %v2767 = vpop.f32.mrb[0].mxu0
    %v2768 = vadd.f32 %v2635, %v2767
    %v2769 = vpop.f32.mrb[0].mxu0
    %v2770 = vpop.f32.mrb[0].mxu0
    %v2771 = vadd.f32 %v2638, %v2770
    %v2772 = vpop.f32.mrb[0].mxu0
    %2773 = vmatprep.mubr.bf16.mxu0 0
    %2774 = vmatmul.mubr.bf16.gmra.mrb[0].mxu0 %v2688
    %v2775 = vpop.f32.mrb[0].mxu0
    %v2776 = vadd.f32 %v2643, %v2775
    %v2777 = vpop.f32.mrb[0].mxu0
    %v2778 = vpop.f32.mrb[0].mxu0
    %v2779 = vadd.f32 %v2646, %v2778
    %v2780 = vpop.f32.mrb[0].mxu0
    %2781 = vmatprep.mubr.bf16.mxu0 0
    %2782 = vmatmul.mubr.bf16.gmra.mrb[0].mxu0 %v2691
    %v2783 = vpop.f32.mrb[0].mxu0
    %v2784 = vadd.f32 %v2651, %v2783
    %v2785 = vpop.f32.mrb[0].mxu0
    %v2786 = vpop.f32.mrb[0].mxu0
    %v2787 = vadd.f32 %v2654, %v2786
    %v2788 = vpop.f32.mrb[0].mxu0
    %2789 = vdwg.mxu0
    %2790 = vrot.lane.b32.xlu0 %v1415, 64
    %v2791 = vpop.permute.xlu0 %2790
    %2792 = vrot.lane.b32.xlu0 %v1416, 64
    %v2793 = vpop.permute.xlu0 %2792
    %2794 = vrot.lane.b32.xlu0 %v1417, 64
    %v2795 = vpop.permute.xlu0 %2794
    %2796 = vrot.lane.b32.xlu0 %v1418, 64
    %v2797 = vpop.permute.xlu0 %2796
    %2798 = vrot.lane.b32.xlu0 %v1419, 64
    %v2799 = vpop.permute.xlu0 %2798
    %2800 = vrot.lane.b32.xlu0 %v1420, 64
    %v2801 = vpop.permute.xlu0 %2800
    %2802 = vrot.lane.b32.xlu0 %v1421, 64
    %v2803 = vpop.permute.xlu0 %2802
    %2804 = vrot.lane.b32.xlu0 %v1422, 64
    %v2805 = vpop.permute.xlu0 %2804
    %2806 = vrot.lane.b32.xlu0 %v1527, 64
    %v2807 = vpop.permute.xlu0 %2806
    %2808 = vrot.lane.b32.xlu0 %v1528, 64
    %v2809 = vpop.permute.xlu0 %2808
    %2810 = vrot.lane.b32.xlu0 %v1529, 64
    %v2811 = vpop.permute.xlu0 %2810
    %2812 = vrot.lane.b32.xlu0 %v1530, 64
    %v2813 = vpop.permute.xlu0 %2812
    %2814 = vrot.lane.b32.xlu0 %v1531, 64
    %v2815 = vpop.permute.xlu0 %2814
    %2816 = vrot.lane.b32.xlu0 %v1532, 64
    %v2817 = vpop.permute.xlu0 %2816
    %2818 = vrot.lane.b32.xlu0 %v1533, 64
    %v2819 = vpop.permute.xlu0 %2818
    %2820 = vrot.lane.b32.xlu0 %v1534, 64
    %v2821 = vpop.permute.xlu0 %2820
    %v2823 = vsel %vm1575, %v2791, 0
    %v2826 = vsel %vm1575, %v2793, 0
    %v2829 = vsel %vm1575, %v2795, 0
    %v2832 = vsel %vm1575, %v2797, 0
    %v2835 = vsel %vm1575, %v2799, 0
    %v2838 = vsel %vm1575, %v2801, 0
    %v2841 = vsel %vm1575, %v2803, 0
    %v2844 = vsel %vm1575, %v2805, 0
    %v2847 = vsel %vm1575, %v2807, 0
    %v2850 = vsel %vm1575, %v2809, 0
    %v2853 = vsel %vm1575, %v2811, 0
    %v2856 = vsel %vm1575, %v2813, 0
    %v2859 = vsel %vm1575, %v2815, 0
    %v2862 = vsel %vm1575, %v2817, 0
    %v2865 = vsel %vm1575, %v2819, 0
    %v2868 = vsel %vm1575, %v2821, 0
    %2870 = vmatprep.subr.bf16.mxu0 0
    %2871 = vmatpush1.bf16.xpose.msra.mxu0 %v2847
    %2872 = vmatprep.subr.bf16.mxu0 0
    %2873 = vmatpush1.bf16.xpose.msra.mxu0 %v2850
    %2874 = vmatprep.subr.bf16.mxu0 0
    %2875 = vmatpush1.bf16.xpose.msra.mxu0 %v2853
    %2876 = vmatprep.subr.bf16.mxu0 0
    %2877 = vmatpush1.bf16.xpose.msra.mxu0 %v2856
    %2878 = vmatprep.subr.bf16.mxu0 0
    %2879 = vmatpush1.bf16.xpose.msra.mxu0 %v2859
    %2880 = vmatprep.subr.bf16.mxu0 0
    %2881 = vmatpush1.bf16.xpose.msra.mxu0 %v2862
    %2882 = vmatprep.subr.bf16.mxu0 0
    %2883 = vmatpush1.bf16.xpose.msra.mxu0 %v2865
    %2884 = vmatprep.subr.bf16.mxu0 0
    %2885 = vmatpush1.bf16.xpose.msra.mxu0 %v2868
    %2886 = vmatprep.subr.bf16.mxu0 0
    %2887 = vmatpush1.bf16.xpose.msra.mxu0 0
    %2888 = vmatprep.subr.bf16.mxu0 0
    %2889 = vmatpush1.bf16.xpose.msra.mxu0 0
    %2890 = vmatprep.subr.bf16.mxu0 0
    %2891 = vmatpush1.bf16.xpose.msra.mxu0 0
    %2892 = vmatprep.subr.bf16.mxu0 0
    %2893 = vmatpush1.bf16.xpose.msra.mxu0 0
    %2894 = vmatprep.subr.bf16.mxu0 0
    %2895 = vmatpush1.bf16.xpose.msra.mxu0 0
    %2896 = vmatprep.subr.bf16.mxu0 0
    %2897 = vmatpush1.bf16.xpose.msra.mxu0 0
    %2898 = vmatprep.subr.bf16.mxu0 0
    %2899 = vmatpush1.bf16.xpose.msra.mxu0 0
    %2900 = vmatprep.subr.bf16.mxu0 0
    %2901 = vmatpush1.bf16.xpose.msra.mxu0 0
    %2902 = vmatprep.mubr.bf16.mxu0 0
    %2903 = vmatmul.mubr.bf16.gmra.mrb[0].mxu0 %v2823
    %v2904 = vpop.f32.mrb[0].mxu0
    %v2905 = vadd.f32 0.0, %v2904
    %v2906 = vpop.f32.mrb[0].mxu0
    %v2907 = vpop.f32.mrb[0].mxu0
    %v2908 = vadd.f32 0.0, %v2907
    %v2909 = vpop.f32.mrb[0].mxu0
    %2910 = vmatprep.mubr.bf16.mxu0 0
    %2911 = vmatmul.mubr.bf16.gmra.mrb[0].mxu0 %v2826
    %v2912 = vpop.f32.mrb[0].mxu0
    %v2913 = vadd.f32 0.0, %v2912
    %v2914 = vpop.f32.mrb[0].mxu0
    %v2915 = vpop.f32.mrb[0].mxu0
    %v2916 = vadd.f32 0.0, %v2915
    %v2917 = vpop.f32.mrb[0].mxu0
    %2918 = vmatprep.mubr.bf16.mxu0 0
    %2919 = vmatmul.mubr.bf16.gmra.mrb[0].mxu0 %v2829
    %v2920 = vpop.f32.mrb[0].mxu0
    %v2921 = vadd.f32 0.0, %v2920
    %v2922 = vpop.f32.mrb[0].mxu0
    %v2923 = vpop.f32.mrb[0].mxu0
    %v2924 = vadd.f32 0.0, %v2923
    %v2925 = vpop.f32.mrb[0].mxu0
    %2926 = vmatprep.mubr.bf16.mxu0 0
    %2927 = vmatmul.mubr.bf16.gmra.mrb[0].mxu0 %v2832
    %v2928 = vpop.f32.mrb[0].mxu0
    %v2929 = vadd.f32 0.0, %v2928
    %v2930 = vpop.f32.mrb[0].mxu0
    %v2931 = vpop.f32.mrb[0].mxu0
    %v2932 = vadd.f32 0.0, %v2931
    %v2933 = vpop.f32.mrb[0].mxu0
    %2934 = vmatprep.mubr.bf16.mxu0 0
    %2935 = vmatmul.mubr.bf16.gmra.mrb[0].mxu0 %v2835
    %v2936 = vpop.f32.mrb[0].mxu0
    %v2937 = vadd.f32 0.0, %v2936
    %v2938 = vpop.f32.mrb[0].mxu0
    %v2939 = vpop.f32.mrb[0].mxu0
    %v2940 = vadd.f32 0.0, %v2939
    %v2941 = vpop.f32.mrb[0].mxu0
    %2942 = vmatprep.mubr.bf16.mxu0 0
    %2943 = vmatmul.mubr.bf16.gmra.mrb[0].mxu0 %v2838
    %v2944 = vpop.f32.mrb[0].mxu0
    %v2945 = vadd.f32 0.0, %v2944
    %v2946 = vpop.f32.mrb[0].mxu0
    %v2947 = vpop.f32.mrb[0].mxu0
    %v2948 = vadd.f32 0.0, %v2947
    %v2949 = vpop.f32.mrb[0].mxu0
    %2950 = vmatprep.mubr.bf16.mxu0 0
    %2951 = vmatmul.mubr.bf16.gmra.mrb[0].mxu0 %v2841
    %v2952 = vpop.f32.mrb[0].mxu0
    %v2953 = vadd.f32 0.0, %v2952
    %v2954 = vpop.f32.mrb[0].mxu0
    %v2955 = vpop.f32.mrb[0].mxu0
    %v2956 = vadd.f32 0.0, %v2955
    %v2957 = vpop.f32.mrb[0].mxu0
    %2958 = vmatprep.mubr.bf16.mxu0 0
    %2959 = vmatmul.mubr.bf16.gmra.mrb[0].mxu0 %v2844
    %v2960 = vpop.f32.mrb[0].mxu0
    %v2961 = vadd.f32 0.0, %v2960
    %v2962 = vpop.f32.mrb[0].mxu0
    %v2963 = vpop.f32.mrb[0].mxu0
    %v2964 = vadd.f32 0.0, %v2963
    %v2965 = vpop.f32.mrb[0].mxu0
    %2966 = vdwg.mxu0
    %v2967 = vmul.f32 %v2905, 0.17677669
    %v2968 = vmul.f32 %v2908, 0.17677669
    %v2969 = vmul.f32 %v2913, 0.17677669
    %v2970 = vmul.f32 %v2916, 0.17677669
    %v2971 = vmul.f32 %v2921, 0.17677669
    %v2972 = vmul.f32 %v2924, 0.17677669
    %v2973 = vmul.f32 %v2929, 0.17677669
    %v2974 = vmul.f32 %v2932, 0.17677669
    %v2975 = vmul.f32 %v2937, 0.17677669
    %v2976 = vmul.f32 %v2940, 0.17677669
    %v2977 = vmul.f32 %v2945, 0.17677669
    %v2978 = vmul.f32 %v2948, 0.17677669
    %v2979 = vmul.f32 %v2953, 0.17677669
    %v2980 = vmul.f32 %v2956, 0.17677669
    %v2981 = vmul.f32 %v2961, 0.17677669
    %v2982 = vmul.f32 %v2964, 0.17677669
    %v2983 = vadd.f32 %v2967, %v1543
    %v2984 = vadd.f32 %v2968, %v1544
    %v2985 = vadd.f32 %v2969, %v1545
    %v2986 = vadd.f32 %v2970, %v1546
    %v2987 = vadd.f32 %v2971, %v1547
    %v2988 = vadd.f32 %v2972, %v1548
    %v2989 = vadd.f32 %v2973, %v1549
    %v2990 = vadd.f32 %v2974, %v1550
    %v2991 = vadd.f32 %v2975, %v1551
    %v2992 = vadd.f32 %v2976, %v1552
    %v2993 = vadd.f32 %v2977, %v1553
    %v2994 = vadd.f32 %v2978, %v1554
    %v2995 = vadd.f32 %v2979, %v1555
    %v2996 = vadd.f32 %v2980, %v1556
    %v2997 = vadd.f32 %v2981, %v1557
    %v2998 = vadd.f32 %v2982, %v1558
    %2999 = vmax.xlane.f32.xlu0 %v2983
    %v3000 = vpop.xlane.xlu0 %2999
    %3001 = vmax.xlane.f32.xlu0 %v2984
    %v3002 = vpop.xlane.xlu0 %3001
    %3003 = vmax.xlane.f32.xlu0 %v2985
    %v3004 = vpop.xlane.xlu0 %3003
    %3005 = vmax.xlane.f32.xlu0 %v2986
    %v3006 = vpop.xlane.xlu0 %3005
    %3007 = vmax.xlane.f32.xlu0 %v2987
    %v3008 = vpop.xlane.xlu0 %3007
    %3009 = vmax.xlane.f32.xlu0 %v2988
    %v3010 = vpop.xlane.xlu0 %3009
    %3011 = vmax.xlane.f32.xlu0 %v2989
    %v3012 = vpop.xlane.xlu0 %3011
    %3013 = vmax.xlane.f32.xlu0 %v2990
    %v3014 = vpop.xlane.xlu0 %3013
    %3015 = vmax.xlane.f32.xlu0 %v2991
    %v3016 = vpop.xlane.xlu0 %3015
    %3017 = vmax.xlane.f32.xlu0 %v2992
    %v3018 = vpop.xlane.xlu0 %3017
    %3019 = vmax.xlane.f32.xlu0 %v2993
    %v3020 = vpop.xlane.xlu0 %3019
    %3021 = vmax.xlane.f32.xlu0 %v2994
    %v3022 = vpop.xlane.xlu0 %3021
    %3023 = vmax.xlane.f32.xlu0 %v2995
    %v3024 = vpop.xlane.xlu0 %3023
    %3025 = vmax.xlane.f32.xlu0 %v2996
    %v3026 = vpop.xlane.xlu0 %3025
    %3027 = vmax.xlane.f32.xlu0 %v2997
    %v3028 = vpop.xlane.xlu0 %3027
    %3029 = vmax.xlane.f32.xlu0 %v2998
    %v3030 = vpop.xlane.xlu0 %3029
    %v3031 = vsub.f32 %v2983, %v3000
    %v3032 = vsub.f32 %v2984, %v3002
    %v3033 = vsub.f32 %v2985, %v3004
    %v3034 = vsub.f32 %v2986, %v3006
    %v3035 = vsub.f32 %v2987, %v3008
    %v3036 = vsub.f32 %v2988, %v3010
    %v3037 = vsub.f32 %v2989, %v3012
    %v3038 = vsub.f32 %v2990, %v3014
    %v3039 = vsub.f32 %v2991, %v3016
    %v3040 = vsub.f32 %v2992, %v3018
    %v3041 = vsub.f32 %v2993, %v3020
    %v3042 = vsub.f32 %v2994, %v3022
    %v3043 = vsub.f32 %v2995, %v3024
    %v3044 = vsub.f32 %v2996, %v3026
    %v3045 = vsub.f32 %v2997, %v3028
    %v3046 = vsub.f32 %v2998, %v3030
    %v3047 = vmul.f32 %v3031, 1.442695
    %v3048 = vpow.pop %v3047
    %v3049 = vmul.f32 %v3032, 1.442695
    %v3050 = vpow.pop %v3049
    %v3051 = vmul.f32 %v3033, 1.442695
    %v3052 = vpow.pop %v3051
    %v3053 = vmul.f32 %v3034, 1.442695
    %v3054 = vpow.pop %v3053
    %v3055 = vmul.f32 %v3035, 1.442695
    %v3056 = vpow.pop %v3055
    %v3057 = vmul.f32 %v3036, 1.442695
    %v3058 = vpow.pop %v3057
    %v3059 = vmul.f32 %v3037, 1.442695
    %v3060 = vpow.pop %v3059
    %v3061 = vmul.f32 %v3038, 1.442695
    %v3062 = vpow.pop %v3061
    %v3063 = vmul.f32 %v3039, 1.442695
    %v3064 = vpow.pop %v3063
    %v3065 = vmul.f32 %v3040, 1.442695
    %v3066 = vpow.pop %v3065
    %v3067 = vmul.f32 %v3041, 1.442695
    %v3068 = vpow.pop %v3067
    %v3069 = vmul.f32 %v3042, 1.442695
    %v3070 = vpow.pop %v3069
    %v3071 = vmul.f32 %v3043, 1.442695
    %v3072 = vpow.pop %v3071
    %v3073 = vmul.f32 %v3044, 1.442695
    %v3074 = vpow.pop %v3073
    %v3075 = vmul.f32 %v3045, 1.442695
    %v3076 = vpow.pop %v3075
    %v3077 = vmul.f32 %v3046, 1.442695
    %v3078 = vpow.pop %v3077
    %3079 = vadd.xlane.f32.xlu0 %v3048
    %v3080 = vpop.xlane.xlu0 %3079
    %3081 = vadd.xlane.f32.xlu0 %v3050
    %v3082 = vpop.xlane.xlu0 %3081
    %3083 = vadd.xlane.f32.xlu0 %v3052
    %v3084 = vpop.xlane.xlu0 %3083
    %3085 = vadd.xlane.f32.xlu0 %v3054
    %v3086 = vpop.xlane.xlu0 %3085
    %3087 = vadd.xlane.f32.xlu0 %v3056
    %v3088 = vpop.xlane.xlu0 %3087
    %3089 = vadd.xlane.f32.xlu0 %v3058
    %v3090 = vpop.xlane.xlu0 %3089
    %3091 = vadd.xlane.f32.xlu0 %v3060
    %v3092 = vpop.xlane.xlu0 %3091
    %3093 = vadd.xlane.f32.xlu0 %v3062
    %v3094 = vpop.xlane.xlu0 %3093
    %3095 = vadd.xlane.f32.xlu0 %v3064
    %v3096 = vpop.xlane.xlu0 %3095
    %3097 = vadd.xlane.f32.xlu0 %v3066
    %v3098 = vpop.xlane.xlu0 %3097
    %3099 = vadd.xlane.f32.xlu0 %v3068
    %v3100 = vpop.xlane.xlu0 %3099
    %3101 = vadd.xlane.f32.xlu0 %v3070
    %v3102 = vpop.xlane.xlu0 %3101
    %3103 = vadd.xlane.f32.xlu0 %v3072
    %v3104 = vpop.xlane.xlu0 %3103
    %3105 = vadd.xlane.f32.xlu0 %v3074
    %v3106 = vpop.xlane.xlu0 %3105
    %3107 = vadd.xlane.f32.xlu0 %v3076
    %v3108 = vpop.xlane.xlu0 %3107
    %3109 = vadd.xlane.f32.xlu0 %v3078
    %v3110 = vpop.xlane.xlu0 %3109
    %v3111 = vpack.c.bf16 %v3050, %v3048
    %v3112 = vpack.c.bf16 %v3054, %v3052
    %v3113 = vpack.c.bf16 %v3058, %v3056
    %v3114 = vpack.c.bf16 %v3062, %v3060
    %v3115 = vpack.c.bf16 %v3066, %v3064
    %v3116 = vpack.c.bf16 %v3070, %v3068
    %v3117 = vpack.c.bf16 %v3074, %v3072
    %v3118 = vpack.c.bf16 %v3078, %v3076
    %3119 = vrot.lane.b32.xlu0 %v821, 64
    %v3120 = vpop.permute.xlu0 %3119
    %3121 = vrot.lane.b32.xlu0 %v822, 64
    %v3122 = vpop.permute.xlu0 %3121
    %3123 = vrot.lane.b32.xlu0 %v823, 64
    %v3124 = vpop.permute.xlu0 %3123
    %3125 = vrot.lane.b32.xlu0 %v824, 64
    %v3126 = vpop.permute.xlu0 %3125
    %3127 = vrot.lane.b32.xlu0 %v825, 64
    %v3128 = vpop.permute.xlu0 %3127
    %3129 = vrot.lane.b32.xlu0 %v826, 64
    %v3130 = vpop.permute.xlu0 %3129
    %3131 = vrot.lane.b32.xlu0 %v827, 64
    %v3132 = vpop.permute.xlu0 %3131
    %3133 = vrot.lane.b32.xlu0 %v828, 64
    %v3134 = vpop.permute.xlu0 %3133
    %3143 = vmatprep.subr.bf16.mxu0 0
    %3144 = vmatpush1.bf16.msra.mxu0 %v3120
    %3145 = vmatprep.subr.bf16.mxu0 0
    %3146 = vmatpush1.bf16.msra.mxu0 %v3122
    %3147 = vmatprep.subr.bf16.mxu0 0
    %3148 = vmatpush1.bf16.msra.mxu0 %v3124
    %3149 = vmatprep.subr.bf16.mxu0 0
    %3150 = vmatpush1.bf16.msra.mxu0 %v3126
    %3151 = vmatprep.subr.bf16.mxu0 0
    %3152 = vmatpush1.bf16.msra.mxu0 %v3128
    %3153 = vmatprep.subr.bf16.mxu0 0
    %3154 = vmatpush1.bf16.msra.mxu0 %v3130
    %3155 = vmatprep.subr.bf16.mxu0 0
    %3156 = vmatpush1.bf16.msra.mxu0 %v3132
    %3157 = vmatprep.subr.bf16.mxu0 0
    %3158 = vmatpush1.bf16.msra.mxu0 %v3134
    %3159 = vmatprep.subr.bf16.mxu0 0
    %3160 = vmatpush1.bf16.msra.mxu0 0
    %3161 = vmatprep.subr.bf16.mxu0 0
    %3162 = vmatpush1.bf16.msra.mxu0 0
    %3163 = vmatprep.subr.bf16.mxu0 0
    %3164 = vmatpush1.bf16.msra.mxu0 0
    %3165 = vmatprep.subr.bf16.mxu0 0
    %3166 = vmatpush1.bf16.msra.mxu0 0
    %3167 = vmatprep.subr.bf16.mxu0 0
    %3168 = vmatpush1.bf16.msra.mxu0 0
    %3169 = vmatprep.subr.bf16.mxu0 0
    %3170 = vmatpush1.bf16.msra.mxu0 0
    %3171 = vmatprep.subr.bf16.mxu0 0
    %3172 = vmatpush1.bf16.msra.mxu0 0
    %3173 = vmatprep.subr.bf16.mxu0 0
    %3174 = vmatpush1.bf16.msra.mxu0 0
    %3175 = vmatprep.mubr.bf16.mxu0 0
    %3176 = vmatmul.mubr.bf16.gmra.mrb[0].mxu0 %v3111
    %v3177 = vpop.f32.mrb[0].mxu0
    %v3178 = vadd.f32 0.0, %v3177
    %v3179 = vpop.f32.mrb[0].mxu0
    %v3180 = vpop.f32.mrb[0].mxu0
    %v3181 = vadd.f32 0.0, %v3180
    %v3182 = vpop.f32.mrb[0].mxu0
    %3183 = vmatprep.mubr.bf16.mxu0 0
    %3184 = vmatmul.mubr.bf16.gmra.mrb[0].mxu0 %v3112
    %v3185 = vpop.f32.mrb[0].mxu0
    %v3186 = vadd.f32 0.0, %v3185
    %v3187 = vpop.f32.mrb[0].mxu0
    %v3188 = vpop.f32.mrb[0].mxu0
    %v3189 = vadd.f32 0.0, %v3188
    %v3190 = vpop.f32.mrb[0].mxu0
    %3191 = vmatprep.mubr.bf16.mxu0 0
    %3192 = vmatmul.mubr.bf16.gmra.mrb[0].mxu0 %v3113
    %v3193 = vpop.f32.mrb[0].mxu0
    %v3194 = vadd.f32 0.0, %v3193
    %v3195 = vpop.f32.mrb[0].mxu0
    %v3196 = vpop.f32.mrb[0].mxu0
    %v3197 = vadd.f32 0.0, %v3196
    %v3198 = vpop.f32.mrb[0].mxu0
    %3199 = vmatprep.mubr.bf16.mxu0 0
    %3200 = vmatmul.mubr.bf16.gmra.mrb[0].mxu0 %v3114
    %v3201 = vpop.f32.mrb[0].mxu0
    %v3202 = vadd.f32 0.0, %v3201
    %v3203 = vpop.f32.mrb[0].mxu0
    %v3204 = vpop.f32.mrb[0].mxu0
    %v3205 = vadd.f32 0.0, %v3204
    %v3206 = vpop.f32.mrb[0].mxu0
    %3207 = vmatprep.mubr.bf16.mxu0 0
    %3208 = vmatmul.mubr.bf16.gmra.mrb[0].mxu0 %v3115
    %v3209 = vpop.f32.mrb[0].mxu0
    %v3210 = vadd.f32 0.0, %v3209
    %v3211 = vpop.f32.mrb[0].mxu0
    %v3212 = vpop.f32.mrb[0].mxu0
    %v3213 = vadd.f32 0.0, %v3212
    %v3214 = vpop.f32.mrb[0].mxu0
    %3215 = vmatprep.mubr.bf16.mxu0 0
    %3216 = vmatmul.mubr.bf16.gmra.mrb[0].mxu0 %v3116
    %v3217 = vpop.f32.mrb[0].mxu0
    %v3218 = vadd.f32 0.0, %v3217
    %v3219 = vpop.f32.mrb[0].mxu0
    %v3220 = vpop.f32.mrb[0].mxu0
    %v3221 = vadd.f32 0.0, %v3220
    %v3222 = vpop.f32.mrb[0].mxu0
    %3223 = vmatprep.mubr.bf16.mxu0 0
    %3224 = vmatmul.mubr.bf16.gmra.mrb[0].mxu0 %v3117
    %v3225 = vpop.f32.mrb[0].mxu0
    %v3226 = vadd.f32 0.0, %v3225
    %v3227 = vpop.f32.mrb[0].mxu0
    %v3228 = vpop.f32.mrb[0].mxu0
    %v3229 = vadd.f32 0.0, %v3228
    %v3230 = vpop.f32.mrb[0].mxu0
    %3231 = vmatprep.mubr.bf16.mxu0 0
    %3232 = vmatmul.mubr.bf16.gmra.mrb[0].mxu0 %v3118
    %v3233 = vpop.f32.mrb[0].mxu0
    %v3234 = vadd.f32 0.0, %v3233
    %v3235 = vpop.f32.mrb[0].mxu0
    %v3236 = vpop.f32.mrb[0].mxu0
    %v3237 = vadd.f32 0.0, %v3236
    %v3238 = vpop.f32.mrb[0].mxu0
    %3239 = vdwg.mxu0
    %v3240 = vrcp.pop %v3080
    %v3241 = vrcp.pop %v3082
    %v3242 = vrcp.pop %v3084
    %v3243 = vrcp.pop %v3086
    %v3244 = vrcp.pop %v3088
    %v3245 = vrcp.pop %v3090
    %v3246 = vrcp.pop %v3092
    %v3247 = vrcp.pop %v3094
    %v3248 = vrcp.pop %v3096
    %v3249 = vrcp.pop %v3098
    %v3250 = vrcp.pop %v3100
    %v3251 = vrcp.pop %v3102
    %v3252 = vrcp.pop %v3104
    %v3253 = vrcp.pop %v3106
    %v3254 = vrcp.pop %v3108
    %v3255 = vrcp.pop %v3110
    %v3256 = vmul.f32 %v3178, %v3240
    %v3257 = vmul.f32 %v3181, %v3241
    %v3258 = vmul.f32 %v3186, %v3242
    %v3259 = vmul.f32 %v3189, %v3243
    %v3260 = vmul.f32 %v3194, %v3244
    %v3261 = vmul.f32 %v3197, %v3245
    %v3262 = vmul.f32 %v3202, %v3246
    %v3263 = vmul.f32 %v3205, %v3247
    %v3264 = vmul.f32 %v3210, %v3248
    %v3265 = vmul.f32 %v3213, %v3249
    %v3266 = vmul.f32 %v3218, %v3250
    %v3267 = vmul.f32 %v3221, %v3251
    %v3268 = vmul.f32 %v3226, %v3252
    %v3269 = vmul.f32 %v3229, %v3253
    %v3270 = vmul.f32 %v3234, %v3254
    %v3271 = vmul.f32 %v3237, %v3255
    %v3272 = vpack.c.bf16 %v3257, %v3256
    %v3273 = vpack.c.bf16 %v3259, %v3258
    %v3274 = vpack.c.bf16 %v3261, %v3260
    %v3275 = vpack.c.bf16 %v3263, %v3262
    %v3276 = vpack.c.bf16 %v3265, %v3264
    %v3277 = vpack.c.bf16 %v3267, %v3266
    %v3278 = vpack.c.bf16 %v3269, %v3268
    %v3279 = vpack.c.bf16 %v3271, %v3270
    %v3284 = vunpack.c.l.b16 %v1567
    %v3285 = vunpack.c.l.b16 %v1568
    %v3286 = vunpack.c.l.b16 %v1569
    %v3287 = vunpack.c.l.b16 %v1570
    %v3288 = vpack.c.b16 %v3285, %v3284
    %v3289 = vpack.c.b16 %v3287, %v3286
    %v3293 = vsel %vm1575, %v3272, 0
    %v3296 = vsel %vm1575, %v3273, 0
    %v3299 = vsel %vm1575, %v3274, 0
    %v3302 = vsel %vm1575, %v3275, 0
    %v3305 = vsel %vm1575, %v3276, 0
    %v3308 = vsel %vm1575, %v3277, 0
    %v3311 = vsel %vm1575, %v3278, 0
    %v3314 = vsel %vm1575, %v3279, 0
    %3316 = vmatprep.subr.bf16.mxu0 0
    %3317 = vmatpush1.bf16.msra.mxu0 %v3288
    %3318 = vmatprep.subr.bf16.mxu0 0
    %3319 = vmatpush1.bf16.msra.mxu0 %v3289
    %3320 = vmatprep.subr.bf16.mxu0 0
    %3321 = vmatpush1.bf16.msra.mxu0 0
    %3322 = vmatprep.subr.bf16.mxu0 0
    %3323 = vmatpush1.bf16.msra.mxu0 0
    %3324 = vmatprep.subr.bf16.mxu0 0
    %3325 = vmatpush1.bf16.msra.mxu0 0
    %3326 = vmatprep.subr.bf16.mxu0 0
    %3327 = vmatpush1.bf16.msra.mxu0 0
    %3328 = vmatprep.subr.bf16.mxu0 0
    %3329 = vmatpush1.bf16.msra.mxu0 0
    %3330 = vmatprep.subr.bf16.mxu0 0
    %3331 = vmatpush1.bf16.msra.mxu0 0
    %3332 = vmatprep.subr.bf16.mxu0 0
    %3333 = vmatpush1.bf16.msra.mxu0 0
    %3334 = vmatprep.subr.bf16.mxu0 0
    %3335 = vmatpush1.bf16.msra.mxu0 0
    %3336 = vmatprep.subr.bf16.mxu0 0
    %3337 = vmatpush1.bf16.msra.mxu0 0
    %3338 = vmatprep.subr.bf16.mxu0 0
    %3339 = vmatpush1.bf16.msra.mxu0 0
    %3340 = vmatprep.subr.bf16.mxu0 0
    %3341 = vmatpush1.bf16.msra.mxu0 0
    %3342 = vmatprep.subr.bf16.mxu0 0
    %3343 = vmatpush1.bf16.msra.mxu0 0
    %3344 = vmatprep.subr.bf16.mxu0 0
    %3345 = vmatpush1.bf16.msra.mxu0 0
    %3346 = vmatprep.subr.bf16.mxu0 0
    %3347 = vmatpush1.bf16.msra.mxu0 0
    %3348 = vmatprep.mubr.bf16.mxu0 0
    %3349 = vmatmul.mubr.bf16.gmra.mrb[0].mxu0 %v3293
    %v3350 = vpop.f32.mrb[0].mxu0
    %v3351 = vadd.f32 0.0, %v3350
    %v3352 = vpop.f32.mrb[0].mxu0
    %v3353 = vpop.f32.mrb[0].mxu0
    %v3354 = vadd.f32 0.0, %v3353
    %v3355 = vpop.f32.mrb[0].mxu0
    %3356 = vmatprep.mubr.bf16.mxu0 0
    %3357 = vmatmul.mubr.bf16.gmra.mrb[0].mxu0 %v3296
    %v3358 = vpop.f32.mrb[0].mxu0
    %v3359 = vadd.f32 0.0, %v3358
    %v3360 = vpop.f32.mrb[0].mxu0
    %v3361 = vpop.f32.mrb[0].mxu0
    %v3362 = vadd.f32 0.0, %v3361
    %v3363 = vpop.f32.mrb[0].mxu0
    %3364 = vmatprep.mubr.bf16.mxu0 0
    %3365 = vmatmul.mubr.bf16.gmra.mrb[0].mxu0 %v3299
    %v3366 = vpop.f32.mrb[0].mxu0
    %v3367 = vadd.f32 0.0, %v3366
    %v3368 = vpop.f32.mrb[0].mxu0
    %v3369 = vpop.f32.mrb[0].mxu0
    %v3370 = vadd.f32 0.0, %v3369
    %v3371 = vpop.f32.mrb[0].mxu0
    %3372 = vmatprep.mubr.bf16.mxu0 0
    %3373 = vmatmul.mubr.bf16.gmra.mrb[0].mxu0 %v3302
    %v3374 = vpop.f32.mrb[0].mxu0
    %v3375 = vadd.f32 0.0, %v3374
    %v3376 = vpop.f32.mrb[0].mxu0
    %v3377 = vpop.f32.mrb[0].mxu0
    %v3378 = vadd.f32 0.0, %v3377
    %v3379 = vpop.f32.mrb[0].mxu0
    %3380 = vmatprep.mubr.bf16.mxu0 0
    %3381 = vmatmul.mubr.bf16.gmra.mrb[0].mxu0 %v3305
    %v3382 = vpop.f32.mrb[0].mxu0
    %v3383 = vadd.f32 0.0, %v3382
    %v3384 = vpop.f32.mrb[0].mxu0
    %v3385 = vpop.f32.mrb[0].mxu0
    %v3386 = vadd.f32 0.0, %v3385
    %v3387 = vpop.f32.mrb[0].mxu0
    %3388 = vmatprep.mubr.bf16.mxu0 0
    %3389 = vmatmul.mubr.bf16.gmra.mrb[0].mxu0 %v3308
    %v3390 = vpop.f32.mrb[0].mxu0
    %v3391 = vadd.f32 0.0, %v3390
    %v3392 = vpop.f32.mrb[0].mxu0
    %v3393 = vpop.f32.mrb[0].mxu0
    %v3394 = vadd.f32 0.0, %v3393
    %v3395 = vpop.f32.mrb[0].mxu0
    %3396 = vmatprep.mubr.bf16.mxu0 0
    %3397 = vmatmul.mubr.bf16.gmra.mrb[0].mxu0 %v3311
    %v3398 = vpop.f32.mrb[0].mxu0
    %v3399 = vadd.f32 0.0, %v3398
    %v3400 = vpop.f32.mrb[0].mxu0
    %v3401 = vpop.f32.mrb[0].mxu0
    %v3402 = vadd.f32 0.0, %v3401
    %v3403 = vpop.f32.mrb[0].mxu0
    %3404 = vmatprep.mubr.bf16.mxu0 0
    %3405 = vmatmul.mubr.bf16.gmra.mrb[0].mxu0 %v3314
    %v3406 = vpop.f32.mrb[0].mxu0
    %v3407 = vadd.f32 0.0, %v3406
    %v3408 = vpop.f32.mrb[0].mxu0
    %v3409 = vpop.f32.mrb[0].mxu0
    %v3410 = vadd.f32 0.0, %v3409
    %v3411 = vpop.f32.mrb[0].mxu0
    %3412 = vdwg.mxu0
    %v3413 = vadd.f32 %v2728, %v3351
    %v3414 = vadd.f32 %v2731, %v3354
    %v3415 = vadd.f32 %v2736, %v3359
    %v3416 = vadd.f32 %v2739, %v3362
    %v3417 = vadd.f32 %v2744, %v3367
    %v3418 = vadd.f32 %v2747, %v3370
    %v3419 = vadd.f32 %v2752, %v3375
    %v3420 = vadd.f32 %v2755, %v3378
    %v3421 = vadd.f32 %v2760, %v3383
    %v3422 = vadd.f32 %v2763, %v3386
    %v3423 = vadd.f32 %v2768, %v3391
    %v3424 = vadd.f32 %v2771, %v3394
    %v3425 = vadd.f32 %v2776, %v3399
    %v3426 = vadd.f32 %v2779, %v3402
    %v3427 = vadd.f32 %v2784, %v3407
    %v3428 = vadd.f32 %v2787, %v3410
    %3429 = vrot.lane.b32.xlu0 %v1415, 32
    %v3430 = vpop.permute.xlu0 %3429
    %3431 = vrot.lane.b32.xlu0 %v1416, 32
    %v3432 = vpop.permute.xlu0 %3431
    %3433 = vrot.lane.b32.xlu0 %v1417, 32
    %v3434 = vpop.permute.xlu0 %3433
    %3435 = vrot.lane.b32.xlu0 %v1418, 32
    %v3436 = vpop.permute.xlu0 %3435
    %3437 = vrot.lane.b32.xlu0 %v1419, 32
    %v3438 = vpop.permute.xlu0 %3437
    %3439 = vrot.lane.b32.xlu0 %v1420, 32
    %v3440 = vpop.permute.xlu0 %3439
    %3441 = vrot.lane.b32.xlu0 %v1421, 32
    %v3442 = vpop.permute.xlu0 %3441
    %3443 = vrot.lane.b32.xlu0 %v1422, 32
    %v3444 = vpop.permute.xlu0 %3443
    %3445 = vrot.lane.b32.xlu0 %v1527, 32
    %v3446 = vpop.permute.xlu0 %3445
    %3447 = vrot.lane.b32.xlu0 %v1528, 32
    %v3448 = vpop.permute.xlu0 %3447
    %3449 = vrot.lane.b32.xlu0 %v1529, 32
    %v3450 = vpop.permute.xlu0 %3449
    %3451 = vrot.lane.b32.xlu0 %v1530, 32
    %v3452 = vpop.permute.xlu0 %3451
    %3453 = vrot.lane.b32.xlu0 %v1531, 32
    %v3454 = vpop.permute.xlu0 %3453
    %3455 = vrot.lane.b32.xlu0 %v1532, 32
    %v3456 = vpop.permute.xlu0 %3455
    %3457 = vrot.lane.b32.xlu0 %v1533, 32
    %v3458 = vpop.permute.xlu0 %3457
    %3459 = vrot.lane.b32.xlu0 %v1534, 32
    %v3460 = vpop.permute.xlu0 %3459
    %v3462 = vsel %vm1575, %v3430, 0
    %v3465 = vsel %vm1575, %v3432, 0
    %v3468 = vsel %vm1575, %v3434, 0
    %v3471 = vsel %vm1575, %v3436, 0
    %v3474 = vsel %vm1575, %v3438, 0
    %v3477 = vsel %vm1575, %v3440, 0
    %v3480 = vsel %vm1575, %v3442, 0
    %v3483 = vsel %vm1575, %v3444, 0
    %v3486 = vsel %vm1575, %v3446, 0
    %v3489 = vsel %vm1575, %v3448, 0
    %v3492 = vsel %vm1575, %v3450, 0
    %v3495 = vsel %vm1575, %v3452, 0
    %v3498 = vsel %vm1575, %v3454, 0
    %v3501 = vsel %vm1575, %v3456, 0
    %v3504 = vsel %vm1575, %v3458, 0
    %v3507 = vsel %vm1575, %v3460, 0
    %3509 = vmatprep.subr.bf16.mxu0 0
    %3510 = vmatpush1.bf16.xpose.msra.mxu0 %v3486
    %3511 = vmatprep.subr.bf16.mxu0 0
    %3512 = vmatpush1.bf16.xpose.msra.mxu0 %v3489
    %3513 = vmatprep.subr.bf16.mxu0 0
    %3514 = vmatpush1.bf16.xpose.msra.mxu0 %v3492
    %3515 = vmatprep.subr.bf16.mxu0 0
    %3516 = vmatpush1.bf16.xpose.msra.mxu0 %v3495
    %3517 = vmatprep.subr.bf16.mxu0 0
    %3518 = vmatpush1.bf16.xpose.msra.mxu0 %v3498
    %3519 = vmatprep.subr.bf16.mxu0 0
    %3520 = vmatpush1.bf16.xpose.msra.mxu0 %v3501
    %3521 = vmatprep.subr.bf16.mxu0 0
    %3522 = vmatpush1.bf16.xpose.msra.mxu0 %v3504
    %3523 = vmatprep.subr.bf16.mxu0 0
    %3524 = vmatpush1.bf16.xpose.msra.mxu0 %v3507
    %3525 = vmatprep.subr.bf16.mxu0 0
    %3526 = vmatpush1.bf16.xpose.msra.mxu0 0
    %3527 = vmatprep.subr.bf16.mxu0 0
    %3528 = vmatpush1.bf16.xpose.msra.mxu0 0
    %3529 = vmatprep.subr.bf16.mxu0 0
    %3530 = vmatpush1.bf16.xpose.msra.mxu0 0
    %3531 = vmatprep.subr.bf16.mxu0 0
    %3532 = vmatpush1.bf16.xpose.msra.mxu0 0
    %3533 = vmatprep.subr.bf16.mxu0 0
    %3534 = vmatpush1.bf16.xpose.msra.mxu0 0
    %3535 = vmatprep.subr.bf16.mxu0 0
    %3536 = vmatpush1.bf16.xpose.msra.mxu0 0
    %3537 = vmatprep.subr.bf16.mxu0 0
    %3538 = vmatpush1.bf16.xpose.msra.mxu0 0
    %3539 = vmatprep.subr.bf16.mxu0 0
    %3540 = vmatpush1.bf16.xpose.msra.mxu0 0
    %3541 = vmatprep.mubr.bf16.mxu0 0
    %3542 = vmatmul.mubr.bf16.gmra.mrb[0].mxu0 %v3462
    %v3543 = vpop.f32.mrb[0].mxu0
    %v3544 = vadd.f32 0.0, %v3543
    %v3545 = vpop.f32.mrb[0].mxu0
    %v3546 = vpop.f32.mrb[0].mxu0
    %v3547 = vadd.f32 0.0, %v3546
    %v3548 = vpop.f32.mrb[0].mxu0
    %3549 = vmatprep.mubr.bf16.mxu0 0
    %3550 = vmatmul.mubr.bf16.gmra.mrb[0].mxu0 %v3465
    %v3551 = vpop.f32.mrb[0].mxu0
    %v3552 = vadd.f32 0.0, %v3551
    %v3553 = vpop.f32.mrb[0].mxu0
    %v3554 = vpop.f32.mrb[0].mxu0
    %v3555 = vadd.f32 0.0, %v3554
    %v3556 = vpop.f32.mrb[0].mxu0
    %3557 = vmatprep.mubr.bf16.mxu0 0
    %3558 = vmatmul.mubr.bf16.gmra.mrb[0].mxu0 %v3468
    %v3559 = vpop.f32.mrb[0].mxu0
    %v3560 = vadd.f32 0.0, %v3559
    %v3561 = vpop.f32.mrb[0].mxu0
    %v3562 = vpop.f32.mrb[0].mxu0
    %v3563 = vadd.f32 0.0, %v3562
    %v3564 = vpop.f32.mrb[0].mxu0
    %3565 = vmatprep.mubr.bf16.mxu0 0
    %3566 = vmatmul.mubr.bf16.gmra.mrb[0].mxu0 %v3471
    %v3567 = vpop.f32.mrb[0].mxu0
    %v3568 = vadd.f32 0.0, %v3567
    %v3569 = vpop.f32.mrb[0].mxu0
    %v3570 = vpop.f32.mrb[0].mxu0
    %v3571 = vadd.f32 0.0, %v3570
    %v3572 = vpop.f32.mrb[0].mxu0
    %3573 = vmatprep.mubr.bf16.mxu0 0
    %3574 = vmatmul.mubr.bf16.gmra.mrb[0].mxu0 %v3474
    %v3575 = vpop.f32.mrb[0].mxu0
    %v3576 = vadd.f32 0.0, %v3575
    %v3577 = vpop.f32.mrb[0].mxu0
    %v3578 = vpop.f32.mrb[0].mxu0
    %v3579 = vadd.f32 0.0, %v3578
    %v3580 = vpop.f32.mrb[0].mxu0
    %3581 = vmatprep.mubr.bf16.mxu0 0
    %3582 = vmatmul.mubr.bf16.gmra.mrb[0].mxu0 %v3477
    %v3583 = vpop.f32.mrb[0].mxu0
    %v3584 = vadd.f32 0.0, %v3583
    %v3585 = vpop.f32.mrb[0].mxu0
    %v3586 = vpop.f32.mrb[0].mxu0
    %v3587 = vadd.f32 0.0, %v3586
    %v3588 = vpop.f32.mrb[0].mxu0
    %3589 = vmatprep.mubr.bf16.mxu0 0
    %3590 = vmatmul.mubr.bf16.gmra.mrb[0].mxu0 %v3480
    %v3591 = vpop.f32.mrb[0].mxu0
    %v3592 = vadd.f32 0.0, %v3591
    %v3593 = vpop.f32.mrb[0].mxu0
    %v3594 = vpop.f32.mrb[0].mxu0
    %v3595 = vadd.f32 0.0, %v3594
    %v3596 = vpop.f32.mrb[0].mxu0
    %3597 = vmatprep.mubr.bf16.mxu0 0
    %3598 = vmatmul.mubr.bf16.gmra.mrb[0].mxu0 %v3483
    %v3599 = vpop.f32.mrb[0].mxu0
    %v3600 = vadd.f32 0.0, %v3599
    %v3601 = vpop.f32.mrb[0].mxu0
    %v3602 = vpop.f32.mrb[0].mxu0
    %v3603 = vadd.f32 0.0, %v3602
    %v3604 = vpop.f32.mrb[0].mxu0
    %3605 = vdwg.mxu0
    %v3606 = vmul.f32 %v3544, 0.17677669
    %v3607 = vmul.f32 %v3547, 0.17677669
    %v3608 = vmul.f32 %v3552, 0.17677669
    %v3609 = vmul.f32 %v3555, 0.17677669
    %v3610 = vmul.f32 %v3560, 0.17677669
    %v3611 = vmul.f32 %v3563, 0.17677669
    %v3612 = vmul.f32 %v3568, 0.17677669
    %v3613 = vmul.f32 %v3571, 0.17677669
    %v3614 = vmul.f32 %v3576, 0.17677669
    %v3615 = vmul.f32 %v3579, 0.17677669
    %v3616 = vmul.f32 %v3584, 0.17677669
    %v3617 = vmul.f32 %v3587, 0.17677669
    %v3618 = vmul.f32 %v3592, 0.17677669
    %v3619 = vmul.f32 %v3595, 0.17677669
    %v3620 = vmul.f32 %v3600, 0.17677669
    %v3621 = vmul.f32 %v3603, 0.17677669
    %v3622 = vadd.f32 %v3606, %v1543
    %v3623 = vadd.f32 %v3607, %v1544
    %v3624 = vadd.f32 %v3608, %v1545
    %v3625 = vadd.f32 %v3609, %v1546
    %v3626 = vadd.f32 %v3610, %v1547
    %v3627 = vadd.f32 %v3611, %v1548
    %v3628 = vadd.f32 %v3612, %v1549
    %v3629 = vadd.f32 %v3613, %v1550
    %v3630 = vadd.f32 %v3614, %v1551
    %v3631 = vadd.f32 %v3615, %v1552
    %v3632 = vadd.f32 %v3616, %v1553
    %v3633 = vadd.f32 %v3617, %v1554
    %v3634 = vadd.f32 %v3618, %v1555
    %v3635 = vadd.f32 %v3619, %v1556
    %v3636 = vadd.f32 %v3620, %v1557
    %v3637 = vadd.f32 %v3621, %v1558
    %3638 = vmax.xlane.f32.xlu0 %v3622
    %v3639 = vpop.xlane.xlu0 %3638
    %3640 = vmax.xlane.f32.xlu0 %v3623
    %v3641 = vpop.xlane.xlu0 %3640
    %3642 = vmax.xlane.f32.xlu0 %v3624
    %v3643 = vpop.xlane.xlu0 %3642
    %3644 = vmax.xlane.f32.xlu0 %v3625
    %v3645 = vpop.xlane.xlu0 %3644
    %3646 = vmax.xlane.f32.xlu0 %v3626
    %v3647 = vpop.xlane.xlu0 %3646
    %3648 = vmax.xlane.f32.xlu0 %v3627
    %v3649 = vpop.xlane.xlu0 %3648
    %3650 = vmax.xlane.f32.xlu0 %v3628
    %v3651 = vpop.xlane.xlu0 %3650
    %3652 = vmax.xlane.f32.xlu0 %v3629
    %v3653 = vpop.xlane.xlu0 %3652
    %3654 = vmax.xlane.f32.xlu0 %v3630
    %v3655 = vpop.xlane.xlu0 %3654
    %3656 = vmax.xlane.f32.xlu0 %v3631
    %v3657 = vpop.xlane.xlu0 %3656
    %3658 = vmax.xlane.f32.xlu0 %v3632
    %v3659 = vpop.xlane.xlu0 %3658
    %3660 = vmax.xlane.f32.xlu0 %v3633
    %v3661 = vpop.xlane.xlu0 %3660
    %3662 = vmax.xlane.f32.xlu0 %v3634
    %v3663 = vpop.xlane.xlu0 %3662
    %3664 = vmax.xlane.f32.xlu0 %v3635
    %v3665 = vpop.xlane.xlu0 %3664
    %3666 = vmax.xlane.f32.xlu0 %v3636
    %v3667 = vpop.xlane.xlu0 %3666
    %3668 = vmax.xlane.f32.xlu0 %v3637
    %v3669 = vpop.xlane.xlu0 %3668
    %v3670 = vsub.f32 %v3622, %v3639
    %v3671 = vsub.f32 %v3623, %v3641
    %v3672 = vsub.f32 %v3624, %v3643
    %v3673 = vsub.f32 %v3625, %v3645
    %v3674 = vsub.f32 %v3626, %v3647
    %v3675 = vsub.f32 %v3627, %v3649
    %v3676 = vsub.f32 %v3628, %v3651
    %v3677 = vsub.f32 %v3629, %v3653
    %v3678 = vsub.f32 %v3630, %v3655
    %v3679 = vsub.f32 %v3631, %v3657
    %v3680 = vsub.f32 %v3632, %v3659
    %v3681 = vsub.f32 %v3633, %v3661
    %v3682 = vsub.f32 %v3634, %v3663
    %v3683 = vsub.f32 %v3635, %v3665
    %v3684 = vsub.f32 %v3636, %v3667
    %v3685 = vsub.f32 %v3637, %v3669
    %v3686 = vmul.f32 %v3670, 1.442695
    %v3687 = vpow.pop %v3686
    %v3688 = vmul.f32 %v3671, 1.442695
    %v3689 = vpow.pop %v3688
    %v3690 = vmul.f32 %v3672, 1.442695
    %v3691 = vpow.pop %v3690
    %v3692 = vmul.f32 %v3673, 1.442695
    %v3693 = vpow.pop %v3692
    %v3694 = vmul.f32 %v3674, 1.442695
    %v3695 = vpow.pop %v3694
    %v3696 = vmul.f32 %v3675, 1.442695
    %v3697 = vpow.pop %v3696
    %v3698 = vmul.f32 %v3676, 1.442695
    %v3699 = vpow.pop %v3698
    %v3700 = vmul.f32 %v3677, 1.442695
    %v3701 = vpow.pop %v3700
    %v3702 = vmul.f32 %v3678, 1.442695
    %v3703 = vpow.pop %v3702
    %v3704 = vmul.f32 %v3679, 1.442695
    %v3705 = vpow.pop %v3704
    %v3706 = vmul.f32 %v3680, 1.442695
    %v3707 = vpow.pop %v3706
    %v3708 = vmul.f32 %v3681, 1.442695
    %v3709 = vpow.pop %v3708
    %v3710 = vmul.f32 %v3682, 1.442695
    %v3711 = vpow.pop %v3710
    %v3712 = vmul.f32 %v3683, 1.442695
    %v3713 = vpow.pop %v3712
    %v3714 = vmul.f32 %v3684, 1.442695
    %v3715 = vpow.pop %v3714
    %v3716 = vmul.f32 %v3685, 1.442695
    %v3717 = vpow.pop %v3716
    %3718 = vadd.xlane.f32.xlu0 %v3687
    %v3719 = vpop.xlane.xlu0 %3718
    %3720 = vadd.xlane.f32.xlu0 %v3689
    %v3721 = vpop.xlane.xlu0 %3720
    %3722 = vadd.xlane.f32.xlu0 %v3691
    %v3723 = vpop.xlane.xlu0 %3722
    %3724 = vadd.xlane.f32.xlu0 %v3693
    %v3725 = vpop.xlane.xlu0 %3724
    %3726 = vadd.xlane.f32.xlu0 %v3695
    %v3727 = vpop.xlane.xlu0 %3726
    %3728 = vadd.xlane.f32.xlu0 %v3697
    %v3729 = vpop.xlane.xlu0 %3728
    %3730 = vadd.xlane.f32.xlu0 %v3699
    %v3731 = vpop.xlane.xlu0 %3730
    %3732 = vadd.xlane.f32.xlu0 %v3701
    %v3733 = vpop.xlane.xlu0 %3732
    %3734 = vadd.xlane.f32.xlu0 %v3703
    %v3735 = vpop.xlane.xlu0 %3734
    %3736 = vadd.xlane.f32.xlu0 %v3705
    %v3737 = vpop.xlane.xlu0 %3736
    %3738 = vadd.xlane.f32.xlu0 %v3707
    %v3739 = vpop.xlane.xlu0 %3738
    %3740 = vadd.xlane.f32.xlu0 %v3709
    %v3741 = vpop.xlane.xlu0 %3740
    %3742 = vadd.xlane.f32.xlu0 %v3711
    %v3743 = vpop.xlane.xlu0 %3742
    %3744 = vadd.xlane.f32.xlu0 %v3713
    %v3745 = vpop.xlane.xlu0 %3744
    %3746 = vadd.xlane.f32.xlu0 %v3715
    %v3747 = vpop.xlane.xlu0 %3746
    %3748 = vadd.xlane.f32.xlu0 %v3717
    %v3749 = vpop.xlane.xlu0 %3748
    %v3750 = vpack.c.bf16 %v3689, %v3687
    %v3751 = vpack.c.bf16 %v3693, %v3691
    %v3752 = vpack.c.bf16 %v3697, %v3695
    %v3753 = vpack.c.bf16 %v3701, %v3699
    %v3754 = vpack.c.bf16 %v3705, %v3703
    %v3755 = vpack.c.bf16 %v3709, %v3707
    %v3756 = vpack.c.bf16 %v3713, %v3711
    %v3757 = vpack.c.bf16 %v3717, %v3715
    %3758 = vrot.lane.b32.xlu0 %v821, 32
    %v3759 = vpop.permute.xlu0 %3758
    %3760 = vrot.lane.b32.xlu0 %v822, 32
    %v3761 = vpop.permute.xlu0 %3760
    %3762 = vrot.lane.b32.xlu0 %v823, 32
    %v3763 = vpop.permute.xlu0 %3762
    %3764 = vrot.lane.b32.xlu0 %v824, 32
    %v3765 = vpop.permute.xlu0 %3764
    %3766 = vrot.lane.b32.xlu0 %v825, 32
    %v3767 = vpop.permute.xlu0 %3766
    %3768 = vrot.lane.b32.xlu0 %v826, 32
    %v3769 = vpop.permute.xlu0 %3768
    %3770 = vrot.lane.b32.xlu0 %v827, 32
    %v3771 = vpop.permute.xlu0 %3770
    %3772 = vrot.lane.b32.xlu0 %v828, 32
    %v3773 = vpop.permute.xlu0 %3772
    %3782 = vmatprep.subr.bf16.mxu0 0
    %3783 = vmatpush1.bf16.msra.mxu0 %v3759
    %3784 = vmatprep.subr.bf16.mxu0 0
    %3785 = vmatpush1.bf16.msra.mxu0 %v3761
    %3786 = vmatprep.subr.bf16.mxu0 0
    %3787 = vmatpush1.bf16.msra.mxu0 %v3763
    %3788 = vmatprep.subr.bf16.mxu0 0
    %3789 = vmatpush1.bf16.msra.mxu0 %v3765
    %3790 = vmatprep.subr.bf16.mxu0 0
    %3791 = vmatpush1.bf16.msra.mxu0 %v3767
    %3792 = vmatprep.subr.bf16.mxu0 0
    %3793 = vmatpush1.bf16.msra.mxu0 %v3769
    %3794 = vmatprep.subr.bf16.mxu0 0
    %3795 = vmatpush1.bf16.msra.mxu0 %v3771
    %3796 = vmatprep.subr.bf16.mxu0 0
    %3797 = vmatpush1.bf16.msra.mxu0 %v3773
    %3798 = vmatprep.subr.bf16.mxu0 0
    %3799 = vmatpush1.bf16.msra.mxu0 0
    %3800 = vmatprep.subr.bf16.mxu0 0
    %3801 = vmatpush1.bf16.msra.mxu0 0
    %3802 = vmatprep.subr.bf16.mxu0 0
    %3803 = vmatpush1.bf16.msra.mxu0 0
    %3804 = vmatprep.subr.bf16.mxu0 0
    %3805 = vmatpush1.bf16.msra.mxu0 0
    %3806 = vmatprep.subr.bf16.mxu0 0
    %3807 = vmatpush1.bf16.msra.mxu0 0
    %3808 = vmatprep.subr.bf16.mxu0 0
    %3809 = vmatpush1.bf16.msra.mxu0 0
    %3810 = vmatprep.subr.bf16.mxu0 0
    %3811 = vmatpush1.bf16.msra.mxu0 0
    %3812 = vmatprep.subr.bf16.mxu0 0
    %3813 = vmatpush1.bf16.msra.mxu0 0
    %3814 = vmatprep.mubr.bf16.mxu0 0
    %3815 = vmatmul.mubr.bf16.gmra.mrb[0].mxu0 %v3750
    %v3816 = vpop.f32.mrb[0].mxu0
    %v3817 = vadd.f32 0.0, %v3816
    %v3818 = vpop.f32.mrb[0].mxu0
    %v3819 = vpop.f32.mrb[0].mxu0
    %v3820 = vadd.f32 0.0, %v3819
    %v3821 = vpop.f32.mrb[0].mxu0
    %3822 = vmatprep.mubr.bf16.mxu0 0
    %3823 = vmatmul.mubr.bf16.gmra.mrb[0].mxu0 %v3751
    %v3824 = vpop.f32.mrb[0].mxu0
    %v3825 = vadd.f32 0.0, %v3824
    %v3826 = vpop.f32.mrb[0].mxu0
    %v3827 = vpop.f32.mrb[0].mxu0
    %v3828 = vadd.f32 0.0, %v3827
    %v3829 = vpop.f32.mrb[0].mxu0
    %3830 = vmatprep.mubr.bf16.mxu0 0
    %3831 = vmatmul.mubr.bf16.gmra.mrb[0].mxu0 %v3752
    %v3832 = vpop.f32.mrb[0].mxu0
    %v3833 = vadd.f32 0.0, %v3832
    %v3834 = vpop.f32.mrb[0].mxu0
    %v3835 = vpop.f32.mrb[0].mxu0
    %v3836 = vadd.f32 0.0, %v3835
    %v3837 = vpop.f32.mrb[0].mxu0
    %3838 = vmatprep.mubr.bf16.mxu0 0
    %3839 = vmatmul.mubr.bf16.gmra.mrb[0].mxu0 %v3753
    %v3840 = vpop.f32.mrb[0].mxu0
    %v3841 = vadd.f32 0.0, %v3840
    %v3842 = vpop.f32.mrb[0].mxu0
    %v3843 = vpop.f32.mrb[0].mxu0
    %v3844 = vadd.f32 0.0, %v3843
    %v3845 = vpop.f32.mrb[0].mxu0
    %3846 = vmatprep.mubr.bf16.mxu0 0
    %3847 = vmatmul.mubr.bf16.gmra.mrb[0].mxu0 %v3754
    %v3848 = vpop.f32.mrb[0].mxu0
    %v3849 = vadd.f32 0.0, %v3848
    %v3850 = vpop.f32.mrb[0].mxu0
    %v3851 = vpop.f32.mrb[0].mxu0
    %v3852 = vadd.f32 0.0, %v3851
    %v3853 = vpop.f32.mrb[0].mxu0
    %3854 = vmatprep.mubr.bf16.mxu0 0
    %3855 = vmatmul.mubr.bf16.gmra.mrb[0].mxu0 %v3755
    %v3856 = vpop.f32.mrb[0].mxu0
    %v3857 = vadd.f32 0.0, %v3856
    %v3858 = vpop.f32.mrb[0].mxu0
    %v3859 = vpop.f32.mrb[0].mxu0
    %v3860 = vadd.f32 0.0, %v3859
    %v3861 = vpop.f32.mrb[0].mxu0
    %3862 = vmatprep.mubr.bf16.mxu0 0
    %3863 = vmatmul.mubr.bf16.gmra.mrb[0].mxu0 %v3756
    %v3864 = vpop.f32.mrb[0].mxu0
    %v3865 = vadd.f32 0.0, %v3864
    %v3866 = vpop.f32.mrb[0].mxu0
    %v3867 = vpop.f32.mrb[0].mxu0
    %v3868 = vadd.f32 0.0, %v3867
    %v3869 = vpop.f32.mrb[0].mxu0
    %3870 = vmatprep.mubr.bf16.mxu0 0
    %3871 = vmatmul.mubr.bf16.gmra.mrb[0].mxu0 %v3757
    %v3872 = vpop.f32.mrb[0].mxu0
    %v3873 = vadd.f32 0.0, %v3872
    %v3874 = vpop.f32.mrb[0].mxu0
    %v3875 = vpop.f32.mrb[0].mxu0
    %v3876 = vadd.f32 0.0, %v3875
    %v3877 = vpop.f32.mrb[0].mxu0
    %3878 = vdwg.mxu0
    %v3879 = vrcp.pop %v3719
    %v3880 = vrcp.pop %v3721
    %v3881 = vrcp.pop %v3723
    %v3882 = vrcp.pop %v3725
    %v3883 = vrcp.pop %v3727
    %v3884 = vrcp.pop %v3729
    %v3885 = vrcp.pop %v3731
    %v3886 = vrcp.pop %v3733
    %v3887 = vrcp.pop %v3735
    %v3888 = vrcp.pop %v3737
    %v3889 = vrcp.pop %v3739
    %v3890 = vrcp.pop %v3741
    %v3891 = vrcp.pop %v3743
    %v3892 = vrcp.pop %v3745
    %v3893 = vrcp.pop %v3747
    %v3894 = vrcp.pop %v3749
    %v3895 = vmul.f32 %v3817, %v3879
    %v3896 = vmul.f32 %v3820, %v3880
    %v3897 = vmul.f32 %v3825, %v3881
    %v3898 = vmul.f32 %v3828, %v3882
    %v3899 = vmul.f32 %v3833, %v3883
    %v3900 = vmul.f32 %v3836, %v3884
    %v3901 = vmul.f32 %v3841, %v3885
    %v3902 = vmul.f32 %v3844, %v3886
    %v3903 = vmul.f32 %v3849, %v3887
    %v3904 = vmul.f32 %v3852, %v3888
    %v3905 = vmul.f32 %v3857, %v3889
    %v3906 = vmul.f32 %v3860, %v3890
    %v3907 = vmul.f32 %v3865, %v3891
    %v3908 = vmul.f32 %v3868, %v3892
    %v3909 = vmul.f32 %v3873, %v3893
    %v3910 = vmul.f32 %v3876, %v3894
    %v3911 = vpack.c.bf16 %v3896, %v3895
    %v3912 = vpack.c.bf16 %v3898, %v3897
    %v3913 = vpack.c.bf16 %v3900, %v3899
    %v3914 = vpack.c.bf16 %v3902, %v3901
    %v3915 = vpack.c.bf16 %v3904, %v3903
    %v3916 = vpack.c.bf16 %v3906, %v3905
    %v3917 = vpack.c.bf16 %v3908, %v3907
    %v3918 = vpack.c.bf16 %v3910, %v3909
    %v3923 = vunpack.c.l.b16 %v1571
    %v3924 = vunpack.c.l.b16 %v1572
    %v3925 = vunpack.c.l.b16 %v1573
    %v3926 = vunpack.c.l.b16 %v1574
    %v3927 = vpack.c.b16 %v3924, %v3923
    %v3928 = vpack.c.b16 %v3926, %v3925
    %v3932 = vsel %vm1575, %v3911, 0
    %v3935 = vsel %vm1575, %v3912, 0
    %v3938 = vsel %vm1575, %v3913, 0
    %v3941 = vsel %vm1575, %v3914, 0
    %v3944 = vsel %vm1575, %v3915, 0
    %v3947 = vsel %vm1575, %v3916, 0
    %v3950 = vsel %vm1575, %v3917, 0
    %v3953 = vsel %vm1575, %v3918, 0
    %3955 = vmatprep.subr.bf16.mxu0 0
    %3956 = vmatpush1.bf16.msra.mxu0 %v3927
    %3957 = vmatprep.subr.bf16.mxu0 0
    %3958 = vmatpush1.bf16.msra.mxu0 %v3928
    %3959 = vmatprep.subr.bf16.mxu0 0
    %3960 = vmatpush1.bf16.msra.mxu0 0
    %3961 = vmatprep.subr.bf16.mxu0 0
    %3962 = vmatpush1.bf16.msra.mxu0 0
    %3963 = vmatprep.subr.bf16.mxu0 0
    %3964 = vmatpush1.bf16.msra.mxu0 0
    %3965 = vmatprep.subr.bf16.mxu0 0
    %3966 = vmatpush1.bf16.msra.mxu0 0
    %3967 = vmatprep.subr.bf16.mxu0 0
    %3968 = vmatpush1.bf16.msra.mxu0 0
    %3969 = vmatprep.subr.bf16.mxu0 0
    %3970 = vmatpush1.bf16.msra.mxu0 0
    %3971 = vmatprep.subr.bf16.mxu0 0
    %3972 = vmatpush1.bf16.msra.mxu0 0
    %3973 = vmatprep.subr.bf16.mxu0 0
    %3974 = vmatpush1.bf16.msra.mxu0 0
    %3975 = vmatprep.subr.bf16.mxu0 0
    %3976 = vmatpush1.bf16.msra.mxu0 0
    %3977 = vmatprep.subr.bf16.mxu0 0
    %3978 = vmatpush1.bf16.msra.mxu0 0
    %3979 = vmatprep.subr.bf16.mxu0 0
    %3980 = vmatpush1.bf16.msra.mxu0 0
    %3981 = vmatprep.subr.bf16.mxu0 0
    %3982 = vmatpush1.bf16.msra.mxu0 0
    %3983 = vmatprep.subr.bf16.mxu0 0
    %3984 = vmatpush1.bf16.msra.mxu0 0
    %3985 = vmatprep.subr.bf16.mxu0 0
    %3986 = vmatpush1.bf16.msra.mxu0 0
    %3987 = vmatprep.mubr.bf16.mxu0 0
    %3988 = vmatmul.mubr.bf16.gmra.mrb[0].mxu0 %v3932
    %v3989 = vpop.f32.mrb[0].mxu0
    %v3990 = vadd.f32 0.0, %v3989
    %v3991 = vpop.f32.mrb[0].mxu0
    %v3992 = vpop.f32.mrb[0].mxu0
    %v3993 = vadd.f32 0.0, %v3992
    %v3994 = vpop.f32.mrb[0].mxu0
    %3995 = vmatprep.mubr.bf16.mxu0 0
    %3996 = vmatmul.mubr.bf16.gmra.mrb[0].mxu0 %v3935
    %v3997 = vpop.f32.mrb[0].mxu0
    %v3998 = vadd.f32 0.0, %v3997
    %v3999 = vpop.f32.mrb[0].mxu0
    %v4000 = vpop.f32.mrb[0].mxu0
    %v4001 = vadd.f32 0.0, %v4000
    %v4002 = vpop.f32.mrb[0].mxu0
    %4003 = vmatprep.mubr.bf16.mxu0 0
    %4004 = vmatmul.mubr.bf16.gmra.mrb[0].mxu0 %v3938
    %v4005 = vpop.f32.mrb[0].mxu0
    %v4006 = vadd.f32 0.0, %v4005
    %v4007 = vpop.f32.mrb[0].mxu0
    %v4008 = vpop.f32.mrb[0].mxu0
    %v4009 = vadd.f32 0.0, %v4008
    %v4010 = vpop.f32.mrb[0].mxu0
    %4011 = vmatprep.mubr.bf16.mxu0 0
    %4012 = vmatmul.mubr.bf16.gmra.mrb[0].mxu0 %v3941
    %v4013 = vpop.f32.mrb[0].mxu0
    %v4014 = vadd.f32 0.0, %v4013
    %v4015 = vpop.f32.mrb[0].mxu0
    %v4016 = vpop.f32.mrb[0].mxu0
    %v4017 = vadd.f32 0.0, %v4016
    %v4018 = vpop.f32.mrb[0].mxu0
    %4019 = vmatprep.mubr.bf16.mxu0 0
    %4020 = vmatmul.mubr.bf16.gmra.mrb[0].mxu0 %v3944
    %v4021 = vpop.f32.mrb[0].mxu0
    %v4022 = vadd.f32 0.0, %v4021
    %v4023 = vpop.f32.mrb[0].mxu0
    %v4024 = vpop.f32.mrb[0].mxu0
    %v4025 = vadd.f32 0.0, %v4024
    %v4026 = vpop.f32.mrb[0].mxu0
    %4027 = vmatprep.mubr.bf16.mxu0 0
    %4028 = vmatmul.mubr.bf16.gmra.mrb[0].mxu0 %v3947
    %v4029 = vpop.f32.mrb[0].mxu0
    %v4030 = vadd.f32 0.0, %v4029
    %v4031 = vpop.f32.mrb[0].mxu0
    %v4032 = vpop.f32.mrb[0].mxu0
    %v4033 = vadd.f32 0.0, %v4032
    %v4034 = vpop.f32.mrb[0].mxu0
    %4035 = vmatprep.mubr.bf16.mxu0 0
    %4036 = vmatmul.mubr.bf16.gmra.mrb[0].mxu0 %v3950
    %v4037 = vpop.f32.mrb[0].mxu0
    %v4038 = vadd.f32 0.0, %v4037
    %v4039 = vpop.f32.mrb[0].mxu0
    %v4040 = vpop.f32.mrb[0].mxu0
    %v4041 = vadd.f32 0.0, %v4040
    %v4042 = vpop.f32.mrb[0].mxu0
    %4043 = vmatprep.mubr.bf16.mxu0 0
    %4044 = vmatmul.mubr.bf16.gmra.mrb[0].mxu0 %v3953
    %v4045 = vpop.f32.mrb[0].mxu0
    %v4046 = vadd.f32 0.0, %v4045
    %v4047 = vpop.f32.mrb[0].mxu0
    %v4048 = vpop.f32.mrb[0].mxu0
    %v4049 = vadd.f32 0.0, %v4048
    %v4050 = vpop.f32.mrb[0].mxu0
    %4051 = vdwg.mxu0
    %v4052 = vadd.f32 %v3413, %v3990
    %v4053 = vadd.f32 %v3414, %v3993
    %v4054 = vadd.f32 %v3415, %v3998
    %v4055 = vadd.f32 %v3416, %v4001
    %v4056 = vadd.f32 %v3417, %v4006
    %v4057 = vadd.f32 %v3418, %v4009
    %v4058 = vadd.f32 %v3419, %v4014
    %v4059 = vadd.f32 %v3420, %v4017
    %v4060 = vadd.f32 %v3421, %v4022
    %v4061 = vadd.f32 %v3422, %v4025
    %v4062 = vadd.f32 %v3423, %v4030
    %v4063 = vadd.f32 %v3424, %v4033
    %v4064 = vadd.f32 %v3425, %v4038
    %v4065 = vadd.f32 %v3426, %v4041
    %v4066 = vadd.f32 %v3427, %v4046
    %v4067 = vadd.f32 %v3428, %v4049
    %v4069 = vsel %vm1575, %v1423, 0
    %v4072 = vsel %vm1575, %v1424, 0
    %v4075 = vsel %vm1575, %v1425, 0
    %v4078 = vsel %vm1575, %v1426, 0
    %v4081 = vsel %vm1575, %v1427, 0
    %v4084 = vsel %vm1575, %v1428, 0
    %v4087 = vsel %vm1575, %v1429, 0
    %v4090 = vsel %vm1575, %v1430, 0
    %v4093 = vsel %vm1575, %v1535, 0
    %v4096 = vsel %vm1575, %v1536, 0
    %v4099 = vsel %vm1575, %v1537, 0
    %v4102 = vsel %vm1575, %v1538, 0
    %v4105 = vsel %vm1575, %v1539, 0
    %v4108 = vsel %vm1575, %v1540, 0
    %v4111 = vsel %vm1575, %v1541, 0
    %v4114 = vsel %vm1575, %v1542, 0
    %4116 = vmatprep.subr.bf16.mxu0 0
    %4117 = vmatpush1.bf16.xpose.msra.mxu0 %v4093
    %4118 = vmatprep.subr.bf16.mxu0 0
    %4119 = vmatpush1.bf16.xpose.msra.mxu0 %v4096
    %4120 = vmatprep.subr.bf16.mxu0 0
    %4121 = vmatpush1.bf16.xpose.msra.mxu0 %v4099
    %4122 = vmatprep.subr.bf16.mxu0 0
    %4123 = vmatpush1.bf16.xpose.msra.mxu0 %v4102
    %4124 = vmatprep.subr.bf16.mxu0 0
    %4125 = vmatpush1.bf16.xpose.msra.mxu0 %v4105
    %4126 = vmatprep.subr.bf16.mxu0 0
    %4127 = vmatpush1.bf16.xpose.msra.mxu0 %v4108
    %4128 = vmatprep.subr.bf16.mxu0 0
    %4129 = vmatpush1.bf16.xpose.msra.mxu0 %v4111
    %4130 = vmatprep.subr.bf16.mxu0 0
    %4131 = vmatpush1.bf16.xpose.msra.mxu0 %v4114
    %4132 = vmatprep.subr.bf16.mxu0 0
    %4133 = vmatpush1.bf16.xpose.msra.mxu0 0
    %4134 = vmatprep.subr.bf16.mxu0 0
    %4135 = vmatpush1.bf16.xpose.msra.mxu0 0
    %4136 = vmatprep.subr.bf16.mxu0 0
    %4137 = vmatpush1.bf16.xpose.msra.mxu0 0
    %4138 = vmatprep.subr.bf16.mxu0 0
    %4139 = vmatpush1.bf16.xpose.msra.mxu0 0
    %4140 = vmatprep.subr.bf16.mxu0 0
    %4141 = vmatpush1.bf16.xpose.msra.mxu0 0
    %4142 = vmatprep.subr.bf16.mxu0 0
    %4143 = vmatpush1.bf16.xpose.msra.mxu0 0
    %4144 = vmatprep.subr.bf16.mxu0 0
    %4145 = vmatpush1.bf16.xpose.msra.mxu0 0
    %4146 = vmatprep.subr.bf16.mxu0 0
    %4147 = vmatpush1.bf16.xpose.msra.mxu0 0
    %4148 = vmatprep.mubr.bf16.mxu0 0
    %4149 = vmatmul.mubr.bf16.gmra.mrb[0].mxu0 %v4069
    %v4150 = vpop.f32.mrb[0].mxu0
    %v4151 = vadd.f32 0.0, %v4150
    %v4152 = vpop.f32.mrb[0].mxu0
    %v4153 = vpop.f32.mrb[0].mxu0
    %v4154 = vadd.f32 0.0, %v4153
    %v4155 = vpop.f32.mrb[0].mxu0
    %4156 = vmatprep.mubr.bf16.mxu0 0
    %4157 = vmatmul.mubr.bf16.gmra.mrb[0].mxu0 %v4072
    %v4158 = vpop.f32.mrb[0].mxu0
    %v4159 = vadd.f32 0.0, %v4158
    %v4160 = vpop.f32.mrb[0].mxu0
    %v4161 = vpop.f32.mrb[0].mxu0
    %v4162 = vadd.f32 0.0, %v4161
    %v4163 = vpop.f32.mrb[0].mxu0
    %4164 = vmatprep.mubr.bf16.mxu0 0
    %4165 = vmatmul.mubr.bf16.gmra.mrb[0].mxu0 %v4075
    %v4166 = vpop.f32.mrb[0].mxu0
    %v4167 = vadd.f32 0.0, %v4166
    %v4168 = vpop.f32.mrb[0].mxu0
    %v4169 = vpop.f32.mrb[0].mxu0
    %v4170 = vadd.f32 0.0, %v4169
    %v4171 = vpop.f32.mrb[0].mxu0
    %4172 = vmatprep.mubr.bf16.mxu0 0
    %4173 = vmatmul.mubr.bf16.gmra.mrb[0].mxu0 %v4078
    %v4174 = vpop.f32.mrb[0].mxu0
    %v4175 = vadd.f32 0.0, %v4174
    %v4176 = vpop.f32.mrb[0].mxu0
    %v4177 = vpop.f32.mrb[0].mxu0
    %v4178 = vadd.f32 0.0, %v4177
    %v4179 = vpop.f32.mrb[0].mxu0
    %4180 = vmatprep.mubr.bf16.mxu0 0
    %4181 = vmatmul.mubr.bf16.gmra.mrb[0].mxu0 %v4081
    %v4182 = vpop.f32.mrb[0].mxu0
    %v4183 = vadd.f32 0.0, %v4182
    %v4184 = vpop.f32.mrb[0].mxu0
    %v4185 = vpop.f32.mrb[0].mxu0
    %v4186 = vadd.f32 0.0, %v4185
    %v4187 = vpop.f32.mrb[0].mxu0
    %4188 = vmatprep.mubr.bf16.mxu0 0
    %4189 = vmatmul.mubr.bf16.gmra.mrb[0].mxu0 %v4084
    %v4190 = vpop.f32.mrb[0].mxu0
    %v4191 = vadd.f32 0.0, %v4190
    %v4192 = vpop.f32.mrb[0].mxu0
    %v4193 = vpop.f32.mrb[0].mxu0
    %v4194 = vadd.f32 0.0, %v4193
    %v4195 = vpop.f32.mrb[0].mxu0
    %4196 = vmatprep.mubr.bf16.mxu0 0
    %4197 = vmatmul.mubr.bf16.gmra.mrb[0].mxu0 %v4087
    %v4198 = vpop.f32.mrb[0].mxu0
    %v4199 = vadd.f32 0.0, %v4198
    %v4200 = vpop.f32.mrb[0].mxu0
    %v4201 = vpop.f32.mrb[0].mxu0
    %v4202 = vadd.f32 0.0, %v4201
    %v4203 = vpop.f32.mrb[0].mxu0
    %4204 = vmatprep.mubr.bf16.mxu0 0
    %4205 = vmatmul.mubr.bf16.gmra.mrb[0].mxu0 %v4090
    %v4206 = vpop.f32.mrb[0].mxu0
    %v4207 = vadd.f32 0.0, %v4206
    %v4208 = vpop.f32.mrb[0].mxu0
    %v4209 = vpop.f32.mrb[0].mxu0
    %v4210 = vadd.f32 0.0, %v4209
    %v4211 = vpop.f32.mrb[0].mxu0
    %4212 = vdwg.mxu0
    %v4213 = vmul.f32 %v4151, 0.17677669
    %v4214 = vmul.f32 %v4154, 0.17677669
    %v4215 = vmul.f32 %v4159, 0.17677669
    %v4216 = vmul.f32 %v4162, 0.17677669
    %v4217 = vmul.f32 %v4167, 0.17677669
    %v4218 = vmul.f32 %v4170, 0.17677669
    %v4219 = vmul.f32 %v4175, 0.17677669
    %v4220 = vmul.f32 %v4178, 0.17677669
    %v4221 = vmul.f32 %v4183, 0.17677669
    %v4222 = vmul.f32 %v4186, 0.17677669
    %v4223 = vmul.f32 %v4191, 0.17677669
    %v4224 = vmul.f32 %v4194, 0.17677669
    %v4225 = vmul.f32 %v4199, 0.17677669
    %v4226 = vmul.f32 %v4202, 0.17677669
    %v4227 = vmul.f32 %v4207, 0.17677669
    %v4228 = vmul.f32 %v4210, 0.17677669
    %v4229 = vadd.f32 %v4213, %v1543
    %v4230 = vadd.f32 %v4214, %v1544
    %v4231 = vadd.f32 %v4215, %v1545
    %v4232 = vadd.f32 %v4216, %v1546
    %v4233 = vadd.f32 %v4217, %v1547
    %v4234 = vadd.f32 %v4218, %v1548
    %v4235 = vadd.f32 %v4219, %v1549
    %v4236 = vadd.f32 %v4220, %v1550
    %v4237 = vadd.f32 %v4221, %v1551
    %v4238 = vadd.f32 %v4222, %v1552
    %v4239 = vadd.f32 %v4223, %v1553
    %v4240 = vadd.f32 %v4224, %v1554
    %v4241 = vadd.f32 %v4225, %v1555
    %v4242 = vadd.f32 %v4226, %v1556
    %v4243 = vadd.f32 %v4227, %v1557
    %v4244 = vadd.f32 %v4228, %v1558
    %4245 = vmax.xlane.f32.xlu0 %v4229
    %v4246 = vpop.xlane.xlu0 %4245
    %4247 = vmax.xlane.f32.xlu0 %v4230
    %v4248 = vpop.xlane.xlu0 %4247
    %4249 = vmax.xlane.f32.xlu0 %v4231
    %v4250 = vpop.xlane.xlu0 %4249
    %4251 = vmax.xlane.f32.xlu0 %v4232
    %v4252 = vpop.xlane.xlu0 %4251
    %4253 = vmax.xlane.f32.xlu0 %v4233
    %v4254 = vpop.xlane.xlu0 %4253
    %4255 = vmax.xlane.f32.xlu0 %v4234
    %v4256 = vpop.xlane.xlu0 %4255
    %4257 = vmax.xlane.f32.xlu0 %v4235
    %v4258 = vpop.xlane.xlu0 %4257
    %4259 = vmax.xlane.f32.xlu0 %v4236
    %v4260 = vpop.xlane.xlu0 %4259
    %4261 = vmax.xlane.f32.xlu0 %v4237
    %v4262 = vpop.xlane.xlu0 %4261
    %4263 = vmax.xlane.f32.xlu0 %v4238
    %v4264 = vpop.xlane.xlu0 %4263
    %4265 = vmax.xlane.f32.xlu0 %v4239
    %v4266 = vpop.xlane.xlu0 %4265
    %4267 = vmax.xlane.f32.xlu0 %v4240
    %v4268 = vpop.xlane.xlu0 %4267
    %4269 = vmax.xlane.f32.xlu0 %v4241
    %v4270 = vpop.xlane.xlu0 %4269
    %4271 = vmax.xlane.f32.xlu0 %v4242
    %v4272 = vpop.xlane.xlu0 %4271
    %4273 = vmax.xlane.f32.xlu0 %v4243
    %v4274 = vpop.xlane.xlu0 %4273
    %4275 = vmax.xlane.f32.xlu0 %v4244
    %v4276 = vpop.xlane.xlu0 %4275
    %v4277 = vsub.f32 %v4229, %v4246
    %v4278 = vsub.f32 %v4230, %v4248
    %v4279 = vsub.f32 %v4231, %v4250
    %v4280 = vsub.f32 %v4232, %v4252
    %v4281 = vsub.f32 %v4233, %v4254
    %v4282 = vsub.f32 %v4234, %v4256
    %v4283 = vsub.f32 %v4235, %v4258
    %v4284 = vsub.f32 %v4236, %v4260
    %v4285 = vsub.f32 %v4237, %v4262
    %v4286 = vsub.f32 %v4238, %v4264
    %v4287 = vsub.f32 %v4239, %v4266
    %v4288 = vsub.f32 %v4240, %v4268
    %v4289 = vsub.f32 %v4241, %v4270
    %v4290 = vsub.f32 %v4242, %v4272
    %v4291 = vsub.f32 %v4243, %v4274
    %v4292 = vsub.f32 %v4244, %v4276
    %v4293 = vmul.f32 %v4277, 1.442695
    %v4294 = vpow.pop %v4293
    %v4295 = vmul.f32 %v4278, 1.442695
    %v4296 = vpow.pop %v4295
    %v4297 = vmul.f32 %v4279, 1.442695
    %v4298 = vpow.pop %v4297
    %v4299 = vmul.f32 %v4280, 1.442695
    %v4300 = vpow.pop %v4299
    %v4301 = vmul.f32 %v4281, 1.442695
    %v4302 = vpow.pop %v4301
    %v4303 = vmul.f32 %v4282, 1.442695
    %v4304 = vpow.pop %v4303
    %v4305 = vmul.f32 %v4283, 1.442695
    %v4306 = vpow.pop %v4305
    %v4307 = vmul.f32 %v4284, 1.442695
    %v4308 = vpow.pop %v4307
    %v4309 = vmul.f32 %v4285, 1.442695
    %v4310 = vpow.pop %v4309
    %v4311 = vmul.f32 %v4286, 1.442695
    %v4312 = vpow.pop %v4311
    %v4313 = vmul.f32 %v4287, 1.442695
    %v4314 = vpow.pop %v4313
    %v4315 = vmul.f32 %v4288, 1.442695
    %v4316 = vpow.pop %v4315
    %v4317 = vmul.f32 %v4289, 1.442695
    %v4318 = vpow.pop %v4317
    %v4319 = vmul.f32 %v4290, 1.442695
    %v4320 = vpow.pop %v4319
    %v4321 = vmul.f32 %v4291, 1.442695
    %v4322 = vpow.pop %v4321
    %v4323 = vmul.f32 %v4292, 1.442695
    %v4324 = vpow.pop %v4323
    %4325 = vadd.xlane.f32.xlu0 %v4294
    %v4326 = vpop.xlane.xlu0 %4325
    %4327 = vadd.xlane.f32.xlu0 %v4296
    %v4328 = vpop.xlane.xlu0 %4327
    %4329 = vadd.xlane.f32.xlu0 %v4298
    %v4330 = vpop.xlane.xlu0 %4329
    %4331 = vadd.xlane.f32.xlu0 %v4300
    %v4332 = vpop.xlane.xlu0 %4331
    %4333 = vadd.xlane.f32.xlu0 %v4302
    %v4334 = vpop.xlane.xlu0 %4333
    %4335 = vadd.xlane.f32.xlu0 %v4304
    %v4336 = vpop.xlane.xlu0 %4335
    %4337 = vadd.xlane.f32.xlu0 %v4306
    %v4338 = vpop.xlane.xlu0 %4337
    %4339 = vadd.xlane.f32.xlu0 %v4308
    %v4340 = vpop.xlane.xlu0 %4339
    %4341 = vadd.xlane.f32.xlu0 %v4310
    %v4342 = vpop.xlane.xlu0 %4341
    %4343 = vadd.xlane.f32.xlu0 %v4312
    %v4344 = vpop.xlane.xlu0 %4343
    %4345 = vadd.xlane.f32.xlu0 %v4314
    %v4346 = vpop.xlane.xlu0 %4345
    %4347 = vadd.xlane.f32.xlu0 %v4316
    %v4348 = vpop.xlane.xlu0 %4347
    %4349 = vadd.xlane.f32.xlu0 %v4318
    %v4350 = vpop.xlane.xlu0 %4349
    %4351 = vadd.xlane.f32.xlu0 %v4320
    %v4352 = vpop.xlane.xlu0 %4351
    %4353 = vadd.xlane.f32.xlu0 %v4322
    %v4354 = vpop.xlane.xlu0 %4353
    %4355 = vadd.xlane.f32.xlu0 %v4324
    %v4356 = vpop.xlane.xlu0 %4355
    %v4357 = vpack.c.bf16 %v4296, %v4294
    %v4358 = vpack.c.bf16 %v4300, %v4298
    %v4359 = vpack.c.bf16 %v4304, %v4302
    %v4360 = vpack.c.bf16 %v4308, %v4306
    %v4361 = vpack.c.bf16 %v4312, %v4310
    %v4362 = vpack.c.bf16 %v4316, %v4314
    %v4363 = vpack.c.bf16 %v4320, %v4318
    %v4364 = vpack.c.bf16 %v4324, %v4322
    %4365 = vmatprep.subr.bf16.mxu0 0
    %4366 = vmatpush1.bf16.msra.mxu0 %v829
    %4367 = vmatprep.subr.bf16.mxu0 0
    %4368 = vmatpush1.bf16.msra.mxu0 %v830
    %4369 = vmatprep.subr.bf16.mxu0 0
    %4370 = vmatpush1.bf16.msra.mxu0 %v831
    %4371 = vmatprep.subr.bf16.mxu0 0
    %4372 = vmatpush1.bf16.msra.mxu0 %v832
    %4373 = vmatprep.subr.bf16.mxu0 0
    %4374 = vmatpush1.bf16.msra.mxu0 %v833
    %4375 = vmatprep.subr.bf16.mxu0 0
    %4376 = vmatpush1.bf16.msra.mxu0 %v834
    %4377 = vmatprep.subr.bf16.mxu0 0
    %4378 = vmatpush1.bf16.msra.mxu0 %v835
    %4379 = vmatprep.subr.bf16.mxu0 0
    %4380 = vmatpush1.bf16.msra.mxu0 %v836
    %4381 = vmatprep.subr.bf16.mxu0 0
    %4382 = vmatpush1.bf16.msra.mxu0 0
    %4383 = vmatprep.subr.bf16.mxu0 0
    %4384 = vmatpush1.bf16.msra.mxu0 0
    %4385 = vmatprep.subr.bf16.mxu0 0
    %4386 = vmatpush1.bf16.msra.mxu0 0
    %4387 = vmatprep.subr.bf16.mxu0 0
    %4388 = vmatpush1.bf16.msra.mxu0 0
    %4389 = vmatprep.subr.bf16.mxu0 0
    %4390 = vmatpush1.bf16.msra.mxu0 0
    %4391 = vmatprep.subr.bf16.mxu0 0
    %4392 = vmatpush1.bf16.msra.mxu0 0
    %4393 = vmatprep.subr.bf16.mxu0 0
    %4394 = vmatpush1.bf16.msra.mxu0 0
    %4395 = vmatprep.subr.bf16.mxu0 0
    %4396 = vmatpush1.bf16.msra.mxu0 0
    %4397 = vmatprep.mubr.bf16.mxu0 0
    %4398 = vmatmul.mubr.bf16.gmra.mrb[0].mxu0 %v4357
    %v4399 = vpop.f32.mrb[0].mxu0
    %v4400 = vadd.f32 0.0, %v4399
    %v4401 = vpop.f32.mrb[0].mxu0
    %v4402 = vpop.f32.mrb[0].mxu0
    %v4403 = vadd.f32 0.0, %v4402
    %v4404 = vpop.f32.mrb[0].mxu0
    %4405 = vmatprep.mubr.bf16.mxu0 0
    %4406 = vmatmul.mubr.bf16.gmra.mrb[0].mxu0 %v4358
    %v4407 = vpop.f32.mrb[0].mxu0
    %v4408 = vadd.f32 0.0, %v4407
    %v4409 = vpop.f32.mrb[0].mxu0
    %v4410 = vpop.f32.mrb[0].mxu0
    %v4411 = vadd.f32 0.0, %v4410
    %v4412 = vpop.f32.mrb[0].mxu0
    %4413 = vmatprep.mubr.bf16.mxu0 0
    %4414 = vmatmul.mubr.bf16.gmra.mrb[0].mxu0 %v4359
    %v4415 = vpop.f32.mrb[0].mxu0
    %v4416 = vadd.f32 0.0, %v4415
    %v4417 = vpop.f32.mrb[0].mxu0
    %v4418 = vpop.f32.mrb[0].mxu0
    %v4419 = vadd.f32 0.0, %v4418
    %v4420 = vpop.f32.mrb[0].mxu0
    %4421 = vmatprep.mubr.bf16.mxu0 0
    %4422 = vmatmul.mubr.bf16.gmra.mrb[0].mxu0 %v4360
    %v4423 = vpop.f32.mrb[0].mxu0
    %v4424 = vadd.f32 0.0, %v4423
    %v4425 = vpop.f32.mrb[0].mxu0
    %v4426 = vpop.f32.mrb[0].mxu0
    %v4427 = vadd.f32 0.0, %v4426
    %v4428 = vpop.f32.mrb[0].mxu0
    %4429 = vmatprep.mubr.bf16.mxu0 0
    %4430 = vmatmul.mubr.bf16.gmra.mrb[0].mxu0 %v4361
    %v4431 = vpop.f32.mrb[0].mxu0
    %v4432 = vadd.f32 0.0, %v4431
    %v4433 = vpop.f32.mrb[0].mxu0
    %v4434 = vpop.f32.mrb[0].mxu0
    %v4435 = vadd.f32 0.0, %v4434
    %v4436 = vpop.f32.mrb[0].mxu0
    %4437 = vmatprep.mubr.bf16.mxu0 0
    %4438 = vmatmul.mubr.bf16.gmra.mrb[0].mxu0 %v4362
    %v4439 = vpop.f32.mrb[0].mxu0
    %v4440 = vadd.f32 0.0, %v4439
    %v4441 = vpop.f32.mrb[0].mxu0
    %v4442 = vpop.f32.mrb[0].mxu0
    %v4443 = vadd.f32 0.0, %v4442
    %v4444 = vpop.f32.mrb[0].mxu0
    %4445 = vmatprep.mubr.bf16.mxu0 0
    %4446 = vmatmul.mubr.bf16.gmra.mrb[0].mxu0 %v4363
    %v4447 = vpop.f32.mrb[0].mxu0
    %v4448 = vadd.f32 0.0, %v4447
    %v4449 = vpop.f32.mrb[0].mxu0
    %v4450 = vpop.f32.mrb[0].mxu0
    %v4451 = vadd.f32 0.0, %v4450
    %v4452 = vpop.f32.mrb[0].mxu0
    %4453 = vmatprep.mubr.bf16.mxu0 0
    %4454 = vmatmul.mubr.bf16.gmra.mrb[0].mxu0 %v4364
    %v4455 = vpop.f32.mrb[0].mxu0
    %v4456 = vadd.f32 0.0, %v4455
    %v4457 = vpop.f32.mrb[0].mxu0
    %v4458 = vpop.f32.mrb[0].mxu0
    %v4459 = vadd.f32 0.0, %v4458
    %v4460 = vpop.f32.mrb[0].mxu0
    %4461 = vdwg.mxu0
    %v4462 = vrcp.pop %v4326
    %v4463 = vrcp.pop %v4328
    %v4464 = vrcp.pop %v4330
    %v4465 = vrcp.pop %v4332
    %v4466 = vrcp.pop %v4334
    %v4467 = vrcp.pop %v4336
    %v4468 = vrcp.pop %v4338
    %v4469 = vrcp.pop %v4340
    %v4470 = vrcp.pop %v4342
    %v4471 = vrcp.pop %v4344
    %v4472 = vrcp.pop %v4346
    %v4473 = vrcp.pop %v4348
    %v4474 = vrcp.pop %v4350
    %v4475 = vrcp.pop %v4352
    %v4476 = vrcp.pop %v4354
    %v4477 = vrcp.pop %v4356
    %v4478 = vmul.f32 %v4400, %v4462
    %v4479 = vmul.f32 %v4403, %v4463
    %v4480 = vmul.f32 %v4408, %v4464
    %v4481 = vmul.f32 %v4411, %v4465
    %v4482 = vmul.f32 %v4416, %v4466
    %v4483 = vmul.f32 %v4419, %v4467
    %v4484 = vmul.f32 %v4424, %v4468
    %v4485 = vmul.f32 %v4427, %v4469
    %v4486 = vmul.f32 %v4432, %v4470
    %v4487 = vmul.f32 %v4435, %v4471
    %v4488 = vmul.f32 %v4440, %v4472
    %v4489 = vmul.f32 %v4443, %v4473
    %v4490 = vmul.f32 %v4448, %v4474
    %v4491 = vmul.f32 %v4451, %v4475
    %v4492 = vmul.f32 %v4456, %v4476
    %v4493 = vmul.f32 %v4459, %v4477
    %v4494 = vpack.c.bf16 %v4479, %v4478
    %v4495 = vpack.c.bf16 %v4481, %v4480
    %v4496 = vpack.c.bf16 %v4483, %v4482
    %v4497 = vpack.c.bf16 %v4485, %v4484
    %v4498 = vpack.c.bf16 %v4487, %v4486
    %v4499 = vpack.c.bf16 %v4489, %v4488
    %v4500 = vpack.c.bf16 %v4491, %v4490
    %v4501 = vpack.c.bf16 %v4493, %v4492
    %4510 = vrot.lane.b32.xlu0 %v1423, 96
    %v4511 = vpop.permute.xlu0 %4510
    %4512 = vrot.lane.b32.xlu0 %v1424, 96
    %v4513 = vpop.permute.xlu0 %4512
    %4514 = vrot.lane.b32.xlu0 %v1425, 96
    %v4515 = vpop.permute.xlu0 %4514
    %4516 = vrot.lane.b32.xlu0 %v1426, 96
    %v4517 = vpop.permute.xlu0 %4516
    %4518 = vrot.lane.b32.xlu0 %v1427, 96
    %v4519 = vpop.permute.xlu0 %4518
    %4520 = vrot.lane.b32.xlu0 %v1428, 96
    %v4521 = vpop.permute.xlu0 %4520
    %4522 = vrot.lane.b32.xlu0 %v1429, 96
    %v4523 = vpop.permute.xlu0 %4522
    %4524 = vrot.lane.b32.xlu0 %v1430, 96
    %v4525 = vpop.permute.xlu0 %4524
    %4534 = vrot.lane.b32.xlu0 %v1535, 96
    %v4535 = vpop.permute.xlu0 %4534
    %4536 = vrot.lane.b32.xlu0 %v1536, 96
    %v4537 = vpop.permute.xlu0 %4536
    %4538 = vrot.lane.b32.xlu0 %v1537, 96
    %v4539 = vpop.permute.xlu0 %4538
    %4540 = vrot.lane.b32.xlu0 %v1538, 96
    %v4541 = vpop.permute.xlu0 %4540
    %4542 = vrot.lane.b32.xlu0 %v1539, 96
    %v4543 = vpop.permute.xlu0 %4542
    %4544 = vrot.lane.b32.xlu0 %v1540, 96
    %v4545 = vpop.permute.xlu0 %4544
    %4546 = vrot.lane.b32.xlu0 %v1541, 96
    %v4547 = vpop.permute.xlu0 %4546
    %4548 = vrot.lane.b32.xlu0 %v1542, 96
    %v4549 = vpop.permute.xlu0 %4548
    %v4551 = vsel %vm1575, %v4511, 0
    %v4554 = vsel %vm1575, %v4513, 0
    %v4557 = vsel %vm1575, %v4515, 0
    %v4560 = vsel %vm1575, %v4517, 0
    %v4563 = vsel %vm1575, %v4519, 0
    %v4566 = vsel %vm1575, %v4521, 0
    %v4569 = vsel %vm1575, %v4523, 0
    %v4572 = vsel %vm1575, %v4525, 0
    %v4575 = vsel %vm1575, %v4535, 0
    %v4578 = vsel %vm1575, %v4537, 0
    %v4581 = vsel %vm1575, %v4539, 0
    %v4584 = vsel %vm1575, %v4541, 0
    %v4587 = vsel %vm1575, %v4543, 0
    %v4590 = vsel %vm1575, %v4545, 0
    %v4593 = vsel %vm1575, %v4547, 0
    %v4596 = vsel %vm1575, %v4549, 0
    %4598 = vmatprep.subr.bf16.mxu0 0
    %4599 = vmatpush1.bf16.xpose.msra.mxu0 %v4575
    %4600 = vmatprep.subr.bf16.mxu0 0
    %4601 = vmatpush1.bf16.xpose.msra.mxu0 %v4578
    %4602 = vmatprep.subr.bf16.mxu0 0
    %4603 = vmatpush1.bf16.xpose.msra.mxu0 %v4581
    %4604 = vmatprep.subr.bf16.mxu0 0
    %4605 = vmatpush1.bf16.xpose.msra.mxu0 %v4584
    %4606 = vmatprep.subr.bf16.mxu0 0
    %4607 = vmatpush1.bf16.xpose.msra.mxu0 %v4587
    %4608 = vmatprep.subr.bf16.mxu0 0
    %4609 = vmatpush1.bf16.xpose.msra.mxu0 %v4590
    %4610 = vmatprep.subr.bf16.mxu0 0
    %4611 = vmatpush1.bf16.xpose.msra.mxu0 %v4593
    %4612 = vmatprep.subr.bf16.mxu0 0
    %4613 = vmatpush1.bf16.xpose.msra.mxu0 %v4596
    %4614 = vmatprep.subr.bf16.mxu0 0
    %4615 = vmatpush1.bf16.xpose.msra.mxu0 0
    %4616 = vmatprep.subr.bf16.mxu0 0
    %4617 = vmatpush1.bf16.xpose.msra.mxu0 0
    %4618 = vmatprep.subr.bf16.mxu0 0
    %4619 = vmatpush1.bf16.xpose.msra.mxu0 0
    %4620 = vmatprep.subr.bf16.mxu0 0
    %4621 = vmatpush1.bf16.xpose.msra.mxu0 0
    %4622 = vmatprep.subr.bf16.mxu0 0
    %4623 = vmatpush1.bf16.xpose.msra.mxu0 0
    %4624 = vmatprep.subr.bf16.mxu0 0
    %4625 = vmatpush1.bf16.xpose.msra.mxu0 0
    %4626 = vmatprep.subr.bf16.mxu0 0
    %4627 = vmatpush1.bf16.xpose.msra.mxu0 0
    %4628 = vmatprep.subr.bf16.mxu0 0
    %4629 = vmatpush1.bf16.xpose.msra.mxu0 0
    %4630 = vmatprep.mubr.bf16.mxu0 0
    %4631 = vmatmul.mubr.bf16.gmra.mrb[0].mxu0 %v4551
    %v4632 = vpop.f32.mrb[0].mxu0
    %v4633 = vadd.f32 0.0, %v4632
    %v4634 = vpop.f32.mrb[0].mxu0
    %v4635 = vpop.f32.mrb[0].mxu0
    %v4636 = vadd.f32 0.0, %v4635
    %v4637 = vpop.f32.mrb[0].mxu0
    %4638 = vmatprep.mubr.bf16.mxu0 0
    %4639 = vmatmul.mubr.bf16.gmra.mrb[0].mxu0 %v4554
    %v4640 = vpop.f32.mrb[0].mxu0
    %v4641 = vadd.f32 0.0, %v4640
    %v4642 = vpop.f32.mrb[0].mxu0
    %v4643 = vpop.f32.mrb[0].mxu0
    %v4644 = vadd.f32 0.0, %v4643
    %v4645 = vpop.f32.mrb[0].mxu0
    %4646 = vmatprep.mubr.bf16.mxu0 0
    %4647 = vmatmul.mubr.bf16.gmra.mrb[0].mxu0 %v4557
    %v4648 = vpop.f32.mrb[0].mxu0
    %v4649 = vadd.f32 0.0, %v4648
    %v4650 = vpop.f32.mrb[0].mxu0
    %v4651 = vpop.f32.mrb[0].mxu0
    %v4652 = vadd.f32 0.0, %v4651
    %v4653 = vpop.f32.mrb[0].mxu0
    %4654 = vmatprep.mubr.bf16.mxu0 0
    %4655 = vmatmul.mubr.bf16.gmra.mrb[0].mxu0 %v4560
    %v4656 = vpop.f32.mrb[0].mxu0
    %v4657 = vadd.f32 0.0, %v4656
    %v4658 = vpop.f32.mrb[0].mxu0
    %v4659 = vpop.f32.mrb[0].mxu0
    %v4660 = vadd.f32 0.0, %v4659
    %v4661 = vpop.f32.mrb[0].mxu0
    %4662 = vmatprep.mubr.bf16.mxu0 0
    %4663 = vmatmul.mubr.bf16.gmra.mrb[0].mxu0 %v4563
    %v4664 = vpop.f32.mrb[0].mxu0
    %v4665 = vadd.f32 0.0, %v4664
    %v4666 = vpop.f32.mrb[0].mxu0
    %v4667 = vpop.f32.mrb[0].mxu0
    %v4668 = vadd.f32 0.0, %v4667
    %v4669 = vpop.f32.mrb[0].mxu0
    %4670 = vmatprep.mubr.bf16.mxu0 0
    %4671 = vmatmul.mubr.bf16.gmra.mrb[0].mxu0 %v4566
    %v4672 = vpop.f32.mrb[0].mxu0
    %v4673 = vadd.f32 0.0, %v4672
    %v4674 = vpop.f32.mrb[0].mxu0
    %v4675 = vpop.f32.mrb[0].mxu0
    %v4676 = vadd.f32 0.0, %v4675
    %v4677 = vpop.f32.mrb[0].mxu0
    %4678 = vmatprep.mubr.bf16.mxu0 0
    %4679 = vmatmul.mubr.bf16.gmra.mrb[0].mxu0 %v4569
    %v4680 = vpop.f32.mrb[0].mxu0
    %v4681 = vadd.f32 0.0, %v4680
    %v4682 = vpop.f32.mrb[0].mxu0
    %v4683 = vpop.f32.mrb[0].mxu0
    %v4684 = vadd.f32 0.0, %v4683
    %v4685 = vpop.f32.mrb[0].mxu0
    %4686 = vmatprep.mubr.bf16.mxu0 0
    %4687 = vmatmul.mubr.bf16.gmra.mrb[0].mxu0 %v4572
    %v4688 = vpop.f32.mrb[0].mxu0
    %v4689 = vadd.f32 0.0, %v4688
    %v4690 = vpop.f32.mrb[0].mxu0
    %v4691 = vpop.f32.mrb[0].mxu0
    %v4692 = vadd.f32 0.0, %v4691
    %v4693 = vpop.f32.mrb[0].mxu0
    %4694 = vdwg.mxu0
    %v4695 = vmul.f32 %v4633, 0.17677669
    %v4696 = vmul.f32 %v4636, 0.17677669
    %v4697 = vmul.f32 %v4641, 0.17677669
    %v4698 = vmul.f32 %v4644, 0.17677669
    %v4699 = vmul.f32 %v4649, 0.17677669
    %v4700 = vmul.f32 %v4652, 0.17677669
    %v4701 = vmul.f32 %v4657, 0.17677669
    %v4702 = vmul.f32 %v4660, 0.17677669
    %v4703 = vmul.f32 %v4665, 0.17677669
    %v4704 = vmul.f32 %v4668, 0.17677669
    %v4705 = vmul.f32 %v4673, 0.17677669
    %v4706 = vmul.f32 %v4676, 0.17677669
    %v4707 = vmul.f32 %v4681, 0.17677669
    %v4708 = vmul.f32 %v4684, 0.17677669
    %v4709 = vmul.f32 %v4689, 0.17677669
    %v4710 = vmul.f32 %v4692, 0.17677669
    %v4711 = vadd.f32 %v4695, %v1543
    %v4712 = vadd.f32 %v4696, %v1544
    %v4713 = vadd.f32 %v4697, %v1545
    %v4714 = vadd.f32 %v4698, %v1546
    %v4715 = vadd.f32 %v4699, %v1547
    %v4716 = vadd.f32 %v4700, %v1548
    %v4717 = vadd.f32 %v4701, %v1549
    %v4718 = vadd.f32 %v4702, %v1550
    %v4719 = vadd.f32 %v4703, %v1551
    %v4720 = vadd.f32 %v4704, %v1552
    %v4721 = vadd.f32 %v4705, %v1553
    %v4722 = vadd.f32 %v4706, %v1554
    %v4723 = vadd.f32 %v4707, %v1555
    %v4724 = vadd.f32 %v4708, %v1556
    %v4725 = vadd.f32 %v4709, %v1557
    %v4726 = vadd.f32 %v4710, %v1558
    %4727 = vmax.xlane.f32.xlu0 %v4711
    %v4728 = vpop.xlane.xlu0 %4727
    %4729 = vmax.xlane.f32.xlu0 %v4712
    %v4730 = vpop.xlane.xlu0 %4729
    %4731 = vmax.xlane.f32.xlu0 %v4713
    %v4732 = vpop.xlane.xlu0 %4731
    %4733 = vmax.xlane.f32.xlu0 %v4714
    %v4734 = vpop.xlane.xlu0 %4733
    %4735 = vmax.xlane.f32.xlu0 %v4715
    %v4736 = vpop.xlane.xlu0 %4735
    %4737 = vmax.xlane.f32.xlu0 %v4716
    %v4738 = vpop.xlane.xlu0 %4737
    %4739 = vmax.xlane.f32.xlu0 %v4717
    %v4740 = vpop.xlane.xlu0 %4739
    %4741 = vmax.xlane.f32.xlu0 %v4718
    %v4742 = vpop.xlane.xlu0 %4741
    %4743 = vmax.xlane.f32.xlu0 %v4719
    %v4744 = vpop.xlane.xlu0 %4743
    %4745 = vmax.xlane.f32.xlu0 %v4720
    %v4746 = vpop.xlane.xlu0 %4745
    %4747 = vmax.xlane.f32.xlu0 %v4721
    %v4748 = vpop.xlane.xlu0 %4747
    %4749 = vmax.xlane.f32.xlu0 %v4722
    %v4750 = vpop.xlane.xlu0 %4749
    %4751 = vmax.xlane.f32.xlu0 %v4723
    %v4752 = vpop.xlane.xlu0 %4751
    %4753 = vmax.xlane.f32.xlu0 %v4724
    %v4754 = vpop.xlane.xlu0 %4753
    %4755 = vmax.xlane.f32.xlu0 %v4725
    %v4756 = vpop.xlane.xlu0 %4755
    %4757 = vmax.xlane.f32.xlu0 %v4726
    %v4758 = vpop.xlane.xlu0 %4757
    %v4759 = vsub.f32 %v4711, %v4728
    %v4760 = vsub.f32 %v4712, %v4730
    %v4761 = vsub.f32 %v4713, %v4732
    %v4762 = vsub.f32 %v4714, %v4734
    %v4763 = vsub.f32 %v4715, %v4736
    %v4764 = vsub.f32 %v4716, %v4738
    %v4765 = vsub.f32 %v4717, %v4740
    %v4766 = vsub.f32 %v4718, %v4742
    %v4767 = vsub.f32 %v4719, %v4744
    %v4768 = vsub.f32 %v4720, %v4746
    %v4769 = vsub.f32 %v4721, %v4748
    %v4770 = vsub.f32 %v4722, %v4750
    %v4771 = vsub.f32 %v4723, %v4752
    %v4772 = vsub.f32 %v4724, %v4754
    %v4773 = vsub.f32 %v4725, %v4756
    %v4774 = vsub.f32 %v4726, %v4758
    %v4775 = vmul.f32 %v4759, 1.442695
    %v4776 = vpow.pop %v4775
    %v4777 = vmul.f32 %v4760, 1.442695
    %v4778 = vpow.pop %v4777
    %v4779 = vmul.f32 %v4761, 1.442695
    %v4780 = vpow.pop %v4779
    %v4781 = vmul.f32 %v4762, 1.442695
    %v4782 = vpow.pop %v4781
    %v4783 = vmul.f32 %v4763, 1.442695
    %v4784 = vpow.pop %v4783
    %v4785 = vmul.f32 %v4764, 1.442695
    %v4786 = vpow.pop %v4785
    %v4787 = vmul.f32 %v4765, 1.442695
    %v4788 = vpow.pop %v4787
    %v4789 = vmul.f32 %v4766, 1.442695
    %v4790 = vpow.pop %v4789
    %v4791 = vmul.f32 %v4767, 1.442695
    %v4792 = vpow.pop %v4791
    %v4793 = vmul.f32 %v4768, 1.442695
    %v4794 = vpow.pop %v4793
    %v4795 = vmul.f32 %v4769, 1.442695
    %v4796 = vpow.pop %v4795
    %v4797 = vmul.f32 %v4770, 1.442695
    %v4798 = vpow.pop %v4797
    %v4799 = vmul.f32 %v4771, 1.442695
    %v4800 = vpow.pop %v4799
    %v4801 = vmul.f32 %v4772, 1.442695
    %v4802 = vpow.pop %v4801
    %v4803 = vmul.f32 %v4773, 1.442695
    %v4804 = vpow.pop %v4803
    %v4805 = vmul.f32 %v4774, 1.442695
    %v4806 = vpow.pop %v4805
    %4807 = vadd.xlane.f32.xlu0 %v4776
    %v4808 = vpop.xlane.xlu0 %4807
    %4809 = vadd.xlane.f32.xlu0 %v4778
    %v4810 = vpop.xlane.xlu0 %4809
    %4811 = vadd.xlane.f32.xlu0 %v4780
    %v4812 = vpop.xlane.xlu0 %4811
    %4813 = vadd.xlane.f32.xlu0 %v4782
    %v4814 = vpop.xlane.xlu0 %4813
    %4815 = vadd.xlane.f32.xlu0 %v4784
    %v4816 = vpop.xlane.xlu0 %4815
    %4817 = vadd.xlane.f32.xlu0 %v4786
    %v4818 = vpop.xlane.xlu0 %4817
    %4819 = vadd.xlane.f32.xlu0 %v4788
    %v4820 = vpop.xlane.xlu0 %4819
    %4821 = vadd.xlane.f32.xlu0 %v4790
    %v4822 = vpop.xlane.xlu0 %4821
    %4823 = vadd.xlane.f32.xlu0 %v4792
    %v4824 = vpop.xlane.xlu0 %4823
    %4825 = vadd.xlane.f32.xlu0 %v4794
    %v4826 = vpop.xlane.xlu0 %4825
    %4827 = vadd.xlane.f32.xlu0 %v4796
    %v4828 = vpop.xlane.xlu0 %4827
    %4829 = vadd.xlane.f32.xlu0 %v4798
    %v4830 = vpop.xlane.xlu0 %4829
    %4831 = vadd.xlane.f32.xlu0 %v4800
    %v4832 = vpop.xlane.xlu0 %4831
    %4833 = vadd.xlane.f32.xlu0 %v4802
    %v4834 = vpop.xlane.xlu0 %4833
    %4835 = vadd.xlane.f32.xlu0 %v4804
    %v4836 = vpop.xlane.xlu0 %4835
    %4837 = vadd.xlane.f32.xlu0 %v4806
    %v4838 = vpop.xlane.xlu0 %4837
    %v4839 = vpack.c.bf16 %v4778, %v4776
    %v4840 = vpack.c.bf16 %v4782, %v4780
    %v4841 = vpack.c.bf16 %v4786, %v4784
    %v4842 = vpack.c.bf16 %v4790, %v4788
    %v4843 = vpack.c.bf16 %v4794, %v4792
    %v4844 = vpack.c.bf16 %v4798, %v4796
    %v4845 = vpack.c.bf16 %v4802, %v4800
    %v4846 = vpack.c.bf16 %v4806, %v4804
    %4855 = vrot.lane.b32.xlu0 %v829, 96
    %v4856 = vpop.permute.xlu0 %4855
    %4857 = vrot.lane.b32.xlu0 %v830, 96
    %v4858 = vpop.permute.xlu0 %4857
    %4859 = vrot.lane.b32.xlu0 %v831, 96
    %v4860 = vpop.permute.xlu0 %4859
    %4861 = vrot.lane.b32.xlu0 %v832, 96
    %v4862 = vpop.permute.xlu0 %4861
    %4863 = vrot.lane.b32.xlu0 %v833, 96
    %v4864 = vpop.permute.xlu0 %4863
    %4865 = vrot.lane.b32.xlu0 %v834, 96
    %v4866 = vpop.permute.xlu0 %4865
    %4867 = vrot.lane.b32.xlu0 %v835, 96
    %v4868 = vpop.permute.xlu0 %4867
    %4869 = vrot.lane.b32.xlu0 %v836, 96
    %v4870 = vpop.permute.xlu0 %4869
    %4879 = vmatprep.subr.bf16.mxu0 0
    %4880 = vmatpush1.bf16.msra.mxu0 %v4856
    %4881 = vmatprep.subr.bf16.mxu0 0
    %4882 = vmatpush1.bf16.msra.mxu0 %v4858
    %4883 = vmatprep.subr.bf16.mxu0 0
    %4884 = vmatpush1.bf16.msra.mxu0 %v4860
    %4885 = vmatprep.subr.bf16.mxu0 0
    %4886 = vmatpush1.bf16.msra.mxu0 %v4862
    %4887 = vmatprep.subr.bf16.mxu0 0
    %4888 = vmatpush1.bf16.msra.mxu0 %v4864
    %4889 = vmatprep.subr.bf16.mxu0 0
    %4890 = vmatpush1.bf16.msra.mxu0 %v4866
    %4891 = vmatprep.subr.bf16.mxu0 0
    %4892 = vmatpush1.bf16.msra.mxu0 %v4868
    %4893 = vmatprep.subr.bf16.mxu0 0
    %4894 = vmatpush1.bf16.msra.mxu0 %v4870
    %4895 = vmatprep.subr.bf16.mxu0 0
    %4896 = vmatpush1.bf16.msra.mxu0 0
    %4897 = vmatprep.subr.bf16.mxu0 0
    %4898 = vmatpush1.bf16.msra.mxu0 0
    %4899 = vmatprep.subr.bf16.mxu0 0
    %4900 = vmatpush1.bf16.msra.mxu0 0
    %4901 = vmatprep.subr.bf16.mxu0 0
    %4902 = vmatpush1.bf16.msra.mxu0 0
    %4903 = vmatprep.subr.bf16.mxu0 0
    %4904 = vmatpush1.bf16.msra.mxu0 0
    %4905 = vmatprep.subr.bf16.mxu0 0
    %4906 = vmatpush1.bf16.msra.mxu0 0
    %4907 = vmatprep.subr.bf16.mxu0 0
    %4908 = vmatpush1.bf16.msra.mxu0 0
    %4909 = vmatprep.subr.bf16.mxu0 0
    %4910 = vmatpush1.bf16.msra.mxu0 0
    %4911 = vmatprep.mubr.bf16.mxu0 0
    %4912 = vmatmul.mubr.bf16.gmra.mrb[0].mxu0 %v4839
    %v4913 = vpop.f32.mrb[0].mxu0
    %v4914 = vadd.f32 0.0, %v4913
    %v4915 = vpop.f32.mrb[0].mxu0
    %v4916 = vpop.f32.mrb[0].mxu0
    %v4917 = vadd.f32 0.0, %v4916
    %v4918 = vpop.f32.mrb[0].mxu0
    %4919 = vmatprep.mubr.bf16.mxu0 0
    %4920 = vmatmul.mubr.bf16.gmra.mrb[0].mxu0 %v4840
    %v4921 = vpop.f32.mrb[0].mxu0
    %v4922 = vadd.f32 0.0, %v4921
    %v4923 = vpop.f32.mrb[0].mxu0
    %v4924 = vpop.f32.mrb[0].mxu0
    %v4925 = vadd.f32 0.0, %v4924
    %v4926 = vpop.f32.mrb[0].mxu0
    %4927 = vmatprep.mubr.bf16.mxu0 0
    %4928 = vmatmul.mubr.bf16.gmra.mrb[0].mxu0 %v4841
    %v4929 = vpop.f32.mrb[0].mxu0
    %v4930 = vadd.f32 0.0, %v4929
    %v4931 = vpop.f32.mrb[0].mxu0
    %v4932 = vpop.f32.mrb[0].mxu0
    %v4933 = vadd.f32 0.0, %v4932
    %v4934 = vpop.f32.mrb[0].mxu0
    %4935 = vmatprep.mubr.bf16.mxu0 0
    %4936 = vmatmul.mubr.bf16.gmra.mrb[0].mxu0 %v4842
    %v4937 = vpop.f32.mrb[0].mxu0
    %v4938 = vadd.f32 0.0, %v4937
    %v4939 = vpop.f32.mrb[0].mxu0
    %v4940 = vpop.f32.mrb[0].mxu0
    %v4941 = vadd.f32 0.0, %v4940
    %v4942 = vpop.f32.mrb[0].mxu0
    %4943 = vmatprep.mubr.bf16.mxu0 0
    %4944 = vmatmul.mubr.bf16.gmra.mrb[0].mxu0 %v4843
    %v4945 = vpop.f32.mrb[0].mxu0
    %v4946 = vadd.f32 0.0, %v4945
    %v4947 = vpop.f32.mrb[0].mxu0
    %v4948 = vpop.f32.mrb[0].mxu0
    %v4949 = vadd.f32 0.0, %v4948
    %v4950 = vpop.f32.mrb[0].mxu0
    %4951 = vmatprep.mubr.bf16.mxu0 0
    %4952 = vmatmul.mubr.bf16.gmra.mrb[0].mxu0 %v4844
    %v4953 = vpop.f32.mrb[0].mxu0
    %v4954 = vadd.f32 0.0, %v4953
    %v4955 = vpop.f32.mrb[0].mxu0
    %v4956 = vpop.f32.mrb[0].mxu0
    %v4957 = vadd.f32 0.0, %v4956
    %v4958 = vpop.f32.mrb[0].mxu0
    %4959 = vmatprep.mubr.bf16.mxu0 0
    %4960 = vmatmul.mubr.bf16.gmra.mrb[0].mxu0 %v4845
    %v4961 = vpop.f32.mrb[0].mxu0
    %v4962 = vadd.f32 0.0, %v4961
    %v4963 = vpop.f32.mrb[0].mxu0
    %v4964 = vpop.f32.mrb[0].mxu0
    %v4965 = vadd.f32 0.0, %v4964
    %v4966 = vpop.f32.mrb[0].mxu0
    %4967 = vmatprep.mubr.bf16.mxu0 0
    %4968 = vmatmul.mubr.bf16.gmra.mrb[0].mxu0 %v4846
    %v4969 = vpop.f32.mrb[0].mxu0
    %v4970 = vadd.f32 0.0, %v4969
    %v4971 = vpop.f32.mrb[0].mxu0
    %v4972 = vpop.f32.mrb[0].mxu0
    %v4973 = vadd.f32 0.0, %v4972
    %v4974 = vpop.f32.mrb[0].mxu0
    %4975 = vdwg.mxu0
    %v4976 = vrcp.pop %v4808
    %v4977 = vrcp.pop %v4810
    %v4978 = vrcp.pop %v4812
    %v4979 = vrcp.pop %v4814
    %v4980 = vrcp.pop %v4816
    %v4981 = vrcp.pop %v4818
    %v4982 = vrcp.pop %v4820
    %v4983 = vrcp.pop %v4822
    %v4984 = vrcp.pop %v4824
    %v4985 = vrcp.pop %v4826
    %v4986 = vrcp.pop %v4828
    %v4987 = vrcp.pop %v4830
    %v4988 = vrcp.pop %v4832
    %v4989 = vrcp.pop %v4834
    %v4990 = vrcp.pop %v4836
    %v4991 = vrcp.pop %v4838
    %v4992 = vmul.f32 %v4914, %v4976
    %v4993 = vmul.f32 %v4917, %v4977
    %v4994 = vmul.f32 %v4922, %v4978
    %v4995 = vmul.f32 %v4925, %v4979
    %v4996 = vmul.f32 %v4930, %v4980
    %v4997 = vmul.f32 %v4933, %v4981
    %v4998 = vmul.f32 %v4938, %v4982
    %v4999 = vmul.f32 %v4941, %v4983
    %v5000 = vmul.f32 %v4946, %v4984
    %v5001 = vmul.f32 %v4949, %v4985
    %v5002 = vmul.f32 %v4954, %v4986
    %v5003 = vmul.f32 %v4957, %v4987
    %v5004 = vmul.f32 %v4962, %v4988
    %v5005 = vmul.f32 %v4965, %v4989
    %v5006 = vmul.f32 %v4970, %v4990
    %v5007 = vmul.f32 %v4973, %v4991
    %v5008 = vpack.c.bf16 %v4993, %v4992
    %v5009 = vpack.c.bf16 %v4995, %v4994
    %v5010 = vpack.c.bf16 %v4997, %v4996
    %v5011 = vpack.c.bf16 %v4999, %v4998
    %v5012 = vpack.c.bf16 %v5001, %v5000
    %v5013 = vpack.c.bf16 %v5003, %v5002
    %v5014 = vpack.c.bf16 %v5005, %v5004
    %v5015 = vpack.c.bf16 %v5007, %v5006
    %v5017 = vsel %vm1575, %v5008, 0
    %v5020 = vsel %vm1575, %v5009, 0
    %v5023 = vsel %vm1575, %v5010, 0
    %v5026 = vsel %vm1575, %v5011, 0
    %v5029 = vsel %vm1575, %v5012, 0
    %v5032 = vsel %vm1575, %v5013, 0
    %v5035 = vsel %vm1575, %v5014, 0
    %v5038 = vsel %vm1575, %v5015, 0
    %5040 = vmatprep.subr.bf16.mxu0 0
    %5041 = vmatpush1.bf16.msra.mxu0 %v2532
    %5042 = vmatprep.subr.bf16.mxu0 0
    %5043 = vmatpush1.bf16.msra.mxu0 %v2533
    %5044 = vmatprep.subr.bf16.mxu0 0
    %5045 = vmatpush1.bf16.msra.mxu0 0
    %5046 = vmatprep.subr.bf16.mxu0 0
    %5047 = vmatpush1.bf16.msra.mxu0 0
    %5048 = vmatprep.subr.bf16.mxu0 0
    %5049 = vmatpush1.bf16.msra.mxu0 0
    %5050 = vmatprep.subr.bf16.mxu0 0
    %5051 = vmatpush1.bf16.msra.mxu0 0
    %5052 = vmatprep.subr.bf16.mxu0 0
    %5053 = vmatpush1.bf16.msra.mxu0 0
    %5054 = vmatprep.subr.bf16.mxu0 0
    %5055 = vmatpush1.bf16.msra.mxu0 0
    %5056 = vmatprep.subr.bf16.mxu0 0
    %5057 = vmatpush1.bf16.msra.mxu0 0
    %5058 = vmatprep.subr.bf16.mxu0 0
    %5059 = vmatpush1.bf16.msra.mxu0 0
    %5060 = vmatprep.subr.bf16.mxu0 0
    %5061 = vmatpush1.bf16.msra.mxu0 0
    %5062 = vmatprep.subr.bf16.mxu0 0
    %5063 = vmatpush1.bf16.msra.mxu0 0
    %5064 = vmatprep.subr.bf16.mxu0 0
    %5065 = vmatpush1.bf16.msra.mxu0 0
    %5066 = vmatprep.subr.bf16.mxu0 0
    %5067 = vmatpush1.bf16.msra.mxu0 0
    %5068 = vmatprep.subr.bf16.mxu0 0
    %5069 = vmatpush1.bf16.msra.mxu0 0
    %5070 = vmatprep.subr.bf16.mxu0 0
    %5071 = vmatpush1.bf16.msra.mxu0 0
    %5072 = vmatprep.mubr.bf16.mxu0 0
    %5073 = vmatmul.mubr.bf16.gmra.mrb[0].mxu0 %v5017
    %v5074 = vpop.f32.mrb[0].mxu0
    %v5075 = vadd.f32 0.0, %v5074
    %v5076 = vpop.f32.mrb[0].mxu0
    %v5077 = vpop.f32.mrb[0].mxu0
    %v5078 = vadd.f32 0.0, %v5077
    %v5079 = vpop.f32.mrb[0].mxu0
    %5080 = vmatprep.mubr.bf16.mxu0 0
    %5081 = vmatmul.mubr.bf16.gmra.mrb[0].mxu0 %v5020
    %v5082 = vpop.f32.mrb[0].mxu0
    %v5083 = vadd.f32 0.0, %v5082
    %v5084 = vpop.f32.mrb[0].mxu0
    %v5085 = vpop.f32.mrb[0].mxu0
    %v5086 = vadd.f32 0.0, %v5085
    %v5087 = vpop.f32.mrb[0].mxu0
    %5088 = vmatprep.mubr.bf16.mxu0 0
    %5089 = vmatmul.mubr.bf16.gmra.mrb[0].mxu0 %v5023
    %v5090 = vpop.f32.mrb[0].mxu0
    %v5091 = vadd.f32 0.0, %v5090
    %v5092 = vpop.f32.mrb[0].mxu0
    %v5093 = vpop.f32.mrb[0].mxu0
    %v5094 = vadd.f32 0.0, %v5093
    %v5095 = vpop.f32.mrb[0].mxu0
    %5096 = vmatprep.mubr.bf16.mxu0 0
    %5097 = vmatmul.mubr.bf16.gmra.mrb[0].mxu0 %v5026
    %v5098 = vpop.f32.mrb[0].mxu0
    %v5099 = vadd.f32 0.0, %v5098
    %v5100 = vpop.f32.mrb[0].mxu0
    %v5101 = vpop.f32.mrb[0].mxu0
    %v5102 = vadd.f32 0.0, %v5101
    %v5103 = vpop.f32.mrb[0].mxu0
    %5104 = vmatprep.mubr.bf16.mxu0 0
    %5105 = vmatmul.mubr.bf16.gmra.mrb[0].mxu0 %v5029
    %v5106 = vpop.f32.mrb[0].mxu0
    %v5107 = vadd.f32 0.0, %v5106
    %v5108 = vpop.f32.mrb[0].mxu0
    %v5109 = vpop.f32.mrb[0].mxu0
    %v5110 = vadd.f32 0.0, %v5109
    %v5111 = vpop.f32.mrb[0].mxu0
    %5112 = vmatprep.mubr.bf16.mxu0 0
    %5113 = vmatmul.mubr.bf16.gmra.mrb[0].mxu0 %v5032
    %v5114 = vpop.f32.mrb[0].mxu0
    %v5115 = vadd.f32 0.0, %v5114
    %v5116 = vpop.f32.mrb[0].mxu0
    %v5117 = vpop.f32.mrb[0].mxu0
    %v5118 = vadd.f32 0.0, %v5117
    %v5119 = vpop.f32.mrb[0].mxu0
    %5120 = vmatprep.mubr.bf16.mxu0 0
    %5121 = vmatmul.mubr.bf16.gmra.mrb[0].mxu0 %v5035
    %v5122 = vpop.f32.mrb[0].mxu0
    %v5123 = vadd.f32 0.0, %v5122
    %v5124 = vpop.f32.mrb[0].mxu0
    %v5125 = vpop.f32.mrb[0].mxu0
    %v5126 = vadd.f32 0.0, %v5125
    %v5127 = vpop.f32.mrb[0].mxu0
    %5128 = vmatprep.mubr.bf16.mxu0 0
    %5129 = vmatmul.mubr.bf16.gmra.mrb[0].mxu0 %v5038
    %v5130 = vpop.f32.mrb[0].mxu0
    %v5131 = vadd.f32 0.0, %v5130
    %v5132 = vpop.f32.mrb[0].mxu0
    %v5133 = vpop.f32.mrb[0].mxu0
    %v5134 = vadd.f32 0.0, %v5133
    %v5135 = vpop.f32.mrb[0].mxu0
    %5136 = vdwg.mxu0
    %v5138 = vsel %vm1575, %v4494, 0
    %v5141 = vsel %vm1575, %v4495, 0
    %v5144 = vsel %vm1575, %v4496, 0
    %v5147 = vsel %vm1575, %v4497, 0
    %v5150 = vsel %vm1575, %v4498, 0
    %v5153 = vsel %vm1575, %v4499, 0
    %v5156 = vsel %vm1575, %v4500, 0
    %v5159 = vsel %vm1575, %v4501, 0
    %5161 = vmatprep.subr.bf16.mxu0 0
    %5162 = vmatpush1.bf16.msra.mxu0 %v2665
    %5163 = vmatprep.subr.bf16.mxu0 0
    %5164 = vmatpush1.bf16.msra.mxu0 %v2666
    %5165 = vmatprep.subr.bf16.mxu0 0
    %5166 = vmatpush1.bf16.msra.mxu0 0
    %5167 = vmatprep.subr.bf16.mxu0 0
    %5168 = vmatpush1.bf16.msra.mxu0 0
    %5169 = vmatprep.subr.bf16.mxu0 0
    %5170 = vmatpush1.bf16.msra.mxu0 0
    %5171 = vmatprep.subr.bf16.mxu0 0
    %5172 = vmatpush1.bf16.msra.mxu0 0
    %5173 = vmatprep.subr.bf16.mxu0 0
    %5174 = vmatpush1.bf16.msra.mxu0 0
    %5175 = vmatprep.subr.bf16.mxu0 0
    %5176 = vmatpush1.bf16.msra.mxu0 0
    %5177 = vmatprep.subr.bf16.mxu0 0
    %5178 = vmatpush1.bf16.msra.mxu0 0
    %5179 = vmatprep.subr.bf16.mxu0 0
    %5180 = vmatpush1.bf16.msra.mxu0 0
    %5181 = vmatprep.subr.bf16.mxu0 0
    %5182 = vmatpush1.bf16.msra.mxu0 0
    %5183 = vmatprep.subr.bf16.mxu0 0
    %5184 = vmatpush1.bf16.msra.mxu0 0
    %5185 = vmatprep.subr.bf16.mxu0 0
    %5186 = vmatpush1.bf16.msra.mxu0 0
    %5187 = vmatprep.subr.bf16.mxu0 0
    %5188 = vmatpush1.bf16.msra.mxu0 0
    %5189 = vmatprep.subr.bf16.mxu0 0
    %5190 = vmatpush1.bf16.msra.mxu0 0
    %5191 = vmatprep.subr.bf16.mxu0 0
    %5192 = vmatpush1.bf16.msra.mxu0 0
    %5193 = vmatprep.mubr.bf16.mxu0 0
    %5194 = vmatmul.mubr.bf16.gmra.mrb[0].mxu0 %v5138
    %v5195 = vpop.f32.mrb[0].mxu0
    %v5196 = vadd.f32 %v5075, %v5195
    %v5197 = vpop.f32.mrb[0].mxu0
    %v5198 = vpop.f32.mrb[0].mxu0
    %v5199 = vadd.f32 %v5078, %v5198
    %v5200 = vpop.f32.mrb[0].mxu0
    %5201 = vmatprep.mubr.bf16.mxu0 0
    %5202 = vmatmul.mubr.bf16.gmra.mrb[0].mxu0 %v5141
    %v5203 = vpop.f32.mrb[0].mxu0
    %v5204 = vadd.f32 %v5083, %v5203
    %v5205 = vpop.f32.mrb[0].mxu0
    %v5206 = vpop.f32.mrb[0].mxu0
    %v5207 = vadd.f32 %v5086, %v5206
    %v5208 = vpop.f32.mrb[0].mxu0
    %5209 = vmatprep.mubr.bf16.mxu0 0
    %5210 = vmatmul.mubr.bf16.gmra.mrb[0].mxu0 %v5144
    %v5211 = vpop.f32.mrb[0].mxu0
    %v5212 = vadd.f32 %v5091, %v5211
    %v5213 = vpop.f32.mrb[0].mxu0
    %v5214 = vpop.f32.mrb[0].mxu0
    %v5215 = vadd.f32 %v5094, %v5214
    %v5216 = vpop.f32.mrb[0].mxu0
    %5217 = vmatprep.mubr.bf16.mxu0 0
    %5218 = vmatmul.mubr.bf16.gmra.mrb[0].mxu0 %v5147
    %v5219 = vpop.f32.mrb[0].mxu0
    %v5220 = vadd.f32 %v5099, %v5219
    %v5221 = vpop.f32.mrb[0].mxu0
    %v5222 = vpop.f32.mrb[0].mxu0
    %v5223 = vadd.f32 %v5102, %v5222
    %v5224 = vpop.f32.mrb[0].mxu0
    %5225 = vmatprep.mubr.bf16.mxu0 0
    %5226 = vmatmul.mubr.bf16.gmra.mrb[0].mxu0 %v5150
    %v5227 = vpop.f32.mrb[0].mxu0
    %v5228 = vadd.f32 %v5107, %v5227
    %v5229 = vpop.f32.mrb[0].mxu0
    %v5230 = vpop.f32.mrb[0].mxu0
    %v5231 = vadd.f32 %v5110, %v5230
    %v5232 = vpop.f32.mrb[0].mxu0
    %5233 = vmatprep.mubr.bf16.mxu0 0
    %5234 = vmatmul.mubr.bf16.gmra.mrb[0].mxu0 %v5153
    %v5235 = vpop.f32.mrb[0].mxu0
    %v5236 = vadd.f32 %v5115, %v5235
    %v5237 = vpop.f32.mrb[0].mxu0
    %v5238 = vpop.f32.mrb[0].mxu0
    %v5239 = vadd.f32 %v5118, %v5238
    %v5240 = vpop.f32.mrb[0].mxu0
    %5241 = vmatprep.mubr.bf16.mxu0 0
    %5242 = vmatmul.mubr.bf16.gmra.mrb[0].mxu0 %v5156
    %v5243 = vpop.f32.mrb[0].mxu0
    %v5244 = vadd.f32 %v5123, %v5243
    %v5245 = vpop.f32.mrb[0].mxu0
    %v5246 = vpop.f32.mrb[0].mxu0
    %v5247 = vadd.f32 %v5126, %v5246
    %v5248 = vpop.f32.mrb[0].mxu0
    %5249 = vmatprep.mubr.bf16.mxu0 0
    %5250 = vmatmul.mubr.bf16.gmra.mrb[0].mxu0 %v5159
    %v5251 = vpop.f32.mrb[0].mxu0
    %v5252 = vadd.f32 %v5131, %v5251
    %v5253 = vpop.f32.mrb[0].mxu0
    %v5254 = vpop.f32.mrb[0].mxu0
    %v5255 = vadd.f32 %v5134, %v5254
    %v5256 = vpop.f32.mrb[0].mxu0
    %5257 = vdwg.mxu0
    %5258 = vrot.lane.b32.xlu0 %v1423, 64
    %v5259 = vpop.permute.xlu0 %5258
    %5260 = vrot.lane.b32.xlu0 %v1424, 64
    %v5261 = vpop.permute.xlu0 %5260
    %5262 = vrot.lane.b32.xlu0 %v1425, 64
    %v5263 = vpop.permute.xlu0 %5262
    %5264 = vrot.lane.b32.xlu0 %v1426, 64
    %v5265 = vpop.permute.xlu0 %5264
    %5266 = vrot.lane.b32.xlu0 %v1427, 64
    %v5267 = vpop.permute.xlu0 %5266
    %5268 = vrot.lane.b32.xlu0 %v1428, 64
    %v5269 = vpop.permute.xlu0 %5268
    %5270 = vrot.lane.b32.xlu0 %v1429, 64
    %v5271 = vpop.permute.xlu0 %5270
    %5272 = vrot.lane.b32.xlu0 %v1430, 64
    %v5273 = vpop.permute.xlu0 %5272
    %5274 = vrot.lane.b32.xlu0 %v1535, 64
    %v5275 = vpop.permute.xlu0 %5274
    %5276 = vrot.lane.b32.xlu0 %v1536, 64
    %v5277 = vpop.permute.xlu0 %5276
    %5278 = vrot.lane.b32.xlu0 %v1537, 64
    %v5279 = vpop.permute.xlu0 %5278
    %5280 = vrot.lane.b32.xlu0 %v1538, 64
    %v5281 = vpop.permute.xlu0 %5280
    %5282 = vrot.lane.b32.xlu0 %v1539, 64
    %v5283 = vpop.permute.xlu0 %5282
    %5284 = vrot.lane.b32.xlu0 %v1540, 64
    %v5285 = vpop.permute.xlu0 %5284
    %5286 = vrot.lane.b32.xlu0 %v1541, 64
    %v5287 = vpop.permute.xlu0 %5286
    %5288 = vrot.lane.b32.xlu0 %v1542, 64
    %v5289 = vpop.permute.xlu0 %5288
    %v5291 = vsel %vm1575, %v5259, 0
    %v5294 = vsel %vm1575, %v5261, 0
    %v5297 = vsel %vm1575, %v5263, 0
    %v5300 = vsel %vm1575, %v5265, 0
    %v5303 = vsel %vm1575, %v5267, 0
    %v5306 = vsel %vm1575, %v5269, 0
    %v5309 = vsel %vm1575, %v5271, 0
    %v5312 = vsel %vm1575, %v5273, 0
    %v5315 = vsel %vm1575, %v5275, 0
    %v5318 = vsel %vm1575, %v5277, 0
    %v5321 = vsel %vm1575, %v5279, 0
    %v5324 = vsel %vm1575, %v5281, 0
    %v5327 = vsel %vm1575, %v5283, 0
    %v5330 = vsel %vm1575, %v5285, 0
    %v5333 = vsel %vm1575, %v5287, 0
    %v5336 = vsel %vm1575, %v5289, 0
    %5338 = vmatprep.subr.bf16.mxu0 0
    %5339 = vmatpush1.bf16.xpose.msra.mxu0 %v5315
    %5340 = vmatprep.subr.bf16.mxu0 0
    %5341 = vmatpush1.bf16.xpose.msra.mxu0 %v5318
    %5342 = vmatprep.subr.bf16.mxu0 0
    %5343 = vmatpush1.bf16.xpose.msra.mxu0 %v5321
    %5344 = vmatprep.subr.bf16.mxu0 0
    %5345 = vmatpush1.bf16.xpose.msra.mxu0 %v5324
    %5346 = vmatprep.subr.bf16.mxu0 0
    %5347 = vmatpush1.bf16.xpose.msra.mxu0 %v5327
    %5348 = vmatprep.subr.bf16.mxu0 0
    %5349 = vmatpush1.bf16.xpose.msra.mxu0 %v5330
    %5350 = vmatprep.subr.bf16.mxu0 0
    %5351 = vmatpush1.bf16.xpose.msra.mxu0 %v5333
    %5352 = vmatprep.subr.bf16.mxu0 0
    %5353 = vmatpush1.bf16.xpose.msra.mxu0 %v5336
    %5354 = vmatprep.subr.bf16.mxu0 0
    %5355 = vmatpush1.bf16.xpose.msra.mxu0 0
    %5356 = vmatprep.subr.bf16.mxu0 0
    %5357 = vmatpush1.bf16.xpose.msra.mxu0 0
    %5358 = vmatprep.subr.bf16.mxu0 0
    %5359 = vmatpush1.bf16.xpose.msra.mxu0 0
    %5360 = vmatprep.subr.bf16.mxu0 0
    %5361 = vmatpush1.bf16.xpose.msra.mxu0 0
    %5362 = vmatprep.subr.bf16.mxu0 0
    %5363 = vmatpush1.bf16.xpose.msra.mxu0 0
    %5364 = vmatprep.subr.bf16.mxu0 0
    %5365 = vmatpush1.bf16.xpose.msra.mxu0 0
    %5366 = vmatprep.subr.bf16.mxu0 0
    %5367 = vmatpush1.bf16.xpose.msra.mxu0 0
    %5368 = vmatprep.subr.bf16.mxu0 0
    %5369 = vmatpush1.bf16.xpose.msra.mxu0 0
    %5370 = vmatprep.mubr.bf16.mxu0 0
    %5371 = vmatmul.mubr.bf16.gmra.mrb[0].mxu0 %v5291
    %v5372 = vpop.f32.mrb[0].mxu0
    %v5373 = vadd.f32 0.0, %v5372
    %v5374 = vpop.f32.mrb[0].mxu0
    %v5375 = vpop.f32.mrb[0].mxu0
    %v5376 = vadd.f32 0.0, %v5375
    %v5377 = vpop.f32.mrb[0].mxu0
    %5378 = vmatprep.mubr.bf16.mxu0 0
    %5379 = vmatmul.mubr.bf16.gmra.mrb[0].mxu0 %v5294
    %v5380 = vpop.f32.mrb[0].mxu0
    %v5381 = vadd.f32 0.0, %v5380
    %v5382 = vpop.f32.mrb[0].mxu0
    %v5383 = vpop.f32.mrb[0].mxu0
    %v5384 = vadd.f32 0.0, %v5383
    %v5385 = vpop.f32.mrb[0].mxu0
    %5386 = vmatprep.mubr.bf16.mxu0 0
    %5387 = vmatmul.mubr.bf16.gmra.mrb[0].mxu0 %v5297
    %v5388 = vpop.f32.mrb[0].mxu0
    %v5389 = vadd.f32 0.0, %v5388
    %v5390 = vpop.f32.mrb[0].mxu0
    %v5391 = vpop.f32.mrb[0].mxu0
    %v5392 = vadd.f32 0.0, %v5391
    %v5393 = vpop.f32.mrb[0].mxu0
    %5394 = vmatprep.mubr.bf16.mxu0 0
    %5395 = vmatmul.mubr.bf16.gmra.mrb[0].mxu0 %v5300
    %v5396 = vpop.f32.mrb[0].mxu0
    %v5397 = vadd.f32 0.0, %v5396
    %v5398 = vpop.f32.mrb[0].mxu0
    %v5399 = vpop.f32.mrb[0].mxu0
    %v5400 = vadd.f32 0.0, %v5399
    %v5401 = vpop.f32.mrb[0].mxu0
    %5402 = vmatprep.mubr.bf16.mxu0 0
    %5403 = vmatmul.mubr.bf16.gmra.mrb[0].mxu0 %v5303
    %v5404 = vpop.f32.mrb[0].mxu0
    %v5405 = vadd.f32 0.0, %v5404
    %v5406 = vpop.f32.mrb[0].mxu0
    %v5407 = vpop.f32.mrb[0].mxu0
    %v5408 = vadd.f32 0.0, %v5407
    %v5409 = vpop.f32.mrb[0].mxu0
    %5410 = vmatprep.mubr.bf16.mxu0 0
    %5411 = vmatmul.mubr.bf16.gmra.mrb[0].mxu0 %v5306
    %v5412 = vpop.f32.mrb[0].mxu0
    %v5413 = vadd.f32 0.0, %v5412
    %v5414 = vpop.f32.mrb[0].mxu0
    %v5415 = vpop.f32.mrb[0].mxu0
    %v5416 = vadd.f32 0.0, %v5415
    %v5417 = vpop.f32.mrb[0].mxu0
    %5418 = vmatprep.mubr.bf16.mxu0 0
    %5419 = vmatmul.mubr.bf16.gmra.mrb[0].mxu0 %v5309
    %v5420 = vpop.f32.mrb[0].mxu0
    %v5421 = vadd.f32 0.0, %v5420
    %v5422 = vpop.f32.mrb[0].mxu0
    %v5423 = vpop.f32.mrb[0].mxu0
    %v5424 = vadd.f32 0.0, %v5423
    %v5425 = vpop.f32.mrb[0].mxu0
    %5426 = vmatprep.mubr.bf16.mxu0 0
    %5427 = vmatmul.mubr.bf16.gmra.mrb[0].mxu0 %v5312
    %v5428 = vpop.f32.mrb[0].mxu0
    %v5429 = vadd.f32 0.0, %v5428
    %v5430 = vpop.f32.mrb[0].mxu0
    %v5431 = vpop.f32.mrb[0].mxu0
    %v5432 = vadd.f32 0.0, %v5431
    %v5433 = vpop.f32.mrb[0].mxu0
    %5434 = vdwg.mxu0
    %v5435 = vmul.f32 %v5373, 0.17677669
    %v5436 = vmul.f32 %v5376, 0.17677669
    %v5437 = vmul.f32 %v5381, 0.17677669
    %v5438 = vmul.f32 %v5384, 0.17677669
    %v5439 = vmul.f32 %v5389, 0.17677669
    %v5440 = vmul.f32 %v5392, 0.17677669
    %v5441 = vmul.f32 %v5397, 0.17677669
    %v5442 = vmul.f32 %v5400, 0.17677669
    %v5443 = vmul.f32 %v5405, 0.17677669
    %v5444 = vmul.f32 %v5408, 0.17677669
    %v5445 = vmul.f32 %v5413, 0.17677669
    %v5446 = vmul.f32 %v5416, 0.17677669
    %v5447 = vmul.f32 %v5421, 0.17677669
    %v5448 = vmul.f32 %v5424, 0.17677669
    %v5449 = vmul.f32 %v5429, 0.17677669
    %v5450 = vmul.f32 %v5432, 0.17677669
    %v5451 = vadd.f32 %v5435, %v1543
    %v5452 = vadd.f32 %v5436, %v1544
    %v5453 = vadd.f32 %v5437, %v1545
    %v5454 = vadd.f32 %v5438, %v1546
    %v5455 = vadd.f32 %v5439, %v1547
    %v5456 = vadd.f32 %v5440, %v1548
    %v5457 = vadd.f32 %v5441, %v1549
    %v5458 = vadd.f32 %v5442, %v1550
    %v5459 = vadd.f32 %v5443, %v1551
    %v5460 = vadd.f32 %v5444, %v1552
    %v5461 = vadd.f32 %v5445, %v1553
    %v5462 = vadd.f32 %v5446, %v1554
    %v5463 = vadd.f32 %v5447, %v1555
    %v5464 = vadd.f32 %v5448, %v1556
    %v5465 = vadd.f32 %v5449, %v1557
    %v5466 = vadd.f32 %v5450, %v1558
    %5467 = vmax.xlane.f32.xlu0 %v5451
    %v5468 = vpop.xlane.xlu0 %5467
    %5469 = vmax.xlane.f32.xlu0 %v5452
    %v5470 = vpop.xlane.xlu0 %5469
    %5471 = vmax.xlane.f32.xlu0 %v5453
    %v5472 = vpop.xlane.xlu0 %5471
    %5473 = vmax.xlane.f32.xlu0 %v5454
    %v5474 = vpop.xlane.xlu0 %5473
    %5475 = vmax.xlane.f32.xlu0 %v5455
    %v5476 = vpop.xlane.xlu0 %5475
    %5477 = vmax.xlane.f32.xlu0 %v5456
    %v5478 = vpop.xlane.xlu0 %5477
    %5479 = vmax.xlane.f32.xlu0 %v5457
    %v5480 = vpop.xlane.xlu0 %5479
    %5481 = vmax.xlane.f32.xlu0 %v5458
    %v5482 = vpop.xlane.xlu0 %5481
    %5483 = vmax.xlane.f32.xlu0 %v5459
    %v5484 = vpop.xlane.xlu0 %5483
    %5485 = vmax.xlane.f32.xlu0 %v5460
    %v5486 = vpop.xlane.xlu0 %5485
    %5487 = vmax.xlane.f32.xlu0 %v5461
    %v5488 = vpop.xlane.xlu0 %5487
    %5489 = vmax.xlane.f32.xlu0 %v5462
    %v5490 = vpop.xlane.xlu0 %5489
    %5491 = vmax.xlane.f32.xlu0 %v5463
    %v5492 = vpop.xlane.xlu0 %5491
    %5493 = vmax.xlane.f32.xlu0 %v5464
    %v5494 = vpop.xlane.xlu0 %5493
    %5495 = vmax.xlane.f32.xlu0 %v5465
    %v5496 = vpop.xlane.xlu0 %5495
    %5497 = vmax.xlane.f32.xlu0 %v5466
    %v5498 = vpop.xlane.xlu0 %5497
    %v5499 = vsub.f32 %v5451, %v5468
    %v5500 = vsub.f32 %v5452, %v5470
    %v5501 = vsub.f32 %v5453, %v5472
    %v5502 = vsub.f32 %v5454, %v5474
    %v5503 = vsub.f32 %v5455, %v5476
    %v5504 = vsub.f32 %v5456, %v5478
    %v5505 = vsub.f32 %v5457, %v5480
    %v5506 = vsub.f32 %v5458, %v5482
    %v5507 = vsub.f32 %v5459, %v5484
    %v5508 = vsub.f32 %v5460, %v5486
    %v5509 = vsub.f32 %v5461, %v5488
    %v5510 = vsub.f32 %v5462, %v5490
    %v5511 = vsub.f32 %v5463, %v5492
    %v5512 = vsub.f32 %v5464, %v5494
    %v5513 = vsub.f32 %v5465, %v5496
    %v5514 = vsub.f32 %v5466, %v5498
    %v5515 = vmul.f32 %v5499, 1.442695
    %v5516 = vpow.pop %v5515
    %v5517 = vmul.f32 %v5500, 1.442695
    %v5518 = vpow.pop %v5517
    %v5519 = vmul.f32 %v5501, 1.442695
    %v5520 = vpow.pop %v5519
    %v5521 = vmul.f32 %v5502, 1.442695
    %v5522 = vpow.pop %v5521
    %v5523 = vmul.f32 %v5503, 1.442695
    %v5524 = vpow.pop %v5523
    %v5525 = vmul.f32 %v5504, 1.442695
    %v5526 = vpow.pop %v5525
    %v5527 = vmul.f32 %v5505, 1.442695
    %v5528 = vpow.pop %v5527
    %v5529 = vmul.f32 %v5506, 1.442695
    %v5530 = vpow.pop %v5529
    %v5531 = vmul.f32 %v5507, 1.442695
    %v5532 = vpow.pop %v5531
    %v5533 = vmul.f32 %v5508, 1.442695
    %v5534 = vpow.pop %v5533
    %v5535 = vmul.f32 %v5509, 1.442695
    %v5536 = vpow.pop %v5535
    %v5537 = vmul.f32 %v5510, 1.442695
    %v5538 = vpow.pop %v5537
    %v5539 = vmul.f32 %v5511, 1.442695
    %v5540 = vpow.pop %v5539
    %v5541 = vmul.f32 %v5512, 1.442695
    %v5542 = vpow.pop %v5541
    %v5543 = vmul.f32 %v5513, 1.442695
    %v5544 = vpow.pop %v5543
    %v5545 = vmul.f32 %v5514, 1.442695
    %v5546 = vpow.pop %v5545
    %5547 = vadd.xlane.f32.xlu0 %v5516
    %v5548 = vpop.xlane.xlu0 %5547
    %5549 = vadd.xlane.f32.xlu0 %v5518
    %v5550 = vpop.xlane.xlu0 %5549
    %5551 = vadd.xlane.f32.xlu0 %v5520
    %v5552 = vpop.xlane.xlu0 %5551
    %5553 = vadd.xlane.f32.xlu0 %v5522
    %v5554 = vpop.xlane.xlu0 %5553
    %5555 = vadd.xlane.f32.xlu0 %v5524
    %v5556 = vpop.xlane.xlu0 %5555
    %5557 = vadd.xlane.f32.xlu0 %v5526
    %v5558 = vpop.xlane.xlu0 %5557
    %5559 = vadd.xlane.f32.xlu0 %v5528
    %v5560 = vpop.xlane.xlu0 %5559
    %5561 = vadd.xlane.f32.xlu0 %v5530
    %v5562 = vpop.xlane.xlu0 %5561
    %5563 = vadd.xlane.f32.xlu0 %v5532
    %v5564 = vpop.xlane.xlu0 %5563
    %5565 = vadd.xlane.f32.xlu0 %v5534
    %v5566 = vpop.xlane.xlu0 %5565
    %5567 = vadd.xlane.f32.xlu0 %v5536
    %v5568 = vpop.xlane.xlu0 %5567
    %5569 = vadd.xlane.f32.xlu0 %v5538
    %v5570 = vpop.xlane.xlu0 %5569
    %5571 = vadd.xlane.f32.xlu0 %v5540
    %v5572 = vpop.xlane.xlu0 %5571
    %5573 = vadd.xlane.f32.xlu0 %v5542
    %v5574 = vpop.xlane.xlu0 %5573
    %5575 = vadd.xlane.f32.xlu0 %v5544
    %v5576 = vpop.xlane.xlu0 %5575
    %5577 = vadd.xlane.f32.xlu0 %v5546
    %v5578 = vpop.xlane.xlu0 %5577
    %v5579 = vpack.c.bf16 %v5518, %v5516
    %v5580 = vpack.c.bf16 %v5522, %v5520
    %v5581 = vpack.c.bf16 %v5526, %v5524
    %v5582 = vpack.c.bf16 %v5530, %v5528
    %v5583 = vpack.c.bf16 %v5534, %v5532
    %v5584 = vpack.c.bf16 %v5538, %v5536
    %v5585 = vpack.c.bf16 %v5542, %v5540
    %v5586 = vpack.c.bf16 %v5546, %v5544
    %5587 = vrot.lane.b32.xlu0 %v829, 64
    %v5588 = vpop.permute.xlu0 %5587
    %5589 = vrot.lane.b32.xlu0 %v830, 64
    %v5590 = vpop.permute.xlu0 %5589
    %5591 = vrot.lane.b32.xlu0 %v831, 64
    %v5592 = vpop.permute.xlu0 %5591
    %5593 = vrot.lane.b32.xlu0 %v832, 64
    %v5594 = vpop.permute.xlu0 %5593
    %5595 = vrot.lane.b32.xlu0 %v833, 64
    %v5596 = vpop.permute.xlu0 %5595
    %5597 = vrot.lane.b32.xlu0 %v834, 64
    %v5598 = vpop.permute.xlu0 %5597
    %5599 = vrot.lane.b32.xlu0 %v835, 64
    %v5600 = vpop.permute.xlu0 %5599
    %5601 = vrot.lane.b32.xlu0 %v836, 64
    %v5602 = vpop.permute.xlu0 %5601
    %5611 = vmatprep.subr.bf16.mxu0 0
    %5612 = vmatpush1.bf16.msra.mxu0 %v5588
    %5613 = vmatprep.subr.bf16.mxu0 0
    %5614 = vmatpush1.bf16.msra.mxu0 %v5590
    %5615 = vmatprep.subr.bf16.mxu0 0
    %5616 = vmatpush1.bf16.msra.mxu0 %v5592
    %5617 = vmatprep.subr.bf16.mxu0 0
    %5618 = vmatpush1.bf16.msra.mxu0 %v5594
    %5619 = vmatprep.subr.bf16.mxu0 0
    %5620 = vmatpush1.bf16.msra.mxu0 %v5596
    %5621 = vmatprep.subr.bf16.mxu0 0
    %5622 = vmatpush1.bf16.msra.mxu0 %v5598
    %5623 = vmatprep.subr.bf16.mxu0 0
    %5624 = vmatpush1.bf16.msra.mxu0 %v5600
    %5625 = vmatprep.subr.bf16.mxu0 0
    %5626 = vmatpush1.bf16.msra.mxu0 %v5602
    %5627 = vmatprep.subr.bf16.mxu0 0
    %5628 = vmatpush1.bf16.msra.mxu0 0
    %5629 = vmatprep.subr.bf16.mxu0 0
    %5630 = vmatpush1.bf16.msra.mxu0 0
    %5631 = vmatprep.subr.bf16.mxu0 0
    %5632 = vmatpush1.bf16.msra.mxu0 0
    %5633 = vmatprep.subr.bf16.mxu0 0
    %5634 = vmatpush1.bf16.msra.mxu0 0
    %5635 = vmatprep.subr.bf16.mxu0 0
    %5636 = vmatpush1.bf16.msra.mxu0 0
    %5637 = vmatprep.subr.bf16.mxu0 0
    %5638 = vmatpush1.bf16.msra.mxu0 0
    %5639 = vmatprep.subr.bf16.mxu0 0
    %5640 = vmatpush1.bf16.msra.mxu0 0
    %5641 = vmatprep.subr.bf16.mxu0 0
    %5642 = vmatpush1.bf16.msra.mxu0 0
    %5643 = vmatprep.mubr.bf16.mxu0 0
    %5644 = vmatmul.mubr.bf16.gmra.mrb[0].mxu0 %v5579
    %v5645 = vpop.f32.mrb[0].mxu0
    %v5646 = vadd.f32 0.0, %v5645
    %v5647 = vpop.f32.mrb[0].mxu0
    %v5648 = vpop.f32.mrb[0].mxu0
    %v5649 = vadd.f32 0.0, %v5648
    %v5650 = vpop.f32.mrb[0].mxu0
    %5651 = vmatprep.mubr.bf16.mxu0 0
    %5652 = vmatmul.mubr.bf16.gmra.mrb[0].mxu0 %v5580
    %v5653 = vpop.f32.mrb[0].mxu0
    %v5654 = vadd.f32 0.0, %v5653
    %v5655 = vpop.f32.mrb[0].mxu0
    %v5656 = vpop.f32.mrb[0].mxu0
    %v5657 = vadd.f32 0.0, %v5656
    %v5658 = vpop.f32.mrb[0].mxu0
    %5659 = vmatprep.mubr.bf16.mxu0 0
    %5660 = vmatmul.mubr.bf16.gmra.mrb[0].mxu0 %v5581
    %v5661 = vpop.f32.mrb[0].mxu0
    %v5662 = vadd.f32 0.0, %v5661
    %v5663 = vpop.f32.mrb[0].mxu0
    %v5664 = vpop.f32.mrb[0].mxu0
    %v5665 = vadd.f32 0.0, %v5664
    %v5666 = vpop.f32.mrb[0].mxu0
    %5667 = vmatprep.mubr.bf16.mxu0 0
    %5668 = vmatmul.mubr.bf16.gmra.mrb[0].mxu0 %v5582
    %v5669 = vpop.f32.mrb[0].mxu0
    %v5670 = vadd.f32 0.0, %v5669
    %v5671 = vpop.f32.mrb[0].mxu0
    %v5672 = vpop.f32.mrb[0].mxu0
    %v5673 = vadd.f32 0.0, %v5672
    %v5674 = vpop.f32.mrb[0].mxu0
    %5675 = vmatprep.mubr.bf16.mxu0 0
    %5676 = vmatmul.mubr.bf16.gmra.mrb[0].mxu0 %v5583
    %v5677 = vpop.f32.mrb[0].mxu0
    %v5678 = vadd.f32 0.0, %v5677
    %v5679 = vpop.f32.mrb[0].mxu0
    %v5680 = vpop.f32.mrb[0].mxu0
    %v5681 = vadd.f32 0.0, %v5680
    %v5682 = vpop.f32.mrb[0].mxu0
    %5683 = vmatprep.mubr.bf16.mxu0 0
    %5684 = vmatmul.mubr.bf16.gmra.mrb[0].mxu0 %v5584
    %v5685 = vpop.f32.mrb[0].mxu0
    %v5686 = vadd.f32 0.0, %v5685
    %v5687 = vpop.f32.mrb[0].mxu0
    %v5688 = vpop.f32.mrb[0].mxu0
    %v5689 = vadd.f32 0.0, %v5688
    %v5690 = vpop.f32.mrb[0].mxu0
    %5691 = vmatprep.mubr.bf16.mxu0 0
    %5692 = vmatmul.mubr.bf16.gmra.mrb[0].mxu0 %v5585
    %v5693 = vpop.f32.mrb[0].mxu0
    %v5694 = vadd.f32 0.0, %v5693
    %v5695 = vpop.f32.mrb[0].mxu0
    %v5696 = vpop.f32.mrb[0].mxu0
    %v5697 = vadd.f32 0.0, %v5696
    %v5698 = vpop.f32.mrb[0].mxu0
    %5699 = vmatprep.mubr.bf16.mxu0 0
    %5700 = vmatmul.mubr.bf16.gmra.mrb[0].mxu0 %v5586
    %v5701 = vpop.f32.mrb[0].mxu0
    %v5702 = vadd.f32 0.0, %v5701
    %v5703 = vpop.f32.mrb[0].mxu0
    %v5704 = vpop.f32.mrb[0].mxu0
    %v5705 = vadd.f32 0.0, %v5704
    %v5706 = vpop.f32.mrb[0].mxu0
    %5707 = vdwg.mxu0
    %v5708 = vrcp.pop %v5548
    %v5709 = vrcp.pop %v5550
    %v5710 = vrcp.pop %v5552
    %v5711 = vrcp.pop %v5554
    %v5712 = vrcp.pop %v5556
    %v5713 = vrcp.pop %v5558
    %v5714 = vrcp.pop %v5560
    %v5715 = vrcp.pop %v5562
    %v5716 = vrcp.pop %v5564
    %v5717 = vrcp.pop %v5566
    %v5718 = vrcp.pop %v5568
    %v5719 = vrcp.pop %v5570
    %v5720 = vrcp.pop %v5572
    %v5721 = vrcp.pop %v5574
    %v5722 = vrcp.pop %v5576
    %v5723 = vrcp.pop %v5578
    %v5724 = vmul.f32 %v5646, %v5708
    %v5725 = vmul.f32 %v5649, %v5709
    %v5726 = vmul.f32 %v5654, %v5710
    %v5727 = vmul.f32 %v5657, %v5711
    %v5728 = vmul.f32 %v5662, %v5712
    %v5729 = vmul.f32 %v5665, %v5713
    %v5730 = vmul.f32 %v5670, %v5714
    %v5731 = vmul.f32 %v5673, %v5715
    %v5732 = vmul.f32 %v5678, %v5716
    %v5733 = vmul.f32 %v5681, %v5717
    %v5734 = vmul.f32 %v5686, %v5718
    %v5735 = vmul.f32 %v5689, %v5719
    %v5736 = vmul.f32 %v5694, %v5720
    %v5737 = vmul.f32 %v5697, %v5721
    %v5738 = vmul.f32 %v5702, %v5722
    %v5739 = vmul.f32 %v5705, %v5723
    %v5740 = vpack.c.bf16 %v5725, %v5724
    %v5741 = vpack.c.bf16 %v5727, %v5726
    %v5742 = vpack.c.bf16 %v5729, %v5728
    %v5743 = vpack.c.bf16 %v5731, %v5730
    %v5744 = vpack.c.bf16 %v5733, %v5732
    %v5745 = vpack.c.bf16 %v5735, %v5734
    %v5746 = vpack.c.bf16 %v5737, %v5736
    %v5747 = vpack.c.bf16 %v5739, %v5738
    %v5749 = vsel %vm1575, %v5740, 0
    %v5752 = vsel %vm1575, %v5741, 0
    %v5755 = vsel %vm1575, %v5742, 0
    %v5758 = vsel %vm1575, %v5743, 0
    %v5761 = vsel %vm1575, %v5744, 0
    %v5764 = vsel %vm1575, %v5745, 0
    %v5767 = vsel %vm1575, %v5746, 0
    %v5770 = vsel %vm1575, %v5747, 0
    %5772 = vmatprep.subr.bf16.mxu0 0
    %5773 = vmatpush1.bf16.msra.mxu0 %v3288
    %5774 = vmatprep.subr.bf16.mxu0 0
    %5775 = vmatpush1.bf16.msra.mxu0 %v3289
    %5776 = vmatprep.subr.bf16.mxu0 0
    %5777 = vmatpush1.bf16.msra.mxu0 0
    %5778 = vmatprep.subr.bf16.mxu0 0
    %5779 = vmatpush1.bf16.msra.mxu0 0
    %5780 = vmatprep.subr.bf16.mxu0 0
    %5781 = vmatpush1.bf16.msra.mxu0 0
    %5782 = vmatprep.subr.bf16.mxu0 0
    %5783 = vmatpush1.bf16.msra.mxu0 0
    %5784 = vmatprep.subr.bf16.mxu0 0
    %5785 = vmatpush1.bf16.msra.mxu0 0
    %5786 = vmatprep.subr.bf16.mxu0 0
    %5787 = vmatpush1.bf16.msra.mxu0 0
    %5788 = vmatprep.subr.bf16.mxu0 0
    %5789 = vmatpush1.bf16.msra.mxu0 0
    %5790 = vmatprep.subr.bf16.mxu0 0
    %5791 = vmatpush1.bf16.msra.mxu0 0
    %5792 = vmatprep.subr.bf16.mxu0 0
    %5793 = vmatpush1.bf16.msra.mxu0 0
    %5794 = vmatprep.subr.bf16.mxu0 0
    %5795 = vmatpush1.bf16.msra.mxu0 0
    %5796 = vmatprep.subr.bf16.mxu0 0
    %5797 = vmatpush1.bf16.msra.mxu0 0
    %5798 = vmatprep.subr.bf16.mxu0 0
    %5799 = vmatpush1.bf16.msra.mxu0 0
    %5800 = vmatprep.subr.bf16.mxu0 0
    %5801 = vmatpush1.bf16.msra.mxu0 0
    %5802 = vmatprep.subr.bf16.mxu0 0
    %5803 = vmatpush1.bf16.msra.mxu0 0
    %5804 = vmatprep.mubr.bf16.mxu0 0
    %5805 = vmatmul.mubr.bf16.gmra.mrb[0].mxu0 %v5749
    %v5806 = vpop.f32.mrb[0].mxu0
    %v5807 = vadd.f32 0.0, %v5806
    %v5808 = vpop.f32.mrb[0].mxu0
    %v5809 = vpop.f32.mrb[0].mxu0
    %v5810 = vadd.f32 0.0, %v5809
    %v5811 = vpop.f32.mrb[0].mxu0
    %5812 = vmatprep.mubr.bf16.mxu0 0
    %5813 = vmatmul.mubr.bf16.gmra.mrb[0].mxu0 %v5752
    %v5814 = vpop.f32.mrb[0].mxu0
    %v5815 = vadd.f32 0.0, %v5814
    %v5816 = vpop.f32.mrb[0].mxu0
    %v5817 = vpop.f32.mrb[0].mxu0
    %v5818 = vadd.f32 0.0, %v5817
    %v5819 = vpop.f32.mrb[0].mxu0
    %5820 = vmatprep.mubr.bf16.mxu0 0
    %5821 = vmatmul.mubr.bf16.gmra.mrb[0].mxu0 %v5755
    %v5822 = vpop.f32.mrb[0].mxu0
    %v5823 = vadd.f32 0.0, %v5822
    %v5824 = vpop.f32.mrb[0].mxu0
    %v5825 = vpop.f32.mrb[0].mxu0
    %v5826 = vadd.f32 0.0, %v5825
    %v5827 = vpop.f32.mrb[0].mxu0
    %5828 = vmatprep.mubr.bf16.mxu0 0
    %5829 = vmatmul.mubr.bf16.gmra.mrb[0].mxu0 %v5758
    %v5830 = vpop.f32.mrb[0].mxu0
    %v5831 = vadd.f32 0.0, %v5830
    %v5832 = vpop.f32.mrb[0].mxu0
    %v5833 = vpop.f32.mrb[0].mxu0
    %v5834 = vadd.f32 0.0, %v5833
    %v5835 = vpop.f32.mrb[0].mxu0
    %5836 = vmatprep.mubr.bf16.mxu0 0
    %5837 = vmatmul.mubr.bf16.gmra.mrb[0].mxu0 %v5761
    %v5838 = vpop.f32.mrb[0].mxu0
    %v5839 = vadd.f32 0.0, %v5838
    %v5840 = vpop.f32.mrb[0].mxu0
    %v5841 = vpop.f32.mrb[0].mxu0
    %v5842 = vadd.f32 0.0, %v5841
    %v5843 = vpop.f32.mrb[0].mxu0
    %5844 = vmatprep.mubr.bf16.mxu0 0
    %5845 = vmatmul.mubr.bf16.gmra.mrb[0].mxu0 %v5764
    %v5846 = vpop.f32.mrb[0].mxu0
    %v5847 = vadd.f32 0.0, %v5846
    %v5848 = vpop.f32.mrb[0].mxu0
    %v5849 = vpop.f32.mrb[0].mxu0
    %v5850 = vadd.f32 0.0, %v5849
    %v5851 = vpop.f32.mrb[0].mxu0
    %5852 = vmatprep.mubr.bf16.mxu0 0
    %5853 = vmatmul.mubr.bf16.gmra.mrb[0].mxu0 %v5767
    %v5854 = vpop.f32.mrb[0].mxu0
    %v5855 = vadd.f32 0.0, %v5854
    %v5856 = vpop.f32.mrb[0].mxu0
    %v5857 = vpop.f32.mrb[0].mxu0
    %v5858 = vadd.f32 0.0, %v5857
    %v5859 = vpop.f32.mrb[0].mxu0
    %5860 = vmatprep.mubr.bf16.mxu0 0
    %5861 = vmatmul.mubr.bf16.gmra.mrb[0].mxu0 %v5770
    %v5862 = vpop.f32.mrb[0].mxu0
    %v5863 = vadd.f32 0.0, %v5862
    %v5864 = vpop.f32.mrb[0].mxu0
    %v5865 = vpop.f32.mrb[0].mxu0
    %v5866 = vadd.f32 0.0, %v5865
    %v5867 = vpop.f32.mrb[0].mxu0
    %5868 = vdwg.mxu0
    %v5869 = vadd.f32 %v5196, %v5807
    %v5870 = vadd.f32 %v5199, %v5810
    %v5871 = vadd.f32 %v5204, %v5815
    %v5872 = vadd.f32 %v5207, %v5818
    %v5873 = vadd.f32 %v5212, %v5823
    %v5874 = vadd.f32 %v5215, %v5826
    %v5875 = vadd.f32 %v5220, %v5831
    %v5876 = vadd.f32 %v5223, %v5834
    %v5877 = vadd.f32 %v5228, %v5839
    %v5878 = vadd.f32 %v5231, %v5842
    %v5879 = vadd.f32 %v5236, %v5847
    %v5880 = vadd.f32 %v5239, %v5850
    %v5881 = vadd.f32 %v5244, %v5855
    %v5882 = vadd.f32 %v5247, %v5858
    %v5883 = vadd.f32 %v5252, %v5863
    %v5884 = vadd.f32 %v5255, %v5866
    %5885 = vrot.lane.b32.xlu0 %v1423, 32
    %v5886 = vpop.permute.xlu0 %5885
    %5887 = vrot.lane.b32.xlu0 %v1424, 32
    %v5888 = vpop.permute.xlu0 %5887
    %5889 = vrot.lane.b32.xlu0 %v1425, 32
    %v5890 = vpop.permute.xlu0 %5889
    %5891 = vrot.lane.b32.xlu0 %v1426, 32
    %v5892 = vpop.permute.xlu0 %5891
    %5893 = vrot.lane.b32.xlu0 %v1427, 32
    %v5894 = vpop.permute.xlu0 %5893
    %5895 = vrot.lane.b32.xlu0 %v1428, 32
    %v5896 = vpop.permute.xlu0 %5895
    %5897 = vrot.lane.b32.xlu0 %v1429, 32
    %v5898 = vpop.permute.xlu0 %5897
    %5899 = vrot.lane.b32.xlu0 %v1430, 32
    %v5900 = vpop.permute.xlu0 %5899
    %5901 = vrot.lane.b32.xlu0 %v1535, 32
    %v5902 = vpop.permute.xlu0 %5901
    %5903 = vrot.lane.b32.xlu0 %v1536, 32
    %v5904 = vpop.permute.xlu0 %5903
    %5905 = vrot.lane.b32.xlu0 %v1537, 32
    %v5906 = vpop.permute.xlu0 %5905
    %5907 = vrot.lane.b32.xlu0 %v1538, 32
    %v5908 = vpop.permute.xlu0 %5907
    %5909 = vrot.lane.b32.xlu0 %v1539, 32
    %v5910 = vpop.permute.xlu0 %5909
    %5911 = vrot.lane.b32.xlu0 %v1540, 32
    %v5912 = vpop.permute.xlu0 %5911
    %5913 = vrot.lane.b32.xlu0 %v1541, 32
    %v5914 = vpop.permute.xlu0 %5913
    %5915 = vrot.lane.b32.xlu0 %v1542, 32
    %v5916 = vpop.permute.xlu0 %5915
    %v5918 = vsel %vm1575, %v5886, 0
    %v5921 = vsel %vm1575, %v5888, 0
    %v5924 = vsel %vm1575, %v5890, 0
    %v5927 = vsel %vm1575, %v5892, 0
    %v5930 = vsel %vm1575, %v5894, 0
    %v5933 = vsel %vm1575, %v5896, 0
    %v5936 = vsel %vm1575, %v5898, 0
    %v5939 = vsel %vm1575, %v5900, 0
    %v5942 = vsel %vm1575, %v5902, 0
    %v5945 = vsel %vm1575, %v5904, 0
    %v5948 = vsel %vm1575, %v5906, 0
    %v5951 = vsel %vm1575, %v5908, 0
    %v5954 = vsel %vm1575, %v5910, 0
    %v5957 = vsel %vm1575, %v5912, 0
    %v5960 = vsel %vm1575, %v5914, 0
    %v5963 = vsel %vm1575, %v5916, 0
    %5965 = vmatprep.subr.bf16.mxu0 0
    %5966 = vmatpush1.bf16.xpose.msra.mxu0 %v5942
    %5967 = vmatprep.subr.bf16.mxu0 0
    %5968 = vmatpush1.bf16.xpose.msra.mxu0 %v5945
    %5969 = vmatprep.subr.bf16.mxu0 0
    %5970 = vmatpush1.bf16.xpose.msra.mxu0 %v5948
    %5971 = vmatprep.subr.bf16.mxu0 0
    %5972 = vmatpush1.bf16.xpose.msra.mxu0 %v5951
    %5973 = vmatprep.subr.bf16.mxu0 0
    %5974 = vmatpush1.bf16.xpose.msra.mxu0 %v5954
    %5975 = vmatprep.subr.bf16.mxu0 0
    %5976 = vmatpush1.bf16.xpose.msra.mxu0 %v5957
    %5977 = vmatprep.subr.bf16.mxu0 0
    %5978 = vmatpush1.bf16.xpose.msra.mxu0 %v5960
    %5979 = vmatprep.subr.bf16.mxu0 0
    %5980 = vmatpush1.bf16.xpose.msra.mxu0 %v5963
    %5981 = vmatprep.subr.bf16.mxu0 0
    %5982 = vmatpush1.bf16.xpose.msra.mxu0 0
    %5983 = vmatprep.subr.bf16.mxu0 0
    %5984 = vmatpush1.bf16.xpose.msra.mxu0 0
    %5985 = vmatprep.subr.bf16.mxu0 0
    %5986 = vmatpush1.bf16.xpose.msra.mxu0 0
    %5987 = vmatprep.subr.bf16.mxu0 0
    %5988 = vmatpush1.bf16.xpose.msra.mxu0 0
    %5989 = vmatprep.subr.bf16.mxu0 0
    %5990 = vmatpush1.bf16.xpose.msra.mxu0 0
    %5991 = vmatprep.subr.bf16.mxu0 0
    %5992 = vmatpush1.bf16.xpose.msra.mxu0 0
    %5993 = vmatprep.subr.bf16.mxu0 0
    %5994 = vmatpush1.bf16.xpose.msra.mxu0 0
    %5995 = vmatprep.subr.bf16.mxu0 0
    %5996 = vmatpush1.bf16.xpose.msra.mxu0 0
    %5997 = vmatprep.mubr.bf16.mxu0 0
    %5998 = vmatmul.mubr.bf16.gmra.mrb[0].mxu0 %v5918
    %v5999 = vpop.f32.mrb[0].mxu0
    %v6000 = vadd.f32 0.0, %v5999
    %v6001 = vpop.f32.mrb[0].mxu0
    %v6002 = vpop.f32.mrb[0].mxu0
    %v6003 = vadd.f32 0.0, %v6002
    %v6004 = vpop.f32.mrb[0].mxu0
    %6005 = vmatprep.mubr.bf16.mxu0 0
    %6006 = vmatmul.mubr.bf16.gmra.mrb[0].mxu0 %v5921
    %v6007 = vpop.f32.mrb[0].mxu0
    %v6008 = vadd.f32 0.0, %v6007
    %v6009 = vpop.f32.mrb[0].mxu0
    %v6010 = vpop.f32.mrb[0].mxu0
    %v6011 = vadd.f32 0.0, %v6010
    %v6012 = vpop.f32.mrb[0].mxu0
    %6013 = vmatprep.mubr.bf16.mxu0 0
    %6014 = vmatmul.mubr.bf16.gmra.mrb[0].mxu0 %v5924
    %v6015 = vpop.f32.mrb[0].mxu0
    %v6016 = vadd.f32 0.0, %v6015
    %v6017 = vpop.f32.mrb[0].mxu0
    %v6018 = vpop.f32.mrb[0].mxu0
    %v6019 = vadd.f32 0.0, %v6018
    %v6020 = vpop.f32.mrb[0].mxu0
    %6021 = vmatprep.mubr.bf16.mxu0 0
    %6022 = vmatmul.mubr.bf16.gmra.mrb[0].mxu0 %v5927
    %v6023 = vpop.f32.mrb[0].mxu0
    %v6024 = vadd.f32 0.0, %v6023
    %v6025 = vpop.f32.mrb[0].mxu0
    %v6026 = vpop.f32.mrb[0].mxu0
    %v6027 = vadd.f32 0.0, %v6026
    %v6028 = vpop.f32.mrb[0].mxu0
    %6029 = vmatprep.mubr.bf16.mxu0 0
    %6030 = vmatmul.mubr.bf16.gmra.mrb[0].mxu0 %v5930
    %v6031 = vpop.f32.mrb[0].mxu0
    %v6032 = vadd.f32 0.0, %v6031
    %v6033 = vpop.f32.mrb[0].mxu0
    %v6034 = vpop.f32.mrb[0].mxu0
    %v6035 = vadd.f32 0.0, %v6034
    %v6036 = vpop.f32.mrb[0].mxu0
    %6037 = vmatprep.mubr.bf16.mxu0 0
    %6038 = vmatmul.mubr.bf16.gmra.mrb[0].mxu0 %v5933
    %v6039 = vpop.f32.mrb[0].mxu0
    %v6040 = vadd.f32 0.0, %v6039
    %v6041 = vpop.f32.mrb[0].mxu0
    %v6042 = vpop.f32.mrb[0].mxu0
    %v6043 = vadd.f32 0.0, %v6042
    %v6044 = vpop.f32.mrb[0].mxu0
    %6045 = vmatprep.mubr.bf16.mxu0 0
    %6046 = vmatmul.mubr.bf16.gmra.mrb[0].mxu0 %v5936
    %v6047 = vpop.f32.mrb[0].mxu0
    %v6048 = vadd.f32 0.0, %v6047
    %v6049 = vpop.f32.mrb[0].mxu0
    %v6050 = vpop.f32.mrb[0].mxu0
    %v6051 = vadd.f32 0.0, %v6050
    %v6052 = vpop.f32.mrb[0].mxu0
    %6053 = vmatprep.mubr.bf16.mxu0 0
    %6054 = vmatmul.mubr.bf16.gmra.mrb[0].mxu0 %v5939
    %v6055 = vpop.f32.mrb[0].mxu0
    %v6056 = vadd.f32 0.0, %v6055
    %v6057 = vpop.f32.mrb[0].mxu0
    %v6058 = vpop.f32.mrb[0].mxu0
    %v6059 = vadd.f32 0.0, %v6058
    %v6060 = vpop.f32.mrb[0].mxu0
    %6061 = vdwg.mxu0
    %v6062 = vmul.f32 %v6000, 0.17677669
    %v6063 = vmul.f32 %v6003, 0.17677669
    %v6064 = vmul.f32 %v6008, 0.17677669
    %v6065 = vmul.f32 %v6011, 0.17677669
    %v6066 = vmul.f32 %v6016, 0.17677669
    %v6067 = vmul.f32 %v6019, 0.17677669
    %v6068 = vmul.f32 %v6024, 0.17677669
    %v6069 = vmul.f32 %v6027, 0.17677669
    %v6070 = vmul.f32 %v6032, 0.17677669
    %v6071 = vmul.f32 %v6035, 0.17677669
    %v6072 = vmul.f32 %v6040, 0.17677669
    %v6073 = vmul.f32 %v6043, 0.17677669
    %v6074 = vmul.f32 %v6048, 0.17677669
    %v6075 = vmul.f32 %v6051, 0.17677669
    %v6076 = vmul.f32 %v6056, 0.17677669
    %v6077 = vmul.f32 %v6059, 0.17677669
    %v6078 = vadd.f32 %v6062, %v1543
    %v6079 = vadd.f32 %v6063, %v1544
    %v6080 = vadd.f32 %v6064, %v1545
    %v6081 = vadd.f32 %v6065, %v1546
    %v6082 = vadd.f32 %v6066, %v1547
    %v6083 = vadd.f32 %v6067, %v1548
    %v6084 = vadd.f32 %v6068, %v1549
    %v6085 = vadd.f32 %v6069, %v1550
    %v6086 = vadd.f32 %v6070, %v1551
    %v6087 = vadd.f32 %v6071, %v1552
    %v6088 = vadd.f32 %v6072, %v1553
    %v6089 = vadd.f32 %v6073, %v1554
    %v6090 = vadd.f32 %v6074, %v1555
    %v6091 = vadd.f32 %v6075, %v1556
    %v6092 = vadd.f32 %v6076, %v1557
    %v6093 = vadd.f32 %v6077, %v1558
    %6094 = vmax.xlane.f32.xlu0 %v6078
    %v6095 = vpop.xlane.xlu0 %6094
    %6096 = vmax.xlane.f32.xlu0 %v6079
    %v6097 = vpop.xlane.xlu0 %6096
    %6098 = vmax.xlane.f32.xlu0 %v6080
    %v6099 = vpop.xlane.xlu0 %6098
    %6100 = vmax.xlane.f32.xlu0 %v6081
    %v6101 = vpop.xlane.xlu0 %6100
    %6102 = vmax.xlane.f32.xlu0 %v6082
    %v6103 = vpop.xlane.xlu0 %6102
    %6104 = vmax.xlane.f32.xlu0 %v6083
    %v6105 = vpop.xlane.xlu0 %6104
    %6106 = vmax.xlane.f32.xlu0 %v6084
    %v6107 = vpop.xlane.xlu0 %6106
    %6108 = vmax.xlane.f32.xlu0 %v6085
    %v6109 = vpop.xlane.xlu0 %6108
    %6110 = vmax.xlane.f32.xlu0 %v6086
    %v6111 = vpop.xlane.xlu0 %6110
    %6112 = vmax.xlane.f32.xlu0 %v6087
    %v6113 = vpop.xlane.xlu0 %6112
    %6114 = vmax.xlane.f32.xlu0 %v6088
    %v6115 = vpop.xlane.xlu0 %6114
    %6116 = vmax.xlane.f32.xlu0 %v6089
    %v6117 = vpop.xlane.xlu0 %6116
    %6118 = vmax.xlane.f32.xlu0 %v6090
    %v6119 = vpop.xlane.xlu0 %6118
    %6120 = vmax.xlane.f32.xlu0 %v6091
    %v6121 = vpop.xlane.xlu0 %6120
    %6122 = vmax.xlane.f32.xlu0 %v6092
    %v6123 = vpop.xlane.xlu0 %6122
    %6124 = vmax.xlane.f32.xlu0 %v6093
    %v6125 = vpop.xlane.xlu0 %6124
    %v6126 = vsub.f32 %v6078, %v6095
    %v6127 = vsub.f32 %v6079, %v6097
    %v6128 = vsub.f32 %v6080, %v6099
    %v6129 = vsub.f32 %v6081, %v6101
    %v6130 = vsub.f32 %v6082, %v6103
    %v6131 = vsub.f32 %v6083, %v6105
    %v6132 = vsub.f32 %v6084, %v6107
    %v6133 = vsub.f32 %v6085, %v6109
    %v6134 = vsub.f32 %v6086, %v6111
    %v6135 = vsub.f32 %v6087, %v6113
    %v6136 = vsub.f32 %v6088, %v6115
    %v6137 = vsub.f32 %v6089, %v6117
    %v6138 = vsub.f32 %v6090, %v6119
    %v6139 = vsub.f32 %v6091, %v6121
    %v6140 = vsub.f32 %v6092, %v6123
    %v6141 = vsub.f32 %v6093, %v6125
    %v6142 = vmul.f32 %v6126, 1.442695
    %v6143 = vpow.pop %v6142
    %v6144 = vmul.f32 %v6127, 1.442695
    %v6145 = vpow.pop %v6144
    %v6146 = vmul.f32 %v6128, 1.442695
    %v6147 = vpow.pop %v6146
    %v6148 = vmul.f32 %v6129, 1.442695
    %v6149 = vpow.pop %v6148
    %v6150 = vmul.f32 %v6130, 1.442695
    %v6151 = vpow.pop %v6150
    %v6152 = vmul.f32 %v6131, 1.442695
    %v6153 = vpow.pop %v6152
    %v6154 = vmul.f32 %v6132, 1.442695
    %v6155 = vpow.pop %v6154
    %v6156 = vmul.f32 %v6133, 1.442695
    %v6157 = vpow.pop %v6156
    %v6158 = vmul.f32 %v6134, 1.442695
    %v6159 = vpow.pop %v6158
    %v6160 = vmul.f32 %v6135, 1.442695
    %v6161 = vpow.pop %v6160
    %v6162 = vmul.f32 %v6136, 1.442695
    %v6163 = vpow.pop %v6162
    %v6164 = vmul.f32 %v6137, 1.442695
    %v6165 = vpow.pop %v6164
    %v6166 = vmul.f32 %v6138, 1.442695
    %v6167 = vpow.pop %v6166
    %v6168 = vmul.f32 %v6139, 1.442695
    %v6169 = vpow.pop %v6168
    %v6170 = vmul.f32 %v6140, 1.442695
    %v6171 = vpow.pop %v6170
    %v6172 = vmul.f32 %v6141, 1.442695
    %v6173 = vpow.pop %v6172
    %6174 = vadd.xlane.f32.xlu0 %v6143
    %v6175 = vpop.xlane.xlu0 %6174
    %6176 = vadd.xlane.f32.xlu0 %v6145
    %v6177 = vpop.xlane.xlu0 %6176
    %6178 = vadd.xlane.f32.xlu0 %v6147
    %v6179 = vpop.xlane.xlu0 %6178
    %6180 = vadd.xlane.f32.xlu0 %v6149
    %v6181 = vpop.xlane.xlu0 %6180
    %6182 = vadd.xlane.f32.xlu0 %v6151
    %v6183 = vpop.xlane.xlu0 %6182
    %6184 = vadd.xlane.f32.xlu0 %v6153
    %v6185 = vpop.xlane.xlu0 %6184
    %6186 = vadd.xlane.f32.xlu0 %v6155
    %v6187 = vpop.xlane.xlu0 %6186
    %6188 = vadd.xlane.f32.xlu0 %v6157
    %v6189 = vpop.xlane.xlu0 %6188
    %6190 = vadd.xlane.f32.xlu0 %v6159
    %v6191 = vpop.xlane.xlu0 %6190
    %6192 = vadd.xlane.f32.xlu0 %v6161
    %v6193 = vpop.xlane.xlu0 %6192
    %6194 = vadd.xlane.f32.xlu0 %v6163
    %v6195 = vpop.xlane.xlu0 %6194
    %6196 = vadd.xlane.f32.xlu0 %v6165
    %v6197 = vpop.xlane.xlu0 %6196
    %6198 = vadd.xlane.f32.xlu0 %v6167
    %v6199 = vpop.xlane.xlu0 %6198
    %6200 = vadd.xlane.f32.xlu0 %v6169
    %v6201 = vpop.xlane.xlu0 %6200
    %6202 = vadd.xlane.f32.xlu0 %v6171
    %v6203 = vpop.xlane.xlu0 %6202
    %6204 = vadd.xlane.f32.xlu0 %v6173
    %v6205 = vpop.xlane.xlu0 %6204
    %v6206 = vpack.c.bf16 %v6145, %v6143
    %v6207 = vpack.c.bf16 %v6149, %v6147
    %v6208 = vpack.c.bf16 %v6153, %v6151
    %v6209 = vpack.c.bf16 %v6157, %v6155
    %v6210 = vpack.c.bf16 %v6161, %v6159
    %v6211 = vpack.c.bf16 %v6165, %v6163
    %v6212 = vpack.c.bf16 %v6169, %v6167
    %v6213 = vpack.c.bf16 %v6173, %v6171
    %6214 = vrot.lane.b32.xlu0 %v829, 32
    %v6215 = vpop.permute.xlu0 %6214
    %6216 = vrot.lane.b32.xlu0 %v830, 32
    %v6217 = vpop.permute.xlu0 %6216
    %6218 = vrot.lane.b32.xlu0 %v831, 32
    %v6219 = vpop.permute.xlu0 %6218
    %6220 = vrot.lane.b32.xlu0 %v832, 32
    %v6221 = vpop.permute.xlu0 %6220
    %6222 = vrot.lane.b32.xlu0 %v833, 32
    %v6223 = vpop.permute.xlu0 %6222
    %6224 = vrot.lane.b32.xlu0 %v834, 32
    %v6225 = vpop.permute.xlu0 %6224
    %6226 = vrot.lane.b32.xlu0 %v835, 32
    %v6227 = vpop.permute.xlu0 %6226
    %6228 = vrot.lane.b32.xlu0 %v836, 32
    %v6229 = vpop.permute.xlu0 %6228
    %6238 = vmatprep.subr.bf16.mxu0 0
    %6239 = vmatpush1.bf16.msra.mxu0 %v6215
    %6240 = vmatprep.subr.bf16.mxu0 0
    %6241 = vmatpush1.bf16.msra.mxu0 %v6217
    %6242 = vmatprep.subr.bf16.mxu0 0
    %6243 = vmatpush1.bf16.msra.mxu0 %v6219
    %6244 = vmatprep.subr.bf16.mxu0 0
    %6245 = vmatpush1.bf16.msra.mxu0 %v6221
    %6246 = vmatprep.subr.bf16.mxu0 0
    %6247 = vmatpush1.bf16.msra.mxu0 %v6223
    %6248 = vmatprep.subr.bf16.mxu0 0
    %6249 = vmatpush1.bf16.msra.mxu0 %v6225
    %6250 = vmatprep.subr.bf16.mxu0 0
    %6251 = vmatpush1.bf16.msra.mxu0 %v6227
    %6252 = vmatprep.subr.bf16.mxu0 0
    %6253 = vmatpush1.bf16.msra.mxu0 %v6229
    %6254 = vmatprep.subr.bf16.mxu0 0
    %6255 = vmatpush1.bf16.msra.mxu0 0
    %6256 = vmatprep.subr.bf16.mxu0 0
    %6257 = vmatpush1.bf16.msra.mxu0 0
    %6258 = vmatprep.subr.bf16.mxu0 0
    %6259 = vmatpush1.bf16.msra.mxu0 0
    %6260 = vmatprep.subr.bf16.mxu0 0
    %6261 = vmatpush1.bf16.msra.mxu0 0
    %6262 = vmatprep.subr.bf16.mxu0 0
    %6263 = vmatpush1.bf16.msra.mxu0 0
    %6264 = vmatprep.subr.bf16.mxu0 0
    %6265 = vmatpush1.bf16.msra.mxu0 0
    %6266 = vmatprep.subr.bf16.mxu0 0
    %6267 = vmatpush1.bf16.msra.mxu0 0
    %6268 = vmatprep.subr.bf16.mxu0 0
    %6269 = vmatpush1.bf16.msra.mxu0 0
    %6270 = vmatprep.mubr.bf16.mxu0 0
    %6271 = vmatmul.mubr.bf16.gmra.mrb[0].mxu0 %v6206
    %v6272 = vpop.f32.mrb[0].mxu0
    %v6273 = vadd.f32 0.0, %v6272
    %v6274 = vpop.f32.mrb[0].mxu0
    %v6275 = vpop.f32.mrb[0].mxu0
    %v6276 = vadd.f32 0.0, %v6275
    %v6277 = vpop.f32.mrb[0].mxu0
    %6278 = vmatprep.mubr.bf16.mxu0 0
    %6279 = vmatmul.mubr.bf16.gmra.mrb[0].mxu0 %v6207
    %v6280 = vpop.f32.mrb[0].mxu0
    %v6281 = vadd.f32 0.0, %v6280
    %v6282 = vpop.f32.mrb[0].mxu0
    %v6283 = vpop.f32.mrb[0].mxu0
    %v6284 = vadd.f32 0.0, %v6283
    %v6285 = vpop.f32.mrb[0].mxu0
    %6286 = vmatprep.mubr.bf16.mxu0 0
    %6287 = vmatmul.mubr.bf16.gmra.mrb[0].mxu0 %v6208
    %v6288 = vpop.f32.mrb[0].mxu0
    %v6289 = vadd.f32 0.0, %v6288
    %v6290 = vpop.f32.mrb[0].mxu0
    %v6291 = vpop.f32.mrb[0].mxu0
    %v6292 = vadd.f32 0.0, %v6291
    %v6293 = vpop.f32.mrb[0].mxu0
    %6294 = vmatprep.mubr.bf16.mxu0 0
    %6295 = vmatmul.mubr.bf16.gmra.mrb[0].mxu0 %v6209
    %v6296 = vpop.f32.mrb[0].mxu0
    %v6297 = vadd.f32 0.0, %v6296
    %v6298 = vpop.f32.mrb[0].mxu0
    %v6299 = vpop.f32.mrb[0].mxu0
    %v6300 = vadd.f32 0.0, %v6299
    %v6301 = vpop.f32.mrb[0].mxu0
    %6302 = vmatprep.mubr.bf16.mxu0 0
    %6303 = vmatmul.mubr.bf16.gmra.mrb[0].mxu0 %v6210
    %v6304 = vpop.f32.mrb[0].mxu0
    %v6305 = vadd.f32 0.0, %v6304
    %v6306 = vpop.f32.mrb[0].mxu0
    %v6307 = vpop.f32.mrb[0].mxu0
    %v6308 = vadd.f32 0.0, %v6307
    %v6309 = vpop.f32.mrb[0].mxu0
    %6310 = vmatprep.mubr.bf16.mxu0 0
    %6311 = vmatmul.mubr.bf16.gmra.mrb[0].mxu0 %v6211
    %v6312 = vpop.f32.mrb[0].mxu0
    %v6313 = vadd.f32 0.0, %v6312
    %v6314 = vpop.f32.mrb[0].mxu0
    %v6315 = vpop.f32.mrb[0].mxu0
    %v6316 = vadd.f32 0.0, %v6315
    %v6317 = vpop.f32.mrb[0].mxu0
    %6318 = vmatprep.mubr.bf16.mxu0 0
    %6319 = vmatmul.mubr.bf16.gmra.mrb[0].mxu0 %v6212
    %v6320 = vpop.f32.mrb[0].mxu0
    %v6321 = vadd.f32 0.0, %v6320
    %v6322 = vpop.f32.mrb[0].mxu0
    %v6323 = vpop.f32.mrb[0].mxu0
    %v6324 = vadd.f32 0.0, %v6323
    %v6325 = vpop.f32.mrb[0].mxu0
    %6326 = vmatprep.mubr.bf16.mxu0 0
    %6327 = vmatmul.mubr.bf16.gmra.mrb[0].mxu0 %v6213
    %v6328 = vpop.f32.mrb[0].mxu0
    %v6329 = vadd.f32 0.0, %v6328
    %v6330 = vpop.f32.mrb[0].mxu0
    %v6331 = vpop.f32.mrb[0].mxu0
    %v6332 = vadd.f32 0.0, %v6331
    %v6333 = vpop.f32.mrb[0].mxu0
    %6334 = vdwg.mxu0
    %v6335 = vrcp.pop %v6175
    %v6336 = vrcp.pop %v6177
    %v6337 = vrcp.pop %v6179
    %v6338 = vrcp.pop %v6181
    %v6339 = vrcp.pop %v6183
    %v6340 = vrcp.pop %v6185
    %v6341 = vrcp.pop %v6187
    %v6342 = vrcp.pop %v6189
    %v6343 = vrcp.pop %v6191
    %v6344 = vrcp.pop %v6193
    %v6345 = vrcp.pop %v6195
    %v6346 = vrcp.pop %v6197
    %v6347 = vrcp.pop %v6199
    %v6348 = vrcp.pop %v6201
    %v6349 = vrcp.pop %v6203
    %v6350 = vrcp.pop %v6205
    %v6351 = vmul.f32 %v6273, %v6335
    %v6352 = vmul.f32 %v6276, %v6336
    %v6353 = vmul.f32 %v6281, %v6337
    %v6354 = vmul.f32 %v6284, %v6338
    %v6355 = vmul.f32 %v6289, %v6339
    %v6356 = vmul.f32 %v6292, %v6340
    %v6357 = vmul.f32 %v6297, %v6341
    %v6358 = vmul.f32 %v6300, %v6342
    %v6359 = vmul.f32 %v6305, %v6343
    %v6360 = vmul.f32 %v6308, %v6344
    %v6361 = vmul.f32 %v6313, %v6345
    %v6362 = vmul.f32 %v6316, %v6346
    %v6363 = vmul.f32 %v6321, %v6347
    %v6364 = vmul.f32 %v6324, %v6348
    %v6365 = vmul.f32 %v6329, %v6349
    %v6366 = vmul.f32 %v6332, %v6350
    %v6367 = vpack.c.bf16 %v6352, %v6351
    %v6368 = vpack.c.bf16 %v6354, %v6353
    %v6369 = vpack.c.bf16 %v6356, %v6355
    %v6370 = vpack.c.bf16 %v6358, %v6357
    %v6371 = vpack.c.bf16 %v6360, %v6359
    %v6372 = vpack.c.bf16 %v6362, %v6361
    %v6373 = vpack.c.bf16 %v6364, %v6363
    %v6374 = vpack.c.bf16 %v6366, %v6365
    %v6376 = vsel %vm1575, %v6367, 0
    %v6379 = vsel %vm1575, %v6368, 0
    %v6382 = vsel %vm1575, %v6369, 0
    %v6385 = vsel %vm1575, %v6370, 0
    %v6388 = vsel %vm1575, %v6371, 0
    %v6391 = vsel %vm1575, %v6372, 0
    %v6394 = vsel %vm1575, %v6373, 0
    %v6397 = vsel %vm1575, %v6374, 0
    %6399 = vmatprep.subr.bf16.mxu0 0
    %6400 = vmatpush1.bf16.msra.mxu0 %v3927
    %6401 = vmatprep.subr.bf16.mxu0 0
    %6402 = vmatpush1.bf16.msra.mxu0 %v3928
    %6403 = vmatprep.subr.bf16.mxu0 0
    %6404 = vmatpush1.bf16.msra.mxu0 0
    %6405 = vmatprep.subr.bf16.mxu0 0
    %6406 = vmatpush1.bf16.msra.mxu0 0
    %6407 = vmatprep.subr.bf16.mxu0 0
    %6408 = vmatpush1.bf16.msra.mxu0 0
    %6409 = vmatprep.subr.bf16.mxu0 0
    %6410 = vmatpush1.bf16.msra.mxu0 0
    %6411 = vmatprep.subr.bf16.mxu0 0
    %6412 = vmatpush1.bf16.msra.mxu0 0
    %6413 = vmatprep.subr.bf16.mxu0 0
    %6414 = vmatpush1.bf16.msra.mxu0 0
    %6415 = vmatprep.subr.bf16.mxu0 0
    %6416 = vmatpush1.bf16.msra.mxu0 0
    %6417 = vmatprep.subr.bf16.mxu0 0
    %6418 = vmatpush1.bf16.msra.mxu0 0
    %6419 = vmatprep.subr.bf16.mxu0 0
    %6420 = vmatpush1.bf16.msra.mxu0 0
    %6421 = vmatprep.subr.bf16.mxu0 0
    %6422 = vmatpush1.bf16.msra.mxu0 0
    %6423 = vmatprep.subr.bf16.mxu0 0
    %6424 = vmatpush1.bf16.msra.mxu0 0
    %6425 = vmatprep.subr.bf16.mxu0 0
    %6426 = vmatpush1.bf16.msra.mxu0 0
    %6427 = vmatprep.subr.bf16.mxu0 0
    %6428 = vmatpush1.bf16.msra.mxu0 0
    %6429 = vmatprep.subr.bf16.mxu0 0
    %6430 = vmatpush1.bf16.msra.mxu0 0
    %6431 = vmatprep.mubr.bf16.mxu0 0
    %6432 = vmatmul.mubr.bf16.gmra.mrb[0].mxu0 %v6376
    %v6433 = vpop.f32.mrb[0].mxu0
    %v6434 = vadd.f32 0.0, %v6433
    %v6435 = vpop.f32.mrb[0].mxu0
    %v6436 = vpop.f32.mrb[0].mxu0
    %v6437 = vadd.f32 0.0, %v6436
    %v6438 = vpop.f32.mrb[0].mxu0
    %6439 = vmatprep.mubr.bf16.mxu0 0
    %6440 = vmatmul.mubr.bf16.gmra.mrb[0].mxu0 %v6379
    %v6441 = vpop.f32.mrb[0].mxu0
    %v6442 = vadd.f32 0.0, %v6441
    %v6443 = vpop.f32.mrb[0].mxu0
    %v6444 = vpop.f32.mrb[0].mxu0
    %v6445 = vadd.f32 0.0, %v6444
    %v6446 = vpop.f32.mrb[0].mxu0
    %6447 = vmatprep.mubr.bf16.mxu0 0
    %6448 = vmatmul.mubr.bf16.gmra.mrb[0].mxu0 %v6382
    %v6449 = vpop.f32.mrb[0].mxu0
    %v6450 = vadd.f32 0.0, %v6449
    %v6451 = vpop.f32.mrb[0].mxu0
    %v6452 = vpop.f32.mrb[0].mxu0
    %v6453 = vadd.f32 0.0, %v6452
    %v6454 = vpop.f32.mrb[0].mxu0
    %6455 = vmatprep.mubr.bf16.mxu0 0
    %6456 = vmatmul.mubr.bf16.gmra.mrb[0].mxu0 %v6385
    %v6457 = vpop.f32.mrb[0].mxu0
    %v6458 = vadd.f32 0.0, %v6457
    %v6459 = vpop.f32.mrb[0].mxu0
    %v6460 = vpop.f32.mrb[0].mxu0
    %v6461 = vadd.f32 0.0, %v6460
    %v6462 = vpop.f32.mrb[0].mxu0
    %6463 = vmatprep.mubr.bf16.mxu0 0
    %6464 = vmatmul.mubr.bf16.gmra.mrb[0].mxu0 %v6388
    %v6465 = vpop.f32.mrb[0].mxu0
    %v6466 = vadd.f32 0.0, %v6465
    %v6467 = vpop.f32.mrb[0].mxu0
    %v6468 = vpop.f32.mrb[0].mxu0
    %v6469 = vadd.f32 0.0, %v6468
    %v6470 = vpop.f32.mrb[0].mxu0
    %6471 = vmatprep.mubr.bf16.mxu0 0
    %6472 = vmatmul.mubr.bf16.gmra.mrb[0].mxu0 %v6391
    %v6473 = vpop.f32.mrb[0].mxu0
    %v6474 = vadd.f32 0.0, %v6473
    %v6475 = vpop.f32.mrb[0].mxu0
    %v6476 = vpop.f32.mrb[0].mxu0
    %v6477 = vadd.f32 0.0, %v6476
    %v6478 = vpop.f32.mrb[0].mxu0
    %6479 = vmatprep.mubr.bf16.mxu0 0
    %6480 = vmatmul.mubr.bf16.gmra.mrb[0].mxu0 %v6394
    %v6481 = vpop.f32.mrb[0].mxu0
    %v6482 = vadd.f32 0.0, %v6481
    %v6483 = vpop.f32.mrb[0].mxu0
    %v6484 = vpop.f32.mrb[0].mxu0
    %v6485 = vadd.f32 0.0, %v6484
    %v6486 = vpop.f32.mrb[0].mxu0
    %6487 = vmatprep.mubr.bf16.mxu0 0
    %6488 = vmatmul.mubr.bf16.gmra.mrb[0].mxu0 %v6397
    %v6489 = vpop.f32.mrb[0].mxu0
    %v6490 = vadd.f32 0.0, %v6489
    %v6491 = vpop.f32.mrb[0].mxu0
    %v6492 = vpop.f32.mrb[0].mxu0
    %v6493 = vadd.f32 0.0, %v6492
    %v6494 = vpop.f32.mrb[0].mxu0
    %6495 = vdwg.mxu0
    %v6496 = vadd.f32 %v5869, %v6434
    %v6497 = vadd.f32 %v5870, %v6437
    %v6498 = vadd.f32 %v5871, %v6442
    %v6499 = vadd.f32 %v5872, %v6445
    %v6500 = vadd.f32 %v5873, %v6450
    %v6501 = vadd.f32 %v5874, %v6453
    %v6502 = vadd.f32 %v5875, %v6458
    %v6503 = vadd.f32 %v5876, %v6461
    %v6504 = vadd.f32 %v5877, %v6466
    %v6505 = vadd.f32 %v5878, %v6469
    %v6506 = vadd.f32 %v5879, %v6474
    %v6507 = vadd.f32 %v5880, %v6477
    %v6508 = vadd.f32 %v5881, %v6482
    %v6509 = vadd.f32 %v5882, %v6485
    %v6510 = vadd.f32 %v5883, %v6490
    %v6511 = vadd.f32 %v5884, %v6493
    %v6512 = vmul.f32 %v4052, 0.35355338
    %v6513 = vmul.f32 %v4053, 0.35355338
    %v6514 = vmul.f32 %v4054, 0.35355338
    %v6515 = vmul.f32 %v4055, 0.35355338
    %v6516 = vmul.f32 %v4056, 0.35355338
    %v6517 = vmul.f32 %v4057, 0.35355338
    %v6518 = vmul.f32 %v4058, 0.35355338
    %v6519 = vmul.f32 %v4059, 0.35355338
    %v6520 = vmul.f32 %v4060, 0.35355338
    %v6521 = vmul.f32 %v4061, 0.35355338
    %v6522 = vmul.f32 %v4062, 0.35355338
    %v6523 = vmul.f32 %v4063, 0.35355338
    %v6524 = vmul.f32 %v4064, 0.35355338
    %v6525 = vmul.f32 %v4065, 0.35355338
    %v6526 = vmul.f32 %v4066, 0.35355338
    %v6527 = vmul.f32 %v4067, 0.35355338
    %v6528 = vmul.f32 %v6496, 0.35355338
    %v6529 = vmul.f32 %v6497, 0.35355338
    %v6530 = vmul.f32 %v6498, 0.35355338
    %v6531 = vmul.f32 %v6499, 0.35355338
    %v6532 = vmul.f32 %v6500, 0.35355338
    %v6533 = vmul.f32 %v6501, 0.35355338
    %v6534 = vmul.f32 %v6502, 0.35355338
    %v6535 = vmul.f32 %v6503, 0.35355338
    %v6536 = vmul.f32 %v6504, 0.35355338
    %v6537 = vmul.f32 %v6505, 0.35355338
    %v6538 = vmul.f32 %v6506, 0.35355338
    %v6539 = vmul.f32 %v6507, 0.35355338
    %v6540 = vmul.f32 %v6508, 0.35355338
    %v6541 = vmul.f32 %v6509, 0.35355338
    %v6542 = vmul.f32 %v6510, 0.35355338
    %v6543 = vmul.f32 %v6511, 0.35355338
    %v6544 = vadd.f32 %v34, %v6512
    %v6545 = vadd.f32 %v35, %v6513
    %v6546 = vadd.f32 %v36, %v6514
    %v6547 = vadd.f32 %v37, %v6515
    %v6548 = vadd.f32 %v38, %v6516
    %v6549 = vadd.f32 %v39, %v6517
    %v6550 = vadd.f32 %v40, %v6518
    %v6551 = vadd.f32 %v41, %v6519
    %v6552 = vadd.f32 %v42, %v6520
    %v6553 = vadd.f32 %v43, %v6521
    %v6554 = vadd.f32 %v44, %v6522
    %v6555 = vadd.f32 %v45, %v6523
    %v6556 = vadd.f32 %v46, %v6524
    %v6557 = vadd.f32 %v47, %v6525
    %v6558 = vadd.f32 %v48, %v6526
    %v6559 = vadd.f32 %v49, %v6527
    %v6560 = vadd.f32 %v50, %v6528
    %v6561 = vadd.f32 %v51, %v6529
    %v6562 = vadd.f32 %v52, %v6530
    %v6563 = vadd.f32 %v53, %v6531
    %v6564 = vadd.f32 %v54, %v6532
    %v6565 = vadd.f32 %v55, %v6533
    %v6566 = vadd.f32 %v56, %v6534
    %v6567 = vadd.f32 %v57, %v6535
    %v6568 = vadd.f32 %v58, %v6536
    %v6569 = vadd.f32 %v59, %v6537
    %v6570 = vadd.f32 %v60, %v6538
    %v6571 = vadd.f32 %v61, %v6539
    %v6572 = vadd.f32 %v62, %v6540
    %v6573 = vadd.f32 %v63, %v6541
    %v6574 = vadd.f32 %v64, %v6542
    %v6575 = vadd.f32 %v65, %v6543
    %v6576 = vmul.f32 %v6544, %v6544
    %v6577 = vmul.f32 %v6545, %v6545
    %v6578 = vmul.f32 %v6546, %v6546
    %v6579 = vmul.f32 %v6547, %v6547
    %v6580 = vmul.f32 %v6548, %v6548
    %v6581 = vmul.f32 %v6549, %v6549
    %v6582 = vmul.f32 %v6550, %v6550
    %v6583 = vmul.f32 %v6551, %v6551
    %v6584 = vmul.f32 %v6552, %v6552
    %v6585 = vmul.f32 %v6553, %v6553
    %v6586 = vmul.f32 %v6554, %v6554
    %v6587 = vmul.f32 %v6555, %v6555
    %v6588 = vmul.f32 %v6556, %v6556
    %v6589 = vmul.f32 %v6557, %v6557
    %v6590 = vmul.f32 %v6558, %v6558
    %v6591 = vmul.f32 %v6559, %v6559
    %v6592 = vmul.f32 %v6560, %v6560
    %v6593 = vmul.f32 %v6561, %v6561
    %v6594 = vmul.f32 %v6562, %v6562
    %v6595 = vmul.f32 %v6563, %v6563
    %v6596 = vmul.f32 %v6564, %v6564
    %v6597 = vmul.f32 %v6565, %v6565
    %v6598 = vmul.f32 %v6566, %v6566
    %v6599 = vmul.f32 %v6567, %v6567
    %v6600 = vmul.f32 %v6568, %v6568
    %v6601 = vmul.f32 %v6569, %v6569
    %v6602 = vmul.f32 %v6570, %v6570
    %v6603 = vmul.f32 %v6571, %v6571
    %v6604 = vmul.f32 %v6572, %v6572
    %v6605 = vmul.f32 %v6573, %v6573
    %v6606 = vmul.f32 %v6574, %v6574
    %v6607 = vmul.f32 %v6575, %v6575
    %6608 = vadd.xlane.f32.xlu0 %v6576
    %v6609 = vpop.xlane.xlu0 %6608
    %6610 = vadd.xlane.f32.xlu0 %v6577
    %v6611 = vpop.xlane.xlu0 %6610
    %6612 = vadd.xlane.f32.xlu0 %v6578
    %v6613 = vpop.xlane.xlu0 %6612
    %6614 = vadd.xlane.f32.xlu0 %v6579
    %v6615 = vpop.xlane.xlu0 %6614
    %6616 = vadd.xlane.f32.xlu0 %v6580
    %v6617 = vpop.xlane.xlu0 %6616
    %6618 = vadd.xlane.f32.xlu0 %v6581
    %v6619 = vpop.xlane.xlu0 %6618
    %6620 = vadd.xlane.f32.xlu0 %v6582
    %v6621 = vpop.xlane.xlu0 %6620
    %6622 = vadd.xlane.f32.xlu0 %v6583
    %v6623 = vpop.xlane.xlu0 %6622
    %6624 = vadd.xlane.f32.xlu0 %v6584
    %v6625 = vpop.xlane.xlu0 %6624
    %6626 = vadd.xlane.f32.xlu0 %v6585
    %v6627 = vpop.xlane.xlu0 %6626
    %6628 = vadd.xlane.f32.xlu0 %v6586
    %v6629 = vpop.xlane.xlu0 %6628
    %6630 = vadd.xlane.f32.xlu0 %v6587
    %v6631 = vpop.xlane.xlu0 %6630
    %6632 = vadd.xlane.f32.xlu0 %v6588
    %v6633 = vpop.xlane.xlu0 %6632
    %6634 = vadd.xlane.f32.xlu0 %v6589
    %v6635 = vpop.xlane.xlu0 %6634
    %6636 = vadd.xlane.f32.xlu0 %v6590
    %v6637 = vpop.xlane.xlu0 %6636
    %6638 = vadd.xlane.f32.xlu0 %v6591
    %v6639 = vpop.xlane.xlu0 %6638
    %6640 = vadd.xlane.f32.xlu0 %v6592
    %v6641 = vpop.xlane.xlu0 %6640
    %6642 = vadd.xlane.f32.xlu0 %v6593
    %v6643 = vpop.xlane.xlu0 %6642
    %6644 = vadd.xlane.f32.xlu0 %v6594
    %v6645 = vpop.xlane.xlu0 %6644
    %6646 = vadd.xlane.f32.xlu0 %v6595
    %v6647 = vpop.xlane.xlu0 %6646
    %6648 = vadd.xlane.f32.xlu0 %v6596
    %v6649 = vpop.xlane.xlu0 %6648
    %6650 = vadd.xlane.f32.xlu0 %v6597
    %v6651 = vpop.xlane.xlu0 %6650
    %6652 = vadd.xlane.f32.xlu0 %v6598
    %v6653 = vpop.xlane.xlu0 %6652
    %6654 = vadd.xlane.f32.xlu0 %v6599
    %v6655 = vpop.xlane.xlu0 %6654
    %6656 = vadd.xlane.f32.xlu0 %v6600
    %v6657 = vpop.xlane.xlu0 %6656
    %6658 = vadd.xlane.f32.xlu0 %v6601
    %v6659 = vpop.xlane.xlu0 %6658
    %6660 = vadd.xlane.f32.xlu0 %v6602
    %v6661 = vpop.xlane.xlu0 %6660
    %6662 = vadd.xlane.f32.xlu0 %v6603
    %v6663 = vpop.xlane.xlu0 %6662
    %6664 = vadd.xlane.f32.xlu0 %v6604
    %v6665 = vpop.xlane.xlu0 %6664
    %6666 = vadd.xlane.f32.xlu0 %v6605
    %v6667 = vpop.xlane.xlu0 %6666
    %6668 = vadd.xlane.f32.xlu0 %v6606
    %v6669 = vpop.xlane.xlu0 %6668
    %6670 = vadd.xlane.f32.xlu0 %v6607
    %v6671 = vpop.xlane.xlu0 %6670
    %v6672 = vmul.f32 %v6609, %v162
    %v6673 = vmul.f32 %v6611, %v162
    %v6674 = vmul.f32 %v6613, %v162
    %v6675 = vmul.f32 %v6615, %v162
    %v6676 = vmul.f32 %v6617, %v162
    %v6677 = vmul.f32 %v6619, %v162
    %v6678 = vmul.f32 %v6621, %v162
    %v6679 = vmul.f32 %v6623, %v162
    %v6680 = vmul.f32 %v6625, %v162
    %v6681 = vmul.f32 %v6627, %v162
    %v6682 = vmul.f32 %v6629, %v162
    %v6683 = vmul.f32 %v6631, %v162
    %v6684 = vmul.f32 %v6633, %v162
    %v6685 = vmul.f32 %v6635, %v162
    %v6686 = vmul.f32 %v6637, %v162
    %v6687 = vmul.f32 %v6639, %v162
    %v6688 = vmul.f32 %v6641, %v162
    %v6689 = vmul.f32 %v6643, %v162
    %v6690 = vmul.f32 %v6645, %v162
    %v6691 = vmul.f32 %v6647, %v162
    %v6692 = vmul.f32 %v6649, %v162
    %v6693 = vmul.f32 %v6651, %v162
    %v6694 = vmul.f32 %v6653, %v162
    %v6695 = vmul.f32 %v6655, %v162
    %v6696 = vmul.f32 %v6657, %v162
    %v6697 = vmul.f32 %v6659, %v162
    %v6698 = vmul.f32 %v6661, %v162
    %v6699 = vmul.f32 %v6663, %v162
    %v6700 = vmul.f32 %v6665, %v162
    %v6701 = vmul.f32 %v6667, %v162
    %v6702 = vmul.f32 %v6669, %v162
    %v6703 = vmul.f32 %v6671, %v162
    %v6704 = vadd.f32 %v6672, 1e-05
    %v6705 = vadd.f32 %v6673, 1e-05
    %v6706 = vadd.f32 %v6674, 1e-05
    %v6707 = vadd.f32 %v6675, 1e-05
    %v6708 = vadd.f32 %v6676, 1e-05
    %v6709 = vadd.f32 %v6677, 1e-05
    %v6710 = vadd.f32 %v6678, 1e-05
    %v6711 = vadd.f32 %v6679, 1e-05
    %v6712 = vadd.f32 %v6680, 1e-05
    %v6713 = vadd.f32 %v6681, 1e-05
    %v6714 = vadd.f32 %v6682, 1e-05
    %v6715 = vadd.f32 %v6683, 1e-05
    %v6716 = vadd.f32 %v6684, 1e-05
    %v6717 = vadd.f32 %v6685, 1e-05
    %v6718 = vadd.f32 %v6686, 1e-05
    %v6719 = vadd.f32 %v6687, 1e-05
    %v6720 = vadd.f32 %v6688, 1e-05
    %v6721 = vadd.f32 %v6689, 1e-05
    %v6722 = vadd.f32 %v6690, 1e-05
    %v6723 = vadd.f32 %v6691, 1e-05
    %v6724 = vadd.f32 %v6692, 1e-05
    %v6725 = vadd.f32 %v6693, 1e-05
    %v6726 = vadd.f32 %v6694, 1e-05
    %v6727 = vadd.f32 %v6695, 1e-05
    %v6728 = vadd.f32 %v6696, 1e-05
    %v6729 = vadd.f32 %v6697, 1e-05
    %v6730 = vadd.f32 %v6698, 1e-05
    %v6731 = vadd.f32 %v6699, 1e-05
    %v6732 = vadd.f32 %v6700, 1e-05
    %v6733 = vadd.f32 %v6701, 1e-05
    %v6734 = vadd.f32 %v6702, 1e-05
    %v6735 = vadd.f32 %v6703, 1e-05
    %v6736 = vrsqrt.pop %v6704
    %v6737 = vrsqrt.pop %v6705
    %v6738 = vrsqrt.pop %v6706
    %v6739 = vrsqrt.pop %v6707
    %v6740 = vrsqrt.pop %v6708
    %v6741 = vrsqrt.pop %v6709
    %v6742 = vrsqrt.pop %v6710
    %v6743 = vrsqrt.pop %v6711
    %v6744 = vrsqrt.pop %v6712
    %v6745 = vrsqrt.pop %v6713
    %v6746 = vrsqrt.pop %v6714
    %v6747 = vrsqrt.pop %v6715
    %v6748 = vrsqrt.pop %v6716
    %v6749 = vrsqrt.pop %v6717
    %v6750 = vrsqrt.pop %v6718
    %v6751 = vrsqrt.pop %v6719
    %v6752 = vrsqrt.pop %v6720
    %v6753 = vrsqrt.pop %v6721
    %v6754 = vrsqrt.pop %v6722
    %v6755 = vrsqrt.pop %v6723
    %v6756 = vrsqrt.pop %v6724
    %v6757 = vrsqrt.pop %v6725
    %v6758 = vrsqrt.pop %v6726
    %v6759 = vrsqrt.pop %v6727
    %v6760 = vrsqrt.pop %v6728
    %v6761 = vrsqrt.pop %v6729
    %v6762 = vrsqrt.pop %v6730
    %v6763 = vrsqrt.pop %v6731
    %v6764 = vrsqrt.pop %v6732
    %v6765 = vrsqrt.pop %v6733
    %v6766 = vrsqrt.pop %v6734
    %v6767 = vrsqrt.pop %v6735
    %v6768 = vmul.f32 %v6544, %v6736
    %v6769 = vmul.f32 %v6545, %v6737
    %v6770 = vmul.f32 %v6546, %v6738
    %v6771 = vmul.f32 %v6547, %v6739
    %v6772 = vmul.f32 %v6548, %v6740
    %v6773 = vmul.f32 %v6549, %v6741
    %v6774 = vmul.f32 %v6550, %v6742
    %v6775 = vmul.f32 %v6551, %v6743
    %v6776 = vmul.f32 %v6552, %v6744
    %v6777 = vmul.f32 %v6553, %v6745
    %v6778 = vmul.f32 %v6554, %v6746
    %v6779 = vmul.f32 %v6555, %v6747
    %v6780 = vmul.f32 %v6556, %v6748
    %v6781 = vmul.f32 %v6557, %v6749
    %v6782 = vmul.f32 %v6558, %v6750
    %v6783 = vmul.f32 %v6559, %v6751
    %v6784 = vmul.f32 %v6560, %v6752
    %v6785 = vmul.f32 %v6561, %v6753
    %v6786 = vmul.f32 %v6562, %v6754
    %v6787 = vmul.f32 %v6563, %v6755
    %v6788 = vmul.f32 %v6564, %v6756
    %v6789 = vmul.f32 %v6565, %v6757
    %v6790 = vmul.f32 %v6566, %v6758
    %v6791 = vmul.f32 %v6567, %v6759
    %v6792 = vmul.f32 %v6568, %v6760
    %v6793 = vmul.f32 %v6569, %v6761
    %v6794 = vmul.f32 %v6570, %v6762
    %v6795 = vmul.f32 %v6571, %v6763
    %v6796 = vmul.f32 %v6572, %v6764
    %v6797 = vmul.f32 %v6573, %v6765
    %v6798 = vmul.f32 %v6574, %v6766
    %v6799 = vmul.f32 %v6575, %v6767
    %v6800 = vpack.c.bf16 %v6769, %v6768
    %v6801 = vpack.c.bf16 %v6771, %v6770
    %v6802 = vpack.c.bf16 %v6773, %v6772
    %v6803 = vpack.c.bf16 %v6775, %v6774
    %v6804 = vpack.c.bf16 %v6777, %v6776
    %v6805 = vpack.c.bf16 %v6779, %v6778
    %v6806 = vpack.c.bf16 %v6781, %v6780
    %v6807 = vpack.c.bf16 %v6783, %v6782
    %v6808 = vpack.c.bf16 %v6785, %v6784
    %v6809 = vpack.c.bf16 %v6787, %v6786
    %v6810 = vpack.c.bf16 %v6789, %v6788
    %v6811 = vpack.c.bf16 %v6791, %v6790
    %v6812 = vpack.c.bf16 %v6793, %v6792
    %v6813 = vpack.c.bf16 %v6795, %v6794
    %v6814 = vpack.c.bf16 %v6797, %v6796
    %v6815 = vpack.c.bf16 %v6799, %v6798
    %v6816 = vld [vmem:[%s3] sm:$0xff]
    %v6817 = vld [vmem:[%s3 + $0x8] sm:$0xff]
    %v6818 = vld [vmem:[%s3 + $0x10] sm:$0xff]
    %v6819 = vld [vmem:[%s3 + $0x18] sm:$0xff]
    %v6820 = vld [vmem:[%s3 + $0x20] sm:$0xff]
    %v6821 = vld [vmem:[%s3 + $0x28] sm:$0xff]
    %v6822 = vld [vmem:[%s3 + $0x30] sm:$0xff]
    %v6823 = vld [vmem:[%s3 + $0x38] sm:$0xff]
    %v6824 = vld [vmem:[%s3 + $0x40] sm:$0xff]
    %v6825 = vld [vmem:[%s3 + $0x48] sm:$0xff]
    %v6826 = vld [vmem:[%s3 + $0x50] sm:$0xff]
    %v6827 = vld [vmem:[%s3 + $0x58] sm:$0xff]
    %v6828 = vld [vmem:[%s3 + $0x60] sm:$0xff]
    %v6829 = vld [vmem:[%s3 + $0x68] sm:$0xff]
    %v6830 = vld [vmem:[%s3 + $0x70] sm:$0xff]
    %v6831 = vld [vmem:[%s3 + $0x78] sm:$0xff]
    %v6832 = vld [vmem:[%s3 + $0x80] sm:$0xff]
    %v6833 = vld [vmem:[%s3 + $0x88] sm:$0xff]
    %v6834 = vld [vmem:[%s3 + $0x90] sm:$0xff]
    %v6835 = vld [vmem:[%s3 + $0x98] sm:$0xff]
    %v6836 = vld [vmem:[%s3 + $0xa0] sm:$0xff]
    %v6837 = vld [vmem:[%s3 + $0xa8] sm:$0xff]
    %v6838 = vld [vmem:[%s3 + $0xb0] sm:$0xff]
    %v6839 = vld [vmem:[%s3 + $0xb8] sm:$0xff]
    %v6840 = vld [vmem:[%s3 + $0xc0] sm:$0xff]
    %v6841 = vld [vmem:[%s3 + $0xc8] sm:$0xff]
    %v6842 = vld [vmem:[%s3 + $0xd0] sm:$0xff]
    %v6843 = vld [vmem:[%s3 + $0xd8] sm:$0xff]
    %v6844 = vld [vmem:[%s3 + $0xe0] sm:$0xff]
    %v6845 = vld [vmem:[%s3 + $0xe8] sm:$0xff]
    %v6846 = vld [vmem:[%s3 + $0xf0] sm:$0xff]
    %v6847 = vld [vmem:[%s3 + $0xf8] sm:$0xff]
    %v6880 = vunpack.c.l.b16 %v6816
    %v6881 = vunpack.c.h.b16 %v6816
    %v6882 = vunpack.c.l.b16 %v6817
    %v6883 = vunpack.c.h.b16 %v6817
    %v6884 = vunpack.c.l.b16 %v6818
    %v6885 = vunpack.c.h.b16 %v6818
    %v6886 = vunpack.c.l.b16 %v6819
    %v6887 = vunpack.c.h.b16 %v6819
    %v6888 = vunpack.c.l.b16 %v6820
    %v6889 = vunpack.c.h.b16 %v6820
    %v6890 = vunpack.c.l.b16 %v6821
    %v6891 = vunpack.c.h.b16 %v6821
    %v6892 = vunpack.c.l.b16 %v6822
    %v6893 = vunpack.c.h.b16 %v6822
    %v6894 = vunpack.c.l.b16 %v6823
    %v6895 = vunpack.c.h.b16 %v6823
    %v6896 = vunpack.c.l.b16 %v6824
    %v6897 = vunpack.c.h.b16 %v6824
    %v6898 = vunpack.c.l.b16 %v6825
    %v6899 = vunpack.c.h.b16 %v6825
    %v6900 = vunpack.c.l.b16 %v6826
    %v6901 = vunpack.c.h.b16 %v6826
    %v6902 = vunpack.c.l.b16 %v6827
    %v6903 = vunpack.c.h.b16 %v6827
    %v6904 = vunpack.c.l.b16 %v6828
    %v6905 = vunpack.c.h.b16 %v6828
    %v6906 = vunpack.c.l.b16 %v6829
    %v6907 = vunpack.c.h.b16 %v6829
    %v6908 = vunpack.c.l.b16 %v6830
    %v6909 = vunpack.c.h.b16 %v6830
    %v6910 = vunpack.c.l.b16 %v6831
    %v6911 = vunpack.c.h.b16 %v6831
    %v6912 = vunpack.c.l.b16 %v6832
    %v6913 = vunpack.c.h.b16 %v6832
    %v6914 = vunpack.c.l.b16 %v6833
    %v6915 = vunpack.c.h.b16 %v6833
    %v6916 = vunpack.c.l.b16 %v6834
    %v6917 = vunpack.c.h.b16 %v6834
    %v6918 = vunpack.c.l.b16 %v6835
    %v6919 = vunpack.c.h.b16 %v6835
    %v6920 = vunpack.c.l.b16 %v6836
    %v6921 = vunpack.c.h.b16 %v6836
    %v6922 = vunpack.c.l.b16 %v6837
    %v6923 = vunpack.c.h.b16 %v6837
    %v6924 = vunpack.c.l.b16 %v6838
    %v6925 = vunpack.c.h.b16 %v6838
    %v6926 = vunpack.c.l.b16 %v6839
    %v6927 = vunpack.c.h.b16 %v6839
    %v6928 = vunpack.c.l.b16 %v6840
    %v6929 = vunpack.c.h.b16 %v6840
    %v6930 = vunpack.c.l.b16 %v6841
    %v6931 = vunpack.c.h.b16 %v6841
    %v6932 = vunpack.c.l.b16 %v6842
    %v6933 = vunpack.c.h.b16 %v6842
    %v6934 = vunpack.c.l.b16 %v6843
    %v6935 = vunpack.c.h.b16 %v6843
    %v6936 = vunpack.c.l.b16 %v6844
    %v6937 = vunpack.c.h.b16 %v6844
    %v6938 = vunpack.c.l.b16 %v6845
    %v6939 = vunpack.c.h.b16 %v6845
    %v6940 = vunpack.c.l.b16 %v6846
    %v6941 = vunpack.c.h.b16 %v6846
    %v6942 = vunpack.c.l.b16 %v6847
    %v6943 = vunpack.c.h.b16 %v6847
    %v6944 = vpack.c.b16 %v6884, %v6880
    %v6945 = vpack.c.b16 %v6885, %v6881
    %v6946 = vpack.c.b16 %v6886, %v6882
    %v6947 = vpack.c.b16 %v6887, %v6883
    %v6948 = vpack.c.b16 %v6892, %v6888
    %v6949 = vpack.c.b16 %v6893, %v6889
    %v6950 = vpack.c.b16 %v6894, %v6890
    %v6951 = vpack.c.b16 %v6895, %v6891
    %v6952 = vpack.c.b16 %v6900, %v6896
    %v6953 = vpack.c.b16 %v6901, %v6897
    %v6954 = vpack.c.b16 %v6902, %v6898
    %v6955 = vpack.c.b16 %v6903, %v6899
    %v6956 = vpack.c.b16 %v6908, %v6904
    %v6957 = vpack.c.b16 %v6909, %v6905
    %v6958 = vpack.c.b16 %v6910, %v6906
    %v6959 = vpack.c.b16 %v6911, %v6907
    %v6960 = vpack.c.b16 %v6916, %v6912
    %v6961 = vpack.c.b16 %v6917, %v6913
    %v6962 = vpack.c.b16 %v6918, %v6914
    %v6963 = vpack.c.b16 %v6919, %v6915
    %v6964 = vpack.c.b16 %v6924, %v6920
    %v6965 = vpack.c.b16 %v6925, %v6921
    %v6966 = vpack.c.b16 %v6926, %v6922
    %v6967 = vpack.c.b16 %v6927, %v6923
    %v6968 = vpack.c.b16 %v6932, %v6928
    %v6969 = vpack.c.b16 %v6933, %v6929
    %v6970 = vpack.c.b16 %v6934, %v6930
    %v6971 = vpack.c.b16 %v6935, %v6931
    %v6972 = vpack.c.b16 %v6940, %v6936
    %v6973 = vpack.c.b16 %v6941, %v6937
    %v6974 = vpack.c.b16 %v6942, %v6938
    %v6975 = vpack.c.b16 %v6943, %v6939
    %7008 = vmatprep.subr.bf16.mxu0 %v6945
    %7009 = vmatpush1.bf16.msra.mxu0 %v6944
    %7010 = vmatprep.subr.bf16.mxu0 %v6949
    %7011 = vmatpush1.bf16.msra.mxu0 %v6948
    %7012 = vmatprep.subr.bf16.mxu0 %v6953
    %7013 = vmatpush1.bf16.msra.mxu0 %v6952
    %7014 = vmatprep.subr.bf16.mxu0 %v6957
    %7015 = vmatpush1.bf16.msra.mxu0 %v6956
    %7016 = vmatprep.subr.bf16.mxu0 %v6961
    %7017 = vmatpush1.bf16.msra.mxu0 %v6960
    %7018 = vmatprep.subr.bf16.mxu0 %v6965
    %7019 = vmatpush1.bf16.msra.mxu0 %v6964
    %7020 = vmatprep.subr.bf16.mxu0 %v6969
    %7021 = vmatpush1.bf16.msra.mxu0 %v6968
    %7022 = vmatprep.subr.bf16.mxu0 %v6973
    %7023 = vmatpush1.bf16.msra.mxu0 %v6972
    %7024 = vmatprep.subr.bf16.mxu0 0
    %7025 = vmatpush1.bf16.msra.mxu0 0
    %7026 = vmatprep.subr.bf16.mxu0 0
    %7027 = vmatpush1.bf16.msra.mxu0 0
    %7028 = vmatprep.subr.bf16.mxu0 0
    %7029 = vmatpush1.bf16.msra.mxu0 0
    %7030 = vmatprep.subr.bf16.mxu0 0
    %7031 = vmatpush1.bf16.msra.mxu0 0
    %7032 = vmatprep.subr.bf16.mxu0 0
    %7033 = vmatpush1.bf16.msra.mxu0 0
    %7034 = vmatprep.subr.bf16.mxu0 0
    %7035 = vmatpush1.bf16.msra.mxu0 0
    %7036 = vmatprep.subr.bf16.mxu0 0
    %7037 = vmatpush1.bf16.msra.mxu0 0
    %7038 = vmatprep.subr.bf16.mxu0 0
    %7039 = vmatpush1.bf16.msra.mxu0 0
    %7040 = vmatprep.mubr.bf16.mxu0 0
    %7041 = vmatmul.mubr.bf16.gmra.mrb[0].mxu0 %v6800
    %v7042 = vpop.f32.mrb[0].mxu0
    %v7043 = vadd.f32 0.0, %v7042
    %v7044 = vpop.f32.mrb[0].mxu0
    %v7045 = vadd.f32 0.0, %v7044
    %v7046 = vpop.f32.mrb[0].mxu0
    %v7047 = vadd.f32 0.0, %v7046
    %v7048 = vpop.f32.mrb[0].mxu0
    %v7049 = vadd.f32 0.0, %v7048
    %7050 = vmatprep.mubr.bf16.mxu0 0
    %7051 = vmatmul.mubr.bf16.gmra.mrb[0].mxu0 %v6801
    %v7052 = vpop.f32.mrb[0].mxu0
    %v7053 = vadd.f32 0.0, %v7052
    %v7054 = vpop.f32.mrb[0].mxu0
    %v7055 = vadd.f32 0.0, %v7054
    %v7056 = vpop.f32.mrb[0].mxu0
    %v7057 = vadd.f32 0.0, %v7056
    %v7058 = vpop.f32.mrb[0].mxu0
    %v7059 = vadd.f32 0.0, %v7058
    %7060 = vmatprep.mubr.bf16.mxu0 0
    %7061 = vmatmul.mubr.bf16.gmra.mrb[0].mxu0 %v6802
    %v7062 = vpop.f32.mrb[0].mxu0
    %v7063 = vadd.f32 0.0, %v7062
    %v7064 = vpop.f32.mrb[0].mxu0
    %v7065 = vadd.f32 0.0, %v7064
    %v7066 = vpop.f32.mrb[0].mxu0
    %v7067 = vadd.f32 0.0, %v7066
    %v7068 = vpop.f32.mrb[0].mxu0
    %v7069 = vadd.f32 0.0, %v7068
    %7070 = vmatprep.mubr.bf16.mxu0 0
    %7071 = vmatmul.mubr.bf16.gmra.mrb[0].mxu0 %v6803
    %v7072 = vpop.f32.mrb[0].mxu0
    %v7073 = vadd.f32 0.0, %v7072
    %v7074 = vpop.f32.mrb[0].mxu0
    %v7075 = vadd.f32 0.0, %v7074
    %v7076 = vpop.f32.mrb[0].mxu0
    %v7077 = vadd.f32 0.0, %v7076
    %v7078 = vpop.f32.mrb[0].mxu0
    %v7079 = vadd.f32 0.0, %v7078
    %7080 = vmatprep.mubr.bf16.mxu0 0
    %7081 = vmatmul.mubr.bf16.gmra.mrb[0].mxu0 %v6804
    %v7082 = vpop.f32.mrb[0].mxu0
    %v7083 = vadd.f32 0.0, %v7082
    %v7084 = vpop.f32.mrb[0].mxu0
    %v7085 = vadd.f32 0.0, %v7084
    %v7086 = vpop.f32.mrb[0].mxu0
    %v7087 = vadd.f32 0.0, %v7086
    %v7088 = vpop.f32.mrb[0].mxu0
    %v7089 = vadd.f32 0.0, %v7088
    %7090 = vmatprep.mubr.bf16.mxu0 0
    %7091 = vmatmul.mubr.bf16.gmra.mrb[0].mxu0 %v6805
    %v7092 = vpop.f32.mrb[0].mxu0
    %v7093 = vadd.f32 0.0, %v7092
    %v7094 = vpop.f32.mrb[0].mxu0
    %v7095 = vadd.f32 0.0, %v7094
    %v7096 = vpop.f32.mrb[0].mxu0
    %v7097 = vadd.f32 0.0, %v7096
    %v7098 = vpop.f32.mrb[0].mxu0
    %v7099 = vadd.f32 0.0, %v7098
    %7100 = vmatprep.mubr.bf16.mxu0 0
    %7101 = vmatmul.mubr.bf16.gmra.mrb[0].mxu0 %v6806
    %v7102 = vpop.f32.mrb[0].mxu0
    %v7103 = vadd.f32 0.0, %v7102
    %v7104 = vpop.f32.mrb[0].mxu0
    %v7105 = vadd.f32 0.0, %v7104
    %v7106 = vpop.f32.mrb[0].mxu0
    %v7107 = vadd.f32 0.0, %v7106
    %v7108 = vpop.f32.mrb[0].mxu0
    %v7109 = vadd.f32 0.0, %v7108
    %7110 = vmatprep.mubr.bf16.mxu0 0
    %7111 = vmatmul.mubr.bf16.gmra.mrb[0].mxu0 %v6807
    %v7112 = vpop.f32.mrb[0].mxu0
    %v7113 = vadd.f32 0.0, %v7112
    %v7114 = vpop.f32.mrb[0].mxu0
    %v7115 = vadd.f32 0.0, %v7114
    %v7116 = vpop.f32.mrb[0].mxu0
    %v7117 = vadd.f32 0.0, %v7116
    %v7118 = vpop.f32.mrb[0].mxu0
    %v7119 = vadd.f32 0.0, %v7118
    %7120 = vmatprep.mubr.bf16.mxu0 0
    %7121 = vmatmul.mubr.bf16.gmra.mrb[0].mxu0 %v6808
    %v7122 = vpop.f32.mrb[0].mxu0
    %v7123 = vadd.f32 0.0, %v7122
    %v7124 = vpop.f32.mrb[0].mxu0
    %v7125 = vadd.f32 0.0, %v7124
    %v7126 = vpop.f32.mrb[0].mxu0
    %v7127 = vadd.f32 0.0, %v7126
    %v7128 = vpop.f32.mrb[0].mxu0
    %v7129 = vadd.f32 0.0, %v7128
    %7130 = vmatprep.mubr.bf16.mxu0 0
    %7131 = vmatmul.mubr.bf16.gmra.mrb[0].mxu0 %v6809
    %v7132 = vpop.f32.mrb[0].mxu0
    %v7133 = vadd.f32 0.0, %v7132
    %v7134 = vpop.f32.mrb[0].mxu0
    %v7135 = vadd.f32 0.0, %v7134
    %v7136 = vpop.f32.mrb[0].mxu0
    %v7137 = vadd.f32 0.0, %v7136
    %v7138 = vpop.f32.mrb[0].mxu0
    %v7139 = vadd.f32 0.0, %v7138
    %7140 = vmatprep.mubr.bf16.mxu0 0
    %7141 = vmatmul.mubr.bf16.gmra.mrb[0].mxu0 %v6810
    %v7142 = vpop.f32.mrb[0].mxu0
    %v7143 = vadd.f32 0.0, %v7142
    %v7144 = vpop.f32.mrb[0].mxu0
    %v7145 = vadd.f32 0.0, %v7144
    %v7146 = vpop.f32.mrb[0].mxu0
    %v7147 = vadd.f32 0.0, %v7146
    %v7148 = vpop.f32.mrb[0].mxu0
    %v7149 = vadd.f32 0.0, %v7148
    %7150 = vmatprep.mubr.bf16.mxu0 0
    %7151 = vmatmul.mubr.bf16.gmra.mrb[0].mxu0 %v6811
    %v7152 = vpop.f32.mrb[0].mxu0
    %v7153 = vadd.f32 0.0, %v7152
    %v7154 = vpop.f32.mrb[0].mxu0
    %v7155 = vadd.f32 0.0, %v7154
    %v7156 = vpop.f32.mrb[0].mxu0
    %v7157 = vadd.f32 0.0, %v7156
    %v7158 = vpop.f32.mrb[0].mxu0
    %v7159 = vadd.f32 0.0, %v7158
    %7160 = vmatprep.mubr.bf16.mxu0 0
    %7161 = vmatmul.mubr.bf16.gmra.mrb[0].mxu0 %v6812
    %v7162 = vpop.f32.mrb[0].mxu0
    %v7163 = vadd.f32 0.0, %v7162
    %v7164 = vpop.f32.mrb[0].mxu0
    %v7165 = vadd.f32 0.0, %v7164
    %v7166 = vpop.f32.mrb[0].mxu0
    %v7167 = vadd.f32 0.0, %v7166
    %v7168 = vpop.f32.mrb[0].mxu0
    %v7169 = vadd.f32 0.0, %v7168
    %7170 = vmatprep.mubr.bf16.mxu0 0
    %7171 = vmatmul.mubr.bf16.gmra.mrb[0].mxu0 %v6813
    %v7172 = vpop.f32.mrb[0].mxu0
    %v7173 = vadd.f32 0.0, %v7172
    %v7174 = vpop.f32.mrb[0].mxu0
    %v7175 = vadd.f32 0.0, %v7174
    %v7176 = vpop.f32.mrb[0].mxu0
    %v7177 = vadd.f32 0.0, %v7176
    %v7178 = vpop.f32.mrb[0].mxu0
    %v7179 = vadd.f32 0.0, %v7178
    %7180 = vmatprep.mubr.bf16.mxu0 0
    %7181 = vmatmul.mubr.bf16.gmra.mrb[0].mxu0 %v6814
    %v7182 = vpop.f32.mrb[0].mxu0
    %v7183 = vadd.f32 0.0, %v7182
    %v7184 = vpop.f32.mrb[0].mxu0
    %v7185 = vadd.f32 0.0, %v7184
    %v7186 = vpop.f32.mrb[0].mxu0
    %v7187 = vadd.f32 0.0, %v7186
    %v7188 = vpop.f32.mrb[0].mxu0
    %v7189 = vadd.f32 0.0, %v7188
    %7190 = vmatprep.mubr.bf16.mxu0 0
    %7191 = vmatmul.mubr.bf16.gmra.mrb[0].mxu0 %v6815
    %v7192 = vpop.f32.mrb[0].mxu0
    %v7193 = vadd.f32 0.0, %v7192
    %v7194 = vpop.f32.mrb[0].mxu0
    %v7195 = vadd.f32 0.0, %v7194
    %v7196 = vpop.f32.mrb[0].mxu0
    %v7197 = vadd.f32 0.0, %v7196
    %v7198 = vpop.f32.mrb[0].mxu0
    %v7199 = vadd.f32 0.0, %v7198
    %7200 = vdwg.mxu0
    %7201 = vmatprep.subr.bf16.mxu0 %v6947
    %7202 = vmatpush1.bf16.msra.mxu0 %v6946
    %7203 = vmatprep.subr.bf16.mxu0 %v6951
    %7204 = vmatpush1.bf16.msra.mxu0 %v6950
    %7205 = vmatprep.subr.bf16.mxu0 %v6955
    %7206 = vmatpush1.bf16.msra.mxu0 %v6954
    %7207 = vmatprep.subr.bf16.mxu0 %v6959
    %7208 = vmatpush1.bf16.msra.mxu0 %v6958
    %7209 = vmatprep.subr.bf16.mxu0 %v6963
    %7210 = vmatpush1.bf16.msra.mxu0 %v6962
    %7211 = vmatprep.subr.bf16.mxu0 %v6967
    %7212 = vmatpush1.bf16.msra.mxu0 %v6966
    %7213 = vmatprep.subr.bf16.mxu0 %v6971
    %7214 = vmatpush1.bf16.msra.mxu0 %v6970
    %7215 = vmatprep.subr.bf16.mxu0 %v6975
    %7216 = vmatpush1.bf16.msra.mxu0 %v6974
    %7217 = vmatprep.subr.bf16.mxu0 0
    %7218 = vmatpush1.bf16.msra.mxu0 0
    %7219 = vmatprep.subr.bf16.mxu0 0
    %7220 = vmatpush1.bf16.msra.mxu0 0
    %7221 = vmatprep.subr.bf16.mxu0 0
    %7222 = vmatpush1.bf16.msra.mxu0 0
    %7223 = vmatprep.subr.bf16.mxu0 0
    %7224 = vmatpush1.bf16.msra.mxu0 0
    %7225 = vmatprep.subr.bf16.mxu0 0
    %7226 = vmatpush1.bf16.msra.mxu0 0
    %7227 = vmatprep.subr.bf16.mxu0 0
    %7228 = vmatpush1.bf16.msra.mxu0 0
    %7229 = vmatprep.subr.bf16.mxu0 0
    %7230 = vmatpush1.bf16.msra.mxu0 0
    %7231 = vmatprep.subr.bf16.mxu0 0
    %7232 = vmatpush1.bf16.msra.mxu0 0
    %7233 = vmatprep.mubr.bf16.mxu0 0
    %7234 = vmatmul.mubr.bf16.gmra.mrb[0].mxu0 %v6800
    %v7235 = vpop.f32.mrb[0].mxu0
    %v7236 = vadd.f32 0.0, %v7235
    %v7237 = vpop.f32.mrb[0].mxu0
    %v7238 = vadd.f32 0.0, %v7237
    %v7239 = vpop.f32.mrb[0].mxu0
    %v7240 = vadd.f32 0.0, %v7239
    %v7241 = vpop.f32.mrb[0].mxu0
    %v7242 = vadd.f32 0.0, %v7241
    %7243 = vmatprep.mubr.bf16.mxu0 0
    %7244 = vmatmul.mubr.bf16.gmra.mrb[0].mxu0 %v6801
    %v7245 = vpop.f32.mrb[0].mxu0
    %v7246 = vadd.f32 0.0, %v7245
    %v7247 = vpop.f32.mrb[0].mxu0
    %v7248 = vadd.f32 0.0, %v7247
    %v7249 = vpop.f32.mrb[0].mxu0
    %v7250 = vadd.f32 0.0, %v7249
    %v7251 = vpop.f32.mrb[0].mxu0
    %v7252 = vadd.f32 0.0, %v7251
    %7253 = vmatprep.mubr.bf16.mxu0 0
    %7254 = vmatmul.mubr.bf16.gmra.mrb[0].mxu0 %v6802
    %v7255 = vpop.f32.mrb[0].mxu0
    %v7256 = vadd.f32 0.0, %v7255
    %v7257 = vpop.f32.mrb[0].mxu0
    %v7258 = vadd.f32 0.0, %v7257
    %v7259 = vpop.f32.mrb[0].mxu0
    %v7260 = vadd.f32 0.0, %v7259
    %v7261 = vpop.f32.mrb[0].mxu0
    %v7262 = vadd.f32 0.0, %v7261
    %7263 = vmatprep.mubr.bf16.mxu0 0
    %7264 = vmatmul.mubr.bf16.gmra.mrb[0].mxu0 %v6803
    %v7265 = vpop.f32.mrb[0].mxu0
    %v7266 = vadd.f32 0.0, %v7265
    %v7267 = vpop.f32.mrb[0].mxu0
    %v7268 = vadd.f32 0.0, %v7267
    %v7269 = vpop.f32.mrb[0].mxu0
    %v7270 = vadd.f32 0.0, %v7269
    %v7271 = vpop.f32.mrb[0].mxu0
    %v7272 = vadd.f32 0.0, %v7271
    %7273 = vmatprep.mubr.bf16.mxu0 0
    %7274 = vmatmul.mubr.bf16.gmra.mrb[0].mxu0 %v6804
    %v7275 = vpop.f32.mrb[0].mxu0
    %v7276 = vadd.f32 0.0, %v7275
    %v7277 = vpop.f32.mrb[0].mxu0
    %v7278 = vadd.f32 0.0, %v7277
    %v7279 = vpop.f32.mrb[0].mxu0
    %v7280 = vadd.f32 0.0, %v7279
    %v7281 = vpop.f32.mrb[0].mxu0
    %v7282 = vadd.f32 0.0, %v7281
    %7283 = vmatprep.mubr.bf16.mxu0 0
    %7284 = vmatmul.mubr.bf16.gmra.mrb[0].mxu0 %v6805
    %v7285 = vpop.f32.mrb[0].mxu0
    %v7286 = vadd.f32 0.0, %v7285
    %v7287 = vpop.f32.mrb[0].mxu0
    %v7288 = vadd.f32 0.0, %v7287
    %v7289 = vpop.f32.mrb[0].mxu0
    %v7290 = vadd.f32 0.0, %v7289
    %v7291 = vpop.f32.mrb[0].mxu0
    %v7292 = vadd.f32 0.0, %v7291
    %7293 = vmatprep.mubr.bf16.mxu0 0
    %7294 = vmatmul.mubr.bf16.gmra.mrb[0].mxu0 %v6806
    %v7295 = vpop.f32.mrb[0].mxu0
    %v7296 = vadd.f32 0.0, %v7295
    %v7297 = vpop.f32.mrb[0].mxu0
    %v7298 = vadd.f32 0.0, %v7297
    %v7299 = vpop.f32.mrb[0].mxu0
    %v7300 = vadd.f32 0.0, %v7299
    %v7301 = vpop.f32.mrb[0].mxu0
    %v7302 = vadd.f32 0.0, %v7301
    %7303 = vmatprep.mubr.bf16.mxu0 0
    %7304 = vmatmul.mubr.bf16.gmra.mrb[0].mxu0 %v6807
    %v7305 = vpop.f32.mrb[0].mxu0
    %v7306 = vadd.f32 0.0, %v7305
    %v7307 = vpop.f32.mrb[0].mxu0
    %v7308 = vadd.f32 0.0, %v7307
    %v7309 = vpop.f32.mrb[0].mxu0
    %v7310 = vadd.f32 0.0, %v7309
    %v7311 = vpop.f32.mrb[0].mxu0
    %v7312 = vadd.f32 0.0, %v7311
    %7313 = vmatprep.mubr.bf16.mxu0 0
    %7314 = vmatmul.mubr.bf16.gmra.mrb[0].mxu0 %v6808
    %v7315 = vpop.f32.mrb[0].mxu0
    %v7316 = vadd.f32 0.0, %v7315
    %v7317 = vpop.f32.mrb[0].mxu0
    %v7318 = vadd.f32 0.0, %v7317
    %v7319 = vpop.f32.mrb[0].mxu0
    %v7320 = vadd.f32 0.0, %v7319
    %v7321 = vpop.f32.mrb[0].mxu0
    %v7322 = vadd.f32 0.0, %v7321
    %7323 = vmatprep.mubr.bf16.mxu0 0
    %7324 = vmatmul.mubr.bf16.gmra.mrb[0].mxu0 %v6809
    %v7325 = vpop.f32.mrb[0].mxu0
    %v7326 = vadd.f32 0.0, %v7325
    %v7327 = vpop.f32.mrb[0].mxu0
    %v7328 = vadd.f32 0.0, %v7327
    %v7329 = vpop.f32.mrb[0].mxu0
    %v7330 = vadd.f32 0.0, %v7329
    %v7331 = vpop.f32.mrb[0].mxu0
    %v7332 = vadd.f32 0.0, %v7331
    %7333 = vmatprep.mubr.bf16.mxu0 0
    %7334 = vmatmul.mubr.bf16.gmra.mrb[0].mxu0 %v6810
    %v7335 = vpop.f32.mrb[0].mxu0
    %v7336 = vadd.f32 0.0, %v7335
    %v7337 = vpop.f32.mrb[0].mxu0
    %v7338 = vadd.f32 0.0, %v7337
    %v7339 = vpop.f32.mrb[0].mxu0
    %v7340 = vadd.f32 0.0, %v7339
    %v7341 = vpop.f32.mrb[0].mxu0
    %v7342 = vadd.f32 0.0, %v7341
    %7343 = vmatprep.mubr.bf16.mxu0 0
    %7344 = vmatmul.mubr.bf16.gmra.mrb[0].mxu0 %v6811
    %v7345 = vpop.f32.mrb[0].mxu0
    %v7346 = vadd.f32 0.0, %v7345
    %v7347 = vpop.f32.mrb[0].mxu0
    %v7348 = vadd.f32 0.0, %v7347
    %v7349 = vpop.f32.mrb[0].mxu0
    %v7350 = vadd.f32 0.0, %v7349
    %v7351 = vpop.f32.mrb[0].mxu0
    %v7352 = vadd.f32 0.0, %v7351
    %7353 = vmatprep.mubr.bf16.mxu0 0
    %7354 = vmatmul.mubr.bf16.gmra.mrb[0].mxu0 %v6812
    %v7355 = vpop.f32.mrb[0].mxu0
    %v7356 = vadd.f32 0.0, %v7355
    %v7357 = vpop.f32.mrb[0].mxu0
    %v7358 = vadd.f32 0.0, %v7357
    %v7359 = vpop.f32.mrb[0].mxu0
    %v7360 = vadd.f32 0.0, %v7359
    %v7361 = vpop.f32.mrb[0].mxu0
    %v7362 = vadd.f32 0.0, %v7361
    %7363 = vmatprep.mubr.bf16.mxu0 0
    %7364 = vmatmul.mubr.bf16.gmra.mrb[0].mxu0 %v6813
    %v7365 = vpop.f32.mrb[0].mxu0
    %v7366 = vadd.f32 0.0, %v7365
    %v7367 = vpop.f32.mrb[0].mxu0
    %v7368 = vadd.f32 0.0, %v7367
    %v7369 = vpop.f32.mrb[0].mxu0
    %v7370 = vadd.f32 0.0, %v7369
    %v7371 = vpop.f32.mrb[0].mxu0
    %v7372 = vadd.f32 0.0, %v7371
    %7373 = vmatprep.mubr.bf16.mxu0 0
    %7374 = vmatmul.mubr.bf16.gmra.mrb[0].mxu0 %v6814
    %v7375 = vpop.f32.mrb[0].mxu0
    %v7376 = vadd.f32 0.0, %v7375
    %v7377 = vpop.f32.mrb[0].mxu0
    %v7378 = vadd.f32 0.0, %v7377
    %v7379 = vpop.f32.mrb[0].mxu0
    %v7380 = vadd.f32 0.0, %v7379
    %v7381 = vpop.f32.mrb[0].mxu0
    %v7382 = vadd.f32 0.0, %v7381
    %7383 = vmatprep.mubr.bf16.mxu0 0
    %7384 = vmatmul.mubr.bf16.gmra.mrb[0].mxu0 %v6815
    %v7385 = vpop.f32.mrb[0].mxu0
    %v7386 = vadd.f32 0.0, %v7385
    %v7387 = vpop.f32.mrb[0].mxu0
    %v7388 = vadd.f32 0.0, %v7387
    %v7389 = vpop.f32.mrb[0].mxu0
    %v7390 = vadd.f32 0.0, %v7389
    %v7391 = vpop.f32.mrb[0].mxu0
    %v7392 = vadd.f32 0.0, %v7391
    %7393 = vdwg.mxu0
    %v7394 = vmul.f32 %v7043, %v7236
    %v7395 = vmul.f32 %v7045, %v7238
    %v7396 = vmul.f32 %v7047, %v7240
    %v7397 = vmul.f32 %v7049, %v7242
    %v7398 = vmul.f32 %v7053, %v7246
    %v7399 = vmul.f32 %v7055, %v7248
    %v7400 = vmul.f32 %v7057, %v7250
    %v7401 = vmul.f32 %v7059, %v7252
    %v7402 = vmul.f32 %v7063, %v7256
    %v7403 = vmul.f32 %v7065, %v7258
    %v7404 = vmul.f32 %v7067, %v7260
    %v7405 = vmul.f32 %v7069, %v7262
    %v7406 = vmul.f32 %v7073, %v7266
    %v7407 = vmul.f32 %v7075, %v7268
    %v7408 = vmul.f32 %v7077, %v7270
    %v7409 = vmul.f32 %v7079, %v7272
    %v7410 = vmul.f32 %v7083, %v7276
    %v7411 = vmul.f32 %v7085, %v7278
    %v7412 = vmul.f32 %v7087, %v7280
    %v7413 = vmul.f32 %v7089, %v7282
    %v7414 = vmul.f32 %v7093, %v7286
    %v7415 = vmul.f32 %v7095, %v7288
    %v7416 = vmul.f32 %v7097, %v7290
    %v7417 = vmul.f32 %v7099, %v7292
    %v7418 = vmul.f32 %v7103, %v7296
    %v7419 = vmul.f32 %v7105, %v7298
    %v7420 = vmul.f32 %v7107, %v7300
    %v7421 = vmul.f32 %v7109, %v7302
    %v7422 = vmul.f32 %v7113, %v7306
    %v7423 = vmul.f32 %v7115, %v7308
    %v7424 = vmul.f32 %v7117, %v7310
    %v7425 = vmul.f32 %v7119, %v7312
    %v7426 = vmul.f32 %v7123, %v7316
    %v7427 = vmul.f32 %v7125, %v7318
    %v7428 = vmul.f32 %v7127, %v7320
    %v7429 = vmul.f32 %v7129, %v7322
    %v7430 = vmul.f32 %v7133, %v7326
    %v7431 = vmul.f32 %v7135, %v7328
    %v7432 = vmul.f32 %v7137, %v7330
    %v7433 = vmul.f32 %v7139, %v7332
    %v7434 = vmul.f32 %v7143, %v7336
    %v7435 = vmul.f32 %v7145, %v7338
    %v7436 = vmul.f32 %v7147, %v7340
    %v7437 = vmul.f32 %v7149, %v7342
    %v7438 = vmul.f32 %v7153, %v7346
    %v7439 = vmul.f32 %v7155, %v7348
    %v7440 = vmul.f32 %v7157, %v7350
    %v7441 = vmul.f32 %v7159, %v7352
    %v7442 = vmul.f32 %v7163, %v7356
    %v7443 = vmul.f32 %v7165, %v7358
    %v7444 = vmul.f32 %v7167, %v7360
    %v7445 = vmul.f32 %v7169, %v7362
    %v7446 = vmul.f32 %v7173, %v7366
    %v7447 = vmul.f32 %v7175, %v7368
    %v7448 = vmul.f32 %v7177, %v7370
    %v7449 = vmul.f32 %v7179, %v7372
    %v7450 = vmul.f32 %v7183, %v7376
    %v7451 = vmul.f32 %v7185, %v7378
    %v7452 = vmul.f32 %v7187, %v7380
    %v7453 = vmul.f32 %v7189, %v7382
    %v7454 = vmul.f32 %v7193, %v7386
    %v7455 = vmul.f32 %v7195, %v7388
    %v7456 = vmul.f32 %v7197, %v7390
    %v7457 = vmul.f32 %v7199, %v7392
    %v7458 = vpack.c.bf16 %v7396, %v7394
    %v7459 = vpack.c.bf16 %v7397, %v7395
    %v7460 = vpack.c.bf16 %v7400, %v7398
    %v7461 = vpack.c.bf16 %v7401, %v7399
    %v7462 = vpack.c.bf16 %v7404, %v7402
    %v7463 = vpack.c.bf16 %v7405, %v7403
    %v7464 = vpack.c.bf16 %v7408, %v7406
    %v7465 = vpack.c.bf16 %v7409, %v7407
    %v7466 = vpack.c.bf16 %v7412, %v7410
    %v7467 = vpack.c.bf16 %v7413, %v7411
    %v7468 = vpack.c.bf16 %v7416, %v7414
    %v7469 = vpack.c.bf16 %v7417, %v7415
    %v7470 = vpack.c.bf16 %v7420, %v7418
    %v7471 = vpack.c.bf16 %v7421, %v7419
    %v7472 = vpack.c.bf16 %v7424, %v7422
    %v7473 = vpack.c.bf16 %v7425, %v7423
    %v7474 = vpack.c.bf16 %v7428, %v7426
    %v7475 = vpack.c.bf16 %v7429, %v7427
    %v7476 = vpack.c.bf16 %v7432, %v7430
    %v7477 = vpack.c.bf16 %v7433, %v7431
    %v7478 = vpack.c.bf16 %v7436, %v7434
    %v7479 = vpack.c.bf16 %v7437, %v7435
    %v7480 = vpack.c.bf16 %v7440, %v7438
    %v7481 = vpack.c.bf16 %v7441, %v7439
    %v7482 = vpack.c.bf16 %v7444, %v7442
    %v7483 = vpack.c.bf16 %v7445, %v7443
    %v7484 = vpack.c.bf16 %v7448, %v7446
    %v7485 = vpack.c.bf16 %v7449, %v7447
    %v7486 = vpack.c.bf16 %v7452, %v7450
    %v7487 = vpack.c.bf16 %v7453, %v7451
    %v7488 = vpack.c.bf16 %v7456, %v7454
    %v7489 = vpack.c.bf16 %v7457, %v7455
    %v7490 = vld [vmem:[%s4] sm:$0xf]
    %v7491 = vld [vmem:[%s4 + $0x4] sm:$0xf]
    %v7492 = vld [vmem:[%s4 + $0x8] sm:$0xf]
    %v7493 = vld [vmem:[%s4 + $0xc] sm:$0xf]
    %v7494 = vld [vmem:[%s4 + $0x10] sm:$0xf]
    %v7495 = vld [vmem:[%s4 + $0x14] sm:$0xf]
    %v7496 = vld [vmem:[%s4 + $0x18] sm:$0xf]
    %v7497 = vld [vmem:[%s4 + $0x1c] sm:$0xf]
    %v7498 = vld [vmem:[%s4 + $0x20] sm:$0xf]
    %v7499 = vld [vmem:[%s4 + $0x24] sm:$0xf]
    %v7500 = vld [vmem:[%s4 + $0x28] sm:$0xf]
    %v7501 = vld [vmem:[%s4 + $0x2c] sm:$0xf]
    %v7502 = vld [vmem:[%s4 + $0x30] sm:$0xf]
    %v7503 = vld [vmem:[%s4 + $0x34] sm:$0xf]
    %v7504 = vld [vmem:[%s4 + $0x38] sm:$0xf]
    %v7505 = vld [vmem:[%s4 + $0x3c] sm:$0xf]
    %v7506 = vld [vmem:[%s4 + $0x40] sm:$0xf]
    %v7507 = vld [vmem:[%s4 + $0x44] sm:$0xf]
    %v7508 = vld [vmem:[%s4 + $0x48] sm:$0xf]
    %v7509 = vld [vmem:[%s4 + $0x4c] sm:$0xf]
    %v7510 = vld [vmem:[%s4 + $0x50] sm:$0xf]
    %v7511 = vld [vmem:[%s4 + $0x54] sm:$0xf]
    %v7512 = vld [vmem:[%s4 + $0x58] sm:$0xf]
    %v7513 = vld [vmem:[%s4 + $0x5c] sm:$0xf]
    %v7514 = vld [vmem:[%s4 + $0x60] sm:$0xf]
    %v7515 = vld [vmem:[%s4 + $0x64] sm:$0xf]
    %v7516 = vld [vmem:[%s4 + $0x68] sm:$0xf]
    %v7517 = vld [vmem:[%s4 + $0x6c] sm:$0xf]
    %v7518 = vld [vmem:[%s4 + $0x70] sm:$0xf]
    %v7519 = vld [vmem:[%s4 + $0x74] sm:$0xf]
    %v7520 = vld [vmem:[%s4 + $0x78] sm:$0xf]
    %v7521 = vld [vmem:[%s4 + $0x7c] sm:$0xf]
    %v7554 = vunpack.c.l.b16 %v7490
    %v7555 = vunpack.c.l.b16 %v7491
    %v7556 = vunpack.c.l.b16 %v7492
    %v7557 = vunpack.c.l.b16 %v7493
    %v7558 = vunpack.c.l.b16 %v7494
    %v7559 = vunpack.c.l.b16 %v7495
    %v7560 = vunpack.c.l.b16 %v7496
    %v7561 = vunpack.c.l.b16 %v7497
    %v7562 = vunpack.c.l.b16 %v7498
    %v7563 = vunpack.c.l.b16 %v7499
    %v7564 = vunpack.c.l.b16 %v7500
    %v7565 = vunpack.c.l.b16 %v7501
    %v7566 = vunpack.c.l.b16 %v7502
    %v7567 = vunpack.c.l.b16 %v7503
    %v7568 = vunpack.c.l.b16 %v7504
    %v7569 = vunpack.c.l.b16 %v7505
    %v7570 = vunpack.c.l.b16 %v7506
    %v7571 = vunpack.c.l.b16 %v7507
    %v7572 = vunpack.c.l.b16 %v7508
    %v7573 = vunpack.c.l.b16 %v7509
    %v7574 = vunpack.c.l.b16 %v7510
    %v7575 = vunpack.c.l.b16 %v7511
    %v7576 = vunpack.c.l.b16 %v7512
    %v7577 = vunpack.c.l.b16 %v7513
    %v7578 = vunpack.c.l.b16 %v7514
    %v7579 = vunpack.c.l.b16 %v7515
    %v7580 = vunpack.c.l.b16 %v7516
    %v7581 = vunpack.c.l.b16 %v7517
    %v7582 = vunpack.c.l.b16 %v7518
    %v7583 = vunpack.c.l.b16 %v7519
    %v7584 = vunpack.c.l.b16 %v7520
    %v7585 = vunpack.c.l.b16 %v7521
    %v7586 = vpack.c.b16 %v7555, %v7554
    %v7587 = vpack.c.b16 %v7557, %v7556
    %v7588 = vpack.c.b16 %v7559, %v7558
    %v7589 = vpack.c.b16 %v7561, %v7560
    %v7590 = vpack.c.b16 %v7563, %v7562
    %v7591 = vpack.c.b16 %v7565, %v7564
    %v7592 = vpack.c.b16 %v7567, %v7566
    %v7593 = vpack.c.b16 %v7569, %v7568
    %v7594 = vpack.c.b16 %v7571, %v7570
    %v7595 = vpack.c.b16 %v7573, %v7572
    %v7596 = vpack.c.b16 %v7575, %v7574
    %v7597 = vpack.c.b16 %v7577, %v7576
    %v7598 = vpack.c.b16 %v7579, %v7578
    %v7599 = vpack.c.b16 %v7581, %v7580
    %v7600 = vpack.c.b16 %v7583, %v7582
    %v7601 = vpack.c.b16 %v7585, %v7584
    %7618 = vmatprep.subr.bf16.mxu0 0
    %7619 = vmatpush1.bf16.msra.mxu0 %v7586
    %7620 = vmatprep.subr.bf16.mxu0 0
    %7621 = vmatpush1.bf16.msra.mxu0 %v7587
    %7622 = vmatprep.subr.bf16.mxu0 0
    %7623 = vmatpush1.bf16.msra.mxu0 %v7588
    %7624 = vmatprep.subr.bf16.mxu0 0
    %7625 = vmatpush1.bf16.msra.mxu0 %v7589
    %7626 = vmatprep.subr.bf16.mxu0 0
    %7627 = vmatpush1.bf16.msra.mxu0 %v7590
    %7628 = vmatprep.subr.bf16.mxu0 0
    %7629 = vmatpush1.bf16.msra.mxu0 %v7591
    %7630 = vmatprep.subr.bf16.mxu0 0
    %7631 = vmatpush1.bf16.msra.mxu0 %v7592
    %7632 = vmatprep.subr.bf16.mxu0 0
    %7633 = vmatpush1.bf16.msra.mxu0 %v7593
    %7634 = vmatprep.subr.bf16.mxu0 0
    %7635 = vmatpush1.bf16.msra.mxu0 %v7594
    %7636 = vmatprep.subr.bf16.mxu0 0
    %7637 = vmatpush1.bf16.msra.mxu0 %v7595
    %7638 = vmatprep.subr.bf16.mxu0 0
    %7639 = vmatpush1.bf16.msra.mxu0 %v7596
    %7640 = vmatprep.subr.bf16.mxu0 0
    %7641 = vmatpush1.bf16.msra.mxu0 %v7597
    %7642 = vmatprep.subr.bf16.mxu0 0
    %7643 = vmatpush1.bf16.msra.mxu0 %v7598
    %7644 = vmatprep.subr.bf16.mxu0 0
    %7645 = vmatpush1.bf16.msra.mxu0 %v7599
    %7646 = vmatprep.subr.bf16.mxu0 0
    %7647 = vmatpush1.bf16.msra.mxu0 %v7600
    %7648 = vmatprep.subr.bf16.mxu0 0
    %7649 = vmatpush1.bf16.msra.mxu0 %v7601
    %7650 = vmatprep.mubr.bf16.mxu0 %v7459
    %7651 = vmatmul.mubr.bf16.gmra.mrb[0].mxu0 %v7458
    %v7652 = vpop.f32.mrb[0].mxu0
    %v7653 = vadd.f32 0.0, %v7652
    %v7654 = vpop.f32.mrb[0].mxu0
    %v7655 = vpop.f32.mrb[0].mxu0
    %v7656 = vadd.f32 0.0, %v7655
    %v7657 = vpop.f32.mrb[0].mxu0
    %7658 = vmatprep.mubr.bf16.mxu0 %v7461
    %7659 = vmatmul.mubr.bf16.gmra.mrb[0].mxu0 %v7460
    %v7660 = vpop.f32.mrb[0].mxu0
    %v7661 = vadd.f32 0.0, %v7660
    %v7662 = vpop.f32.mrb[0].mxu0
    %v7663 = vpop.f32.mrb[0].mxu0
    %v7664 = vadd.f32 0.0, %v7663
    %v7665 = vpop.f32.mrb[0].mxu0
    %7666 = vmatprep.mubr.bf16.mxu0 %v7463
    %7667 = vmatmul.mubr.bf16.gmra.mrb[0].mxu0 %v7462
    %v7668 = vpop.f32.mrb[0].mxu0
    %v7669 = vadd.f32 0.0, %v7668
    %v7670 = vpop.f32.mrb[0].mxu0
    %v7671 = vpop.f32.mrb[0].mxu0
    %v7672 = vadd.f32 0.0, %v7671
    %v7673 = vpop.f32.mrb[0].mxu0
    %7674 = vmatprep.mubr.bf16.mxu0 %v7465
    %7675 = vmatmul.mubr.bf16.gmra.mrb[0].mxu0 %v7464
    %v7676 = vpop.f32.mrb[0].mxu0
    %v7677 = vadd.f32 0.0, %v7676
    %v7678 = vpop.f32.mrb[0].mxu0
    %v7679 = vpop.f32.mrb[0].mxu0
    %v7680 = vadd.f32 0.0, %v7679
    %v7681 = vpop.f32.mrb[0].mxu0
    %7682 = vmatprep.mubr.bf16.mxu0 %v7467
    %7683 = vmatmul.mubr.bf16.gmra.mrb[0].mxu0 %v7466
    %v7684 = vpop.f32.mrb[0].mxu0
    %v7685 = vadd.f32 0.0, %v7684
    %v7686 = vpop.f32.mrb[0].mxu0
    %v7687 = vpop.f32.mrb[0].mxu0
    %v7688 = vadd.f32 0.0, %v7687
    %v7689 = vpop.f32.mrb[0].mxu0
    %7690 = vmatprep.mubr.bf16.mxu0 %v7469
    %7691 = vmatmul.mubr.bf16.gmra.mrb[0].mxu0 %v7468
    %v7692 = vpop.f32.mrb[0].mxu0
    %v7693 = vadd.f32 0.0, %v7692
    %v7694 = vpop.f32.mrb[0].mxu0
    %v7695 = vpop.f32.mrb[0].mxu0
    %v7696 = vadd.f32 0.0, %v7695
    %v7697 = vpop.f32.mrb[0].mxu0
    %7698 = vmatprep.mubr.bf16.mxu0 %v7471
    %7699 = vmatmul.mubr.bf16.gmra.mrb[0].mxu0 %v7470
    %v7700 = vpop.f32.mrb[0].mxu0
    %v7701 = vadd.f32 0.0, %v7700
    %v7702 = vpop.f32.mrb[0].mxu0
    %v7703 = vpop.f32.mrb[0].mxu0
    %v7704 = vadd.f32 0.0, %v7703
    %v7705 = vpop.f32.mrb[0].mxu0
    %7706 = vmatprep.mubr.bf16.mxu0 %v7473
    %7707 = vmatmul.mubr.bf16.gmra.mrb[0].mxu0 %v7472
    %v7708 = vpop.f32.mrb[0].mxu0
    %v7709 = vadd.f32 0.0, %v7708
    %v7710 = vpop.f32.mrb[0].mxu0
    %v7711 = vpop.f32.mrb[0].mxu0
    %v7712 = vadd.f32 0.0, %v7711
    %v7713 = vpop.f32.mrb[0].mxu0
    %7714 = vmatprep.mubr.bf16.mxu0 %v7475
    %7715 = vmatmul.mubr.bf16.gmra.mrb[0].mxu0 %v7474
    %v7716 = vpop.f32.mrb[0].mxu0
    %v7717 = vadd.f32 0.0, %v7716
    %v7718 = vpop.f32.mrb[0].mxu0
    %v7719 = vpop.f32.mrb[0].mxu0
    %v7720 = vadd.f32 0.0, %v7719
    %v7721 = vpop.f32.mrb[0].mxu0
    %7722 = vmatprep.mubr.bf16.mxu0 %v7477
    %7723 = vmatmul.mubr.bf16.gmra.mrb[0].mxu0 %v7476
    %v7724 = vpop.f32.mrb[0].mxu0
    %v7725 = vadd.f32 0.0, %v7724
    %v7726 = vpop.f32.mrb[0].mxu0
    %v7727 = vpop.f32.mrb[0].mxu0
    %v7728 = vadd.f32 0.0, %v7727
    %v7729 = vpop.f32.mrb[0].mxu0
    %7730 = vmatprep.mubr.bf16.mxu0 %v7479
    %7731 = vmatmul.mubr.bf16.gmra.mrb[0].mxu0 %v7478
    %v7732 = vpop.f32.mrb[0].mxu0
    %v7733 = vadd.f32 0.0, %v7732
    %v7734 = vpop.f32.mrb[0].mxu0
    %v7735 = vpop.f32.mrb[0].mxu0
    %v7736 = vadd.f32 0.0, %v7735
    %v7737 = vpop.f32.mrb[0].mxu0
    %7738 = vmatprep.mubr.bf16.mxu0 %v7481
    %7739 = vmatmul.mubr.bf16.gmra.mrb[0].mxu0 %v7480
    %v7740 = vpop.f32.mrb[0].mxu0
    %v7741 = vadd.f32 0.0, %v7740
    %v7742 = vpop.f32.mrb[0].mxu0
    %v7743 = vpop.f32.mrb[0].mxu0
    %v7744 = vadd.f32 0.0, %v7743
    %v7745 = vpop.f32.mrb[0].mxu0
    %7746 = vmatprep.mubr.bf16.mxu0 %v7483
    %7747 = vmatmul.mubr.bf16.gmra.mrb[0].mxu0 %v7482
    %v7748 = vpop.f32.mrb[0].mxu0
    %v7749 = vadd.f32 0.0, %v7748
    %v7750 = vpop.f32.mrb[0].mxu0
    %v7751 = vpop.f32.mrb[0].mxu0
    %v7752 = vadd.f32 0.0, %v7751
    %v7753 = vpop.f32.mrb[0].mxu0
    %7754 = vmatprep.mubr.bf16.mxu0 %v7485
    %7755 = vmatmul.mubr.bf16.gmra.mrb[0].mxu0 %v7484
    %v7756 = vpop.f32.mrb[0].mxu0
    %v7757 = vadd.f32 0.0, %v7756
    %v7758 = vpop.f32.mrb[0].mxu0
    %v7759 = vpop.f32.mrb[0].mxu0
    %v7760 = vadd.f32 0.0, %v7759
    %v7761 = vpop.f32.mrb[0].mxu0
    %7762 = vmatprep.mubr.bf16.mxu0 %v7487
    %7763 = vmatmul.mubr.bf16.gmra.mrb[0].mxu0 %v7486
    %v7764 = vpop.f32.mrb[0].mxu0
    %v7765 = vadd.f32 0.0, %v7764
    %v7766 = vpop.f32.mrb[0].mxu0
    %v7767 = vpop.f32.mrb[0].mxu0
    %v7768 = vadd.f32 0.0, %v7767
    %v7769 = vpop.f32.mrb[0].mxu0
    %7770 = vmatprep.mubr.bf16.mxu0 %v7489
    %7771 = vmatmul.mubr.bf16.gmra.mrb[0].mxu0 %v7488
    %v7772 = vpop.f32.mrb[0].mxu0
    %v7773 = vadd.f32 0.0, %v7772
    %v7774 = vpop.f32.mrb[0].mxu0
    %v7775 = vpop.f32.mrb[0].mxu0
    %v7776 = vadd.f32 0.0, %v7775
    %v7777 = vpop.f32.mrb[0].mxu0
    %7778 = vdwg.mxu0
    %v7779 = vadd.f32 %v6544, %v7653
    %v7780 = vadd.f32 %v6545, %v7656
    %v7781 = vadd.f32 %v6546, %v7661
    %v7782 = vadd.f32 %v6547, %v7664
    %v7783 = vadd.f32 %v6548, %v7669
    %v7784 = vadd.f32 %v6549, %v7672
    %v7785 = vadd.f32 %v6550, %v7677
    %v7786 = vadd.f32 %v6551, %v7680
    %v7787 = vadd.f32 %v6552, %v7685
    %v7788 = vadd.f32 %v6553, %v7688
    %v7789 = vadd.f32 %v6554, %v7693
    %v7790 = vadd.f32 %v6555, %v7696
    %v7791 = vadd.f32 %v6556, %v7701
    %v7792 = vadd.f32 %v6557, %v7704
    %v7793 = vadd.f32 %v6558, %v7709
    %v7794 = vadd.f32 %v6559, %v7712
    %v7795 = vadd.f32 %v6560, %v7717
    %v7796 = vadd.f32 %v6561, %v7720
    %v7797 = vadd.f32 %v6562, %v7725
    %v7798 = vadd.f32 %v6563, %v7728
    %v7799 = vadd.f32 %v6564, %v7733
    %v7800 = vadd.f32 %v6565, %v7736
    %v7801 = vadd.f32 %v6566, %v7741
    %v7802 = vadd.f32 %v6567, %v7744
    %v7803 = vadd.f32 %v6568, %v7749
    %v7804 = vadd.f32 %v6569, %v7752
    %v7805 = vadd.f32 %v6570, %v7757
    %v7806 = vadd.f32 %v6571, %v7760
    %v7807 = vadd.f32 %v6572, %v7765
    %v7808 = vadd.f32 %v6573, %v7768
    %v7809 = vadd.f32 %v6574, %v7773
    %v7810 = vadd.f32 %v6575, %v7776
    %7811 = vst [vmem:[#allocation2] sm:$0xff] %v7779
    %7812 = vst [vmem:[#allocation2 + $0x8] sm:$0xff] %v7780
    %7813 = vst [vmem:[#allocation2 + $0x10] sm:$0xff] %v7781
    %7814 = vst [vmem:[#allocation2 + $0x18] sm:$0xff] %v7782
    %7815 = vst [vmem:[#allocation2 + $0x20] sm:$0xff] %v7783
    %7816 = vst [vmem:[#allocation2 + $0x28] sm:$0xff] %v7784
    %7817 = vst [vmem:[#allocation2 + $0x30] sm:$0xff] %v7785
    %7818 = vst [vmem:[#allocation2 + $0x38] sm:$0xff] %v7786
    %7819 = vst [vmem:[#allocation2 + $0x40] sm:$0xff] %v7787
    %7820 = vst [vmem:[#allocation2 + $0x48] sm:$0xff] %v7788
    %7821 = vst [vmem:[#allocation2 + $0x50] sm:$0xff] %v7789
    %7822 = vst [vmem:[#allocation2 + $0x58] sm:$0xff] %v7790
    %7823 = vst [vmem:[#allocation2 + $0x60] sm:$0xff] %v7791
    %7824 = vst [vmem:[#allocation2 + $0x68] sm:$0xff] %v7792
    %7825 = vst [vmem:[#allocation2 + $0x70] sm:$0xff] %v7793
    %7826 = vst [vmem:[#allocation2 + $0x78] sm:$0xff] %v7794
    %7827 = vst [vmem:[#allocation2 + $0x80] sm:$0xff] %v7795
    %7828 = vst [vmem:[#allocation2 + $0x88] sm:$0xff] %v7796
    %7829 = vst [vmem:[#allocation2 + $0x90] sm:$0xff] %v7797
    %7830 = vst [vmem:[#allocation2 + $0x98] sm:$0xff] %v7798
    %7831 = vst [vmem:[#allocation2 + $0xa0] sm:$0xff] %v7799
    %7832 = vst [vmem:[#allocation2 + $0xa8] sm:$0xff] %v7800
    %7833 = vst [vmem:[#allocation2 + $0xb0] sm:$0xff] %v7801
    %7834 = vst [vmem:[#allocation2 + $0xb8] sm:$0xff] %v7802
    %7835 = vst [vmem:[#allocation2 + $0xc0] sm:$0xff] %v7803
    %7836 = vst [vmem:[#allocation2 + $0xc8] sm:$0xff] %v7804
    %7837 = vst [vmem:[#allocation2 + $0xd0] sm:$0xff] %v7805
    %7838 = vst [vmem:[#allocation2 + $0xd8] sm:$0xff] %v7806
    %7839 = vst [vmem:[#allocation2 + $0xe0] sm:$0xff] %v7807
    %7840 = vst [vmem:[#allocation2 + $0xe8] sm:$0xff] %v7808
    %7841 = vst [vmem:[#allocation2 + $0xf0] sm:$0xff] %v7809
    %7842 = vst [vmem:[#allocation2 + $0xf8] sm:$0xff] %v7810
    // Predicated region
    $region38: #{layer_forward.1} parent=1 // pred_check
      _
    $region39: #{layer_forward.1} parent=1 // pred_check_branch
      %7844 = sbr.rel (0) target = $region41
    $region40: #{layer_forward.1} parent=1 // pred_region
      %s7846 = ssub.s32 4096, 4096
      %7847 = vsyncadd [#allocation3], %s7846
      %s7848 = sshll.u32 [#allocation2], 4
      %s7849 = int_to_ptr.vmem [resolvable:$true] %s7848
      %7854 = dma.vmem_to_hbm [thread:$0]  %s7849, 4096, %s9, [#allocation3], 128, 128, 8
    $region41: #{layer_forward.1} parent=1 // pred_fallthru
      _
    // Predicated region
    $region42: #{layer_forward.1} parent=1 // pred_check
      _
    $region43: #{layer_forward.1} parent=1 // pred_check_branch
      %7856 = sbr.rel (0) target = $region45
    $region44: #{layer_forward.1} parent=1 // pred_region
      %7857 = dma.done [#allocation3], 4096
    $region45: #{layer_forward.1} parent=1 // pred_fallthru
      _
    %7858 = vsyncpa [#allocation3], 1

</llo_original>
